<compile_context>
chip_gen: v7x
topology: tpu7x:2x2x1
jax: 0.10.0
libtpu: 0.0.40
codegen_flags: <defaults>
</compile_context>

<pallas_src>
import jax
import jax.numpy as jnp
from jax import lax
from jax.experimental import pallas as pl
from jax.experimental.pallas import tpu as pltpu

EPS = 1e-5  # nn.BatchNorm2d default eps


def _merge_minor(v3):
    """(A, B, C) value -> (A, B*C) lane-dense slab via concat along the lane
    axis (avoids relying on a lane-merging reshape inside the kernel)."""
    return jnp.concatenate([v3[:, i, :] for i in range(v3.shape[1])], axis=-1)


def _make_residual_kernel(N, H, W, Cin, Cout, has_proj, compute_dtype):
    M = N * H * W

    def kernel(*refs):
        if has_proj:
            (xcol_ref, xc_ref, w1_ref, w2_ref, ws_ref,
             g1_ref, b1_ref, g2_ref, b2_ref, out_ref, pad_ref) = refs
        else:
            (xcol_ref, xc_ref, w1_ref, w2_ref,
             g1_ref, b1_ref, g2_ref, b2_ref, out_ref, pad_ref) = refs
            ws_ref = None

        # ---- conv1: single MXU matmul on the wrapper-built im2col (K=9*Cin) --
        acc1 = jnp.dot(xcol_ref[...], w1_ref[...],
                       preferred_element_type=jnp.float32)        # (M, Cout) f32

        # ---- BN1 folded (scale/shift, rsqrt on EUP, one-pass var) + ReLU -----
        mean1 = jnp.mean(acc1, axis=0, keepdims=True)
        var1 = jnp.mean(acc1 * acc1, axis=0, keepdims=True) - mean1 * mean1
        scale1 = g1_ref[...] * lax.rsqrt(var1 + EPS)
        shift1 = b1_ref[...] - mean1 * scale1
        y1 = jnp.maximum(acc1 * scale1 + shift1, 0.0)             # (M, Cout) f32

        # ---- padded intermediate for conv2: zero ONLY the 1-wide halo --------
        pad_ref[:, 0:1, :, :] = jnp.zeros((N, 1, W + 2, Cout), compute_dtype)
        pad_ref[:, H + 1:H + 2, :, :] = jnp.zeros((N, 1, W + 2, Cout), compute_dtype)
        pad_ref[:, :, 0:1, :] = jnp.zeros((N, H + 2, 1, Cout), compute_dtype)
        pad_ref[:, :, W + 1:W + 2, :] = jnp.zeros((N, H + 2, 1, Cout), compute_dtype)
        pad_ref[:, 1:H + 1, 1:W + 1, :] = (
            y1.reshape(N, H, W, Cout).astype(compute_dtype))

        # ---- conv2: in-kernel im2col (tap-major concat) + ONE matmul (K=9*Cout)
        taps = [pad_ref[:, dy:dy + H, dx:dx + W, :].reshape(M, Cout)
                for dy in range(3) for dx in range(3)]
        y1_col = jnp.concatenate(taps, axis=-1)                   # (M, 9*Cout)
        acc2 = jnp.dot(y1_col, w2_ref[...],
                       preferred_element_type=jnp.float32)        # (M, Cout) f32

        # ---- BN2 folded -------------------------------------------------------
        mean2 = jnp.mean(acc2, axis=0, keepdims=True)
        var2 = jnp.mean(acc2 * acc2, axis=0, keepdims=True) - mean2 * mean2
        scale2 = g2_ref[...] * lax.rsqrt(var2 + EPS)
        shift2 = b2_ref[...] - mean2 * scale2
        y2 = acc2 * scale2 + shift2

        # ---- shortcut: identity (no matmul) or 1x1-conv matmul ----------------
        if has_proj:
            sc = jnp.dot(xc_ref[...], ws_ref[...],
                         preferred_element_type=jnp.float32)
        else:
            sc = xc_ref[...].astype(jnp.float32)

        out = jnp.maximum(y2 + sc, 0.0)                           # (M, Cout) f32

        # ---- lane-dense writeback: (N*H, W*Cout) slab -------------------------
        out3 = out.reshape(N * H, W, Cout)        # split leading dim only
        out_ref[...] = _merge_minor(out3).astype(out_ref.dtype)

    return kernel


def residual_block_forward(x_nchw, kparams, compute_dtype=jnp.float32):
    """x_nchw: (N, Cin, H, W) float32 -> (N, Cout, H, W) float32.

    compute_dtype: dtype of the MXU inputs (f32 or bf16); accumulation and all
    BatchNorm math stay in f32.
    """
    w1, g1, b1, w2, g2, b2, ws = kparams        # ws is None for identity shortcut
    N, Cin, H, W = x_nchw.shape
    Cout = g1.shape[-1]
    has_proj = ws is not None
    M = N * H * W

    x_nhwc = jnp.transpose(x_nchw, (0, 2, 3, 1)).astype(jnp.float32)
    x_pad = jnp.pad(x_nhwc, ((0, 0), (1, 1), (1, 1), (0, 0)))

    # im2col for conv1, built once in the wrapper (tap-major, channel minor).
    taps = [x_pad[:, dy:dy + H, dx:dx + W, :] for dy in range(3) for dx in range(3)]
    x_col = jnp.concatenate(taps, axis=-1).reshape(M, 9 * Cin).astype(compute_dtype)
    x_center = x_nhwc.reshape(M, Cin).astype(compute_dtype)

    w1f = w1.reshape(9 * Cin, Cout).astype(compute_dtype)
    w2f = w2.reshape(9 * Cout, Cout).astype(compute_dtype)
    g1r = g1.reshape(1, Cout).astype(jnp.float32)
    b1r = b1.reshape(1, Cout).astype(jnp.float32)
    g2r = g2.reshape(1, Cout).astype(jnp.float32)
    b2r = b2.reshape(1, Cout).astype(jnp.float32)

    inputs = [x_col, x_center, w1f, w2f]
    if has_proj:
        inputs.append(ws.astype(compute_dtype))
    inputs += [g1r, b1r, g2r, b2r]

    kernel = _make_residual_kernel(N, H, W, Cin, Cout, has_proj, compute_dtype)

    out2d = pl.pallas_call(
        kernel,
        out_shape=jax.ShapeDtypeStruct((N * H, W * Cout), jnp.float32),
        scratch_shapes=[pltpu.VMEM((N, H + 2, W + 2, Cout), compute_dtype)],
        compiler_params=pltpu.CompilerParams(
            vmem_limit_bytes=32 * 1024 * 1024),
    )(*inputs)

    out_nhwc = out2d.reshape(N, H, W, Cout)
    return jnp.transpose(out_nhwc, (0, 3, 1, 2))


# ------------------------- parameter setup (deterministic) -------------------
def init_params(key, in_channels, out_channels):
    k1, k2, k3, kg1, kb1, kg2, kb2 = jax.random.split(key, 7)
    w1_oihw = jax.random.normal(k1, (out_channels, in_channels, 3, 3), jnp.float32) * 0.2
    w2_oihw = jax.random.normal(k2, (out_channels, out_channels, 3, 3), jnp.float32) * 0.2
    g1 = jax.random.uniform(kg1, (out_channels,), jnp.float32, 0.5, 1.5)
    b1 = jax.random.normal(kb1, (out_channels,), jnp.float32) * 0.1
    g2 = jax.random.uniform(kg2, (out_channels,), jnp.float32, 0.5, 1.5)
    b2 = jax.random.normal(kb2, (out_channels,), jnp.float32) * 0.1
    if in_channels == out_channels:
        ws_oihw = None                     # nn.Identity shortcut
    else:
        ws_oihw = jax.random.normal(k3, (out_channels, in_channels, 1, 1), jnp.float32) * 0.2
    return w1_oihw, g1, b1, w2_oihw, g2, b2, ws_oihw


def to_kernel_params(params):
    w1_oihw, g1, b1, w2_oihw, g2, b2, ws_oihw = params
    cout, cin = w1_oihw.shape[0], w1_oihw.shape[1]
    # OIHW -> (ky, kx, I, O) -> (9, I, O); tap order matches the im2col build.
    w1 = jnp.transpose(w1_oihw, (2, 3, 1, 0)).reshape(9, cin, cout)
    w2 = jnp.transpose(w2_oihw, (2, 3, 1, 0)).reshape(9, cout, cout)
    ws = None if ws_oihw is None else jnp.transpose(ws_oihw[:, :, 0, 0], (1, 0))
    return (w1, g1, b1, w2, g2, b2, ws)


# ------------------------- pure-JAX reference (for verification) -------------
def ref_forward(x, params):
    w1_oihw, g1, b1, w2_oihw, g2, b2, ws_oihw = params

    def conv(x, w, pad):
        dn = lax.conv_dimension_numbers(x.shape, w.shape, ('NCHW', 'OIHW', 'NCHW'))
        return lax.conv_general_dilated(x, w, (1, 1), [(pad, pad), (pad, pad)],
                                        dimension_numbers=dn)

    def bn(x, g, b):
        mean = jnp.mean(x, axis=(0, 2, 3), keepdims=True)
        var = jnp.mean((x - mean) ** 2, axis=(0, 2, 3), keepdims=True)
        return ((x - mean) / jnp.sqrt(var + EPS) * g[None, :, None, None]
                + b[None, :, None, None])

    y = jax.nn.relu(bn(conv(x, w1_oihw, 1), g1, b1))
    y = bn(conv(y, w2_oihw, 1), g2, b2)
    sc = x if ws_oihw is None else conv(x, ws_oihw, 0)
    return jax.nn.relu(y + sc)


if __name__ == "__main__":
    key = jax.random.PRNGKey(0)
    k1, k2, k3, k4 = jax.random.split(key, 4)

    def run_case(n, cin, cout, h, w, kx, kp):
        x = jax.random.normal(kx, (n, cin, h, w), jnp.float32)
        params = init_params(kp, cin, cout)
        kparams = to_kernel_params(params)
        ref = jax.block_until_ready(ref_forward(x, params))

        # f32 MXU inputs: tight check against the reference.
        out_f32 = jax.block_until_ready(
            residual_block_forward(x, kparams, compute_dtype=jnp.float32))
        assert out_f32.shape == (n, cout, h, w)
        err = float(jnp.max(jnp.abs(out_f32 - ref)))
        assert jnp.allclose(out_f32, ref, atol=1e-3, rtol=1e-3), f"f32 max err {err}"

        # bf16 MXU inputs (f32 accumulation / BN math): looser check.
        out_bf16 = jax.block_until_ready(
            residual_block_forward(x, kparams, compute_dtype=jnp.bfloat16))
        err = float(jnp.max(jnp.abs(out_bf16 - ref)))
        assert jnp.allclose(out_bf16, ref, atol=5e-2, rtol=5e-2), f"bf16 max err {err}"

    # Projection shortcut (1x1 conv) and identity shortcut (no ws operand).
    run_case(2, 4, 8, 16, 16, k1, k2)
    run_case(2, 8, 8, 16, 16, k3, k4)

    print("KERNEL_OK")
</pallas_src>

<mosaic_0001>
module attributes {stable_mosaic.version = 11 : i64} {
  func.func @kernel(%arg0: memref<512x36xf32, #tpu.memory_space<vmem>>, %arg1: memref<512x4xf32, #tpu.memory_space<vmem>>, %arg2: memref<36x8xf32, #tpu.memory_space<vmem>>, %arg3: memref<72x8xf32, #tpu.memory_space<vmem>>, %arg4: memref<4x8xf32, #tpu.memory_space<vmem>>, %arg5: memref<1x8xf32, #tpu.memory_space<vmem>>, %arg6: memref<1x8xf32, #tpu.memory_space<vmem>>, %arg7: memref<1x8xf32, #tpu.memory_space<vmem>>, %arg8: memref<1x8xf32, #tpu.memory_space<vmem>>, %arg9: memref<32x128xf32, #tpu.memory_space<vmem>>, %arg10: memref<2x18x18x8xf32, #tpu.memory_space<vmem>>) attributes {dimension_semantics = [], scalar_prefetch = 0 : i64, scratch_operands = 1 : i64, tpu.core_type = #tpu.core_type<tc>} {
    %c0 = arith.constant 0 : index
    %c0_0 = arith.constant 0 : index
    %0 = vector.load %arg0[%c0, %c0_0] : memref<512x36xf32, #tpu.memory_space<vmem>>, vector<512x36xf32>
    %c0_1 = arith.constant 0 : index
    %c0_2 = arith.constant 0 : index
    %1 = vector.load %arg2[%c0_1, %c0_2] : memref<36x8xf32, #tpu.memory_space<vmem>>, vector<36x8xf32>
    %cst = arith.constant dense<0.000000e+00> : vector<512x8xf32>
    %2 = tpu.matmul %0, %1, %cst {dimension_numbers = #tpu.dot_dimension_numbers<[1], [0], [0], [1], [0, 0, 1, 1], [], []>} : vector<512x36xf32>, vector<36x8xf32>, vector<512x8xf32> -> vector<512x8xf32>
    %cst_3 = arith.constant dense<0.000000e+00> : vector<8xf32>
    %3 = vector.multi_reduction <add>, %2, %cst_3 [0] : vector<512x8xf32> to vector<8xf32>
    %4 = vector.shape_cast %3 : vector<8xf32> to vector<1x8xf32>
    %cst_4 = arith.constant 5.120000e+02 : f32
    %5 = vector.broadcast %cst_4 : f32 to vector<1x8xf32>
    %6 = arith.divf %4, %5 : vector<1x8xf32>
    %7 = arith.mulf %2, %2 : vector<512x8xf32>
    %cst_5 = arith.constant dense<0.000000e+00> : vector<8xf32>
    %8 = vector.multi_reduction <add>, %7, %cst_5 [0] : vector<512x8xf32> to vector<8xf32>
    %9 = vector.shape_cast %8 : vector<8xf32> to vector<1x8xf32>
    %cst_6 = arith.constant 5.120000e+02 : f32
    %10 = vector.broadcast %cst_6 : f32 to vector<1x8xf32>
    %11 = arith.divf %9, %10 : vector<1x8xf32>
    %12 = arith.mulf %6, %6 : vector<1x8xf32>
    %13 = arith.subf %11, %12 : vector<1x8xf32>
    %c0_7 = arith.constant 0 : index
    %c0_8 = arith.constant 0 : index
    %14 = vector.load %arg5[%c0_7, %c0_8] : memref<1x8xf32, #tpu.memory_space<vmem>>, vector<1x8xf32>
    %cst_9 = arith.constant 9.99999974E-6 : f32
    %15 = vector.broadcast %cst_9 : f32 to vector<1x8xf32>
    %16 = arith.addf %13, %15 : vector<1x8xf32>
    %17 = math.rsqrt %16 : vector<1x8xf32>
    %18 = arith.mulf %14, %17 : vector<1x8xf32>
    %c0_10 = arith.constant 0 : index
    %c0_11 = arith.constant 0 : index
    %19 = vector.load %arg6[%c0_10, %c0_11] : memref<1x8xf32, #tpu.memory_space<vmem>>, vector<1x8xf32>
    %20 = arith.mulf %6, %18 : vector<1x8xf32>
    %21 = arith.subf %19, %20 : vector<1x8xf32>
    %22 = vector.broadcast %18 : vector<1x8xf32> to vector<512x8xf32>
    %23 = arith.mulf %2, %22 : vector<512x8xf32>
    %24 = vector.broadcast %21 : vector<1x8xf32> to vector<512x8xf32>
    %25 = arith.addf %23, %24 : vector<512x8xf32>
    %cst_12 = arith.constant 0.000000e+00 : f32
    %26 = vector.broadcast %cst_12 : f32 to vector<512x8xf32>
    %27 = arith.maximumf %25, %26 : vector<512x8xf32>
    %cst_13 = arith.constant 0.000000e+00 : f32
    %28 = vector.broadcast %cst_13 : f32 to vector<2x1x18x8xf32>
    %c0_14 = arith.constant 0 : index
    %c0_15 = arith.constant 0 : index
    %c0_16 = arith.constant 0 : index
    %c0_17 = arith.constant 0 : index
    %29 = vector.load %arg10[%c0_14, %c0_15, %c0_16, %c0_17] : memref<2x18x18x8xf32, #tpu.memory_space<vmem>>, vector<2x1x18x8xf32>
    tpu.vector_store %arg10[%c0_14, %c0_15, %c0_16, %c0_17], %28 {strides = array<i32>} : memref<2x18x18x8xf32, #tpu.memory_space<vmem>>, vector<2x1x18x8xf32>,
    %cst_18 = arith.constant 0.000000e+00 : f32
    %30 = vector.broadcast %cst_18 : f32 to vector<2x1x18x8xf32>
    %c0_19 = arith.constant 0 : index
    %c17 = arith.constant 17 : index
    %c0_20 = arith.constant 0 : index
    %c0_21 = arith.constant 0 : index
    %31 = vector.load %arg10[%c0_19, %c17, %c0_20, %c0_21] : memref<2x18x18x8xf32, #tpu.memory_space<vmem>>, vector<2x1x18x8xf32>
    tpu.vector_store %arg10[%c0_19, %c17, %c0_20, %c0_21], %30 {strides = array<i32>} : memref<2x18x18x8xf32, #tpu.memory_space<vmem>>, vector<2x1x18x8xf32>,
    %cst_22 = arith.constant 0.000000e+00 : f32
    %32 = vector.broadcast %cst_22 : f32 to vector<2x18x1x8xf32>
    %c0_23 = arith.constant 0 : index
    %c0_24 = arith.constant 0 : index
    %c0_25 = arith.constant 0 : index
    %c0_26 = arith.constant 0 : index
    %33 = vector.load %arg10[%c0_23, %c0_24, %c0_25, %c0_26] : memref<2x18x18x8xf32, #tpu.memory_space<vmem>>, vector<2x18x1x8xf32>
    tpu.vector_store %arg10[%c0_23, %c0_24, %c0_25, %c0_26], %32 {strides = array<i32>} : memref<2x18x18x8xf32, #tpu.memory_space<vmem>>, vector<2x18x1x8xf32>,
    %cst_27 = arith.constant 0.000000e+00 : f32
    %34 = vector.broadcast %cst_27 : f32 to vector<2x18x1x8xf32>
    %c0_28 = arith.constant 0 : index
    %c0_29 = arith.constant 0 : index
    %c17_30 = arith.constant 17 : index
    %c0_31 = arith.constant 0 : index
    %35 = vector.load %arg10[%c0_28, %c0_29, %c17_30, %c0_31] : memref<2x18x18x8xf32, #tpu.memory_space<vmem>>, vector<2x18x1x8xf32>
    tpu.vector_store %arg10[%c0_28, %c0_29, %c17_30, %c0_31], %34 {strides = array<i32>} : memref<2x18x18x8xf32, #tpu.memory_space<vmem>>, vector<2x18x1x8xf32>,
    %36 = vector.shape_cast %27 : vector<512x8xf32> to vector<2x16x16x8xf32>
    %c0_32 = arith.constant 0 : index
    %c1 = arith.constant 1 : index
    %c1_33 = arith.constant 1 : index
    %c0_34 = arith.constant 0 : index
    %37 = vector.load %arg10[%c0_32, %c1, %c1_33, %c0_34] : memref<2x18x18x8xf32, #tpu.memory_space<vmem>>, vector<2x16x16x8xf32>
    tpu.vector_store %arg10[%c0_32, %c1, %c1_33, %c0_34], %36 {strides = array<i32>} : memref<2x18x18x8xf32, #tpu.memory_space<vmem>>, vector<2x16x16x8xf32>,
    %c0_35 = arith.constant 0 : index
    %c0_36 = arith.constant 0 : index
    %c0_37 = arith.constant 0 : index
    %c0_38 = arith.constant 0 : index
    %38 = vector.load %arg10[%c0_35, %c0_36, %c0_37, %c0_38] : memref<2x18x18x8xf32, #tpu.memory_space<vmem>>, vector<2x16x16x8xf32>
    %39 = vector.shape_cast %38 : vector<2x16x16x8xf32> to vector<512x8xf32>
    %c0_39 = arith.constant 0 : index
    %c0_40 = arith.constant 0 : index
    %c1_41 = arith.constant 1 : index
    %c0_42 = arith.constant 0 : index
    %40 = vector.load %arg10[%c0_39, %c0_40, %c1_41, %c0_42] : memref<2x18x18x8xf32, #tpu.memory_space<vmem>>, vector<2x16x16x8xf32>
    %41 = vector.shape_cast %40 : vector<2x16x16x8xf32> to vector<512x8xf32>
    %c0_43 = arith.constant 0 : index
    %c0_44 = arith.constant 0 : index
    %c2 = arith.constant 2 : index
    %c0_45 = arith.constant 0 : index
    %42 = vector.load %arg10[%c0_43, %c0_44, %c2, %c0_45] : memref<2x18x18x8xf32, #tpu.memory_space<vmem>>, vector<2x16x16x8xf32>
    %43 = vector.shape_cast %42 : vector<2x16x16x8xf32> to vector<512x8xf32>
    %c0_46 = arith.constant 0 : index
    %c1_47 = arith.constant 1 : index
    %c0_48 = arith.constant 0 : index
    %c0_49 = arith.constant 0 : index
    %44 = vector.load %arg10[%c0_46, %c1_47, %c0_48, %c0_49] : memref<2x18x18x8xf32, #tpu.memory_space<vmem>>, vector<2x16x16x8xf32>
    %45 = vector.shape_cast %44 : vector<2x16x16x8xf32> to vector<512x8xf32>
    %c0_50 = arith.constant 0 : index
    %c1_51 = arith.constant 1 : index
    %c1_52 = arith.constant 1 : index
    %c0_53 = arith.constant 0 : index
    %46 = vector.load %arg10[%c0_50, %c1_51, %c1_52, %c0_53] : memref<2x18x18x8xf32, #tpu.memory_space<vmem>>, vector<2x16x16x8xf32>
    %47 = vector.shape_cast %46 : vector<2x16x16x8xf32> to vector<512x8xf32>
    %c0_54 = arith.constant 0 : index
    %c1_55 = arith.constant 1 : index
    %c2_56 = arith.constant 2 : index
    %c0_57 = arith.constant 0 : index
    %48 = vector.load %arg10[%c0_54, %c1_55, %c2_56, %c0_57] : memref<2x18x18x8xf32, #tpu.memory_space<vmem>>, vector<2x16x16x8xf32>
    %49 = vector.shape_cast %48 : vector<2x16x16x8xf32> to vector<512x8xf32>
    %c0_58 = arith.constant 0 : index
    %c2_59 = arith.constant 2 : index
    %c0_60 = arith.constant 0 : index
    %c0_61 = arith.constant 0 : index
    %50 = vector.load %arg10[%c0_58, %c2_59, %c0_60, %c0_61] : memref<2x18x18x8xf32, #tpu.memory_space<vmem>>, vector<2x16x16x8xf32>
    %51 = vector.shape_cast %50 : vector<2x16x16x8xf32> to vector<512x8xf32>
    %c0_62 = arith.constant 0 : index
    %c2_63 = arith.constant 2 : index
    %c1_64 = arith.constant 1 : index
    %c0_65 = arith.constant 0 : index
    %52 = vector.load %arg10[%c0_62, %c2_63, %c1_64, %c0_65] : memref<2x18x18x8xf32, #tpu.memory_space<vmem>>, vector<2x16x16x8xf32>
    %53 = vector.shape_cast %52 : vector<2x16x16x8xf32> to vector<512x8xf32>
    %c0_66 = arith.constant 0 : index
    %c2_67 = arith.constant 2 : index
    %c2_68 = arith.constant 2 : index
    %c0_69 = arith.constant 0 : index
    %54 = vector.load %arg10[%c0_66, %c2_67, %c2_68, %c0_69] : memref<2x18x18x8xf32, #tpu.memory_space<vmem>>, vector<2x16x16x8xf32>
    %55 = vector.shape_cast %54 : vector<2x16x16x8xf32> to vector<512x8xf32>
    %56 = tpu.concatenate %39, %41, %43, %45, %47, %49, %51, %53, %55 in 1 : vector<512x8xf32>, vector<512x8xf32>, vector<512x8xf32>, vector<512x8xf32>, vector<512x8xf32>, vector<512x8xf32>, vector<512x8xf32>, vector<512x8xf32>, vector<512x8xf32> -> vector<512x72xf32>
    %c0_70 = arith.constant 0 : index
    %c0_71 = arith.constant 0 : index
    %57 = vector.load %arg3[%c0_70, %c0_71] : memref<72x8xf32, #tpu.memory_space<vmem>>, vector<72x8xf32>
    %cst_72 = arith.constant dense<0.000000e+00> : vector<512x8xf32>
    %58 = tpu.matmul %56, %57, %cst_72 {dimension_numbers = #tpu.dot_dimension_numbers<[1], [0], [0], [1], [0, 0, 1, 1], [], []>} : vector<512x72xf32>, vector<72x8xf32>, vector<512x8xf32> -> vector<512x8xf32>
    %cst_73 = arith.constant dense<0.000000e+00> : vector<8xf32>
    %59 = vector.multi_reduction <add>, %58, %cst_73 [0] : vector<512x8xf32> to vector<8xf32>
    %60 = vector.shape_cast %59 : vector<8xf32> to vector<1x8xf32>
    %cst_74 = arith.constant 5.120000e+02 : f32
    %61 = vector.broadcast %cst_74 : f32 to vector<1x8xf32>
    %62 = arith.divf %60, %61 : vector<1x8xf32>
    %63 = arith.mulf %58, %58 : vector<512x8xf32>
    %cst_75 = arith.constant dense<0.000000e+00> : vector<8xf32>
    %64 = vector.multi_reduction <add>, %63, %cst_75 [0] : vector<512x8xf32> to vector<8xf32>
    %65 = vector.shape_cast %64 : vector<8xf32> to vector<1x8xf32>
    %cst_76 = arith.constant 5.120000e+02 : f32
    %66 = vector.broadcast %cst_76 : f32 to vector<1x8xf32>
    %67 = arith.divf %65, %66 : vector<1x8xf32>
    %68 = arith.mulf %62, %62 : vector<1x8xf32>
    %69 = arith.subf %67, %68 : vector<1x8xf32>
    %c0_77 = arith.constant 0 : index
    %c0_78 = arith.constant 0 : index
    %70 = vector.load %arg7[%c0_77, %c0_78] : memref<1x8xf32, #tpu.memory_space<vmem>>, vector<1x8xf32>
    %cst_79 = arith.constant 9.99999974E-6 : f32
    %71 = vector.broadcast %cst_79 : f32 to vector<1x8xf32>
    %72 = arith.addf %69, %71 : vector<1x8xf32>
    %73 = math.rsqrt %72 : vector<1x8xf32>
    %74 = arith.mulf %70, %73 : vector<1x8xf32>
    %c0_80 = arith.constant 0 : index
    %c0_81 = arith.constant 0 : index
    %75 = vector.load %arg8[%c0_80, %c0_81] : memref<1x8xf32, #tpu.memory_space<vmem>>, vector<1x8xf32>
    %76 = arith.mulf %62, %74 : vector<1x8xf32>
    %77 = arith.subf %75, %76 : vector<1x8xf32>
    %78 = vector.broadcast %74 : vector<1x8xf32> to vector<512x8xf32>
    %79 = arith.mulf %58, %78 : vector<512x8xf32>
    %80 = vector.broadcast %77 : vector<1x8xf32> to vector<512x8xf32>
    %81 = arith.addf %79, %80 : vector<512x8xf32>
    %c0_82 = arith.constant 0 : index
    %c0_83 = arith.constant 0 : index
    %82 = vector.load %arg1[%c0_82, %c0_83] : memref<512x4xf32, #tpu.memory_space<vmem>>, vector<512x4xf32>
    %c0_84 = arith.constant 0 : index
    %c0_85 = arith.constant 0 : index
    %83 = vector.load %arg4[%c0_84, %c0_85] : memref<4x8xf32, #tpu.memory_space<vmem>>, vector<4x8xf32>
    %cst_86 = arith.constant dense<0.000000e+00> : vector<512x8xf32>
    %84 = tpu.matmul %82, %83, %cst_86 {dimension_numbers = #tpu.dot_dimension_numbers<[1], [0], [0], [1], [0, 0, 1, 1], [], []>} : vector<512x4xf32>, vector<4x8xf32>, vector<512x8xf32> -> vector<512x8xf32>
    %85 = arith.addf %81, %84 : vector<512x8xf32>
    %cst_87 = arith.constant 0.000000e+00 : f32
    %86 = vector.broadcast %cst_87 : f32 to vector<512x8xf32>
    %87 = arith.maximumf %85, %86 : vector<512x8xf32>
    %88 = vector.shape_cast %87 : vector<512x8xf32> to vector<32x16x8xf32>
    %89 = vector.extract_strided_slice %88 {offsets = [0, 0, 0], sizes = [32, 1, 8], strides = [1, 1, 1]} : vector<32x16x8xf32> to vector<32x1x8xf32>
    %90 = vector.shape_cast %89 : vector<32x1x8xf32> to vector<32x8xf32>
    %91 = vector.extract_strided_slice %88 {offsets = [0, 1, 0], sizes = [32, 1, 8], strides = [1, 1, 1]} : vector<32x16x8xf32> to vector<32x1x8xf32>
    %92 = vector.shape_cast %91 : vector<32x1x8xf32> to vector<32x8xf32>
    %93 = vector.extract_strided_slice %88 {offsets = [0, 2, 0], sizes = [32, 1, 8], strides = [1, 1, 1]} : vector<32x16x8xf32> to vector<32x1x8xf32>
    %94 = vector.shape_cast %93 : vector<32x1x8xf32> to vector<32x8xf32>
    %95 = vector.extract_strided_slice %88 {offsets = [0, 3, 0], sizes = [32, 1, 8], strides = [1, 1, 1]} : vector<32x16x8xf32> to vector<32x1x8xf32>
    %96 = vector.shape_cast %95 : vector<32x1x8xf32> to vector<32x8xf32>
    %97 = vector.extract_strided_slice %88 {offsets = [0, 4, 0], sizes = [32, 1, 8], strides = [1, 1, 1]} : vector<32x16x8xf32> to vector<32x1x8xf32>
    %98 = vector.shape_cast %97 : vector<32x1x8xf32> to vector<32x8xf32>
    %99 = vector.extract_strided_slice %88 {offsets = [0, 5, 0], sizes = [32, 1, 8], strides = [1, 1, 1]} : vector<32x16x8xf32> to vector<32x1x8xf32>
    %100 = vector.shape_cast %99 : vector<32x1x8xf32> to vector<32x8xf32>
    %101 = vector.extract_strided_slice %88 {offsets = [0, 6, 0], sizes = [32, 1, 8], strides = [1, 1, 1]} : vector<32x16x8xf32> to vector<32x1x8xf32>
    %102 = vector.shape_cast %101 : vector<32x1x8xf32> to vector<32x8xf32>
    %103 = vector.extract_strided_slice %88 {offsets = [0, 7, 0], sizes = [32, 1, 8], strides = [1, 1, 1]} : vector<32x16x8xf32> to vector<32x1x8xf32>
    %104 = vector.shape_cast %103 : vector<32x1x8xf32> to vector<32x8xf32>
    %105 = vector.extract_strided_slice %88 {offsets = [0, 8, 0], sizes = [32, 1, 8], strides = [1, 1, 1]} : vector<32x16x8xf32> to vector<32x1x8xf32>
    %106 = vector.shape_cast %105 : vector<32x1x8xf32> to vector<32x8xf32>
    %107 = vector.extract_strided_slice %88 {offsets = [0, 9, 0], sizes = [32, 1, 8], strides = [1, 1, 1]} : vector<32x16x8xf32> to vector<32x1x8xf32>
    %108 = vector.shape_cast %107 : vector<32x1x8xf32> to vector<32x8xf32>
    %109 = vector.extract_strided_slice %88 {offsets = [0, 10, 0], sizes = [32, 1, 8], strides = [1, 1, 1]} : vector<32x16x8xf32> to vector<32x1x8xf32>
    %110 = vector.shape_cast %109 : vector<32x1x8xf32> to vector<32x8xf32>
    %111 = vector.extract_strided_slice %88 {offsets = [0, 11, 0], sizes = [32, 1, 8], strides = [1, 1, 1]} : vector<32x16x8xf32> to vector<32x1x8xf32>
    %112 = vector.shape_cast %111 : vector<32x1x8xf32> to vector<32x8xf32>
    %113 = vector.extract_strided_slice %88 {offsets = [0, 12, 0], sizes = [32, 1, 8], strides = [1, 1, 1]} : vector<32x16x8xf32> to vector<32x1x8xf32>
    %114 = vector.shape_cast %113 : vector<32x1x8xf32> to vector<32x8xf32>
    %115 = vector.extract_strided_slice %88 {offsets = [0, 13, 0], sizes = [32, 1, 8], strides = [1, 1, 1]} : vector<32x16x8xf32> to vector<32x1x8xf32>
    %116 = vector.shape_cast %115 : vector<32x1x8xf32> to vector<32x8xf32>
    %117 = vector.extract_strided_slice %88 {offsets = [0, 14, 0], sizes = [32, 1, 8], strides = [1, 1, 1]} : vector<32x16x8xf32> to vector<32x1x8xf32>
    %118 = vector.shape_cast %117 : vector<32x1x8xf32> to vector<32x8xf32>
    %119 = vector.extract_strided_slice %88 {offsets = [0, 15, 0], sizes = [32, 1, 8], strides = [1, 1, 1]} : vector<32x16x8xf32> to vector<32x1x8xf32>
    %120 = vector.shape_cast %119 : vector<32x1x8xf32> to vector<32x8xf32>
    %121 = tpu.concatenate %90, %92, %94, %96, %98, %100, %102, %104, %106, %108, %110, %112, %114, %116, %118, %120 in 1 : vector<32x8xf32>, vector<32x8xf32>, vector<32x8xf32>, vector<32x8xf32>, vector<32x8xf32>, vector<32x8xf32>, vector<32x8xf32>, vector<32x8xf32>, vector<32x8xf32>, vector<32x8xf32>, vector<32x8xf32>, vector<32x8xf32>, vector<32x8xf32>, vector<32x8xf32>, vector<32x8xf32>, vector<32x8xf32> -> vector<32x128xf32>
    %c0_88 = arith.constant 0 : index
    %c0_89 = arith.constant 0 : index
    %122 = vector.load %arg9[%c0_88, %c0_89] : memref<32x128xf32, #tpu.memory_space<vmem>>, vector<32x128xf32>
    tpu.vector_store %arg9[%c0_88, %c0_89], %121 {strides = array<i32>} : memref<32x128xf32, #tpu.memory_space<vmem>>, vector<32x128xf32>,
    return
  }
}

</mosaic_0001>

<llo_original>
// kernel: tpu_custom_call.1
$region0: #{tpu_custom_call.1}
  #allocation0 [shape = 'u32[]', space=smem, size = 0x4, offset = 0x4, fixed_abs, tag = 'smem constant byte address 0x4 - core index']
  #allocation1 [shape = 'u32[144,128]{1,0:T(1,128)}', space=vmem, size = 0x12000, scoped, tag = 'internal scratch']
  #allocation2 [shape = 'f32[2,18,18,8]{3,2,1,0:T(8,128)}', space=vmem, size = 0x6c000, scoped, tag = 'scratch operand']
  %s0 = inlined_call_operand.vmem [shape: f32[512,36], index: 0, kind: input, shape index: {}]
  %s1 = inlined_call_operand.vmem [shape: f32[512,4], index: 1, kind: input, shape index: {}]
  %s2 = inlined_call_operand.vmem [shape: f32[36,8], index: 2, kind: input, shape index: {}]
  %s3 = inlined_call_operand.vmem [shape: f32[72,8], index: 3, kind: input, shape index: {}]
  %s4 = inlined_call_operand.vmem [shape: f32[4,8], index: 4, kind: input, shape index: {}]
  %s5 = inlined_call_operand.vmem [shape: f32[1,8], index: 5, kind: input, shape index: {}]
  %s6 = inlined_call_operand.vmem [shape: f32[1,8], index: 6, kind: input, shape index: {}]
  %s7 = inlined_call_operand.vmem [shape: f32[1,8], index: 7, kind: input, shape index: {}]
  %s8 = inlined_call_operand.vmem [shape: f32[1,8], index: 8, kind: input, shape index: {}]
  %s9 = inlined_call_operand.hbm [shape: f32[32,128], index: 9, kind: output, shape index: {}]
  %s10 = sld [smem:[#allocation0]]
  $region46: #{tpu_custom_call.1} parent=0
    _
  %s12 = ssub.s32 1, %s10
  %s13 = scalar_select 0, %s12, %s10
  $region1: #{tpu_custom_call.1} parent=0
    #allocation3 [shape = 'u8[16384]{0}', space=vmem, size = 0x4000, scoped, tag = 'output window, operand 0, single buffered']
    #allocation4 [shape = 's32[1]{0}', space=sflag, size = 0x4, scoped, tag = 'scoped memory for tpu_custom_call.1']
    %14 = vsyncpa [#allocation4], 0
    // Predicated region
    $region2: #{tpu_custom_call.1} parent=1 // pred_check
      _
    $region3: #{tpu_custom_call.1} parent=1 // pred_check_branch
      %16 = sbr.rel (0) target = $region5
    $region4: #{tpu_custom_call.1} parent=1 // pred_region
      _
    $region5: #{tpu_custom_call.1} parent=1 // pred_fallthru
      _
    // Predicated region
    $region6: #{tpu_custom_call.1} parent=1 // pred_check
      _
    $region7: #{tpu_custom_call.1} parent=1 // pred_check_branch
      %18 = sbr.rel (0) target = $region9
    $region8: #{tpu_custom_call.1} parent=1 // pred_region
      _
    $region9: #{tpu_custom_call.1} parent=1 // pred_fallthru
      _
    // Predicated region
    $region10: #{tpu_custom_call.1} parent=1 // pred_check
      _
    $region11: #{tpu_custom_call.1} parent=1 // pred_check_branch
      %20 = sbr.rel (0) target = $region13
    $region12: #{tpu_custom_call.1} parent=1 // pred_region
      _
    $region13: #{tpu_custom_call.1} parent=1 // pred_fallthru
      _
    // Predicated region
    $region14: #{tpu_custom_call.1} parent=1 // pred_check
      _
    $region15: #{tpu_custom_call.1} parent=1 // pred_check_branch
      %22 = sbr.rel (0) target = $region17
    $region16: #{tpu_custom_call.1} parent=1 // pred_region
      _
    $region17: #{tpu_custom_call.1} parent=1 // pred_fallthru
      _
    // Predicated region
    $region18: #{tpu_custom_call.1} parent=1 // pred_check
      _
    $region19: #{tpu_custom_call.1} parent=1 // pred_check_branch
      %24 = sbr.rel (0) target = $region21
    $region20: #{tpu_custom_call.1} parent=1 // pred_region
      _
    $region21: #{tpu_custom_call.1} parent=1 // pred_fallthru
      _
    // Predicated region
    $region22: #{tpu_custom_call.1} parent=1 // pred_check
      _
    $region23: #{tpu_custom_call.1} parent=1 // pred_check_branch
      %26 = sbr.rel (0) target = $region25
    $region24: #{tpu_custom_call.1} parent=1 // pred_region
      _
    $region25: #{tpu_custom_call.1} parent=1 // pred_fallthru
      _
    // Predicated region
    $region26: #{tpu_custom_call.1} parent=1 // pred_check
      _
    $region27: #{tpu_custom_call.1} parent=1 // pred_check_branch
      %28 = sbr.rel (0) target = $region29
    $region28: #{tpu_custom_call.1} parent=1 // pred_region
      _
    $region29: #{tpu_custom_call.1} parent=1 // pred_fallthru
      _
    // Predicated region
    $region30: #{tpu_custom_call.1} parent=1 // pred_check
      _
    $region31: #{tpu_custom_call.1} parent=1 // pred_check_branch
      %30 = sbr.rel (0) target = $region33
    $region32: #{tpu_custom_call.1} parent=1 // pred_region
      _
    $region33: #{tpu_custom_call.1} parent=1 // pred_fallthru
      _
    // Predicated region
    $region34: #{tpu_custom_call.1} parent=1 // pred_check
      _
    $region35: #{tpu_custom_call.1} parent=1 // pred_check_branch
      %32 = sbr.rel (0) target = $region37
    $region36: #{tpu_custom_call.1} parent=1 // pred_region
      _
    $region37: #{tpu_custom_call.1} parent=1 // pred_fallthru
      _
    %v33 = vld [vmem:[%s0] sm:$0xff]
    %v34 = vld [vmem:[%s0 + $0x8] sm:$0xff]
    %v35 = vld [vmem:[%s0 + $0x10] sm:$0xff]
    %v36 = vld [vmem:[%s0 + $0x18] sm:$0xff]
    %v37 = vld [vmem:[%s0 + $0x20] sm:$0xff]
    %v38 = vld [vmem:[%s0 + $0x28] sm:$0xff]
    %v39 = vld [vmem:[%s0 + $0x30] sm:$0xff]
    %v40 = vld [vmem:[%s0 + $0x38] sm:$0xff]
    %v41 = vld [vmem:[%s0 + $0x40] sm:$0xff]
    %v42 = vld [vmem:[%s0 + $0x48] sm:$0xff]
    %v43 = vld [vmem:[%s0 + $0x50] sm:$0xff]
    %v44 = vld [vmem:[%s0 + $0x58] sm:$0xff]
    %v45 = vld [vmem:[%s0 + $0x60] sm:$0xff]
    %v46 = vld [vmem:[%s0 + $0x68] sm:$0xff]
    %v47 = vld [vmem:[%s0 + $0x70] sm:$0xff]
    %v48 = vld [vmem:[%s0 + $0x78] sm:$0xff]
    %v49 = vld [vmem:[%s0 + $0x80] sm:$0xff]
    %v50 = vld [vmem:[%s0 + $0x88] sm:$0xff]
    %v51 = vld [vmem:[%s0 + $0x90] sm:$0xff]
    %v52 = vld [vmem:[%s0 + $0x98] sm:$0xff]
    %v53 = vld [vmem:[%s0 + $0xa0] sm:$0xff]
    %v54 = vld [vmem:[%s0 + $0xa8] sm:$0xff]
    %v55 = vld [vmem:[%s0 + $0xb0] sm:$0xff]
    %v56 = vld [vmem:[%s0 + $0xb8] sm:$0xff]
    %v57 = vld [vmem:[%s0 + $0xc0] sm:$0xff]
    %v58 = vld [vmem:[%s0 + $0xc8] sm:$0xff]
    %v59 = vld [vmem:[%s0 + $0xd0] sm:$0xff]
    %v60 = vld [vmem:[%s0 + $0xd8] sm:$0xff]
    %v61 = vld [vmem:[%s0 + $0xe0] sm:$0xff]
    %v62 = vld [vmem:[%s0 + $0xe8] sm:$0xff]
    %v63 = vld [vmem:[%s0 + $0xf0] sm:$0xff]
    %v64 = vld [vmem:[%s0 + $0xf8] sm:$0xff]
    %v65 = vld [vmem:[%s0 + $0x100] sm:$0xff]
    %v66 = vld [vmem:[%s0 + $0x108] sm:$0xff]
    %v67 = vld [vmem:[%s0 + $0x110] sm:$0xff]
    %v68 = vld [vmem:[%s0 + $0x118] sm:$0xff]
    %v69 = vld [vmem:[%s0 + $0x120] sm:$0xff]
    %v70 = vld [vmem:[%s0 + $0x128] sm:$0xff]
    %v71 = vld [vmem:[%s0 + $0x130] sm:$0xff]
    %v72 = vld [vmem:[%s0 + $0x138] sm:$0xff]
    %v73 = vld [vmem:[%s0 + $0x140] sm:$0xff]
    %v74 = vld [vmem:[%s0 + $0x148] sm:$0xff]
    %v75 = vld [vmem:[%s0 + $0x150] sm:$0xff]
    %v76 = vld [vmem:[%s0 + $0x158] sm:$0xff]
    %v77 = vld [vmem:[%s0 + $0x160] sm:$0xff]
    %v78 = vld [vmem:[%s0 + $0x168] sm:$0xff]
    %v79 = vld [vmem:[%s0 + $0x170] sm:$0xff]
    %v80 = vld [vmem:[%s0 + $0x178] sm:$0xff]
    %v81 = vld [vmem:[%s0 + $0x180] sm:$0xff]
    %v82 = vld [vmem:[%s0 + $0x188] sm:$0xff]
    %v83 = vld [vmem:[%s0 + $0x190] sm:$0xff]
    %v84 = vld [vmem:[%s0 + $0x198] sm:$0xff]
    %v85 = vld [vmem:[%s0 + $0x1a0] sm:$0xff]
    %v86 = vld [vmem:[%s0 + $0x1a8] sm:$0xff]
    %v87 = vld [vmem:[%s0 + $0x1b0] sm:$0xff]
    %v88 = vld [vmem:[%s0 + $0x1b8] sm:$0xff]
    %v89 = vld [vmem:[%s0 + $0x1c0] sm:$0xff]
    %v90 = vld [vmem:[%s0 + $0x1c8] sm:$0xff]
    %v91 = vld [vmem:[%s0 + $0x1d0] sm:$0xff]
    %v92 = vld [vmem:[%s0 + $0x1d8] sm:$0xff]
    %v93 = vld [vmem:[%s0 + $0x1e0] sm:$0xff]
    %v94 = vld [vmem:[%s0 + $0x1e8] sm:$0xff]
    %v95 = vld [vmem:[%s0 + $0x1f0] sm:$0xff]
    %v96 = vld [vmem:[%s0 + $0x1f8] sm:$0xff]
    %v97 = vld [vmem:[%s2] sm:$0xff]
    %v98 = vld [vmem:[%s2 + $0x8] sm:$0xff]
    %v99 = vld [vmem:[%s2 + $0x10] sm:$0xff]
    %v100 = vld [vmem:[%s2 + $0x18] sm:$0xff]
    %v101 = vld [vmem:[%s2 + $0x20] sm:$0xf]
    %vm102 = vcmask 293888
    %v104 = vsel %vm102, %v33, 0
    %v107 = vsel %vm102, %v34, 0
    %v110 = vsel %vm102, %v35, 0
    %v113 = vsel %vm102, %v36, 0
    %v116 = vsel %vm102, %v37, 0
    %v119 = vsel %vm102, %v38, 0
    %v122 = vsel %vm102, %v39, 0
    %v125 = vsel %vm102, %v40, 0
    %v128 = vsel %vm102, %v41, 0
    %v131 = vsel %vm102, %v42, 0
    %v134 = vsel %vm102, %v43, 0
    %v137 = vsel %vm102, %v44, 0
    %v140 = vsel %vm102, %v45, 0
    %v143 = vsel %vm102, %v46, 0
    %v146 = vsel %vm102, %v47, 0
    %v149 = vsel %vm102, %v48, 0
    %v152 = vsel %vm102, %v49, 0
    %v155 = vsel %vm102, %v50, 0
    %v158 = vsel %vm102, %v51, 0
    %v161 = vsel %vm102, %v52, 0
    %v164 = vsel %vm102, %v53, 0
    %v167 = vsel %vm102, %v54, 0
    %v170 = vsel %vm102, %v55, 0
    %v173 = vsel %vm102, %v56, 0
    %v176 = vsel %vm102, %v57, 0
    %v179 = vsel %vm102, %v58, 0
    %v182 = vsel %vm102, %v59, 0
    %v185 = vsel %vm102, %v60, 0
    %v188 = vsel %vm102, %v61, 0
    %v191 = vsel %vm102, %v62, 0
    %v194 = vsel %vm102, %v63, 0
    %v197 = vsel %vm102, %v64, 0
    %v200 = vsel %vm102, %v65, 0
    %v203 = vsel %vm102, %v66, 0
    %v206 = vsel %vm102, %v67, 0
    %v209 = vsel %vm102, %v68, 0
    %v212 = vsel %vm102, %v69, 0
    %v215 = vsel %vm102, %v70, 0
    %v218 = vsel %vm102, %v71, 0
    %v221 = vsel %vm102, %v72, 0
    %v224 = vsel %vm102, %v73, 0
    %v227 = vsel %vm102, %v74, 0
    %v230 = vsel %vm102, %v75, 0
    %v233 = vsel %vm102, %v76, 0
    %v236 = vsel %vm102, %v77, 0
    %v239 = vsel %vm102, %v78, 0
    %v242 = vsel %vm102, %v79, 0
    %v245 = vsel %vm102, %v80, 0
    %v248 = vsel %vm102, %v81, 0
    %v251 = vsel %vm102, %v82, 0
    %v254 = vsel %vm102, %v83, 0
    %v257 = vsel %vm102, %v84, 0
    %v260 = vsel %vm102, %v85, 0
    %v263 = vsel %vm102, %v86, 0
    %v266 = vsel %vm102, %v87, 0
    %v269 = vsel %vm102, %v88, 0
    %v272 = vsel %vm102, %v89, 0
    %v275 = vsel %vm102, %v90, 0
    %v278 = vsel %vm102, %v91, 0
    %v281 = vsel %vm102, %v92, 0
    %v284 = vsel %vm102, %v93, 0
    %v287 = vsel %vm102, %v94, 0
    %v290 = vsel %vm102, %v95, 0
    %v293 = vsel %vm102, %v96, 0
    %vm295 = vcmask 1043456
    %v297 = vsel %vm295, %v101, 0
    %299 = vmatprep.subr.mxu0 0.0
    %300 = vmatpush1.msra.mxu0 %v97
    %301 = vmatprep.subr.mxu0 0.0
    %302 = vmatpush1.msra.mxu0 %v98
    %303 = vmatprep.subr.mxu0 0.0
    %304 = vmatpush1.msra.mxu0 %v99
    %305 = vmatprep.subr.mxu0 0.0
    %306 = vmatpush1.msra.mxu0 %v100
    %307 = vmatprep.subr.mxu0 0.0
    %308 = vmatpush1.msra.mxu0 %v297
    %309 = vmatprep.subr.mxu0 0.0
    %310 = vmatpush1.msra.mxu0 0.0
    %311 = vmatprep.subr.mxu0 0.0
    %312 = vmatpush1.msra.mxu0 0.0
    %313 = vmatprep.subr.mxu0 0.0
    %314 = vmatpush1.msra.mxu0 0.0
    %315 = vmatprep.subr.mxu0 0.0
    %316 = vmatpush1.msra.mxu0 0.0
    %317 = vmatprep.subr.mxu0 0.0
    %318 = vmatpush1.msra.mxu0 0.0
    %319 = vmatprep.subr.mxu0 0.0
    %320 = vmatpush1.msra.mxu0 0.0
    %321 = vmatprep.subr.mxu0 0.0
    %322 = vmatpush1.msra.mxu0 0.0
    %323 = vmatprep.subr.mxu0 0.0
    %324 = vmatpush1.msra.mxu0 0.0
    %325 = vmatprep.subr.mxu0 0.0
    %326 = vmatpush1.msra.mxu0 0.0
    %327 = vmatprep.subr.mxu0 0.0
    %328 = vmatpush1.msra.mxu0 0.0
    %329 = vmatprep.subr.mxu0 0.0
    %330 = vmatpush1.msra.mxu0 0.0
    %331 = vmatprep.subr.mxu0 0.0
    %332 = vmatpush1.msra.mxu0 0.0
    %333 = vmatprep.subr.mxu0 0.0
    %334 = vmatpush1.msra.mxu0 0.0
    %335 = vmatprep.subr.mxu0 0.0
    %336 = vmatpush1.msra.mxu0 0.0
    %337 = vmatprep.subr.mxu0 0.0
    %338 = vmatpush1.msra.mxu0 0.0
    %339 = vmatprep.subr.mxu0 0.0
    %340 = vmatpush1.msra.mxu0 0.0
    %341 = vmatprep.subr.mxu0 0.0
    %342 = vmatpush1.msra.mxu0 0.0
    %343 = vmatprep.subr.mxu0 0.0
    %344 = vmatpush1.msra.mxu0 0.0
    %345 = vmatprep.subr.mxu0 0.0
    %346 = vmatpush1.msra.mxu0 0.0
    %347 = vmatprep.subr.mxu0 0.0
    %348 = vmatpush1.msra.mxu0 0.0
    %349 = vmatprep.subr.mxu0 0.0
    %350 = vmatpush1.msra.mxu0 0.0
    %351 = vmatprep.subr.mxu0 0.0
    %352 = vmatpush1.msra.mxu0 0.0
    %353 = vmatprep.subr.mxu0 0.0
    %354 = vmatpush1.msra.mxu0 0.0
    %355 = vmatprep.subr.mxu0 0.0
    %356 = vmatpush1.msra.mxu0 0.0
    %357 = vmatprep.subr.mxu0 0.0
    %358 = vmatpush1.msra.mxu0 0.0
    %359 = vmatprep.subr.mxu0 0.0
    %360 = vmatpush1.msra.mxu0 0.0
    %361 = vmatprep.subr.mxu0 0.0
    %362 = vmatpush1.msra.mxu0 0.0
    %363 = vmatprep.mubr.f32.mxu0 0.0
    %364 = vmatmul.mubr.f32.gmra.mrb[0].mxu0 %v104
    %v365 = vpop.f32.mrb[0].mxu0
    %v366 = vadd.f32 0.0, %v365
    %v367 = vpop.f32.mrb[0].mxu0
    %368 = vmatprep.mubr.f32.mxu0 0.0
    %369 = vmatmul.mubr.f32.gmra.mrb[0].mxu0 %v107
    %v370 = vpop.f32.mrb[0].mxu0
    %v371 = vadd.f32 0.0, %v370
    %v372 = vpop.f32.mrb[0].mxu0
    %373 = vmatprep.mubr.f32.mxu0 0.0
    %374 = vmatmul.mubr.f32.gmra.mrb[0].mxu0 %v110
    %v375 = vpop.f32.mrb[0].mxu0
    %v376 = vadd.f32 0.0, %v375
    %v377 = vpop.f32.mrb[0].mxu0
    %378 = vmatprep.mubr.f32.mxu0 0.0
    %379 = vmatmul.mubr.f32.gmra.mrb[0].mxu0 %v113
    %v380 = vpop.f32.mrb[0].mxu0
    %v381 = vadd.f32 0.0, %v380
    %v382 = vpop.f32.mrb[0].mxu0
    %383 = vmatprep.mubr.f32.mxu0 0.0
    %384 = vmatmul.mubr.f32.gmra.mrb[0].mxu0 %v116
    %v385 = vpop.f32.mrb[0].mxu0
    %v386 = vadd.f32 0.0, %v385
    %v387 = vpop.f32.mrb[0].mxu0
    %388 = vmatprep.mubr.f32.mxu0 0.0
    %389 = vmatmul.mubr.f32.gmra.mrb[0].mxu0 %v119
    %v390 = vpop.f32.mrb[0].mxu0
    %v391 = vadd.f32 0.0, %v390
    %v392 = vpop.f32.mrb[0].mxu0
    %393 = vmatprep.mubr.f32.mxu0 0.0
    %394 = vmatmul.mubr.f32.gmra.mrb[0].mxu0 %v122
    %v395 = vpop.f32.mrb[0].mxu0
    %v396 = vadd.f32 0.0, %v395
    %v397 = vpop.f32.mrb[0].mxu0
    %398 = vmatprep.mubr.f32.mxu0 0.0
    %399 = vmatmul.mubr.f32.gmra.mrb[0].mxu0 %v125
    %v400 = vpop.f32.mrb[0].mxu0
    %v401 = vadd.f32 0.0, %v400
    %v402 = vpop.f32.mrb[0].mxu0
    %403 = vmatprep.mubr.f32.mxu0 0.0
    %404 = vmatmul.mubr.f32.gmra.mrb[0].mxu0 %v128
    %v405 = vpop.f32.mrb[0].mxu0
    %v406 = vadd.f32 0.0, %v405
    %v407 = vpop.f32.mrb[0].mxu0
    %408 = vmatprep.mubr.f32.mxu0 0.0
    %409 = vmatmul.mubr.f32.gmra.mrb[0].mxu0 %v131
    %v410 = vpop.f32.mrb[0].mxu0
    %v411 = vadd.f32 0.0, %v410
    %v412 = vpop.f32.mrb[0].mxu0
    %413 = vmatprep.mubr.f32.mxu0 0.0
    %414 = vmatmul.mubr.f32.gmra.mrb[0].mxu0 %v134
    %v415 = vpop.f32.mrb[0].mxu0
    %v416 = vadd.f32 0.0, %v415
    %v417 = vpop.f32.mrb[0].mxu0
    %418 = vmatprep.mubr.f32.mxu0 0.0
    %419 = vmatmul.mubr.f32.gmra.mrb[0].mxu0 %v137
    %v420 = vpop.f32.mrb[0].mxu0
    %v421 = vadd.f32 0.0, %v420
    %v422 = vpop.f32.mrb[0].mxu0
    %423 = vmatprep.mubr.f32.mxu0 0.0
    %424 = vmatmul.mubr.f32.gmra.mrb[0].mxu0 %v140
    %v425 = vpop.f32.mrb[0].mxu0
    %v426 = vadd.f32 0.0, %v425
    %v427 = vpop.f32.mrb[0].mxu0
    %428 = vmatprep.mubr.f32.mxu0 0.0
    %429 = vmatmul.mubr.f32.gmra.mrb[0].mxu0 %v143
    %v430 = vpop.f32.mrb[0].mxu0
    %v431 = vadd.f32 0.0, %v430
    %v432 = vpop.f32.mrb[0].mxu0
    %433 = vmatprep.mubr.f32.mxu0 0.0
    %434 = vmatmul.mubr.f32.gmra.mrb[0].mxu0 %v146
    %v435 = vpop.f32.mrb[0].mxu0
    %v436 = vadd.f32 0.0, %v435
    %v437 = vpop.f32.mrb[0].mxu0
    %438 = vmatprep.mubr.f32.mxu0 0.0
    %439 = vmatmul.mubr.f32.gmra.mrb[0].mxu0 %v149
    %v440 = vpop.f32.mrb[0].mxu0
    %v441 = vadd.f32 0.0, %v440
    %v442 = vpop.f32.mrb[0].mxu0
    %443 = vmatprep.mubr.f32.mxu0 0.0
    %444 = vmatmul.mubr.f32.gmra.mrb[0].mxu0 %v152
    %v445 = vpop.f32.mrb[0].mxu0
    %v446 = vadd.f32 0.0, %v445
    %v447 = vpop.f32.mrb[0].mxu0
    %448 = vmatprep.mubr.f32.mxu0 0.0
    %449 = vmatmul.mubr.f32.gmra.mrb[0].mxu0 %v155
    %v450 = vpop.f32.mrb[0].mxu0
    %v451 = vadd.f32 0.0, %v450
    %v452 = vpop.f32.mrb[0].mxu0
    %453 = vmatprep.mubr.f32.mxu0 0.0
    %454 = vmatmul.mubr.f32.gmra.mrb[0].mxu0 %v158
    %v455 = vpop.f32.mrb[0].mxu0
    %v456 = vadd.f32 0.0, %v455
    %v457 = vpop.f32.mrb[0].mxu0
    %458 = vmatprep.mubr.f32.mxu0 0.0
    %459 = vmatmul.mubr.f32.gmra.mrb[0].mxu0 %v161
    %v460 = vpop.f32.mrb[0].mxu0
    %v461 = vadd.f32 0.0, %v460
    %v462 = vpop.f32.mrb[0].mxu0
    %463 = vmatprep.mubr.f32.mxu0 0.0
    %464 = vmatmul.mubr.f32.gmra.mrb[0].mxu0 %v164
    %v465 = vpop.f32.mrb[0].mxu0
    %v466 = vadd.f32 0.0, %v465
    %v467 = vpop.f32.mrb[0].mxu0
    %468 = vmatprep.mubr.f32.mxu0 0.0
    %469 = vmatmul.mubr.f32.gmra.mrb[0].mxu0 %v167
    %v470 = vpop.f32.mrb[0].mxu0
    %v471 = vadd.f32 0.0, %v470
    %v472 = vpop.f32.mrb[0].mxu0
    %473 = vmatprep.mubr.f32.mxu0 0.0
    %474 = vmatmul.mubr.f32.gmra.mrb[0].mxu0 %v170
    %v475 = vpop.f32.mrb[0].mxu0
    %v476 = vadd.f32 0.0, %v475
    %v477 = vpop.f32.mrb[0].mxu0
    %478 = vmatprep.mubr.f32.mxu0 0.0
    %479 = vmatmul.mubr.f32.gmra.mrb[0].mxu0 %v173
    %v480 = vpop.f32.mrb[0].mxu0
    %v481 = vadd.f32 0.0, %v480
    %v482 = vpop.f32.mrb[0].mxu0
    %483 = vmatprep.mubr.f32.mxu0 0.0
    %484 = vmatmul.mubr.f32.gmra.mrb[0].mxu0 %v176
    %v485 = vpop.f32.mrb[0].mxu0
    %v486 = vadd.f32 0.0, %v485
    %v487 = vpop.f32.mrb[0].mxu0
    %488 = vmatprep.mubr.f32.mxu0 0.0
    %489 = vmatmul.mubr.f32.gmra.mrb[0].mxu0 %v179
    %v490 = vpop.f32.mrb[0].mxu0
    %v491 = vadd.f32 0.0, %v490
    %v492 = vpop.f32.mrb[0].mxu0
    %493 = vmatprep.mubr.f32.mxu0 0.0
    %494 = vmatmul.mubr.f32.gmra.mrb[0].mxu0 %v182
    %v495 = vpop.f32.mrb[0].mxu0
    %v496 = vadd.f32 0.0, %v495
    %v497 = vpop.f32.mrb[0].mxu0
    %498 = vmatprep.mubr.f32.mxu0 0.0
    %499 = vmatmul.mubr.f32.gmra.mrb[0].mxu0 %v185
    %v500 = vpop.f32.mrb[0].mxu0
    %v501 = vadd.f32 0.0, %v500
    %v502 = vpop.f32.mrb[0].mxu0
    %503 = vmatprep.mubr.f32.mxu0 0.0
    %504 = vmatmul.mubr.f32.gmra.mrb[0].mxu0 %v188
    %v505 = vpop.f32.mrb[0].mxu0
    %v506 = vadd.f32 0.0, %v505
    %v507 = vpop.f32.mrb[0].mxu0
    %508 = vmatprep.mubr.f32.mxu0 0.0
    %509 = vmatmul.mubr.f32.gmra.mrb[0].mxu0 %v191
    %v510 = vpop.f32.mrb[0].mxu0
    %v511 = vadd.f32 0.0, %v510
    %v512 = vpop.f32.mrb[0].mxu0
    %513 = vmatprep.mubr.f32.mxu0 0.0
    %514 = vmatmul.mubr.f32.gmra.mrb[0].mxu0 %v194
    %v515 = vpop.f32.mrb[0].mxu0
    %v516 = vadd.f32 0.0, %v515
    %v517 = vpop.f32.mrb[0].mxu0
    %518 = vmatprep.mubr.f32.mxu0 0.0
    %519 = vmatmul.mubr.f32.gmra.mrb[0].mxu0 %v197
    %v520 = vpop.f32.mrb[0].mxu0
    %v521 = vadd.f32 0.0, %v520
    %v522 = vpop.f32.mrb[0].mxu0
    %523 = vmatprep.mubr.f32.mxu0 0.0
    %524 = vmatmul.mubr.f32.gmra.mrb[0].mxu0 %v200
    %v525 = vpop.f32.mrb[0].mxu0
    %v526 = vadd.f32 0.0, %v525
    %v527 = vpop.f32.mrb[0].mxu0
    %528 = vmatprep.mubr.f32.mxu0 0.0
    %529 = vmatmul.mubr.f32.gmra.mrb[0].mxu0 %v203
    %v530 = vpop.f32.mrb[0].mxu0
    %v531 = vadd.f32 0.0, %v530
    %v532 = vpop.f32.mrb[0].mxu0
    %533 = vmatprep.mubr.f32.mxu0 0.0
    %534 = vmatmul.mubr.f32.gmra.mrb[0].mxu0 %v206
    %v535 = vpop.f32.mrb[0].mxu0
    %v536 = vadd.f32 0.0, %v535
    %v537 = vpop.f32.mrb[0].mxu0
    %538 = vmatprep.mubr.f32.mxu0 0.0
    %539 = vmatmul.mubr.f32.gmra.mrb[0].mxu0 %v209
    %v540 = vpop.f32.mrb[0].mxu0
    %v541 = vadd.f32 0.0, %v540
    %v542 = vpop.f32.mrb[0].mxu0
    %543 = vmatprep.mubr.f32.mxu0 0.0
    %544 = vmatmul.mubr.f32.gmra.mrb[0].mxu0 %v212
    %v545 = vpop.f32.mrb[0].mxu0
    %v546 = vadd.f32 0.0, %v545
    %v547 = vpop.f32.mrb[0].mxu0
    %548 = vmatprep.mubr.f32.mxu0 0.0
    %549 = vmatmul.mubr.f32.gmra.mrb[0].mxu0 %v215
    %v550 = vpop.f32.mrb[0].mxu0
    %v551 = vadd.f32 0.0, %v550
    %v552 = vpop.f32.mrb[0].mxu0
    %553 = vmatprep.mubr.f32.mxu0 0.0
    %554 = vmatmul.mubr.f32.gmra.mrb[0].mxu0 %v218
    %v555 = vpop.f32.mrb[0].mxu0
    %v556 = vadd.f32 0.0, %v555
    %v557 = vpop.f32.mrb[0].mxu0
    %558 = vmatprep.mubr.f32.mxu0 0.0
    %559 = vmatmul.mubr.f32.gmra.mrb[0].mxu0 %v221
    %v560 = vpop.f32.mrb[0].mxu0
    %v561 = vadd.f32 0.0, %v560
    %v562 = vpop.f32.mrb[0].mxu0
    %563 = vmatprep.mubr.f32.mxu0 0.0
    %564 = vmatmul.mubr.f32.gmra.mrb[0].mxu0 %v224
    %v565 = vpop.f32.mrb[0].mxu0
    %v566 = vadd.f32 0.0, %v565
    %v567 = vpop.f32.mrb[0].mxu0
    %568 = vmatprep.mubr.f32.mxu0 0.0
    %569 = vmatmul.mubr.f32.gmra.mrb[0].mxu0 %v227
    %v570 = vpop.f32.mrb[0].mxu0
    %v571 = vadd.f32 0.0, %v570
    %v572 = vpop.f32.mrb[0].mxu0
    %573 = vmatprep.mubr.f32.mxu0 0.0
    %574 = vmatmul.mubr.f32.gmra.mrb[0].mxu0 %v230
    %v575 = vpop.f32.mrb[0].mxu0
    %v576 = vadd.f32 0.0, %v575
    %v577 = vpop.f32.mrb[0].mxu0
    %578 = vmatprep.mubr.f32.mxu0 0.0
    %579 = vmatmul.mubr.f32.gmra.mrb[0].mxu0 %v233
    %v580 = vpop.f32.mrb[0].mxu0
    %v581 = vadd.f32 0.0, %v580
    %v582 = vpop.f32.mrb[0].mxu0
    %583 = vmatprep.mubr.f32.mxu0 0.0
    %584 = vmatmul.mubr.f32.gmra.mrb[0].mxu0 %v236
    %v585 = vpop.f32.mrb[0].mxu0
    %v586 = vadd.f32 0.0, %v585
    %v587 = vpop.f32.mrb[0].mxu0
    %588 = vmatprep.mubr.f32.mxu0 0.0
    %589 = vmatmul.mubr.f32.gmra.mrb[0].mxu0 %v239
    %v590 = vpop.f32.mrb[0].mxu0
    %v591 = vadd.f32 0.0, %v590
    %v592 = vpop.f32.mrb[0].mxu0
    %593 = vmatprep.mubr.f32.mxu0 0.0
    %594 = vmatmul.mubr.f32.gmra.mrb[0].mxu0 %v242
    %v595 = vpop.f32.mrb[0].mxu0
    %v596 = vadd.f32 0.0, %v595
    %v597 = vpop.f32.mrb[0].mxu0
    %598 = vmatprep.mubr.f32.mxu0 0.0
    %599 = vmatmul.mubr.f32.gmra.mrb[0].mxu0 %v245
    %v600 = vpop.f32.mrb[0].mxu0
    %v601 = vadd.f32 0.0, %v600
    %v602 = vpop.f32.mrb[0].mxu0
    %603 = vmatprep.mubr.f32.mxu0 0.0
    %604 = vmatmul.mubr.f32.gmra.mrb[0].mxu0 %v248
    %v605 = vpop.f32.mrb[0].mxu0
    %v606 = vadd.f32 0.0, %v605
    %v607 = vpop.f32.mrb[0].mxu0
    %608 = vmatprep.mubr.f32.mxu0 0.0
    %609 = vmatmul.mubr.f32.gmra.mrb[0].mxu0 %v251
    %v610 = vpop.f32.mrb[0].mxu0
    %v611 = vadd.f32 0.0, %v610
    %v612 = vpop.f32.mrb[0].mxu0
    %613 = vmatprep.mubr.f32.mxu0 0.0
    %614 = vmatmul.mubr.f32.gmra.mrb[0].mxu0 %v254
    %v615 = vpop.f32.mrb[0].mxu0
    %v616 = vadd.f32 0.0, %v615
    %v617 = vpop.f32.mrb[0].mxu0
    %618 = vmatprep.mubr.f32.mxu0 0.0
    %619 = vmatmul.mubr.f32.gmra.mrb[0].mxu0 %v257
    %v620 = vpop.f32.mrb[0].mxu0
    %v621 = vadd.f32 0.0, %v620
    %v622 = vpop.f32.mrb[0].mxu0
    %623 = vmatprep.mubr.f32.mxu0 0.0
    %624 = vmatmul.mubr.f32.gmra.mrb[0].mxu0 %v260
    %v625 = vpop.f32.mrb[0].mxu0
    %v626 = vadd.f32 0.0, %v625
    %v627 = vpop.f32.mrb[0].mxu0
    %628 = vmatprep.mubr.f32.mxu0 0.0
    %629 = vmatmul.mubr.f32.gmra.mrb[0].mxu0 %v263
    %v630 = vpop.f32.mrb[0].mxu0
    %v631 = vadd.f32 0.0, %v630
    %v632 = vpop.f32.mrb[0].mxu0
    %633 = vmatprep.mubr.f32.mxu0 0.0
    %634 = vmatmul.mubr.f32.gmra.mrb[0].mxu0 %v266
    %v635 = vpop.f32.mrb[0].mxu0
    %v636 = vadd.f32 0.0, %v635
    %v637 = vpop.f32.mrb[0].mxu0
    %638 = vmatprep.mubr.f32.mxu0 0.0
    %639 = vmatmul.mubr.f32.gmra.mrb[0].mxu0 %v269
    %v640 = vpop.f32.mrb[0].mxu0
    %v641 = vadd.f32 0.0, %v640
    %v642 = vpop.f32.mrb[0].mxu0
    %643 = vmatprep.mubr.f32.mxu0 0.0
    %644 = vmatmul.mubr.f32.gmra.mrb[0].mxu0 %v272
    %v645 = vpop.f32.mrb[0].mxu0
    %v646 = vadd.f32 0.0, %v645
    %v647 = vpop.f32.mrb[0].mxu0
    %648 = vmatprep.mubr.f32.mxu0 0.0
    %649 = vmatmul.mubr.f32.gmra.mrb[0].mxu0 %v275
    %v650 = vpop.f32.mrb[0].mxu0
    %v651 = vadd.f32 0.0, %v650
    %v652 = vpop.f32.mrb[0].mxu0
    %653 = vmatprep.mubr.f32.mxu0 0.0
    %654 = vmatmul.mubr.f32.gmra.mrb[0].mxu0 %v278
    %v655 = vpop.f32.mrb[0].mxu0
    %v656 = vadd.f32 0.0, %v655
    %v657 = vpop.f32.mrb[0].mxu0
    %658 = vmatprep.mubr.f32.mxu0 0.0
    %659 = vmatmul.mubr.f32.gmra.mrb[0].mxu0 %v281
    %v660 = vpop.f32.mrb[0].mxu0
    %v661 = vadd.f32 0.0, %v660
    %v662 = vpop.f32.mrb[0].mxu0
    %663 = vmatprep.mubr.f32.mxu0 0.0
    %664 = vmatmul.mubr.f32.gmra.mrb[0].mxu0 %v284
    %v665 = vpop.f32.mrb[0].mxu0
    %v666 = vadd.f32 0.0, %v665
    %v667 = vpop.f32.mrb[0].mxu0
    %668 = vmatprep.mubr.f32.mxu0 0.0
    %669 = vmatmul.mubr.f32.gmra.mrb[0].mxu0 %v287
    %v670 = vpop.f32.mrb[0].mxu0
    %v671 = vadd.f32 0.0, %v670
    %v672 = vpop.f32.mrb[0].mxu0
    %673 = vmatprep.mubr.f32.mxu0 0.0
    %674 = vmatmul.mubr.f32.gmra.mrb[0].mxu0 %v290
    %v675 = vpop.f32.mrb[0].mxu0
    %v676 = vadd.f32 0.0, %v675
    %v677 = vpop.f32.mrb[0].mxu0
    %678 = vmatprep.mubr.f32.mxu0 0.0
    %679 = vmatmul.mubr.f32.gmra.mrb[0].mxu0 %v293
    %v680 = vpop.f32.mrb[0].mxu0
    %v681 = vadd.f32 0.0, %v680
    %v682 = vpop.f32.mrb[0].mxu0
    %683 = vdwg.mxu0
    %vm684 = vcmask 64512
    %v685 = vsel %vm684, %v366, 0.0
    %v686 = vsel %vm684, %v371, 0.0
    %v687 = vadd.f32 %v685, %v686
    %v688 = vsel %vm684, %v376, 0.0
    %v689 = vadd.f32 %v687, %v688
    %v690 = vsel %vm684, %v381, 0.0
    %v691 = vadd.f32 %v689, %v690
    %v692 = vsel %vm684, %v386, 0.0
    %v693 = vadd.f32 %v691, %v692
    %v694 = vsel %vm684, %v391, 0.0
    %v695 = vadd.f32 %v693, %v694
    %v696 = vsel %vm684, %v396, 0.0
    %v697 = vadd.f32 %v695, %v696
    %v698 = vsel %vm684, %v401, 0.0
    %v699 = vadd.f32 %v697, %v698
    %v700 = vsel %vm684, %v406, 0.0
    %v701 = vadd.f32 %v699, %v700
    %v702 = vsel %vm684, %v411, 0.0
    %v703 = vadd.f32 %v701, %v702
    %v704 = vsel %vm684, %v416, 0.0
    %v705 = vadd.f32 %v703, %v704
    %v706 = vsel %vm684, %v421, 0.0
    %v707 = vadd.f32 %v705, %v706
    %v708 = vsel %vm684, %v426, 0.0
    %v709 = vadd.f32 %v707, %v708
    %v710 = vsel %vm684, %v431, 0.0
    %v711 = vadd.f32 %v709, %v710
    %v712 = vsel %vm684, %v436, 0.0
    %v713 = vadd.f32 %v711, %v712
    %v714 = vsel %vm684, %v441, 0.0
    %v715 = vadd.f32 %v713, %v714
    %v716 = vsel %vm684, %v446, 0.0
    %v717 = vadd.f32 %v715, %v716
    %v718 = vsel %vm684, %v451, 0.0
    %v719 = vadd.f32 %v717, %v718
    %v720 = vsel %vm684, %v456, 0.0
    %v721 = vadd.f32 %v719, %v720
    %v722 = vsel %vm684, %v461, 0.0
    %v723 = vadd.f32 %v721, %v722
    %v724 = vsel %vm684, %v466, 0.0
    %v725 = vadd.f32 %v723, %v724
    %v726 = vsel %vm684, %v471, 0.0
    %v727 = vadd.f32 %v725, %v726
    %v728 = vsel %vm684, %v476, 0.0
    %v729 = vadd.f32 %v727, %v728
    %v730 = vsel %vm684, %v481, 0.0
    %v731 = vadd.f32 %v729, %v730
    %v732 = vsel %vm684, %v486, 0.0
    %v733 = vadd.f32 %v731, %v732
    %v734 = vsel %vm684, %v491, 0.0
    %v735 = vadd.f32 %v733, %v734
    %v736 = vsel %vm684, %v496, 0.0
    %v737 = vadd.f32 %v735, %v736
    %v738 = vsel %vm684, %v501, 0.0
    %v739 = vadd.f32 %v737, %v738
    %v740 = vsel %vm684, %v506, 0.0
    %v741 = vadd.f32 %v739, %v740
    %v742 = vsel %vm684, %v511, 0.0
    %v743 = vadd.f32 %v741, %v742
    %v744 = vsel %vm684, %v516, 0.0
    %v745 = vadd.f32 %v743, %v744
    %v746 = vsel %vm684, %v521, 0.0
    %v747 = vadd.f32 %v745, %v746
    %v748 = vsel %vm684, %v526, 0.0
    %v749 = vadd.f32 %v747, %v748
    %v750 = vsel %vm684, %v531, 0.0
    %v751 = vadd.f32 %v749, %v750
    %v752 = vsel %vm684, %v536, 0.0
    %v753 = vadd.f32 %v751, %v752
    %v754 = vsel %vm684, %v541, 0.0
    %v755 = vadd.f32 %v753, %v754
    %v756 = vsel %vm684, %v546, 0.0
    %v757 = vadd.f32 %v755, %v756
    %v758 = vsel %vm684, %v551, 0.0
    %v759 = vadd.f32 %v757, %v758
    %v760 = vsel %vm684, %v556, 0.0
    %v761 = vadd.f32 %v759, %v760
    %v762 = vsel %vm684, %v561, 0.0
    %v763 = vadd.f32 %v761, %v762
    %v764 = vsel %vm684, %v566, 0.0
    %v765 = vadd.f32 %v763, %v764
    %v766 = vsel %vm684, %v571, 0.0
    %v767 = vadd.f32 %v765, %v766
    %v768 = vsel %vm684, %v576, 0.0
    %v769 = vadd.f32 %v767, %v768
    %v770 = vsel %vm684, %v581, 0.0
    %v771 = vadd.f32 %v769, %v770
    %v772 = vsel %vm684, %v586, 0.0
    %v773 = vadd.f32 %v771, %v772
    %v774 = vsel %vm684, %v591, 0.0
    %v775 = vadd.f32 %v773, %v774
    %v776 = vsel %vm684, %v596, 0.0
    %v777 = vadd.f32 %v775, %v776
    %v778 = vsel %vm684, %v601, 0.0
    %v779 = vadd.f32 %v777, %v778
    %v780 = vsel %vm684, %v606, 0.0
    %v781 = vadd.f32 %v779, %v780
    %v782 = vsel %vm684, %v611, 0.0
    %v783 = vadd.f32 %v781, %v782
    %v784 = vsel %vm684, %v616, 0.0
    %v785 = vadd.f32 %v783, %v784
    %v786 = vsel %vm684, %v621, 0.0
    %v787 = vadd.f32 %v785, %v786
    %v788 = vsel %vm684, %v626, 0.0
    %v789 = vadd.f32 %v787, %v788
    %v790 = vsel %vm684, %v631, 0.0
    %v791 = vadd.f32 %v789, %v790
    %v792 = vsel %vm684, %v636, 0.0
    %v793 = vadd.f32 %v791, %v792
    %v794 = vsel %vm684, %v641, 0.0
    %v795 = vadd.f32 %v793, %v794
    %v796 = vsel %vm684, %v646, 0.0
    %v797 = vadd.f32 %v795, %v796
    %v798 = vsel %vm684, %v651, 0.0
    %v799 = vadd.f32 %v797, %v798
    %v800 = vsel %vm684, %v656, 0.0
    %v801 = vadd.f32 %v799, %v800
    %v802 = vsel %vm684, %v661, 0.0
    %v803 = vadd.f32 %v801, %v802
    %v804 = vsel %vm684, %v666, 0.0
    %v805 = vadd.f32 %v803, %v804
    %v806 = vsel %vm684, %v671, 0.0
    %v807 = vadd.f32 %v805, %v806
    %v808 = vsel %vm684, %v676, 0.0
    %v809 = vadd.f32 %v807, %v808
    %v810 = vsel %vm684, %v681, 0.0
    %v811 = vadd.f32 %v809, %v810
    %v812 = vrot.slane %v811, 4
    %v813 = vadd.f32 %v811, %v812
    %v814 = vrot.slane %v813, 2
    %v815 = vadd.f32 %v813, %v814
    %v816 = vrot.slane %v815, 1
    %v817 = vadd.f32 %v815, %v816
    %v818 = vrcp.pop 512.0
    %v819 = vmul.f32 %v817, %v818
    %v820 = vmul.f32 %v366, %v366
    %v821 = vmul.f32 %v371, %v371
    %v822 = vmul.f32 %v376, %v376
    %v823 = vmul.f32 %v381, %v381
    %v824 = vmul.f32 %v386, %v386
    %v825 = vmul.f32 %v391, %v391
    %v826 = vmul.f32 %v396, %v396
    %v827 = vmul.f32 %v401, %v401
    %v828 = vmul.f32 %v406, %v406
    %v829 = vmul.f32 %v411, %v411
    %v830 = vmul.f32 %v416, %v416
    %v831 = vmul.f32 %v421, %v421
    %v832 = vmul.f32 %v426, %v426
    %v833 = vmul.f32 %v431, %v431
    %v834 = vmul.f32 %v436, %v436
    %v835 = vmul.f32 %v441, %v441
    %v836 = vmul.f32 %v446, %v446
    %v837 = vmul.f32 %v451, %v451
    %v838 = vmul.f32 %v456, %v456
    %v839 = vmul.f32 %v461, %v461
    %v840 = vmul.f32 %v466, %v466
    %v841 = vmul.f32 %v471, %v471
    %v842 = vmul.f32 %v476, %v476
    %v843 = vmul.f32 %v481, %v481
    %v844 = vmul.f32 %v486, %v486
    %v845 = vmul.f32 %v491, %v491
    %v846 = vmul.f32 %v496, %v496
    %v847 = vmul.f32 %v501, %v501
    %v848 = vmul.f32 %v506, %v506
    %v849 = vmul.f32 %v511, %v511
    %v850 = vmul.f32 %v516, %v516
    %v851 = vmul.f32 %v521, %v521
    %v852 = vmul.f32 %v526, %v526
    %v853 = vmul.f32 %v531, %v531
    %v854 = vmul.f32 %v536, %v536
    %v855 = vmul.f32 %v541, %v541
    %v856 = vmul.f32 %v546, %v546
    %v857 = vmul.f32 %v551, %v551
    %v858 = vmul.f32 %v556, %v556
    %v859 = vmul.f32 %v561, %v561
    %v860 = vmul.f32 %v566, %v566
    %v861 = vmul.f32 %v571, %v571
    %v862 = vmul.f32 %v576, %v576
    %v863 = vmul.f32 %v581, %v581
    %v864 = vmul.f32 %v586, %v586
    %v865 = vmul.f32 %v591, %v591
    %v866 = vmul.f32 %v596, %v596
    %v867 = vmul.f32 %v601, %v601
    %v868 = vmul.f32 %v606, %v606
    %v869 = vmul.f32 %v611, %v611
    %v870 = vmul.f32 %v616, %v616
    %v871 = vmul.f32 %v621, %v621
    %v872 = vmul.f32 %v626, %v626
    %v873 = vmul.f32 %v631, %v631
    %v874 = vmul.f32 %v636, %v636
    %v875 = vmul.f32 %v641, %v641
    %v876 = vmul.f32 %v646, %v646
    %v877 = vmul.f32 %v651, %v651
    %v878 = vmul.f32 %v656, %v656
    %v879 = vmul.f32 %v661, %v661
    %v880 = vmul.f32 %v666, %v666
    %v881 = vmul.f32 %v671, %v671
    %v882 = vmul.f32 %v676, %v676
    %v883 = vmul.f32 %v681, %v681
    %v884 = vsel %vm684, %v820, 0.0
    %v885 = vsel %vm684, %v821, 0.0
    %v886 = vadd.f32 %v884, %v885
    %v887 = vsel %vm684, %v822, 0.0
    %v888 = vadd.f32 %v886, %v887
    %v889 = vsel %vm684, %v823, 0.0
    %v890 = vadd.f32 %v888, %v889
    %v891 = vsel %vm684, %v824, 0.0
    %v892 = vadd.f32 %v890, %v891
    %v893 = vsel %vm684, %v825, 0.0
    %v894 = vadd.f32 %v892, %v893
    %v895 = vsel %vm684, %v826, 0.0
    %v896 = vadd.f32 %v894, %v895
    %v897 = vsel %vm684, %v827, 0.0
    %v898 = vadd.f32 %v896, %v897
    %v899 = vsel %vm684, %v828, 0.0
    %v900 = vadd.f32 %v898, %v899
    %v901 = vsel %vm684, %v829, 0.0
    %v902 = vadd.f32 %v900, %v901
    %v903 = vsel %vm684, %v830, 0.0
    %v904 = vadd.f32 %v902, %v903
    %v905 = vsel %vm684, %v831, 0.0
    %v906 = vadd.f32 %v904, %v905
    %v907 = vsel %vm684, %v832, 0.0
    %v908 = vadd.f32 %v906, %v907
    %v909 = vsel %vm684, %v833, 0.0
    %v910 = vadd.f32 %v908, %v909
    %v911 = vsel %vm684, %v834, 0.0
    %v912 = vadd.f32 %v910, %v911
    %v913 = vsel %vm684, %v835, 0.0
    %v914 = vadd.f32 %v912, %v913
    %v915 = vsel %vm684, %v836, 0.0
    %v916 = vadd.f32 %v914, %v915
    %v917 = vsel %vm684, %v837, 0.0
    %v918 = vadd.f32 %v916, %v917
    %v919 = vsel %vm684, %v838, 0.0
    %v920 = vadd.f32 %v918, %v919
    %v921 = vsel %vm684, %v839, 0.0
    %v922 = vadd.f32 %v920, %v921
    %v923 = vsel %vm684, %v840, 0.0
    %v924 = vadd.f32 %v922, %v923
    %v925 = vsel %vm684, %v841, 0.0
    %v926 = vadd.f32 %v924, %v925
    %v927 = vsel %vm684, %v842, 0.0
    %v928 = vadd.f32 %v926, %v927
    %v929 = vsel %vm684, %v843, 0.0
    %v930 = vadd.f32 %v928, %v929
    %v931 = vsel %vm684, %v844, 0.0
    %v932 = vadd.f32 %v930, %v931
    %v933 = vsel %vm684, %v845, 0.0
    %v934 = vadd.f32 %v932, %v933
    %v935 = vsel %vm684, %v846, 0.0
    %v936 = vadd.f32 %v934, %v935
    %v937 = vsel %vm684, %v847, 0.0
    %v938 = vadd.f32 %v936, %v937
    %v939 = vsel %vm684, %v848, 0.0
    %v940 = vadd.f32 %v938, %v939
    %v941 = vsel %vm684, %v849, 0.0
    %v942 = vadd.f32 %v940, %v941
    %v943 = vsel %vm684, %v850, 0.0
    %v944 = vadd.f32 %v942, %v943
    %v945 = vsel %vm684, %v851, 0.0
    %v946 = vadd.f32 %v944, %v945
    %v947 = vsel %vm684, %v852, 0.0
    %v948 = vadd.f32 %v946, %v947
    %v949 = vsel %vm684, %v853, 0.0
    %v950 = vadd.f32 %v948, %v949
    %v951 = vsel %vm684, %v854, 0.0
    %v952 = vadd.f32 %v950, %v951
    %v953 = vsel %vm684, %v855, 0.0
    %v954 = vadd.f32 %v952, %v953
    %v955 = vsel %vm684, %v856, 0.0
    %v956 = vadd.f32 %v954, %v955
    %v957 = vsel %vm684, %v857, 0.0
    %v958 = vadd.f32 %v956, %v957
    %v959 = vsel %vm684, %v858, 0.0
    %v960 = vadd.f32 %v958, %v959
    %v961 = vsel %vm684, %v859, 0.0
    %v962 = vadd.f32 %v960, %v961
    %v963 = vsel %vm684, %v860, 0.0
    %v964 = vadd.f32 %v962, %v963
    %v965 = vsel %vm684, %v861, 0.0
    %v966 = vadd.f32 %v964, %v965
    %v967 = vsel %vm684, %v862, 0.0
    %v968 = vadd.f32 %v966, %v967
    %v969 = vsel %vm684, %v863, 0.0
    %v970 = vadd.f32 %v968, %v969
    %v971 = vsel %vm684, %v864, 0.0
    %v972 = vadd.f32 %v970, %v971
    %v973 = vsel %vm684, %v865, 0.0
    %v974 = vadd.f32 %v972, %v973
    %v975 = vsel %vm684, %v866, 0.0
    %v976 = vadd.f32 %v974, %v975
    %v977 = vsel %vm684, %v867, 0.0
    %v978 = vadd.f32 %v976, %v977
    %v979 = vsel %vm684, %v868, 0.0
    %v980 = vadd.f32 %v978, %v979
    %v981 = vsel %vm684, %v869, 0.0
    %v982 = vadd.f32 %v980, %v981
    %v983 = vsel %vm684, %v870, 0.0
    %v984 = vadd.f32 %v982, %v983
    %v985 = vsel %vm684, %v871, 0.0
    %v986 = vadd.f32 %v984, %v985
    %v987 = vsel %vm684, %v872, 0.0
    %v988 = vadd.f32 %v986, %v987
    %v989 = vsel %vm684, %v873, 0.0
    %v990 = vadd.f32 %v988, %v989
    %v991 = vsel %vm684, %v874, 0.0
    %v992 = vadd.f32 %v990, %v991
    %v993 = vsel %vm684, %v875, 0.0
    %v994 = vadd.f32 %v992, %v993
    %v995 = vsel %vm684, %v876, 0.0
    %v996 = vadd.f32 %v994, %v995
    %v997 = vsel %vm684, %v877, 0.0
    %v998 = vadd.f32 %v996, %v997
    %v999 = vsel %vm684, %v878, 0.0
    %v1000 = vadd.f32 %v998, %v999
    %v1001 = vsel %vm684, %v879, 0.0
    %v1002 = vadd.f32 %v1000, %v1001
    %v1003 = vsel %vm684, %v880, 0.0
    %v1004 = vadd.f32 %v1002, %v1003
    %v1005 = vsel %vm684, %v881, 0.0
    %v1006 = vadd.f32 %v1004, %v1005
    %v1007 = vsel %vm684, %v882, 0.0
    %v1008 = vadd.f32 %v1006, %v1007
    %v1009 = vsel %vm684, %v883, 0.0
    %v1010 = vadd.f32 %v1008, %v1009
    %v1011 = vrot.slane %v1010, 4
    %v1012 = vadd.f32 %v1010, %v1011
    %v1013 = vrot.slane %v1012, 2
    %v1014 = vadd.f32 %v1012, %v1013
    %v1015 = vrot.slane %v1014, 1
    %v1016 = vadd.f32 %v1014, %v1015
    %v1017 = vmul.f32 %v1016, %v818
    %v1018 = vmul.f32 %v819, %v819
    %v1019 = vsub.f32 %v1017, %v1018
    %v1020 = vld [vmem:[%s5] sm:$0x1]
    %v1021 = vadd.f32 %v1019, 1e-05
    %v1022 = vrsqrt.pop %v1021
    %v1023 = vmul.f32 %v1020, %v1022
    %v1024 = vld [vmem:[%s6] sm:$0x1]
    %v1025 = vmul.f32 %v819, %v1023
    %v1026 = vsub.f32 %v1024, %v1025
    %v1028 = vlaneseq
    %v1029 = vshrl.u32 %v1028, 7
    %v1030 = vsub.s32 0, %v1029
    %v1031 = vrot.slane %v1023, %v1030
    %v1033 = vmul.f32 %v366, %v1031
    %v1034 = vmul.f32 %v371, %v1031
    %v1035 = vmul.f32 %v376, %v1031
    %v1036 = vmul.f32 %v381, %v1031
    %v1037 = vmul.f32 %v386, %v1031
    %v1038 = vmul.f32 %v391, %v1031
    %v1039 = vmul.f32 %v396, %v1031
    %v1040 = vmul.f32 %v401, %v1031
    %v1041 = vmul.f32 %v406, %v1031
    %v1042 = vmul.f32 %v411, %v1031
    %v1043 = vmul.f32 %v416, %v1031
    %v1044 = vmul.f32 %v421, %v1031
    %v1045 = vmul.f32 %v426, %v1031
    %v1046 = vmul.f32 %v431, %v1031
    %v1047 = vmul.f32 %v436, %v1031
    %v1048 = vmul.f32 %v441, %v1031
    %v1049 = vmul.f32 %v446, %v1031
    %v1050 = vmul.f32 %v451, %v1031
    %v1051 = vmul.f32 %v456, %v1031
    %v1052 = vmul.f32 %v461, %v1031
    %v1053 = vmul.f32 %v466, %v1031
    %v1054 = vmul.f32 %v471, %v1031
    %v1055 = vmul.f32 %v476, %v1031
    %v1056 = vmul.f32 %v481, %v1031
    %v1057 = vmul.f32 %v486, %v1031
    %v1058 = vmul.f32 %v491, %v1031
    %v1059 = vmul.f32 %v496, %v1031
    %v1060 = vmul.f32 %v501, %v1031
    %v1061 = vmul.f32 %v506, %v1031
    %v1062 = vmul.f32 %v511, %v1031
    %v1063 = vmul.f32 %v516, %v1031
    %v1064 = vmul.f32 %v521, %v1031
    %v1065 = vmul.f32 %v526, %v1031
    %v1066 = vmul.f32 %v531, %v1031
    %v1067 = vmul.f32 %v536, %v1031
    %v1068 = vmul.f32 %v541, %v1031
    %v1069 = vmul.f32 %v546, %v1031
    %v1070 = vmul.f32 %v551, %v1031
    %v1071 = vmul.f32 %v556, %v1031
    %v1072 = vmul.f32 %v561, %v1031
    %v1073 = vmul.f32 %v566, %v1031
    %v1074 = vmul.f32 %v571, %v1031
    %v1075 = vmul.f32 %v576, %v1031
    %v1076 = vmul.f32 %v581, %v1031
    %v1077 = vmul.f32 %v586, %v1031
    %v1078 = vmul.f32 %v591, %v1031
    %v1079 = vmul.f32 %v596, %v1031
    %v1080 = vmul.f32 %v601, %v1031
    %v1081 = vmul.f32 %v606, %v1031
    %v1082 = vmul.f32 %v611, %v1031
    %v1083 = vmul.f32 %v616, %v1031
    %v1084 = vmul.f32 %v621, %v1031
    %v1085 = vmul.f32 %v626, %v1031
    %v1086 = vmul.f32 %v631, %v1031
    %v1087 = vmul.f32 %v636, %v1031
    %v1088 = vmul.f32 %v641, %v1031
    %v1089 = vmul.f32 %v646, %v1031
    %v1090 = vmul.f32 %v651, %v1031
    %v1091 = vmul.f32 %v656, %v1031
    %v1092 = vmul.f32 %v661, %v1031
    %v1093 = vmul.f32 %v666, %v1031
    %v1094 = vmul.f32 %v671, %v1031
    %v1095 = vmul.f32 %v676, %v1031
    %v1096 = vmul.f32 %v681, %v1031
    %v1098 = vlaneseq
    %v1099 = vshrl.u32 %v1098, 7
    %v1100 = vsub.s32 0, %v1099
    %v1101 = vrot.slane %v1026, %v1100
    %v1103 = vadd.f32 %v1033, %v1101
    %v1104 = vadd.f32 %v1034, %v1101
    %v1105 = vadd.f32 %v1035, %v1101
    %v1106 = vadd.f32 %v1036, %v1101
    %v1107 = vadd.f32 %v1037, %v1101
    %v1108 = vadd.f32 %v1038, %v1101
    %v1109 = vadd.f32 %v1039, %v1101
    %v1110 = vadd.f32 %v1040, %v1101
    %v1111 = vadd.f32 %v1041, %v1101
    %v1112 = vadd.f32 %v1042, %v1101
    %v1113 = vadd.f32 %v1043, %v1101
    %v1114 = vadd.f32 %v1044, %v1101
    %v1115 = vadd.f32 %v1045, %v1101
    %v1116 = vadd.f32 %v1046, %v1101
    %v1117 = vadd.f32 %v1047, %v1101
    %v1118 = vadd.f32 %v1048, %v1101
    %v1119 = vadd.f32 %v1049, %v1101
    %v1120 = vadd.f32 %v1050, %v1101
    %v1121 = vadd.f32 %v1051, %v1101
    %v1122 = vadd.f32 %v1052, %v1101
    %v1123 = vadd.f32 %v1053, %v1101
    %v1124 = vadd.f32 %v1054, %v1101
    %v1125 = vadd.f32 %v1055, %v1101
    %v1126 = vadd.f32 %v1056, %v1101
    %v1127 = vadd.f32 %v1057, %v1101
    %v1128 = vadd.f32 %v1058, %v1101
    %v1129 = vadd.f32 %v1059, %v1101
    %v1130 = vadd.f32 %v1060, %v1101
    %v1131 = vadd.f32 %v1061, %v1101
    %v1132 = vadd.f32 %v1062, %v1101
    %v1133 = vadd.f32 %v1063, %v1101
    %v1134 = vadd.f32 %v1064, %v1101
    %v1135 = vadd.f32 %v1065, %v1101
    %v1136 = vadd.f32 %v1066, %v1101
    %v1137 = vadd.f32 %v1067, %v1101
    %v1138 = vadd.f32 %v1068, %v1101
    %v1139 = vadd.f32 %v1069, %v1101
    %v1140 = vadd.f32 %v1070, %v1101
    %v1141 = vadd.f32 %v1071, %v1101
    %v1142 = vadd.f32 %v1072, %v1101
    %v1143 = vadd.f32 %v1073, %v1101
    %v1144 = vadd.f32 %v1074, %v1101
    %v1145 = vadd.f32 %v1075, %v1101
    %v1146 = vadd.f32 %v1076, %v1101
    %v1147 = vadd.f32 %v1077, %v1101
    %v1148 = vadd.f32 %v1078, %v1101
    %v1149 = vadd.f32 %v1079, %v1101
    %v1150 = vadd.f32 %v1080, %v1101
    %v1151 = vadd.f32 %v1081, %v1101
    %v1152 = vadd.f32 %v1082, %v1101
    %v1153 = vadd.f32 %v1083, %v1101
    %v1154 = vadd.f32 %v1084, %v1101
    %v1155 = vadd.f32 %v1085, %v1101
    %v1156 = vadd.f32 %v1086, %v1101
    %v1157 = vadd.f32 %v1087, %v1101
    %v1158 = vadd.f32 %v1088, %v1101
    %v1159 = vadd.f32 %v1089, %v1101
    %v1160 = vadd.f32 %v1090, %v1101
    %v1161 = vadd.f32 %v1091, %v1101
    %v1162 = vadd.f32 %v1092, %v1101
    %v1163 = vadd.f32 %v1093, %v1101
    %v1164 = vadd.f32 %v1094, %v1101
    %v1165 = vadd.f32 %v1095, %v1101
    %v1166 = vadd.f32 %v1096, %v1101
    %v1167 = vmax.f32 %v1103, 0.0
    %v1168 = vmax.f32 %v1104, 0.0
    %v1169 = vmax.f32 %v1105, 0.0
    %v1170 = vmax.f32 %v1106, 0.0
    %v1171 = vmax.f32 %v1107, 0.0
    %v1172 = vmax.f32 %v1108, 0.0
    %v1173 = vmax.f32 %v1109, 0.0
    %v1174 = vmax.f32 %v1110, 0.0
    %v1175 = vmax.f32 %v1111, 0.0
    %v1176 = vmax.f32 %v1112, 0.0
    %v1177 = vmax.f32 %v1113, 0.0
    %v1178 = vmax.f32 %v1114, 0.0
    %v1179 = vmax.f32 %v1115, 0.0
    %v1180 = vmax.f32 %v1116, 0.0
    %v1181 = vmax.f32 %v1117, 0.0
    %v1182 = vmax.f32 %v1118, 0.0
    %v1183 = vmax.f32 %v1119, 0.0
    %v1184 = vmax.f32 %v1120, 0.0
    %v1185 = vmax.f32 %v1121, 0.0
    %v1186 = vmax.f32 %v1122, 0.0
    %v1187 = vmax.f32 %v1123, 0.0
    %v1188 = vmax.f32 %v1124, 0.0
    %v1189 = vmax.f32 %v1125, 0.0
    %v1190 = vmax.f32 %v1126, 0.0
    %v1191 = vmax.f32 %v1127, 0.0
    %v1192 = vmax.f32 %v1128, 0.0
    %v1193 = vmax.f32 %v1129, 0.0
    %v1194 = vmax.f32 %v1130, 0.0
    %v1195 = vmax.f32 %v1131, 0.0
    %v1196 = vmax.f32 %v1132, 0.0
    %v1197 = vmax.f32 %v1133, 0.0
    %v1198 = vmax.f32 %v1134, 0.0
    %v1199 = vmax.f32 %v1135, 0.0
    %v1200 = vmax.f32 %v1136, 0.0
    %v1201 = vmax.f32 %v1137, 0.0
    %v1202 = vmax.f32 %v1138, 0.0
    %v1203 = vmax.f32 %v1139, 0.0
    %v1204 = vmax.f32 %v1140, 0.0
    %v1205 = vmax.f32 %v1141, 0.0
    %v1206 = vmax.f32 %v1142, 0.0
    %v1207 = vmax.f32 %v1143, 0.0
    %v1208 = vmax.f32 %v1144, 0.0
    %v1209 = vmax.f32 %v1145, 0.0
    %v1210 = vmax.f32 %v1146, 0.0
    %v1211 = vmax.f32 %v1147, 0.0
    %v1212 = vmax.f32 %v1148, 0.0
    %v1213 = vmax.f32 %v1149, 0.0
    %v1214 = vmax.f32 %v1150, 0.0
    %v1215 = vmax.f32 %v1151, 0.0
    %v1216 = vmax.f32 %v1152, 0.0
    %v1217 = vmax.f32 %v1153, 0.0
    %v1218 = vmax.f32 %v1154, 0.0
    %v1219 = vmax.f32 %v1155, 0.0
    %v1220 = vmax.f32 %v1156, 0.0
    %v1221 = vmax.f32 %v1157, 0.0
    %v1222 = vmax.f32 %v1158, 0.0
    %v1223 = vmax.f32 %v1159, 0.0
    %v1224 = vmax.f32 %v1160, 0.0
    %v1225 = vmax.f32 %v1161, 0.0
    %v1226 = vmax.f32 %v1162, 0.0
    %v1227 = vmax.f32 %v1163, 0.0
    %v1228 = vmax.f32 %v1164, 0.0
    %v1229 = vmax.f32 %v1165, 0.0
    %v1230 = vmax.f32 %v1166, 0.0
    %1231 = vst.msk [vmem:[#allocation2] sm:$0xff] %vm684, 0.0
    %1232 = vst.msk [vmem:[#allocation2 + $0x8] sm:$0xff] %vm684, 0.0
    %vm1233 = vcmask 58368
    %1234 = vst.msk [vmem:[#allocation2 + $0x10] sm:$0x3] %vm1233, 0.0
    %1235 = vst.msk [vmem:[#allocation2 + $0x1b0] sm:$0xff] %vm684, 0.0
    %1236 = vst.msk [vmem:[#allocation2 + $0x1b8] sm:$0xff] %vm684, 0.0
    %1237 = vst.msk [vmem:[#allocation2 + $0x1c0] sm:$0x3] %vm1233, 0.0
    %s1238 = scalar_lea.vmem [#allocation2], 408
    %1239 = vst.msk [vmem:[%s1238] sm:$0xff] %vm684, 0.0
    %1240 = vst.msk [vmem:[%s1238 + $0x8] sm:$0xff] %vm684, 0.0
    %1241 = vst.msk [vmem:[%s1238 + $0x10] sm:$0x3] %vm1233, 0.0
    %1242 = vst.msk [vmem:[%s1238 + $0x1b0] sm:$0xff] %vm684, 0.0
    %1243 = vst.msk [vmem:[%s1238 + $0x1b8] sm:$0xff] %vm684, 0.0
    %1244 = vst.msk [vmem:[%s1238 + $0x1c0] sm:$0x3] %vm1233, 0.0
    %vm1245 = vcmask 57344
    %1246 = vst.msk [vmem:[#allocation2] sm:$0x1] %vm1245, 0.0
    %1247 = vst.msk [vmem:[#allocation2 + $0x18] sm:$0x1] %vm1245, 0.0
    %1248 = vst.msk [vmem:[#allocation2 + $0x30] sm:$0x1] %vm1245, 0.0
    %1249 = vst.msk [vmem:[#allocation2 + $0x48] sm:$0x1] %vm1245, 0.0
    %1250 = vst.msk [vmem:[#allocation2 + $0x60] sm:$0x1] %vm1245, 0.0
    %1251 = vst.msk [vmem:[#allocation2 + $0x78] sm:$0x1] %vm1245, 0.0
    %1252 = vst.msk [vmem:[#allocation2 + $0x90] sm:$0x1] %vm1245, 0.0
    %1253 = vst.msk [vmem:[#allocation2 + $0xa8] sm:$0x1] %vm1245, 0.0
    %1254 = vst.msk [vmem:[#allocation2 + $0xc0] sm:$0x1] %vm1245, 0.0
    %1255 = vst.msk [vmem:[#allocation2 + $0xd8] sm:$0x1] %vm1245, 0.0
    %1256 = vst.msk [vmem:[#allocation2 + $0xf0] sm:$0x1] %vm1245, 0.0
    %1257 = vst.msk [vmem:[#allocation2 + $0x108] sm:$0x1] %vm1245, 0.0
    %1258 = vst.msk [vmem:[#allocation2 + $0x120] sm:$0x1] %vm1245, 0.0
    %1259 = vst.msk [vmem:[#allocation2 + $0x138] sm:$0x1] %vm1245, 0.0
    %1260 = vst.msk [vmem:[#allocation2 + $0x150] sm:$0x1] %vm1245, 0.0
    %1261 = vst.msk [vmem:[#allocation2 + $0x168] sm:$0x1] %vm1245, 0.0
    %1262 = vst.msk [vmem:[#allocation2 + $0x180] sm:$0x1] %vm1245, 0.0
    %1263 = vst.msk [vmem:[#allocation2 + $0x198] sm:$0x1] %vm1245, 0.0
    %1264 = vst.msk [vmem:[#allocation2 + $0x1b0] sm:$0x1] %vm1245, 0.0
    %1265 = vst.msk [vmem:[#allocation2 + $0x1c8] sm:$0x1] %vm1245, 0.0
    %1266 = vst.msk [vmem:[#allocation2 + $0x1e0] sm:$0x1] %vm1245, 0.0
    %1267 = vst.msk [vmem:[#allocation2 + $0x1f8] sm:$0x1] %vm1245, 0.0
    %1268 = vst.msk [vmem:[#allocation2 + $0x210] sm:$0x1] %vm1245, 0.0
    %1269 = vst.msk [vmem:[#allocation2 + $0x228] sm:$0x1] %vm1245, 0.0
    %1270 = vst.msk [vmem:[#allocation2 + $0x240] sm:$0x1] %vm1245, 0.0
    %1271 = vst.msk [vmem:[#allocation2 + $0x258] sm:$0x1] %vm1245, 0.0
    %1272 = vst.msk [vmem:[#allocation2 + $0x270] sm:$0x1] %vm1245, 0.0
    %1273 = vst.msk [vmem:[#allocation2 + $0x288] sm:$0x1] %vm1245, 0.0
    %1274 = vst.msk [vmem:[#allocation2 + $0x2a0] sm:$0x1] %vm1245, 0.0
    %1275 = vst.msk [vmem:[#allocation2 + $0x2b8] sm:$0x1] %vm1245, 0.0
    %1276 = vst.msk [vmem:[#allocation2 + $0x2d0] sm:$0x1] %vm1245, 0.0
    %1277 = vst.msk [vmem:[#allocation2 + $0x2e8] sm:$0x1] %vm1245, 0.0
    %1278 = vst.msk [vmem:[#allocation2 + $0x300] sm:$0x1] %vm1245, 0.0
    %1279 = vst.msk [vmem:[#allocation2 + $0x318] sm:$0x1] %vm1245, 0.0
    %1280 = vst.msk [vmem:[#allocation2 + $0x330] sm:$0x1] %vm1245, 0.0
    %1281 = vst.msk [vmem:[#allocation2 + $0x348] sm:$0x1] %vm1245, 0.0
    %1282 = vst.msk [vmem:[#allocation2 + $0x11] sm:$0x1] %vm1245, 0.0
    %1283 = vst.msk [vmem:[#allocation2 + $0x29] sm:$0x1] %vm1245, 0.0
    %1284 = vst.msk [vmem:[#allocation2 + $0x41] sm:$0x1] %vm1245, 0.0
    %1285 = vst.msk [vmem:[#allocation2 + $0x59] sm:$0x1] %vm1245, 0.0
    %1286 = vst.msk [vmem:[#allocation2 + $0x71] sm:$0x1] %vm1245, 0.0
    %1287 = vst.msk [vmem:[#allocation2 + $0x89] sm:$0x1] %vm1245, 0.0
    %1288 = vst.msk [vmem:[#allocation2 + $0xa1] sm:$0x1] %vm1245, 0.0
    %1289 = vst.msk [vmem:[#allocation2 + $0xb9] sm:$0x1] %vm1245, 0.0
    %1290 = vst.msk [vmem:[#allocation2 + $0xd1] sm:$0x1] %vm1245, 0.0
    %1291 = vst.msk [vmem:[#allocation2 + $0xe9] sm:$0x1] %vm1245, 0.0
    %1292 = vst.msk [vmem:[#allocation2 + $0x101] sm:$0x1] %vm1245, 0.0
    %1293 = vst.msk [vmem:[#allocation2 + $0x119] sm:$0x1] %vm1245, 0.0
    %1294 = vst.msk [vmem:[#allocation2 + $0x131] sm:$0x1] %vm1245, 0.0
    %1295 = vst.msk [vmem:[#allocation2 + $0x149] sm:$0x1] %vm1245, 0.0
    %1296 = vst.msk [vmem:[#allocation2 + $0x161] sm:$0x1] %vm1245, 0.0
    %1297 = vst.msk [vmem:[#allocation2 + $0x179] sm:$0x1] %vm1245, 0.0
    %1298 = vst.msk [vmem:[#allocation2 + $0x191] sm:$0x1] %vm1245, 0.0
    %1299 = vst.msk [vmem:[#allocation2 + $0x1a9] sm:$0x1] %vm1245, 0.0
    %1300 = vst.msk [vmem:[#allocation2 + $0x1c1] sm:$0x1] %vm1245, 0.0
    %1301 = vst.msk [vmem:[#allocation2 + $0x1d9] sm:$0x1] %vm1245, 0.0
    %1302 = vst.msk [vmem:[#allocation2 + $0x1f1] sm:$0x1] %vm1245, 0.0
    %1303 = vst.msk [vmem:[#allocation2 + $0x209] sm:$0x1] %vm1245, 0.0
    %1304 = vst.msk [vmem:[#allocation2 + $0x221] sm:$0x1] %vm1245, 0.0
    %1305 = vst.msk [vmem:[#allocation2 + $0x239] sm:$0x1] %vm1245, 0.0
    %1306 = vst.msk [vmem:[#allocation2 + $0x251] sm:$0x1] %vm1245, 0.0
    %1307 = vst.msk [vmem:[#allocation2 + $0x269] sm:$0x1] %vm1245, 0.0
    %1308 = vst.msk [vmem:[#allocation2 + $0x281] sm:$0x1] %vm1245, 0.0
    %1309 = vst.msk [vmem:[#allocation2 + $0x299] sm:$0x1] %vm1245, 0.0
    %1310 = vst.msk [vmem:[#allocation2 + $0x2b1] sm:$0x1] %vm1245, 0.0
    %1311 = vst.msk [vmem:[#allocation2 + $0x2c9] sm:$0x1] %vm1245, 0.0
    %1312 = vst.msk [vmem:[#allocation2 + $0x2e1] sm:$0x1] %vm1245, 0.0
    %1313 = vst.msk [vmem:[#allocation2 + $0x2f9] sm:$0x1] %vm1245, 0.0
    %1314 = vst.msk [vmem:[#allocation2 + $0x311] sm:$0x1] %vm1245, 0.0
    %1315 = vst.msk [vmem:[#allocation2 + $0x329] sm:$0x1] %vm1245, 0.0
    %1316 = vst.msk [vmem:[#allocation2 + $0x341] sm:$0x1] %vm1245, 0.0
    %1317 = vst.msk [vmem:[#allocation2 + $0x359] sm:$0x1] %vm1245, 0.0
    %s1318 = scalar_lea.vmem [#allocation2], 24
    %1319 = vst.msk [vmem:[%s1318 + $0x1] sm:$0xff] %vm684, %v1167
    %1320 = vst.msk [vmem:[%s1318 + $0x9] sm:$0xff] %vm684, %v1168
    %1321 = vst.msk [vmem:[%s1318 + $0x19] sm:$0xff] %vm684, %v1169
    %1322 = vst.msk [vmem:[%s1318 + $0x21] sm:$0xff] %vm684, %v1170
    %1323 = vst.msk [vmem:[%s1318 + $0x31] sm:$0xff] %vm684, %v1171
    %1324 = vst.msk [vmem:[%s1318 + $0x39] sm:$0xff] %vm684, %v1172
    %1325 = vst.msk [vmem:[%s1318 + $0x49] sm:$0xff] %vm684, %v1173
    %1326 = vst.msk [vmem:[%s1318 + $0x51] sm:$0xff] %vm684, %v1174
    %1327 = vst.msk [vmem:[%s1318 + $0x61] sm:$0xff] %vm684, %v1175
    %1328 = vst.msk [vmem:[%s1318 + $0x69] sm:$0xff] %vm684, %v1176
    %1329 = vst.msk [vmem:[%s1318 + $0x79] sm:$0xff] %vm684, %v1177
    %1330 = vst.msk [vmem:[%s1318 + $0x81] sm:$0xff] %vm684, %v1178
    %1331 = vst.msk [vmem:[%s1318 + $0x91] sm:$0xff] %vm684, %v1179
    %1332 = vst.msk [vmem:[%s1318 + $0x99] sm:$0xff] %vm684, %v1180
    %1333 = vst.msk [vmem:[%s1318 + $0xa9] sm:$0xff] %vm684, %v1181
    %1334 = vst.msk [vmem:[%s1318 + $0xb1] sm:$0xff] %vm684, %v1182
    %1335 = vst.msk [vmem:[%s1318 + $0xc1] sm:$0xff] %vm684, %v1183
    %1336 = vst.msk [vmem:[%s1318 + $0xc9] sm:$0xff] %vm684, %v1184
    %1337 = vst.msk [vmem:[%s1318 + $0xd9] sm:$0xff] %vm684, %v1185
    %1338 = vst.msk [vmem:[%s1318 + $0xe1] sm:$0xff] %vm684, %v1186
    %1339 = vst.msk [vmem:[%s1318 + $0xf1] sm:$0xff] %vm684, %v1187
    %1340 = vst.msk [vmem:[%s1318 + $0xf9] sm:$0xff] %vm684, %v1188
    %1341 = vst.msk [vmem:[%s1318 + $0x109] sm:$0xff] %vm684, %v1189
    %1342 = vst.msk [vmem:[%s1318 + $0x111] sm:$0xff] %vm684, %v1190
    %1343 = vst.msk [vmem:[%s1318 + $0x121] sm:$0xff] %vm684, %v1191
    %1344 = vst.msk [vmem:[%s1318 + $0x129] sm:$0xff] %vm684, %v1192
    %1345 = vst.msk [vmem:[%s1318 + $0x139] sm:$0xff] %vm684, %v1193
    %1346 = vst.msk [vmem:[%s1318 + $0x141] sm:$0xff] %vm684, %v1194
    %1347 = vst.msk [vmem:[%s1318 + $0x151] sm:$0xff] %vm684, %v1195
    %1348 = vst.msk [vmem:[%s1318 + $0x159] sm:$0xff] %vm684, %v1196
    %1349 = vst.msk [vmem:[%s1318 + $0x169] sm:$0xff] %vm684, %v1197
    %1350 = vst.msk [vmem:[%s1318 + $0x171] sm:$0xff] %vm684, %v1198
    %1351 = vst.msk [vmem:[%s1318 + $0x1b1] sm:$0xff] %vm684, %v1199
    %1352 = vst.msk [vmem:[%s1318 + $0x1b9] sm:$0xff] %vm684, %v1200
    %1353 = vst.msk [vmem:[%s1318 + $0x1c9] sm:$0xff] %vm684, %v1201
    %1354 = vst.msk [vmem:[%s1318 + $0x1d1] sm:$0xff] %vm684, %v1202
    %1355 = vst.msk [vmem:[%s1318 + $0x1e1] sm:$0xff] %vm684, %v1203
    %1356 = vst.msk [vmem:[%s1318 + $0x1e9] sm:$0xff] %vm684, %v1204
    %1357 = vst.msk [vmem:[%s1318 + $0x1f9] sm:$0xff] %vm684, %v1205
    %1358 = vst.msk [vmem:[%s1318 + $0x201] sm:$0xff] %vm684, %v1206
    %1359 = vst.msk [vmem:[%s1318 + $0x211] sm:$0xff] %vm684, %v1207
    %1360 = vst.msk [vmem:[%s1318 + $0x219] sm:$0xff] %vm684, %v1208
    %1361 = vst.msk [vmem:[%s1318 + $0x229] sm:$0xff] %vm684, %v1209
    %1362 = vst.msk [vmem:[%s1318 + $0x231] sm:$0xff] %vm684, %v1210
    %1363 = vst.msk [vmem:[%s1318 + $0x241] sm:$0xff] %vm684, %v1211
    %1364 = vst.msk [vmem:[%s1318 + $0x249] sm:$0xff] %vm684, %v1212
    %1365 = vst.msk [vmem:[%s1318 + $0x259] sm:$0xff] %vm684, %v1213
    %1366 = vst.msk [vmem:[%s1318 + $0x261] sm:$0xff] %vm684, %v1214
    %1367 = vst.msk [vmem:[%s1318 + $0x271] sm:$0xff] %vm684, %v1215
    %1368 = vst.msk [vmem:[%s1318 + $0x279] sm:$0xff] %vm684, %v1216
    %1369 = vst.msk [vmem:[%s1318 + $0x289] sm:$0xff] %vm684, %v1217
    %1370 = vst.msk [vmem:[%s1318 + $0x291] sm:$0xff] %vm684, %v1218
    %1371 = vst.msk [vmem:[%s1318 + $0x2a1] sm:$0xff] %vm684, %v1219
    %1372 = vst.msk [vmem:[%s1318 + $0x2a9] sm:$0xff] %vm684, %v1220
    %1373 = vst.msk [vmem:[%s1318 + $0x2b9] sm:$0xff] %vm684, %v1221
    %1374 = vst.msk [vmem:[%s1318 + $0x2c1] sm:$0xff] %vm684, %v1222
    %1375 = vst.msk [vmem:[%s1318 + $0x2d1] sm:$0xff] %vm684, %v1223
    %1376 = vst.msk [vmem:[%s1318 + $0x2d9] sm:$0xff] %vm684, %v1224
    %1377 = vst.msk [vmem:[%s1318 + $0x2e9] sm:$0xff] %vm684, %v1225
    %1378 = vst.msk [vmem:[%s1318 + $0x2f1] sm:$0xff] %vm684, %v1226
    %1379 = vst.msk [vmem:[%s1318 + $0x301] sm:$0xff] %vm684, %v1227
    %1380 = vst.msk [vmem:[%s1318 + $0x309] sm:$0xff] %vm684, %v1228
    %1381 = vst.msk [vmem:[%s1318 + $0x319] sm:$0xff] %vm684, %v1229
    %1382 = vst.msk [vmem:[%s1318 + $0x321] sm:$0xff] %vm684, %v1230
    %v1383 = vld [vmem:[#allocation2] sm:$0xff]
    %v1384 = vld [vmem:[#allocation2 + $0x8] sm:$0xff]
    %v1385 = vld [vmem:[#allocation2 + $0x18] sm:$0xff]
    %v1386 = vld [vmem:[#allocation2 + $0x20] sm:$0xff]
    %v1387 = vld [vmem:[#allocation2 + $0x30] sm:$0xff]
    %v1388 = vld [vmem:[#allocation2 + $0x38] sm:$0xff]
    %v1389 = vld [vmem:[#allocation2 + $0x48] sm:$0xff]
    %v1390 = vld [vmem:[#allocation2 + $0x50] sm:$0xff]
    %v1391 = vld [vmem:[#allocation2 + $0x60] sm:$0xff]
    %v1392 = vld [vmem:[#allocation2 + $0x68] sm:$0xff]
    %v1393 = vld [vmem:[#allocation2 + $0x78] sm:$0xff]
    %v1394 = vld [vmem:[#allocation2 + $0x80] sm:$0xff]
    %v1395 = vld [vmem:[#allocation2 + $0x90] sm:$0xff]
    %v1396 = vld [vmem:[#allocation2 + $0x98] sm:$0xff]
    %v1397 = vld [vmem:[#allocation2 + $0xa8] sm:$0xff]
    %v1398 = vld [vmem:[#allocation2 + $0xb0] sm:$0xff]
    %v1399 = vld [vmem:[#allocation2 + $0xc0] sm:$0xff]
    %v1400 = vld [vmem:[#allocation2 + $0xc8] sm:$0xff]
    %v1401 = vld [vmem:[#allocation2 + $0xd8] sm:$0xff]
    %v1402 = vld [vmem:[#allocation2 + $0xe0] sm:$0xff]
    %v1403 = vld [vmem:[#allocation2 + $0xf0] sm:$0xff]
    %v1404 = vld [vmem:[#allocation2 + $0xf8] sm:$0xff]
    %v1405 = vld [vmem:[#allocation2 + $0x108] sm:$0xff]
    %v1406 = vld [vmem:[#allocation2 + $0x110] sm:$0xff]
    %v1407 = vld [vmem:[#allocation2 + $0x120] sm:$0xff]
    %v1408 = vld [vmem:[#allocation2 + $0x128] sm:$0xff]
    %v1409 = vld [vmem:[#allocation2 + $0x138] sm:$0xff]
    %v1410 = vld [vmem:[#allocation2 + $0x140] sm:$0xff]
    %v1411 = vld [vmem:[#allocation2 + $0x150] sm:$0xff]
    %v1412 = vld [vmem:[#allocation2 + $0x158] sm:$0xff]
    %v1413 = vld [vmem:[#allocation2 + $0x168] sm:$0xff]
    %v1414 = vld [vmem:[#allocation2 + $0x170] sm:$0xff]
    %v1415 = vld [vmem:[#allocation2 + $0x1b0] sm:$0xff]
    %v1416 = vld [vmem:[#allocation2 + $0x1b8] sm:$0xff]
    %v1417 = vld [vmem:[#allocation2 + $0x1c8] sm:$0xff]
    %v1418 = vld [vmem:[#allocation2 + $0x1d0] sm:$0xff]
    %v1419 = vld [vmem:[#allocation2 + $0x1e0] sm:$0xff]
    %v1420 = vld [vmem:[#allocation2 + $0x1e8] sm:$0xff]
    %v1421 = vld [vmem:[#allocation2 + $0x1f8] sm:$0xff]
    %v1422 = vld [vmem:[#allocation2 + $0x200] sm:$0xff]
    %v1423 = vld [vmem:[#allocation2 + $0x210] sm:$0xff]
    %v1424 = vld [vmem:[#allocation2 + $0x218] sm:$0xff]
    %v1425 = vld [vmem:[#allocation2 + $0x228] sm:$0xff]
    %v1426 = vld [vmem:[#allocation2 + $0x230] sm:$0xff]
    %v1427 = vld [vmem:[#allocation2 + $0x240] sm:$0xff]
    %v1428 = vld [vmem:[#allocation2 + $0x248] sm:$0xff]
    %v1429 = vld [vmem:[#allocation2 + $0x258] sm:$0xff]
    %v1430 = vld [vmem:[#allocation2 + $0x260] sm:$0xff]
    %v1431 = vld [vmem:[#allocation2 + $0x270] sm:$0xff]
    %v1432 = vld [vmem:[#allocation2 + $0x278] sm:$0xff]
    %v1433 = vld [vmem:[#allocation2 + $0x288] sm:$0xff]
    %v1434 = vld [vmem:[#allocation2 + $0x290] sm:$0xff]
    %v1435 = vld [vmem:[#allocation2 + $0x2a0] sm:$0xff]
    %v1436 = vld [vmem:[#allocation2 + $0x2a8] sm:$0xff]
    %v1437 = vld [vmem:[#allocation2 + $0x2b8] sm:$0xff]
    %v1438 = vld [vmem:[#allocation2 + $0x2c0] sm:$0xff]
    %v1439 = vld [vmem:[#allocation2 + $0x2d0] sm:$0xff]
    %v1440 = vld [vmem:[#allocation2 + $0x2d8] sm:$0xff]
    %v1441 = vld [vmem:[#allocation2 + $0x2e8] sm:$0xff]
    %v1442 = vld [vmem:[#allocation2 + $0x2f0] sm:$0xff]
    %v1443 = vld [vmem:[#allocation2 + $0x300] sm:$0xff]
    %v1444 = vld [vmem:[#allocation2 + $0x308] sm:$0xff]
    %v1445 = vld [vmem:[#allocation2 + $0x318] sm:$0xff]
    %v1446 = vld [vmem:[#allocation2 + $0x320] sm:$0xff]
    %v1447 = vld [vmem:[#allocation2 + $0x1] sm:$0xff]
    %v1448 = vld [vmem:[#allocation2 + $0x9] sm:$0xff]
    %v1449 = vld [vmem:[#allocation2 + $0x19] sm:$0xff]
    %v1450 = vld [vmem:[#allocation2 + $0x21] sm:$0xff]
    %v1451 = vld [vmem:[#allocation2 + $0x31] sm:$0xff]
    %v1452 = vld [vmem:[#allocation2 + $0x39] sm:$0xff]
    %v1453 = vld [vmem:[#allocation2 + $0x49] sm:$0xff]
    %v1454 = vld [vmem:[#allocation2 + $0x51] sm:$0xff]
    %v1455 = vld [vmem:[#allocation2 + $0x61] sm:$0xff]
    %v1456 = vld [vmem:[#allocation2 + $0x69] sm:$0xff]
    %v1457 = vld [vmem:[#allocation2 + $0x79] sm:$0xff]
    %v1458 = vld [vmem:[#allocation2 + $0x81] sm:$0xff]
    %v1459 = vld [vmem:[#allocation2 + $0x91] sm:$0xff]
    %v1460 = vld [vmem:[#allocation2 + $0x99] sm:$0xff]
    %v1461 = vld [vmem:[#allocation2 + $0xa9] sm:$0xff]
    %v1462 = vld [vmem:[#allocation2 + $0xb1] sm:$0xff]
    %v1463 = vld [vmem:[#allocation2 + $0xc1] sm:$0xff]
    %v1464 = vld [vmem:[#allocation2 + $0xc9] sm:$0xff]
    %v1465 = vld [vmem:[#allocation2 + $0xd9] sm:$0xff]
    %v1466 = vld [vmem:[#allocation2 + $0xe1] sm:$0xff]
    %v1467 = vld [vmem:[#allocation2 + $0xf1] sm:$0xff]
    %v1468 = vld [vmem:[#allocation2 + $0xf9] sm:$0xff]
    %v1469 = vld [vmem:[#allocation2 + $0x109] sm:$0xff]
    %v1470 = vld [vmem:[#allocation2 + $0x111] sm:$0xff]
    %v1471 = vld [vmem:[#allocation2 + $0x121] sm:$0xff]
    %v1472 = vld [vmem:[#allocation2 + $0x129] sm:$0xff]
    %v1473 = vld [vmem:[#allocation2 + $0x139] sm:$0xff]
    %v1474 = vld [vmem:[#allocation2 + $0x141] sm:$0xff]
    %v1475 = vld [vmem:[#allocation2 + $0x151] sm:$0xff]
    %v1476 = vld [vmem:[#allocation2 + $0x159] sm:$0xff]
    %v1477 = vld [vmem:[#allocation2 + $0x169] sm:$0xff]
    %v1478 = vld [vmem:[#allocation2 + $0x171] sm:$0xff]
    %v1479 = vld [vmem:[#allocation2 + $0x1b1] sm:$0xff]
    %v1480 = vld [vmem:[#allocation2 + $0x1b9] sm:$0xff]
    %v1481 = vld [vmem:[#allocation2 + $0x1c9] sm:$0xff]
    %v1482 = vld [vmem:[#allocation2 + $0x1d1] sm:$0xff]
    %v1483 = vld [vmem:[#allocation2 + $0x1e1] sm:$0xff]
    %v1484 = vld [vmem:[#allocation2 + $0x1e9] sm:$0xff]
    %v1485 = vld [vmem:[#allocation2 + $0x1f9] sm:$0xff]
    %v1486 = vld [vmem:[#allocation2 + $0x201] sm:$0xff]
    %v1487 = vld [vmem:[#allocation2 + $0x211] sm:$0xff]
    %v1488 = vld [vmem:[#allocation2 + $0x219] sm:$0xff]
    %v1489 = vld [vmem:[#allocation2 + $0x229] sm:$0xff]
    %v1490 = vld [vmem:[#allocation2 + $0x231] sm:$0xff]
    %v1491 = vld [vmem:[#allocation2 + $0x241] sm:$0xff]
    %v1492 = vld [vmem:[#allocation2 + $0x249] sm:$0xff]
    %v1493 = vld [vmem:[#allocation2 + $0x259] sm:$0xff]
    %v1494 = vld [vmem:[#allocation2 + $0x261] sm:$0xff]
    %v1495 = vld [vmem:[#allocation2 + $0x271] sm:$0xff]
    %v1496 = vld [vmem:[#allocation2 + $0x279] sm:$0xff]
    %v1497 = vld [vmem:[#allocation2 + $0x289] sm:$0xff]
    %v1498 = vld [vmem:[#allocation2 + $0x291] sm:$0xff]
    %v1499 = vld [vmem:[#allocation2 + $0x2a1] sm:$0xff]
    %v1500 = vld [vmem:[#allocation2 + $0x2a9] sm:$0xff]
    %v1501 = vld [vmem:[#allocation2 + $0x2b9] sm:$0xff]
    %v1502 = vld [vmem:[#allocation2 + $0x2c1] sm:$0xff]
    %v1503 = vld [vmem:[#allocation2 + $0x2d1] sm:$0xff]
    %v1504 = vld [vmem:[#allocation2 + $0x2d9] sm:$0xff]
    %v1505 = vld [vmem:[#allocation2 + $0x2e9] sm:$0xff]
    %v1506 = vld [vmem:[#allocation2 + $0x2f1] sm:$0xff]
    %v1507 = vld [vmem:[#allocation2 + $0x301] sm:$0xff]
    %v1508 = vld [vmem:[#allocation2 + $0x309] sm:$0xff]
    %v1509 = vld [vmem:[#allocation2 + $0x319] sm:$0xff]
    %v1510 = vld [vmem:[#allocation2 + $0x321] sm:$0xff]
    %v1511 = vld [vmem:[#allocation2 + $0x2] sm:$0xff]
    %v1512 = vld [vmem:[#allocation2 + $0xa] sm:$0xff]
    %v1513 = vld [vmem:[#allocation2 + $0x1a] sm:$0xff]
    %v1514 = vld [vmem:[#allocation2 + $0x22] sm:$0xff]
    %v1515 = vld [vmem:[#allocation2 + $0x32] sm:$0xff]
    %v1516 = vld [vmem:[#allocation2 + $0x3a] sm:$0xff]
    %v1517 = vld [vmem:[#allocation2 + $0x4a] sm:$0xff]
    %v1518 = vld [vmem:[#allocation2 + $0x52] sm:$0xff]
    %v1519 = vld [vmem:[#allocation2 + $0x62] sm:$0xff]
    %v1520 = vld [vmem:[#allocation2 + $0x6a] sm:$0xff]
    %v1521 = vld [vmem:[#allocation2 + $0x7a] sm:$0xff]
    %v1522 = vld [vmem:[#allocation2 + $0x82] sm:$0xff]
    %v1523 = vld [vmem:[#allocation2 + $0x92] sm:$0xff]
    %v1524 = vld [vmem:[#allocation2 + $0x9a] sm:$0xff]
    %v1525 = vld [vmem:[#allocation2 + $0xaa] sm:$0xff]
    %v1526 = vld [vmem:[#allocation2 + $0xb2] sm:$0xff]
    %v1527 = vld [vmem:[#allocation2 + $0xc2] sm:$0xff]
    %v1528 = vld [vmem:[#allocation2 + $0xca] sm:$0xff]
    %v1529 = vld [vmem:[#allocation2 + $0xda] sm:$0xff]
    %v1530 = vld [vmem:[#allocation2 + $0xe2] sm:$0xff]
    %v1531 = vld [vmem:[#allocation2 + $0xf2] sm:$0xff]
    %v1532 = vld [vmem:[#allocation2 + $0xfa] sm:$0xff]
    %v1533 = vld [vmem:[#allocation2 + $0x10a] sm:$0xff]
    %v1534 = vld [vmem:[#allocation2 + $0x112] sm:$0xff]
    %v1535 = vld [vmem:[#allocation2 + $0x122] sm:$0xff]
    %v1536 = vld [vmem:[#allocation2 + $0x12a] sm:$0xff]
    %v1537 = vld [vmem:[#allocation2 + $0x13a] sm:$0xff]
    %v1538 = vld [vmem:[#allocation2 + $0x142] sm:$0xff]
    %v1539 = vld [vmem:[#allocation2 + $0x152] sm:$0xff]
    %v1540 = vld [vmem:[#allocation2 + $0x15a] sm:$0xff]
    %v1541 = vld [vmem:[#allocation2 + $0x16a] sm:$0xff]
    %v1542 = vld [vmem:[#allocation2 + $0x172] sm:$0xff]
    %v1543 = vld [vmem:[#allocation2 + $0x1b2] sm:$0xff]
    %v1544 = vld [vmem:[#allocation2 + $0x1ba] sm:$0xff]
    %v1545 = vld [vmem:[#allocation2 + $0x1ca] sm:$0xff]
    %v1546 = vld [vmem:[#allocation2 + $0x1d2] sm:$0xff]
    %v1547 = vld [vmem:[#allocation2 + $0x1e2] sm:$0xff]
    %v1548 = vld [vmem:[#allocation2 + $0x1ea] sm:$0xff]
    %v1549 = vld [vmem:[#allocation2 + $0x1fa] sm:$0xff]
    %v1550 = vld [vmem:[#allocation2 + $0x202] sm:$0xff]
    %v1551 = vld [vmem:[#allocation2 + $0x212] sm:$0xff]
    %v1552 = vld [vmem:[#allocation2 + $0x21a] sm:$0xff]
    %v1553 = vld [vmem:[#allocation2 + $0x22a] sm:$0xff]
    %v1554 = vld [vmem:[#allocation2 + $0x232] sm:$0xff]
    %v1555 = vld [vmem:[#allocation2 + $0x242] sm:$0xff]
    %v1556 = vld [vmem:[#allocation2 + $0x24a] sm:$0xff]
    %v1557 = vld [vmem:[#allocation2 + $0x25a] sm:$0xff]
    %v1558 = vld [vmem:[#allocation2 + $0x262] sm:$0xff]
    %v1559 = vld [vmem:[#allocation2 + $0x272] sm:$0xff]
    %v1560 = vld [vmem:[#allocation2 + $0x27a] sm:$0xff]
    %v1561 = vld [vmem:[#allocation2 + $0x28a] sm:$0xff]
    %v1562 = vld [vmem:[#allocation2 + $0x292] sm:$0xff]
    %v1563 = vld [vmem:[#allocation2 + $0x2a2] sm:$0xff]
    %v1564 = vld [vmem:[#allocation2 + $0x2aa] sm:$0xff]
    %v1565 = vld [vmem:[#allocation2 + $0x2ba] sm:$0xff]
    %v1566 = vld [vmem:[#allocation2 + $0x2c2] sm:$0xff]
    %v1567 = vld [vmem:[#allocation2 + $0x2d2] sm:$0xff]
    %v1568 = vld [vmem:[#allocation2 + $0x2da] sm:$0xff]
    %v1569 = vld [vmem:[#allocation2 + $0x2ea] sm:$0xff]
    %v1570 = vld [vmem:[#allocation2 + $0x2f2] sm:$0xff]
    %v1571 = vld [vmem:[#allocation2 + $0x302] sm:$0xff]
    %v1572 = vld [vmem:[#allocation2 + $0x30a] sm:$0xff]
    %v1573 = vld [vmem:[#allocation2 + $0x31a] sm:$0xff]
    %v1574 = vld [vmem:[#allocation2 + $0x322] sm:$0xff]
    %v1575 = vld [vmem:[%s1318] sm:$0xff]
    %v1576 = vld [vmem:[%s1318 + $0x8] sm:$0xff]
    %v1577 = vld [vmem:[%s1318 + $0x18] sm:$0xff]
    %v1578 = vld [vmem:[%s1318 + $0x20] sm:$0xff]
    %v1579 = vld [vmem:[%s1318 + $0x30] sm:$0xff]
    %v1580 = vld [vmem:[%s1318 + $0x38] sm:$0xff]
    %v1581 = vld [vmem:[%s1318 + $0x48] sm:$0xff]
    %v1582 = vld [vmem:[%s1318 + $0x50] sm:$0xff]
    %v1583 = vld [vmem:[%s1318 + $0x60] sm:$0xff]
    %v1584 = vld [vmem:[%s1318 + $0x68] sm:$0xff]
    %v1585 = vld [vmem:[%s1318 + $0x78] sm:$0xff]
    %v1586 = vld [vmem:[%s1318 + $0x80] sm:$0xff]
    %v1587 = vld [vmem:[%s1318 + $0x90] sm:$0xff]
    %v1588 = vld [vmem:[%s1318 + $0x98] sm:$0xff]
    %v1589 = vld [vmem:[%s1318 + $0xa8] sm:$0xff]
    %v1590 = vld [vmem:[%s1318 + $0xb0] sm:$0xff]
    %v1591 = vld [vmem:[%s1318 + $0xc0] sm:$0xff]
    %v1592 = vld [vmem:[%s1318 + $0xc8] sm:$0xff]
    %v1593 = vld [vmem:[%s1318 + $0xd8] sm:$0xff]
    %v1594 = vld [vmem:[%s1318 + $0xe0] sm:$0xff]
    %v1595 = vld [vmem:[%s1318 + $0xf0] sm:$0xff]
    %v1596 = vld [vmem:[%s1318 + $0xf8] sm:$0xff]
    %v1597 = vld [vmem:[%s1318 + $0x108] sm:$0xff]
    %v1598 = vld [vmem:[%s1318 + $0x110] sm:$0xff]
    %v1599 = vld [vmem:[%s1318 + $0x120] sm:$0xff]
    %v1600 = vld [vmem:[%s1318 + $0x128] sm:$0xff]
    %v1601 = vld [vmem:[%s1318 + $0x138] sm:$0xff]
    %v1602 = vld [vmem:[%s1318 + $0x140] sm:$0xff]
    %v1603 = vld [vmem:[%s1318 + $0x150] sm:$0xff]
    %v1604 = vld [vmem:[%s1318 + $0x158] sm:$0xff]
    %v1605 = vld [vmem:[%s1318 + $0x168] sm:$0xff]
    %v1606 = vld [vmem:[%s1318 + $0x170] sm:$0xff]
    %v1607 = vld [vmem:[%s1318 + $0x1b0] sm:$0xff]
    %v1608 = vld [vmem:[%s1318 + $0x1b8] sm:$0xff]
    %v1609 = vld [vmem:[%s1318 + $0x1c8] sm:$0xff]
    %v1610 = vld [vmem:[%s1318 + $0x1d0] sm:$0xff]
    %v1611 = vld [vmem:[%s1318 + $0x1e0] sm:$0xff]
    %v1612 = vld [vmem:[%s1318 + $0x1e8] sm:$0xff]
    %v1613 = vld [vmem:[%s1318 + $0x1f8] sm:$0xff]
    %v1614 = vld [vmem:[%s1318 + $0x200] sm:$0xff]
    %v1615 = vld [vmem:[%s1318 + $0x210] sm:$0xff]
    %v1616 = vld [vmem:[%s1318 + $0x218] sm:$0xff]
    %v1617 = vld [vmem:[%s1318 + $0x228] sm:$0xff]
    %v1618 = vld [vmem:[%s1318 + $0x230] sm:$0xff]
    %v1619 = vld [vmem:[%s1318 + $0x240] sm:$0xff]
    %v1620 = vld [vmem:[%s1318 + $0x248] sm:$0xff]
    %v1621 = vld [vmem:[%s1318 + $0x258] sm:$0xff]
    %v1622 = vld [vmem:[%s1318 + $0x260] sm:$0xff]
    %v1623 = vld [vmem:[%s1318 + $0x270] sm:$0xff]
    %v1624 = vld [vmem:[%s1318 + $0x278] sm:$0xff]
    %v1625 = vld [vmem:[%s1318 + $0x288] sm:$0xff]
    %v1626 = vld [vmem:[%s1318 + $0x290] sm:$0xff]
    %v1627 = vld [vmem:[%s1318 + $0x2a0] sm:$0xff]
    %v1628 = vld [vmem:[%s1318 + $0x2a8] sm:$0xff]
    %v1629 = vld [vmem:[%s1318 + $0x2b8] sm:$0xff]
    %v1630 = vld [vmem:[%s1318 + $0x2c0] sm:$0xff]
    %v1631 = vld [vmem:[%s1318 + $0x2d0] sm:$0xff]
    %v1632 = vld [vmem:[%s1318 + $0x2d8] sm:$0xff]
    %v1633 = vld [vmem:[%s1318 + $0x2e8] sm:$0xff]
    %v1634 = vld [vmem:[%s1318 + $0x2f0] sm:$0xff]
    %v1635 = vld [vmem:[%s1318 + $0x300] sm:$0xff]
    %v1636 = vld [vmem:[%s1318 + $0x308] sm:$0xff]
    %v1637 = vld [vmem:[%s1318 + $0x318] sm:$0xff]
    %v1638 = vld [vmem:[%s1318 + $0x320] sm:$0xff]
    %v1639 = vld [vmem:[%s1318 + $0x1] sm:$0xff]
    %v1640 = vld [vmem:[%s1318 + $0x9] sm:$0xff]
    %v1641 = vld [vmem:[%s1318 + $0x19] sm:$0xff]
    %v1642 = vld [vmem:[%s1318 + $0x21] sm:$0xff]
    %v1643 = vld [vmem:[%s1318 + $0x31] sm:$0xff]
    %v1644 = vld [vmem:[%s1318 + $0x39] sm:$0xff]
    %v1645 = vld [vmem:[%s1318 + $0x49] sm:$0xff]
    %v1646 = vld [vmem:[%s1318 + $0x51] sm:$0xff]
    %v1647 = vld [vmem:[%s1318 + $0x61] sm:$0xff]
    %v1648 = vld [vmem:[%s1318 + $0x69] sm:$0xff]
    %v1649 = vld [vmem:[%s1318 + $0x79] sm:$0xff]
    %v1650 = vld [vmem:[%s1318 + $0x81] sm:$0xff]
    %v1651 = vld [vmem:[%s1318 + $0x91] sm:$0xff]
    %v1652 = vld [vmem:[%s1318 + $0x99] sm:$0xff]
    %v1653 = vld [vmem:[%s1318 + $0xa9] sm:$0xff]
    %v1654 = vld [vmem:[%s1318 + $0xb1] sm:$0xff]
    %v1655 = vld [vmem:[%s1318 + $0xc1] sm:$0xff]
    %v1656 = vld [vmem:[%s1318 + $0xc9] sm:$0xff]
    %v1657 = vld [vmem:[%s1318 + $0xd9] sm:$0xff]
    %v1658 = vld [vmem:[%s1318 + $0xe1] sm:$0xff]
    %v1659 = vld [vmem:[%s1318 + $0xf1] sm:$0xff]
    %v1660 = vld [vmem:[%s1318 + $0xf9] sm:$0xff]
    %v1661 = vld [vmem:[%s1318 + $0x109] sm:$0xff]
    %v1662 = vld [vmem:[%s1318 + $0x111] sm:$0xff]
    %v1663 = vld [vmem:[%s1318 + $0x121] sm:$0xff]
    %v1664 = vld [vmem:[%s1318 + $0x129] sm:$0xff]
    %v1665 = vld [vmem:[%s1318 + $0x139] sm:$0xff]
    %v1666 = vld [vmem:[%s1318 + $0x141] sm:$0xff]
    %v1667 = vld [vmem:[%s1318 + $0x151] sm:$0xff]
    %v1668 = vld [vmem:[%s1318 + $0x159] sm:$0xff]
    %v1669 = vld [vmem:[%s1318 + $0x169] sm:$0xff]
    %v1670 = vld [vmem:[%s1318 + $0x171] sm:$0xff]
    %v1671 = vld [vmem:[%s1318 + $0x1b1] sm:$0xff]
    %v1672 = vld [vmem:[%s1318 + $0x1b9] sm:$0xff]
    %v1673 = vld [vmem:[%s1318 + $0x1c9] sm:$0xff]
    %v1674 = vld [vmem:[%s1318 + $0x1d1] sm:$0xff]
    %v1675 = vld [vmem:[%s1318 + $0x1e1] sm:$0xff]
    %v1676 = vld [vmem:[%s1318 + $0x1e9] sm:$0xff]
    %v1677 = vld [vmem:[%s1318 + $0x1f9] sm:$0xff]
    %v1678 = vld [vmem:[%s1318 + $0x201] sm:$0xff]
    %v1679 = vld [vmem:[%s1318 + $0x211] sm:$0xff]
    %v1680 = vld [vmem:[%s1318 + $0x219] sm:$0xff]
    %v1681 = vld [vmem:[%s1318 + $0x229] sm:$0xff]
    %v1682 = vld [vmem:[%s1318 + $0x231] sm:$0xff]
    %v1683 = vld [vmem:[%s1318 + $0x241] sm:$0xff]
    %v1684 = vld [vmem:[%s1318 + $0x249] sm:$0xff]
    %v1685 = vld [vmem:[%s1318 + $0x259] sm:$0xff]
    %v1686 = vld [vmem:[%s1318 + $0x261] sm:$0xff]
    %v1687 = vld [vmem:[%s1318 + $0x271] sm:$0xff]
    %v1688 = vld [vmem:[%s1318 + $0x279] sm:$0xff]
    %v1689 = vld [vmem:[%s1318 + $0x289] sm:$0xff]
    %v1690 = vld [vmem:[%s1318 + $0x291] sm:$0xff]
    %v1691 = vld [vmem:[%s1318 + $0x2a1] sm:$0xff]
    %v1692 = vld [vmem:[%s1318 + $0x2a9] sm:$0xff]
    %v1693 = vld [vmem:[%s1318 + $0x2b9] sm:$0xff]
    %v1694 = vld [vmem:[%s1318 + $0x2c1] sm:$0xff]
    %v1695 = vld [vmem:[%s1318 + $0x2d1] sm:$0xff]
    %v1696 = vld [vmem:[%s1318 + $0x2d9] sm:$0xff]
    %v1697 = vld [vmem:[%s1318 + $0x2e9] sm:$0xff]
    %v1698 = vld [vmem:[%s1318 + $0x2f1] sm:$0xff]
    %v1699 = vld [vmem:[%s1318 + $0x301] sm:$0xff]
    %v1700 = vld [vmem:[%s1318 + $0x309] sm:$0xff]
    %v1701 = vld [vmem:[%s1318 + $0x319] sm:$0xff]
    %v1702 = vld [vmem:[%s1318 + $0x321] sm:$0xff]
    %v1703 = vld [vmem:[%s1318 + $0x2] sm:$0xff]
    %v1704 = vld [vmem:[%s1318 + $0xa] sm:$0xff]
    %v1705 = vld [vmem:[%s1318 + $0x1a] sm:$0xff]
    %v1706 = vld [vmem:[%s1318 + $0x22] sm:$0xff]
    %v1707 = vld [vmem:[%s1318 + $0x32] sm:$0xff]
    %v1708 = vld [vmem:[%s1318 + $0x3a] sm:$0xff]
    %v1709 = vld [vmem:[%s1318 + $0x4a] sm:$0xff]
    %v1710 = vld [vmem:[%s1318 + $0x52] sm:$0xff]
    %v1711 = vld [vmem:[%s1318 + $0x62] sm:$0xff]
    %v1712 = vld [vmem:[%s1318 + $0x6a] sm:$0xff]
    %v1713 = vld [vmem:[%s1318 + $0x7a] sm:$0xff]
    %v1714 = vld [vmem:[%s1318 + $0x82] sm:$0xff]
    %v1715 = vld [vmem:[%s1318 + $0x92] sm:$0xff]
    %v1716 = vld [vmem:[%s1318 + $0x9a] sm:$0xff]
    %v1717 = vld [vmem:[%s1318 + $0xaa] sm:$0xff]
    %v1718 = vld [vmem:[%s1318 + $0xb2] sm:$0xff]
    %v1719 = vld [vmem:[%s1318 + $0xc2] sm:$0xff]
    %v1720 = vld [vmem:[%s1318 + $0xca] sm:$0xff]
    %v1721 = vld [vmem:[%s1318 + $0xda] sm:$0xff]
    %v1722 = vld [vmem:[%s1318 + $0xe2] sm:$0xff]
    %v1723 = vld [vmem:[%s1318 + $0xf2] sm:$0xff]
    %v1724 = vld [vmem:[%s1318 + $0xfa] sm:$0xff]
    %v1725 = vld [vmem:[%s1318 + $0x10a] sm:$0xff]
    %v1726 = vld [vmem:[%s1318 + $0x112] sm:$0xff]
    %v1727 = vld [vmem:[%s1318 + $0x122] sm:$0xff]
    %v1728 = vld [vmem:[%s1318 + $0x12a] sm:$0xff]
    %v1729 = vld [vmem:[%s1318 + $0x13a] sm:$0xff]
    %v1730 = vld [vmem:[%s1318 + $0x142] sm:$0xff]
    %v1731 = vld [vmem:[%s1318 + $0x152] sm:$0xff]
    %v1732 = vld [vmem:[%s1318 + $0x15a] sm:$0xff]
    %v1733 = vld [vmem:[%s1318 + $0x16a] sm:$0xff]
    %v1734 = vld [vmem:[%s1318 + $0x172] sm:$0xff]
    %v1735 = vld [vmem:[%s1318 + $0x1b2] sm:$0xff]
    %v1736 = vld [vmem:[%s1318 + $0x1ba] sm:$0xff]
    %v1737 = vld [vmem:[%s1318 + $0x1ca] sm:$0xff]
    %v1738 = vld [vmem:[%s1318 + $0x1d2] sm:$0xff]
    %v1739 = vld [vmem:[%s1318 + $0x1e2] sm:$0xff]
    %v1740 = vld [vmem:[%s1318 + $0x1ea] sm:$0xff]
    %v1741 = vld [vmem:[%s1318 + $0x1fa] sm:$0xff]
    %v1742 = vld [vmem:[%s1318 + $0x202] sm:$0xff]
    %v1743 = vld [vmem:[%s1318 + $0x212] sm:$0xff]
    %v1744 = vld [vmem:[%s1318 + $0x21a] sm:$0xff]
    %v1745 = vld [vmem:[%s1318 + $0x22a] sm:$0xff]
    %v1746 = vld [vmem:[%s1318 + $0x232] sm:$0xff]
    %v1747 = vld [vmem:[%s1318 + $0x242] sm:$0xff]
    %v1748 = vld [vmem:[%s1318 + $0x24a] sm:$0xff]
    %v1749 = vld [vmem:[%s1318 + $0x25a] sm:$0xff]
    %v1750 = vld [vmem:[%s1318 + $0x262] sm:$0xff]
    %v1751 = vld [vmem:[%s1318 + $0x272] sm:$0xff]
    %v1752 = vld [vmem:[%s1318 + $0x27a] sm:$0xff]
    %v1753 = vld [vmem:[%s1318 + $0x28a] sm:$0xff]
    %v1754 = vld [vmem:[%s1318 + $0x292] sm:$0xff]
    %v1755 = vld [vmem:[%s1318 + $0x2a2] sm:$0xff]
    %v1756 = vld [vmem:[%s1318 + $0x2aa] sm:$0xff]
    %v1757 = vld [vmem:[%s1318 + $0x2ba] sm:$0xff]
    %v1758 = vld [vmem:[%s1318 + $0x2c2] sm:$0xff]
    %v1759 = vld [vmem:[%s1318 + $0x2d2] sm:$0xff]
    %v1760 = vld [vmem:[%s1318 + $0x2da] sm:$0xff]
    %v1761 = vld [vmem:[%s1318 + $0x2ea] sm:$0xff]
    %v1762 = vld [vmem:[%s1318 + $0x2f2] sm:$0xff]
    %v1763 = vld [vmem:[%s1318 + $0x302] sm:$0xff]
    %v1764 = vld [vmem:[%s1318 + $0x30a] sm:$0xff]
    %v1765 = vld [vmem:[%s1318 + $0x31a] sm:$0xff]
    %v1766 = vld [vmem:[%s1318 + $0x322] sm:$0xff]
    %s1767 = scalar_lea.vmem [#allocation2], 48
    %v1768 = vld [vmem:[%s1767] sm:$0xff]
    %v1769 = vld [vmem:[%s1767 + $0x8] sm:$0xff]
    %v1770 = vld [vmem:[%s1767 + $0x18] sm:$0xff]
    %v1771 = vld [vmem:[%s1767 + $0x20] sm:$0xff]
    %v1772 = vld [vmem:[%s1767 + $0x30] sm:$0xff]
    %v1773 = vld [vmem:[%s1767 + $0x38] sm:$0xff]
    %v1774 = vld [vmem:[%s1767 + $0x48] sm:$0xff]
    %v1775 = vld [vmem:[%s1767 + $0x50] sm:$0xff]
    %v1776 = vld [vmem:[%s1767 + $0x60] sm:$0xff]
    %v1777 = vld [vmem:[%s1767 + $0x68] sm:$0xff]
    %v1778 = vld [vmem:[%s1767 + $0x78] sm:$0xff]
    %v1779 = vld [vmem:[%s1767 + $0x80] sm:$0xff]
    %v1780 = vld [vmem:[%s1767 + $0x90] sm:$0xff]
    %v1781 = vld [vmem:[%s1767 + $0x98] sm:$0xff]
    %v1782 = vld [vmem:[%s1767 + $0xa8] sm:$0xff]
    %v1783 = vld [vmem:[%s1767 + $0xb0] sm:$0xff]
    %v1784 = vld [vmem:[%s1767 + $0xc0] sm:$0xff]
    %v1785 = vld [vmem:[%s1767 + $0xc8] sm:$0xff]
    %v1786 = vld [vmem:[%s1767 + $0xd8] sm:$0xff]
    %v1787 = vld [vmem:[%s1767 + $0xe0] sm:$0xff]
    %v1788 = vld [vmem:[%s1767 + $0xf0] sm:$0xff]
    %v1789 = vld [vmem:[%s1767 + $0xf8] sm:$0xff]
    %v1790 = vld [vmem:[%s1767 + $0x108] sm:$0xff]
    %v1791 = vld [vmem:[%s1767 + $0x110] sm:$0xff]
    %v1792 = vld [vmem:[%s1767 + $0x120] sm:$0xff]
    %v1793 = vld [vmem:[%s1767 + $0x128] sm:$0xff]
    %v1794 = vld [vmem:[%s1767 + $0x138] sm:$0xff]
    %v1795 = vld [vmem:[%s1767 + $0x140] sm:$0xff]
    %v1796 = vld [vmem:[%s1767 + $0x150] sm:$0xff]
    %v1797 = vld [vmem:[%s1767 + $0x158] sm:$0xff]
    %v1798 = vld [vmem:[%s1767 + $0x168] sm:$0xff]
    %v1799 = vld [vmem:[%s1767 + $0x170] sm:$0xff]
    %v1800 = vld [vmem:[%s1767 + $0x1b0] sm:$0xff]
    %v1801 = vld [vmem:[%s1767 + $0x1b8] sm:$0xff]
    %v1802 = vld [vmem:[%s1767 + $0x1c8] sm:$0xff]
    %v1803 = vld [vmem:[%s1767 + $0x1d0] sm:$0xff]
    %v1804 = vld [vmem:[%s1767 + $0x1e0] sm:$0xff]
    %v1805 = vld [vmem:[%s1767 + $0x1e8] sm:$0xff]
    %v1806 = vld [vmem:[%s1767 + $0x1f8] sm:$0xff]
    %v1807 = vld [vmem:[%s1767 + $0x200] sm:$0xff]
    %v1808 = vld [vmem:[%s1767 + $0x210] sm:$0xff]
    %v1809 = vld [vmem:[%s1767 + $0x218] sm:$0xff]
    %v1810 = vld [vmem:[%s1767 + $0x228] sm:$0xff]
    %v1811 = vld [vmem:[%s1767 + $0x230] sm:$0xff]
    %v1812 = vld [vmem:[%s1767 + $0x240] sm:$0xff]
    %v1813 = vld [vmem:[%s1767 + $0x248] sm:$0xff]
    %v1814 = vld [vmem:[%s1767 + $0x258] sm:$0xff]
    %v1815 = vld [vmem:[%s1767 + $0x260] sm:$0xff]
    %v1816 = vld [vmem:[%s1767 + $0x270] sm:$0xff]
    %v1817 = vld [vmem:[%s1767 + $0x278] sm:$0xff]
    %v1818 = vld [vmem:[%s1767 + $0x288] sm:$0xff]
    %v1819 = vld [vmem:[%s1767 + $0x290] sm:$0xff]
    %v1820 = vld [vmem:[%s1767 + $0x2a0] sm:$0xff]
    %v1821 = vld [vmem:[%s1767 + $0x2a8] sm:$0xff]
    %v1822 = vld [vmem:[%s1767 + $0x2b8] sm:$0xff]
    %v1823 = vld [vmem:[%s1767 + $0x2c0] sm:$0xff]
    %v1824 = vld [vmem:[%s1767 + $0x2d0] sm:$0xff]
    %v1825 = vld [vmem:[%s1767 + $0x2d8] sm:$0xff]
    %v1826 = vld [vmem:[%s1767 + $0x2e8] sm:$0xff]
    %v1827 = vld [vmem:[%s1767 + $0x2f0] sm:$0xff]
    %v1828 = vld [vmem:[%s1767 + $0x300] sm:$0xff]
    %v1829 = vld [vmem:[%s1767 + $0x308] sm:$0xff]
    %v1830 = vld [vmem:[%s1767 + $0x318] sm:$0xff]
    %v1831 = vld [vmem:[%s1767 + $0x320] sm:$0xff]
    %v1832 = vld [vmem:[%s1767 + $0x1] sm:$0xff]
    %v1833 = vld [vmem:[%s1767 + $0x9] sm:$0xff]
    %v1834 = vld [vmem:[%s1767 + $0x19] sm:$0xff]
    %v1835 = vld [vmem:[%s1767 + $0x21] sm:$0xff]
    %v1836 = vld [vmem:[%s1767 + $0x31] sm:$0xff]
    %v1837 = vld [vmem:[%s1767 + $0x39] sm:$0xff]
    %v1838 = vld [vmem:[%s1767 + $0x49] sm:$0xff]
    %v1839 = vld [vmem:[%s1767 + $0x51] sm:$0xff]
    %v1840 = vld [vmem:[%s1767 + $0x61] sm:$0xff]
    %v1841 = vld [vmem:[%s1767 + $0x69] sm:$0xff]
    %v1842 = vld [vmem:[%s1767 + $0x79] sm:$0xff]
    %v1843 = vld [vmem:[%s1767 + $0x81] sm:$0xff]
    %v1844 = vld [vmem:[%s1767 + $0x91] sm:$0xff]
    %v1845 = vld [vmem:[%s1767 + $0x99] sm:$0xff]
    %v1846 = vld [vmem:[%s1767 + $0xa9] sm:$0xff]
    %v1847 = vld [vmem:[%s1767 + $0xb1] sm:$0xff]
    %v1848 = vld [vmem:[%s1767 + $0xc1] sm:$0xff]
    %v1849 = vld [vmem:[%s1767 + $0xc9] sm:$0xff]
    %v1850 = vld [vmem:[%s1767 + $0xd9] sm:$0xff]
    %v1851 = vld [vmem:[%s1767 + $0xe1] sm:$0xff]
    %v1852 = vld [vmem:[%s1767 + $0xf1] sm:$0xff]
    %v1853 = vld [vmem:[%s1767 + $0xf9] sm:$0xff]
    %v1854 = vld [vmem:[%s1767 + $0x109] sm:$0xff]
    %v1855 = vld [vmem:[%s1767 + $0x111] sm:$0xff]
    %v1856 = vld [vmem:[%s1767 + $0x121] sm:$0xff]
    %v1857 = vld [vmem:[%s1767 + $0x129] sm:$0xff]
    %v1858 = vld [vmem:[%s1767 + $0x139] sm:$0xff]
    %v1859 = vld [vmem:[%s1767 + $0x141] sm:$0xff]
    %v1860 = vld [vmem:[%s1767 + $0x151] sm:$0xff]
    %v1861 = vld [vmem:[%s1767 + $0x159] sm:$0xff]
    %v1862 = vld [vmem:[%s1767 + $0x169] sm:$0xff]
    %v1863 = vld [vmem:[%s1767 + $0x171] sm:$0xff]
    %v1864 = vld [vmem:[%s1767 + $0x1b1] sm:$0xff]
    %v1865 = vld [vmem:[%s1767 + $0x1b9] sm:$0xff]
    %v1866 = vld [vmem:[%s1767 + $0x1c9] sm:$0xff]
    %v1867 = vld [vmem:[%s1767 + $0x1d1] sm:$0xff]
    %v1868 = vld [vmem:[%s1767 + $0x1e1] sm:$0xff]
    %v1869 = vld [vmem:[%s1767 + $0x1e9] sm:$0xff]
    %v1870 = vld [vmem:[%s1767 + $0x1f9] sm:$0xff]
    %v1871 = vld [vmem:[%s1767 + $0x201] sm:$0xff]
    %v1872 = vld [vmem:[%s1767 + $0x211] sm:$0xff]
    %v1873 = vld [vmem:[%s1767 + $0x219] sm:$0xff]
    %v1874 = vld [vmem:[%s1767 + $0x229] sm:$0xff]
    %v1875 = vld [vmem:[%s1767 + $0x231] sm:$0xff]
    %v1876 = vld [vmem:[%s1767 + $0x241] sm:$0xff]
    %v1877 = vld [vmem:[%s1767 + $0x249] sm:$0xff]
    %v1878 = vld [vmem:[%s1767 + $0x259] sm:$0xff]
    %v1879 = vld [vmem:[%s1767 + $0x261] sm:$0xff]
    %v1880 = vld [vmem:[%s1767 + $0x271] sm:$0xff]
    %v1881 = vld [vmem:[%s1767 + $0x279] sm:$0xff]
    %v1882 = vld [vmem:[%s1767 + $0x289] sm:$0xff]
    %v1883 = vld [vmem:[%s1767 + $0x291] sm:$0xff]
    %v1884 = vld [vmem:[%s1767 + $0x2a1] sm:$0xff]
    %v1885 = vld [vmem:[%s1767 + $0x2a9] sm:$0xff]
    %v1886 = vld [vmem:[%s1767 + $0x2b9] sm:$0xff]
    %v1887 = vld [vmem:[%s1767 + $0x2c1] sm:$0xff]
    %v1888 = vld [vmem:[%s1767 + $0x2d1] sm:$0xff]
    %v1889 = vld [vmem:[%s1767 + $0x2d9] sm:$0xff]
    %v1890 = vld [vmem:[%s1767 + $0x2e9] sm:$0xff]
    %v1891 = vld [vmem:[%s1767 + $0x2f1] sm:$0xff]
    %v1892 = vld [vmem:[%s1767 + $0x301] sm:$0xff]
    %v1893 = vld [vmem:[%s1767 + $0x309] sm:$0xff]
    %v1894 = vld [vmem:[%s1767 + $0x319] sm:$0xff]
    %v1895 = vld [vmem:[%s1767 + $0x321] sm:$0xff]
    %v1896 = vld [vmem:[%s1767 + $0x2] sm:$0xff]
    %v1897 = vld [vmem:[%s1767 + $0xa] sm:$0xff]
    %v1898 = vld [vmem:[%s1767 + $0x1a] sm:$0xff]
    %v1899 = vld [vmem:[%s1767 + $0x22] sm:$0xff]
    %v1900 = vld [vmem:[%s1767 + $0x32] sm:$0xff]
    %v1901 = vld [vmem:[%s1767 + $0x3a] sm:$0xff]
    %v1902 = vld [vmem:[%s1767 + $0x4a] sm:$0xff]
    %v1903 = vld [vmem:[%s1767 + $0x52] sm:$0xff]
    %v1904 = vld [vmem:[%s1767 + $0x62] sm:$0xff]
    %v1905 = vld [vmem:[%s1767 + $0x6a] sm:$0xff]
    %v1906 = vld [vmem:[%s1767 + $0x7a] sm:$0xff]
    %v1907 = vld [vmem:[%s1767 + $0x82] sm:$0xff]
    %v1908 = vld [vmem:[%s1767 + $0x92] sm:$0xff]
    %v1909 = vld [vmem:[%s1767 + $0x9a] sm:$0xff]
    %v1910 = vld [vmem:[%s1767 + $0xaa] sm:$0xff]
    %v1911 = vld [vmem:[%s1767 + $0xb2] sm:$0xff]
    %v1912 = vld [vmem:[%s1767 + $0xc2] sm:$0xff]
    %v1913 = vld [vmem:[%s1767 + $0xca] sm:$0xff]
    %v1914 = vld [vmem:[%s1767 + $0xda] sm:$0xff]
    %v1915 = vld [vmem:[%s1767 + $0xe2] sm:$0xff]
    %v1916 = vld [vmem:[%s1767 + $0xf2] sm:$0xff]
    %v1917 = vld [vmem:[%s1767 + $0xfa] sm:$0xff]
    %v1918 = vld [vmem:[%s1767 + $0x10a] sm:$0xff]
    %v1919 = vld [vmem:[%s1767 + $0x112] sm:$0xff]
    %v1920 = vld [vmem:[%s1767 + $0x122] sm:$0xff]
    %v1921 = vld [vmem:[%s1767 + $0x12a] sm:$0xff]
    %v1922 = vld [vmem:[%s1767 + $0x13a] sm:$0xff]
    %v1923 = vld [vmem:[%s1767 + $0x142] sm:$0xff]
    %v1924 = vld [vmem:[%s1767 + $0x152] sm:$0xff]
    %v1925 = vld [vmem:[%s1767 + $0x15a] sm:$0xff]
    %v1926 = vld [vmem:[%s1767 + $0x16a] sm:$0xff]
    %v1927 = vld [vmem:[%s1767 + $0x172] sm:$0xff]
    %v1928 = vld [vmem:[%s1767 + $0x1b2] sm:$0xff]
    %v1929 = vld [vmem:[%s1767 + $0x1ba] sm:$0xff]
    %v1930 = vld [vmem:[%s1767 + $0x1ca] sm:$0xff]
    %v1931 = vld [vmem:[%s1767 + $0x1d2] sm:$0xff]
    %v1932 = vld [vmem:[%s1767 + $0x1e2] sm:$0xff]
    %v1933 = vld [vmem:[%s1767 + $0x1ea] sm:$0xff]
    %v1934 = vld [vmem:[%s1767 + $0x1fa] sm:$0xff]
    %v1935 = vld [vmem:[%s1767 + $0x202] sm:$0xff]
    %v1936 = vld [vmem:[%s1767 + $0x212] sm:$0xff]
    %v1937 = vld [vmem:[%s1767 + $0x21a] sm:$0xff]
    %v1938 = vld [vmem:[%s1767 + $0x22a] sm:$0xff]
    %v1939 = vld [vmem:[%s1767 + $0x232] sm:$0xff]
    %v1940 = vld [vmem:[%s1767 + $0x242] sm:$0xff]
    %v1941 = vld [vmem:[%s1767 + $0x24a] sm:$0xff]
    %v1942 = vld [vmem:[%s1767 + $0x25a] sm:$0xff]
    %v1943 = vld [vmem:[%s1767 + $0x262] sm:$0xff]
    %v1944 = vld [vmem:[%s1767 + $0x272] sm:$0xff]
    %v1945 = vld [vmem:[%s1767 + $0x27a] sm:$0xff]
    %v1946 = vld [vmem:[%s1767 + $0x28a] sm:$0xff]
    %v1947 = vld [vmem:[%s1767 + $0x292] sm:$0xff]
    %v1948 = vld [vmem:[%s1767 + $0x2a2] sm:$0xff]
    %v1949 = vld [vmem:[%s1767 + $0x2aa] sm:$0xff]
    %v1950 = vld [vmem:[%s1767 + $0x2ba] sm:$0xff]
    %v1951 = vld [vmem:[%s1767 + $0x2c2] sm:$0xff]
    %v1952 = vld [vmem:[%s1767 + $0x2d2] sm:$0xff]
    %v1953 = vld [vmem:[%s1767 + $0x2da] sm:$0xff]
    %v1954 = vld [vmem:[%s1767 + $0x2ea] sm:$0xff]
    %v1955 = vld [vmem:[%s1767 + $0x2f2] sm:$0xff]
    %v1956 = vld [vmem:[%s1767 + $0x302] sm:$0xff]
    %v1957 = vld [vmem:[%s1767 + $0x30a] sm:$0xff]
    %v1958 = vld [vmem:[%s1767 + $0x31a] sm:$0xff]
    %v1959 = vld [vmem:[%s1767 + $0x322] sm:$0xff]
    %2024 = vrot.lane.b32.xlu0 %v1447, 8
    %v2025 = vpop.permute.xlu0 %2024
    %2026 = vrot.lane.b32.xlu0 %v1448, 8
    %v2027 = vpop.permute.xlu0 %2026
    %2028 = vrot.lane.b32.xlu0 %v1449, 8
    %v2029 = vpop.permute.xlu0 %2028
    %2030 = vrot.lane.b32.xlu0 %v1450, 8
    %v2031 = vpop.permute.xlu0 %2030
    %2032 = vrot.lane.b32.xlu0 %v1451, 8
    %v2033 = vpop.permute.xlu0 %2032
    %2034 = vrot.lane.b32.xlu0 %v1452, 8
    %v2035 = vpop.permute.xlu0 %2034
    %2036 = vrot.lane.b32.xlu0 %v1453, 8
    %v2037 = vpop.permute.xlu0 %2036
    %2038 = vrot.lane.b32.xlu0 %v1454, 8
    %v2039 = vpop.permute.xlu0 %2038
    %2040 = vrot.lane.b32.xlu0 %v1455, 8
    %v2041 = vpop.permute.xlu0 %2040
    %2042 = vrot.lane.b32.xlu0 %v1456, 8
    %v2043 = vpop.permute.xlu0 %2042
    %2044 = vrot.lane.b32.xlu0 %v1457, 8
    %v2045 = vpop.permute.xlu0 %2044
    %2046 = vrot.lane.b32.xlu0 %v1458, 8
    %v2047 = vpop.permute.xlu0 %2046
    %2048 = vrot.lane.b32.xlu0 %v1459, 8
    %v2049 = vpop.permute.xlu0 %2048
    %2050 = vrot.lane.b32.xlu0 %v1460, 8
    %v2051 = vpop.permute.xlu0 %2050
    %2052 = vrot.lane.b32.xlu0 %v1461, 8
    %v2053 = vpop.permute.xlu0 %2052
    %2054 = vrot.lane.b32.xlu0 %v1462, 8
    %v2055 = vpop.permute.xlu0 %2054
    %2056 = vrot.lane.b32.xlu0 %v1463, 8
    %v2057 = vpop.permute.xlu0 %2056
    %2058 = vrot.lane.b32.xlu0 %v1464, 8
    %v2059 = vpop.permute.xlu0 %2058
    %2060 = vrot.lane.b32.xlu0 %v1465, 8
    %v2061 = vpop.permute.xlu0 %2060
    %2062 = vrot.lane.b32.xlu0 %v1466, 8
    %v2063 = vpop.permute.xlu0 %2062
    %2064 = vrot.lane.b32.xlu0 %v1467, 8
    %v2065 = vpop.permute.xlu0 %2064
    %2066 = vrot.lane.b32.xlu0 %v1468, 8
    %v2067 = vpop.permute.xlu0 %2066
    %2068 = vrot.lane.b32.xlu0 %v1469, 8
    %v2069 = vpop.permute.xlu0 %2068
    %2070 = vrot.lane.b32.xlu0 %v1470, 8
    %v2071 = vpop.permute.xlu0 %2070
    %2072 = vrot.lane.b32.xlu0 %v1471, 8
    %v2073 = vpop.permute.xlu0 %2072
    %2074 = vrot.lane.b32.xlu0 %v1472, 8
    %v2075 = vpop.permute.xlu0 %2074
    %2076 = vrot.lane.b32.xlu0 %v1473, 8
    %v2077 = vpop.permute.xlu0 %2076
    %2078 = vrot.lane.b32.xlu0 %v1474, 8
    %v2079 = vpop.permute.xlu0 %2078
    %2080 = vrot.lane.b32.xlu0 %v1475, 8
    %v2081 = vpop.permute.xlu0 %2080
    %2082 = vrot.lane.b32.xlu0 %v1476, 8
    %v2083 = vpop.permute.xlu0 %2082
    %2084 = vrot.lane.b32.xlu0 %v1477, 8
    %v2085 = vpop.permute.xlu0 %2084
    %2086 = vrot.lane.b32.xlu0 %v1478, 8
    %v2087 = vpop.permute.xlu0 %2086
    %2088 = vrot.lane.b32.xlu0 %v1479, 8
    %v2089 = vpop.permute.xlu0 %2088
    %2090 = vrot.lane.b32.xlu0 %v1480, 8
    %v2091 = vpop.permute.xlu0 %2090
    %2092 = vrot.lane.b32.xlu0 %v1481, 8
    %v2093 = vpop.permute.xlu0 %2092
    %2094 = vrot.lane.b32.xlu0 %v1482, 8
    %v2095 = vpop.permute.xlu0 %2094
    %2096 = vrot.lane.b32.xlu0 %v1483, 8
    %v2097 = vpop.permute.xlu0 %2096
    %2098 = vrot.lane.b32.xlu0 %v1484, 8
    %v2099 = vpop.permute.xlu0 %2098
    %2100 = vrot.lane.b32.xlu0 %v1485, 8
    %v2101 = vpop.permute.xlu0 %2100
    %2102 = vrot.lane.b32.xlu0 %v1486, 8
    %v2103 = vpop.permute.xlu0 %2102
    %2104 = vrot.lane.b32.xlu0 %v1487, 8
    %v2105 = vpop.permute.xlu0 %2104
    %2106 = vrot.lane.b32.xlu0 %v1488, 8
    %v2107 = vpop.permute.xlu0 %2106
    %2108 = vrot.lane.b32.xlu0 %v1489, 8
    %v2109 = vpop.permute.xlu0 %2108
    %2110 = vrot.lane.b32.xlu0 %v1490, 8
    %v2111 = vpop.permute.xlu0 %2110
    %2112 = vrot.lane.b32.xlu0 %v1491, 8
    %v2113 = vpop.permute.xlu0 %2112
    %2114 = vrot.lane.b32.xlu0 %v1492, 8
    %v2115 = vpop.permute.xlu0 %2114
    %2116 = vrot.lane.b32.xlu0 %v1493, 8
    %v2117 = vpop.permute.xlu0 %2116
    %2118 = vrot.lane.b32.xlu0 %v1494, 8
    %v2119 = vpop.permute.xlu0 %2118
    %2120 = vrot.lane.b32.xlu0 %v1495, 8
    %v2121 = vpop.permute.xlu0 %2120
    %2122 = vrot.lane.b32.xlu0 %v1496, 8
    %v2123 = vpop.permute.xlu0 %2122
    %2124 = vrot.lane.b32.xlu0 %v1497, 8
    %v2125 = vpop.permute.xlu0 %2124
    %2126 = vrot.lane.b32.xlu0 %v1498, 8
    %v2127 = vpop.permute.xlu0 %2126
    %2128 = vrot.lane.b32.xlu0 %v1499, 8
    %v2129 = vpop.permute.xlu0 %2128
    %2130 = vrot.lane.b32.xlu0 %v1500, 8
    %v2131 = vpop.permute.xlu0 %2130
    %2132 = vrot.lane.b32.xlu0 %v1501, 8
    %v2133 = vpop.permute.xlu0 %2132
    %2134 = vrot.lane.b32.xlu0 %v1502, 8
    %v2135 = vpop.permute.xlu0 %2134
    %2136 = vrot.lane.b32.xlu0 %v1503, 8
    %v2137 = vpop.permute.xlu0 %2136
    %2138 = vrot.lane.b32.xlu0 %v1504, 8
    %v2139 = vpop.permute.xlu0 %2138
    %2140 = vrot.lane.b32.xlu0 %v1505, 8
    %v2141 = vpop.permute.xlu0 %2140
    %2142 = vrot.lane.b32.xlu0 %v1506, 8
    %v2143 = vpop.permute.xlu0 %2142
    %2144 = vrot.lane.b32.xlu0 %v1507, 8
    %v2145 = vpop.permute.xlu0 %2144
    %2146 = vrot.lane.b32.xlu0 %v1508, 8
    %v2147 = vpop.permute.xlu0 %2146
    %2148 = vrot.lane.b32.xlu0 %v1509, 8
    %v2149 = vpop.permute.xlu0 %2148
    %2150 = vrot.lane.b32.xlu0 %v1510, 8
    %v2151 = vpop.permute.xlu0 %2150
    %2280 = vrot.lane.b32.xlu0 %v1511, 16
    %v2281 = vpop.permute.xlu0 %2280
    %2282 = vrot.lane.b32.xlu0 %v1512, 16
    %v2283 = vpop.permute.xlu0 %2282
    %2284 = vrot.lane.b32.xlu0 %v1513, 16
    %v2285 = vpop.permute.xlu0 %2284
    %2286 = vrot.lane.b32.xlu0 %v1514, 16
    %v2287 = vpop.permute.xlu0 %2286
    %2288 = vrot.lane.b32.xlu0 %v1515, 16
    %v2289 = vpop.permute.xlu0 %2288
    %2290 = vrot.lane.b32.xlu0 %v1516, 16
    %v2291 = vpop.permute.xlu0 %2290
    %2292 = vrot.lane.b32.xlu0 %v1517, 16
    %v2293 = vpop.permute.xlu0 %2292
    %2294 = vrot.lane.b32.xlu0 %v1518, 16
    %v2295 = vpop.permute.xlu0 %2294
    %2296 = vrot.lane.b32.xlu0 %v1519, 16
    %v2297 = vpop.permute.xlu0 %2296
    %2298 = vrot.lane.b32.xlu0 %v1520, 16
    %v2299 = vpop.permute.xlu0 %2298
    %2300 = vrot.lane.b32.xlu0 %v1521, 16
    %v2301 = vpop.permute.xlu0 %2300
    %2302 = vrot.lane.b32.xlu0 %v1522, 16
    %v2303 = vpop.permute.xlu0 %2302
    %2304 = vrot.lane.b32.xlu0 %v1523, 16
    %v2305 = vpop.permute.xlu0 %2304
    %2306 = vrot.lane.b32.xlu0 %v1524, 16
    %v2307 = vpop.permute.xlu0 %2306
    %2308 = vrot.lane.b32.xlu0 %v1525, 16
    %v2309 = vpop.permute.xlu0 %2308
    %2310 = vrot.lane.b32.xlu0 %v1526, 16
    %v2311 = vpop.permute.xlu0 %2310
    %2312 = vrot.lane.b32.xlu0 %v1527, 16
    %v2313 = vpop.permute.xlu0 %2312
    %2314 = vrot.lane.b32.xlu0 %v1528, 16
    %v2315 = vpop.permute.xlu0 %2314
    %2316 = vrot.lane.b32.xlu0 %v1529, 16
    %v2317 = vpop.permute.xlu0 %2316
    %2318 = vrot.lane.b32.xlu0 %v1530, 16
    %v2319 = vpop.permute.xlu0 %2318
    %2320 = vrot.lane.b32.xlu0 %v1531, 16
    %v2321 = vpop.permute.xlu0 %2320
    %2322 = vrot.lane.b32.xlu0 %v1532, 16
    %v2323 = vpop.permute.xlu0 %2322
    %2324 = vrot.lane.b32.xlu0 %v1533, 16
    %v2325 = vpop.permute.xlu0 %2324
    %2326 = vrot.lane.b32.xlu0 %v1534, 16
    %v2327 = vpop.permute.xlu0 %2326
    %2328 = vrot.lane.b32.xlu0 %v1535, 16
    %v2329 = vpop.permute.xlu0 %2328
    %2330 = vrot.lane.b32.xlu0 %v1536, 16
    %v2331 = vpop.permute.xlu0 %2330
    %2332 = vrot.lane.b32.xlu0 %v1537, 16
    %v2333 = vpop.permute.xlu0 %2332
    %2334 = vrot.lane.b32.xlu0 %v1538, 16
    %v2335 = vpop.permute.xlu0 %2334
    %2336 = vrot.lane.b32.xlu0 %v1539, 16
    %v2337 = vpop.permute.xlu0 %2336
    %2338 = vrot.lane.b32.xlu0 %v1540, 16
    %v2339 = vpop.permute.xlu0 %2338
    %2340 = vrot.lane.b32.xlu0 %v1541, 16
    %v2341 = vpop.permute.xlu0 %2340
    %2342 = vrot.lane.b32.xlu0 %v1542, 16
    %v2343 = vpop.permute.xlu0 %2342
    %2344 = vrot.lane.b32.xlu0 %v1543, 16
    %v2345 = vpop.permute.xlu0 %2344
    %2346 = vrot.lane.b32.xlu0 %v1544, 16
    %v2347 = vpop.permute.xlu0 %2346
    %2348 = vrot.lane.b32.xlu0 %v1545, 16
    %v2349 = vpop.permute.xlu0 %2348
    %2350 = vrot.lane.b32.xlu0 %v1546, 16
    %v2351 = vpop.permute.xlu0 %2350
    %2352 = vrot.lane.b32.xlu0 %v1547, 16
    %v2353 = vpop.permute.xlu0 %2352
    %2354 = vrot.lane.b32.xlu0 %v1548, 16
    %v2355 = vpop.permute.xlu0 %2354
    %2356 = vrot.lane.b32.xlu0 %v1549, 16
    %v2357 = vpop.permute.xlu0 %2356
    %2358 = vrot.lane.b32.xlu0 %v1550, 16
    %v2359 = vpop.permute.xlu0 %2358
    %2360 = vrot.lane.b32.xlu0 %v1551, 16
    %v2361 = vpop.permute.xlu0 %2360
    %2362 = vrot.lane.b32.xlu0 %v1552, 16
    %v2363 = vpop.permute.xlu0 %2362
    %2364 = vrot.lane.b32.xlu0 %v1553, 16
    %v2365 = vpop.permute.xlu0 %2364
    %2366 = vrot.lane.b32.xlu0 %v1554, 16
    %v2367 = vpop.permute.xlu0 %2366
    %2368 = vrot.lane.b32.xlu0 %v1555, 16
    %v2369 = vpop.permute.xlu0 %2368
    %2370 = vrot.lane.b32.xlu0 %v1556, 16
    %v2371 = vpop.permute.xlu0 %2370
    %2372 = vrot.lane.b32.xlu0 %v1557, 16
    %v2373 = vpop.permute.xlu0 %2372
    %2374 = vrot.lane.b32.xlu0 %v1558, 16
    %v2375 = vpop.permute.xlu0 %2374
    %2376 = vrot.lane.b32.xlu0 %v1559, 16
    %v2377 = vpop.permute.xlu0 %2376
    %2378 = vrot.lane.b32.xlu0 %v1560, 16
    %v2379 = vpop.permute.xlu0 %2378
    %2380 = vrot.lane.b32.xlu0 %v1561, 16
    %v2381 = vpop.permute.xlu0 %2380
    %2382 = vrot.lane.b32.xlu0 %v1562, 16
    %v2383 = vpop.permute.xlu0 %2382
    %2384 = vrot.lane.b32.xlu0 %v1563, 16
    %v2385 = vpop.permute.xlu0 %2384
    %2386 = vrot.lane.b32.xlu0 %v1564, 16
    %v2387 = vpop.permute.xlu0 %2386
    %2388 = vrot.lane.b32.xlu0 %v1565, 16
    %v2389 = vpop.permute.xlu0 %2388
    %2390 = vrot.lane.b32.xlu0 %v1566, 16
    %v2391 = vpop.permute.xlu0 %2390
    %2392 = vrot.lane.b32.xlu0 %v1567, 16
    %v2393 = vpop.permute.xlu0 %2392
    %2394 = vrot.lane.b32.xlu0 %v1568, 16
    %v2395 = vpop.permute.xlu0 %2394
    %2396 = vrot.lane.b32.xlu0 %v1569, 16
    %v2397 = vpop.permute.xlu0 %2396
    %2398 = vrot.lane.b32.xlu0 %v1570, 16
    %v2399 = vpop.permute.xlu0 %2398
    %2400 = vrot.lane.b32.xlu0 %v1571, 16
    %v2401 = vpop.permute.xlu0 %2400
    %2402 = vrot.lane.b32.xlu0 %v1572, 16
    %v2403 = vpop.permute.xlu0 %2402
    %2404 = vrot.lane.b32.xlu0 %v1573, 16
    %v2405 = vpop.permute.xlu0 %2404
    %2406 = vrot.lane.b32.xlu0 %v1574, 16
    %v2407 = vpop.permute.xlu0 %2406
    %2536 = vrot.lane.b32.xlu0 %v1575, 24
    %v2537 = vpop.permute.xlu0 %2536
    %2538 = vrot.lane.b32.xlu0 %v1576, 24
    %v2539 = vpop.permute.xlu0 %2538
    %2540 = vrot.lane.b32.xlu0 %v1577, 24
    %v2541 = vpop.permute.xlu0 %2540
    %2542 = vrot.lane.b32.xlu0 %v1578, 24
    %v2543 = vpop.permute.xlu0 %2542
    %2544 = vrot.lane.b32.xlu0 %v1579, 24
    %v2545 = vpop.permute.xlu0 %2544
    %2546 = vrot.lane.b32.xlu0 %v1580, 24
    %v2547 = vpop.permute.xlu0 %2546
    %2548 = vrot.lane.b32.xlu0 %v1581, 24
    %v2549 = vpop.permute.xlu0 %2548
    %2550 = vrot.lane.b32.xlu0 %v1582, 24
    %v2551 = vpop.permute.xlu0 %2550
    %2552 = vrot.lane.b32.xlu0 %v1583, 24
    %v2553 = vpop.permute.xlu0 %2552
    %2554 = vrot.lane.b32.xlu0 %v1584, 24
    %v2555 = vpop.permute.xlu0 %2554
    %2556 = vrot.lane.b32.xlu0 %v1585, 24
    %v2557 = vpop.permute.xlu0 %2556
    %2558 = vrot.lane.b32.xlu0 %v1586, 24
    %v2559 = vpop.permute.xlu0 %2558
    %2560 = vrot.lane.b32.xlu0 %v1587, 24
    %v2561 = vpop.permute.xlu0 %2560
    %2562 = vrot.lane.b32.xlu0 %v1588, 24
    %v2563 = vpop.permute.xlu0 %2562
    %2564 = vrot.lane.b32.xlu0 %v1589, 24
    %v2565 = vpop.permute.xlu0 %2564
    %2566 = vrot.lane.b32.xlu0 %v1590, 24
    %v2567 = vpop.permute.xlu0 %2566
    %2568 = vrot.lane.b32.xlu0 %v1591, 24
    %v2569 = vpop.permute.xlu0 %2568
    %2570 = vrot.lane.b32.xlu0 %v1592, 24
    %v2571 = vpop.permute.xlu0 %2570
    %2572 = vrot.lane.b32.xlu0 %v1593, 24
    %v2573 = vpop.permute.xlu0 %2572
    %2574 = vrot.lane.b32.xlu0 %v1594, 24
    %v2575 = vpop.permute.xlu0 %2574
    %2576 = vrot.lane.b32.xlu0 %v1595, 24
    %v2577 = vpop.permute.xlu0 %2576
    %2578 = vrot.lane.b32.xlu0 %v1596, 24
    %v2579 = vpop.permute.xlu0 %2578
    %2580 = vrot.lane.b32.xlu0 %v1597, 24
    %v2581 = vpop.permute.xlu0 %2580
    %2582 = vrot.lane.b32.xlu0 %v1598, 24
    %v2583 = vpop.permute.xlu0 %2582
    %2584 = vrot.lane.b32.xlu0 %v1599, 24
    %v2585 = vpop.permute.xlu0 %2584
    %2586 = vrot.lane.b32.xlu0 %v1600, 24
    %v2587 = vpop.permute.xlu0 %2586
    %2588 = vrot.lane.b32.xlu0 %v1601, 24
    %v2589 = vpop.permute.xlu0 %2588
    %2590 = vrot.lane.b32.xlu0 %v1602, 24
    %v2591 = vpop.permute.xlu0 %2590
    %2592 = vrot.lane.b32.xlu0 %v1603, 24
    %v2593 = vpop.permute.xlu0 %2592
    %2594 = vrot.lane.b32.xlu0 %v1604, 24
    %v2595 = vpop.permute.xlu0 %2594
    %2596 = vrot.lane.b32.xlu0 %v1605, 24
    %v2597 = vpop.permute.xlu0 %2596
    %2598 = vrot.lane.b32.xlu0 %v1606, 24
    %v2599 = vpop.permute.xlu0 %2598
    %2600 = vrot.lane.b32.xlu0 %v1607, 24
    %v2601 = vpop.permute.xlu0 %2600
    %2602 = vrot.lane.b32.xlu0 %v1608, 24
    %v2603 = vpop.permute.xlu0 %2602
    %2604 = vrot.lane.b32.xlu0 %v1609, 24
    %v2605 = vpop.permute.xlu0 %2604
    %2606 = vrot.lane.b32.xlu0 %v1610, 24
    %v2607 = vpop.permute.xlu0 %2606
    %2608 = vrot.lane.b32.xlu0 %v1611, 24
    %v2609 = vpop.permute.xlu0 %2608
    %2610 = vrot.lane.b32.xlu0 %v1612, 24
    %v2611 = vpop.permute.xlu0 %2610
    %2612 = vrot.lane.b32.xlu0 %v1613, 24
    %v2613 = vpop.permute.xlu0 %2612
    %2614 = vrot.lane.b32.xlu0 %v1614, 24
    %v2615 = vpop.permute.xlu0 %2614
    %2616 = vrot.lane.b32.xlu0 %v1615, 24
    %v2617 = vpop.permute.xlu0 %2616
    %2618 = vrot.lane.b32.xlu0 %v1616, 24
    %v2619 = vpop.permute.xlu0 %2618
    %2620 = vrot.lane.b32.xlu0 %v1617, 24
    %v2621 = vpop.permute.xlu0 %2620
    %2622 = vrot.lane.b32.xlu0 %v1618, 24
    %v2623 = vpop.permute.xlu0 %2622
    %2624 = vrot.lane.b32.xlu0 %v1619, 24
    %v2625 = vpop.permute.xlu0 %2624
    %2626 = vrot.lane.b32.xlu0 %v1620, 24
    %v2627 = vpop.permute.xlu0 %2626
    %2628 = vrot.lane.b32.xlu0 %v1621, 24
    %v2629 = vpop.permute.xlu0 %2628
    %2630 = vrot.lane.b32.xlu0 %v1622, 24
    %v2631 = vpop.permute.xlu0 %2630
    %2632 = vrot.lane.b32.xlu0 %v1623, 24
    %v2633 = vpop.permute.xlu0 %2632
    %2634 = vrot.lane.b32.xlu0 %v1624, 24
    %v2635 = vpop.permute.xlu0 %2634
    %2636 = vrot.lane.b32.xlu0 %v1625, 24
    %v2637 = vpop.permute.xlu0 %2636
    %2638 = vrot.lane.b32.xlu0 %v1626, 24
    %v2639 = vpop.permute.xlu0 %2638
    %2640 = vrot.lane.b32.xlu0 %v1627, 24
    %v2641 = vpop.permute.xlu0 %2640
    %2642 = vrot.lane.b32.xlu0 %v1628, 24
    %v2643 = vpop.permute.xlu0 %2642
    %2644 = vrot.lane.b32.xlu0 %v1629, 24
    %v2645 = vpop.permute.xlu0 %2644
    %2646 = vrot.lane.b32.xlu0 %v1630, 24
    %v2647 = vpop.permute.xlu0 %2646
    %2648 = vrot.lane.b32.xlu0 %v1631, 24
    %v2649 = vpop.permute.xlu0 %2648
    %2650 = vrot.lane.b32.xlu0 %v1632, 24
    %v2651 = vpop.permute.xlu0 %2650
    %2652 = vrot.lane.b32.xlu0 %v1633, 24
    %v2653 = vpop.permute.xlu0 %2652
    %2654 = vrot.lane.b32.xlu0 %v1634, 24
    %v2655 = vpop.permute.xlu0 %2654
    %2656 = vrot.lane.b32.xlu0 %v1635, 24
    %v2657 = vpop.permute.xlu0 %2656
    %2658 = vrot.lane.b32.xlu0 %v1636, 24
    %v2659 = vpop.permute.xlu0 %2658
    %2660 = vrot.lane.b32.xlu0 %v1637, 24
    %v2661 = vpop.permute.xlu0 %2660
    %2662 = vrot.lane.b32.xlu0 %v1638, 24
    %v2663 = vpop.permute.xlu0 %2662
    %2792 = vrot.lane.b32.xlu0 %v1639, 32
    %v2793 = vpop.permute.xlu0 %2792
    %2794 = vrot.lane.b32.xlu0 %v1640, 32
    %v2795 = vpop.permute.xlu0 %2794
    %2796 = vrot.lane.b32.xlu0 %v1641, 32
    %v2797 = vpop.permute.xlu0 %2796
    %2798 = vrot.lane.b32.xlu0 %v1642, 32
    %v2799 = vpop.permute.xlu0 %2798
    %2800 = vrot.lane.b32.xlu0 %v1643, 32
    %v2801 = vpop.permute.xlu0 %2800
    %2802 = vrot.lane.b32.xlu0 %v1644, 32
    %v2803 = vpop.permute.xlu0 %2802
    %2804 = vrot.lane.b32.xlu0 %v1645, 32
    %v2805 = vpop.permute.xlu0 %2804
    %2806 = vrot.lane.b32.xlu0 %v1646, 32
    %v2807 = vpop.permute.xlu0 %2806
    %2808 = vrot.lane.b32.xlu0 %v1647, 32
    %v2809 = vpop.permute.xlu0 %2808
    %2810 = vrot.lane.b32.xlu0 %v1648, 32
    %v2811 = vpop.permute.xlu0 %2810
    %2812 = vrot.lane.b32.xlu0 %v1649, 32
    %v2813 = vpop.permute.xlu0 %2812
    %2814 = vrot.lane.b32.xlu0 %v1650, 32
    %v2815 = vpop.permute.xlu0 %2814
    %2816 = vrot.lane.b32.xlu0 %v1651, 32
    %v2817 = vpop.permute.xlu0 %2816
    %2818 = vrot.lane.b32.xlu0 %v1652, 32
    %v2819 = vpop.permute.xlu0 %2818
    %2820 = vrot.lane.b32.xlu0 %v1653, 32
    %v2821 = vpop.permute.xlu0 %2820
    %2822 = vrot.lane.b32.xlu0 %v1654, 32
    %v2823 = vpop.permute.xlu0 %2822
    %2824 = vrot.lane.b32.xlu0 %v1655, 32
    %v2825 = vpop.permute.xlu0 %2824
    %2826 = vrot.lane.b32.xlu0 %v1656, 32
    %v2827 = vpop.permute.xlu0 %2826
    %2828 = vrot.lane.b32.xlu0 %v1657, 32
    %v2829 = vpop.permute.xlu0 %2828
    %2830 = vrot.lane.b32.xlu0 %v1658, 32
    %v2831 = vpop.permute.xlu0 %2830
    %2832 = vrot.lane.b32.xlu0 %v1659, 32
    %v2833 = vpop.permute.xlu0 %2832
    %2834 = vrot.lane.b32.xlu0 %v1660, 32
    %v2835 = vpop.permute.xlu0 %2834
    %2836 = vrot.lane.b32.xlu0 %v1661, 32
    %v2837 = vpop.permute.xlu0 %2836
    %2838 = vrot.lane.b32.xlu0 %v1662, 32
    %v2839 = vpop.permute.xlu0 %2838
    %2840 = vrot.lane.b32.xlu0 %v1663, 32
    %v2841 = vpop.permute.xlu0 %2840
    %2842 = vrot.lane.b32.xlu0 %v1664, 32
    %v2843 = vpop.permute.xlu0 %2842
    %2844 = vrot.lane.b32.xlu0 %v1665, 32
    %v2845 = vpop.permute.xlu0 %2844
    %2846 = vrot.lane.b32.xlu0 %v1666, 32
    %v2847 = vpop.permute.xlu0 %2846
    %2848 = vrot.lane.b32.xlu0 %v1667, 32
    %v2849 = vpop.permute.xlu0 %2848
    %2850 = vrot.lane.b32.xlu0 %v1668, 32
    %v2851 = vpop.permute.xlu0 %2850
    %2852 = vrot.lane.b32.xlu0 %v1669, 32
    %v2853 = vpop.permute.xlu0 %2852
    %2854 = vrot.lane.b32.xlu0 %v1670, 32
    %v2855 = vpop.permute.xlu0 %2854
    %2856 = vrot.lane.b32.xlu0 %v1671, 32
    %v2857 = vpop.permute.xlu0 %2856
    %2858 = vrot.lane.b32.xlu0 %v1672, 32
    %v2859 = vpop.permute.xlu0 %2858
    %2860 = vrot.lane.b32.xlu0 %v1673, 32
    %v2861 = vpop.permute.xlu0 %2860
    %2862 = vrot.lane.b32.xlu0 %v1674, 32
    %v2863 = vpop.permute.xlu0 %2862
    %2864 = vrot.lane.b32.xlu0 %v1675, 32
    %v2865 = vpop.permute.xlu0 %2864
    %2866 = vrot.lane.b32.xlu0 %v1676, 32
    %v2867 = vpop.permute.xlu0 %2866
    %2868 = vrot.lane.b32.xlu0 %v1677, 32
    %v2869 = vpop.permute.xlu0 %2868
    %2870 = vrot.lane.b32.xlu0 %v1678, 32
    %v2871 = vpop.permute.xlu0 %2870
    %2872 = vrot.lane.b32.xlu0 %v1679, 32
    %v2873 = vpop.permute.xlu0 %2872
    %2874 = vrot.lane.b32.xlu0 %v1680, 32
    %v2875 = vpop.permute.xlu0 %2874
    %2876 = vrot.lane.b32.xlu0 %v1681, 32
    %v2877 = vpop.permute.xlu0 %2876
    %2878 = vrot.lane.b32.xlu0 %v1682, 32
    %v2879 = vpop.permute.xlu0 %2878
    %2880 = vrot.lane.b32.xlu0 %v1683, 32
    %v2881 = vpop.permute.xlu0 %2880
    %2882 = vrot.lane.b32.xlu0 %v1684, 32
    %v2883 = vpop.permute.xlu0 %2882
    %2884 = vrot.lane.b32.xlu0 %v1685, 32
    %v2885 = vpop.permute.xlu0 %2884
    %2886 = vrot.lane.b32.xlu0 %v1686, 32
    %v2887 = vpop.permute.xlu0 %2886
    %2888 = vrot.lane.b32.xlu0 %v1687, 32
    %v2889 = vpop.permute.xlu0 %2888
    %2890 = vrot.lane.b32.xlu0 %v1688, 32
    %v2891 = vpop.permute.xlu0 %2890
    %2892 = vrot.lane.b32.xlu0 %v1689, 32
    %v2893 = vpop.permute.xlu0 %2892
    %2894 = vrot.lane.b32.xlu0 %v1690, 32
    %v2895 = vpop.permute.xlu0 %2894
    %2896 = vrot.lane.b32.xlu0 %v1691, 32
    %v2897 = vpop.permute.xlu0 %2896
    %2898 = vrot.lane.b32.xlu0 %v1692, 32
    %v2899 = vpop.permute.xlu0 %2898
    %2900 = vrot.lane.b32.xlu0 %v1693, 32
    %v2901 = vpop.permute.xlu0 %2900
    %2902 = vrot.lane.b32.xlu0 %v1694, 32
    %v2903 = vpop.permute.xlu0 %2902
    %2904 = vrot.lane.b32.xlu0 %v1695, 32
    %v2905 = vpop.permute.xlu0 %2904
    %2906 = vrot.lane.b32.xlu0 %v1696, 32
    %v2907 = vpop.permute.xlu0 %2906
    %2908 = vrot.lane.b32.xlu0 %v1697, 32
    %v2909 = vpop.permute.xlu0 %2908
    %2910 = vrot.lane.b32.xlu0 %v1698, 32
    %v2911 = vpop.permute.xlu0 %2910
    %2912 = vrot.lane.b32.xlu0 %v1699, 32
    %v2913 = vpop.permute.xlu0 %2912
    %2914 = vrot.lane.b32.xlu0 %v1700, 32
    %v2915 = vpop.permute.xlu0 %2914
    %2916 = vrot.lane.b32.xlu0 %v1701, 32
    %v2917 = vpop.permute.xlu0 %2916
    %2918 = vrot.lane.b32.xlu0 %v1702, 32
    %v2919 = vpop.permute.xlu0 %2918
    %3048 = vrot.lane.b32.xlu0 %v1703, 40
    %v3049 = vpop.permute.xlu0 %3048
    %3050 = vrot.lane.b32.xlu0 %v1704, 40
    %v3051 = vpop.permute.xlu0 %3050
    %3052 = vrot.lane.b32.xlu0 %v1705, 40
    %v3053 = vpop.permute.xlu0 %3052
    %3054 = vrot.lane.b32.xlu0 %v1706, 40
    %v3055 = vpop.permute.xlu0 %3054
    %3056 = vrot.lane.b32.xlu0 %v1707, 40
    %v3057 = vpop.permute.xlu0 %3056
    %3058 = vrot.lane.b32.xlu0 %v1708, 40
    %v3059 = vpop.permute.xlu0 %3058
    %3060 = vrot.lane.b32.xlu0 %v1709, 40
    %v3061 = vpop.permute.xlu0 %3060
    %3062 = vrot.lane.b32.xlu0 %v1710, 40
    %v3063 = vpop.permute.xlu0 %3062
    %3064 = vrot.lane.b32.xlu0 %v1711, 40
    %v3065 = vpop.permute.xlu0 %3064
    %3066 = vrot.lane.b32.xlu0 %v1712, 40
    %v3067 = vpop.permute.xlu0 %3066
    %3068 = vrot.lane.b32.xlu0 %v1713, 40
    %v3069 = vpop.permute.xlu0 %3068
    %3070 = vrot.lane.b32.xlu0 %v1714, 40
    %v3071 = vpop.permute.xlu0 %3070
    %3072 = vrot.lane.b32.xlu0 %v1715, 40
    %v3073 = vpop.permute.xlu0 %3072
    %3074 = vrot.lane.b32.xlu0 %v1716, 40
    %v3075 = vpop.permute.xlu0 %3074
    %3076 = vrot.lane.b32.xlu0 %v1717, 40
    %v3077 = vpop.permute.xlu0 %3076
    %3078 = vrot.lane.b32.xlu0 %v1718, 40
    %v3079 = vpop.permute.xlu0 %3078
    %3080 = vrot.lane.b32.xlu0 %v1719, 40
    %v3081 = vpop.permute.xlu0 %3080
    %3082 = vrot.lane.b32.xlu0 %v1720, 40
    %v3083 = vpop.permute.xlu0 %3082
    %3084 = vrot.lane.b32.xlu0 %v1721, 40
    %v3085 = vpop.permute.xlu0 %3084
    %3086 = vrot.lane.b32.xlu0 %v1722, 40
    %v3087 = vpop.permute.xlu0 %3086
    %3088 = vrot.lane.b32.xlu0 %v1723, 40
    %v3089 = vpop.permute.xlu0 %3088
    %3090 = vrot.lane.b32.xlu0 %v1724, 40
    %v3091 = vpop.permute.xlu0 %3090
    %3092 = vrot.lane.b32.xlu0 %v1725, 40
    %v3093 = vpop.permute.xlu0 %3092
    %3094 = vrot.lane.b32.xlu0 %v1726, 40
    %v3095 = vpop.permute.xlu0 %3094
    %3096 = vrot.lane.b32.xlu0 %v1727, 40
    %v3097 = vpop.permute.xlu0 %3096
    %3098 = vrot.lane.b32.xlu0 %v1728, 40
    %v3099 = vpop.permute.xlu0 %3098
    %3100 = vrot.lane.b32.xlu0 %v1729, 40
    %v3101 = vpop.permute.xlu0 %3100
    %3102 = vrot.lane.b32.xlu0 %v1730, 40
    %v3103 = vpop.permute.xlu0 %3102
    %3104 = vrot.lane.b32.xlu0 %v1731, 40
    %v3105 = vpop.permute.xlu0 %3104
    %3106 = vrot.lane.b32.xlu0 %v1732, 40
    %v3107 = vpop.permute.xlu0 %3106
    %3108 = vrot.lane.b32.xlu0 %v1733, 40
    %v3109 = vpop.permute.xlu0 %3108
    %3110 = vrot.lane.b32.xlu0 %v1734, 40
    %v3111 = vpop.permute.xlu0 %3110
    %3112 = vrot.lane.b32.xlu0 %v1735, 40
    %v3113 = vpop.permute.xlu0 %3112
    %3114 = vrot.lane.b32.xlu0 %v1736, 40
    %v3115 = vpop.permute.xlu0 %3114
    %3116 = vrot.lane.b32.xlu0 %v1737, 40
    %v3117 = vpop.permute.xlu0 %3116
    %3118 = vrot.lane.b32.xlu0 %v1738, 40
    %v3119 = vpop.permute.xlu0 %3118
    %3120 = vrot.lane.b32.xlu0 %v1739, 40
    %v3121 = vpop.permute.xlu0 %3120
    %3122 = vrot.lane.b32.xlu0 %v1740, 40
    %v3123 = vpop.permute.xlu0 %3122
    %3124 = vrot.lane.b32.xlu0 %v1741, 40
    %v3125 = vpop.permute.xlu0 %3124
    %3126 = vrot.lane.b32.xlu0 %v1742, 40
    %v3127 = vpop.permute.xlu0 %3126
    %3128 = vrot.lane.b32.xlu0 %v1743, 40
    %v3129 = vpop.permute.xlu0 %3128
    %3130 = vrot.lane.b32.xlu0 %v1744, 40
    %v3131 = vpop.permute.xlu0 %3130
    %3132 = vrot.lane.b32.xlu0 %v1745, 40
    %v3133 = vpop.permute.xlu0 %3132
    %3134 = vrot.lane.b32.xlu0 %v1746, 40
    %v3135 = vpop.permute.xlu0 %3134
    %3136 = vrot.lane.b32.xlu0 %v1747, 40
    %v3137 = vpop.permute.xlu0 %3136
    %3138 = vrot.lane.b32.xlu0 %v1748, 40
    %v3139 = vpop.permute.xlu0 %3138
    %3140 = vrot.lane.b32.xlu0 %v1749, 40
    %v3141 = vpop.permute.xlu0 %3140
    %3142 = vrot.lane.b32.xlu0 %v1750, 40
    %v3143 = vpop.permute.xlu0 %3142
    %3144 = vrot.lane.b32.xlu0 %v1751, 40
    %v3145 = vpop.permute.xlu0 %3144
    %3146 = vrot.lane.b32.xlu0 %v1752, 40
    %v3147 = vpop.permute.xlu0 %3146
    %3148 = vrot.lane.b32.xlu0 %v1753, 40
    %v3149 = vpop.permute.xlu0 %3148
    %3150 = vrot.lane.b32.xlu0 %v1754, 40
    %v3151 = vpop.permute.xlu0 %3150
    %3152 = vrot.lane.b32.xlu0 %v1755, 40
    %v3153 = vpop.permute.xlu0 %3152
    %3154 = vrot.lane.b32.xlu0 %v1756, 40
    %v3155 = vpop.permute.xlu0 %3154
    %3156 = vrot.lane.b32.xlu0 %v1757, 40
    %v3157 = vpop.permute.xlu0 %3156
    %3158 = vrot.lane.b32.xlu0 %v1758, 40
    %v3159 = vpop.permute.xlu0 %3158
    %3160 = vrot.lane.b32.xlu0 %v1759, 40
    %v3161 = vpop.permute.xlu0 %3160
    %3162 = vrot.lane.b32.xlu0 %v1760, 40
    %v3163 = vpop.permute.xlu0 %3162
    %3164 = vrot.lane.b32.xlu0 %v1761, 40
    %v3165 = vpop.permute.xlu0 %3164
    %3166 = vrot.lane.b32.xlu0 %v1762, 40
    %v3167 = vpop.permute.xlu0 %3166
    %3168 = vrot.lane.b32.xlu0 %v1763, 40
    %v3169 = vpop.permute.xlu0 %3168
    %3170 = vrot.lane.b32.xlu0 %v1764, 40
    %v3171 = vpop.permute.xlu0 %3170
    %3172 = vrot.lane.b32.xlu0 %v1765, 40
    %v3173 = vpop.permute.xlu0 %3172
    %3174 = vrot.lane.b32.xlu0 %v1766, 40
    %v3175 = vpop.permute.xlu0 %3174
    %3304 = vrot.lane.b32.xlu0 %v1768, 48
    %v3305 = vpop.permute.xlu0 %3304
    %3306 = vrot.lane.b32.xlu0 %v1769, 48
    %v3307 = vpop.permute.xlu0 %3306
    %3308 = vrot.lane.b32.xlu0 %v1770, 48
    %v3309 = vpop.permute.xlu0 %3308
    %3310 = vrot.lane.b32.xlu0 %v1771, 48
    %v3311 = vpop.permute.xlu0 %3310
    %3312 = vrot.lane.b32.xlu0 %v1772, 48
    %v3313 = vpop.permute.xlu0 %3312
    %3314 = vrot.lane.b32.xlu0 %v1773, 48
    %v3315 = vpop.permute.xlu0 %3314
    %3316 = vrot.lane.b32.xlu0 %v1774, 48
    %v3317 = vpop.permute.xlu0 %3316
    %3318 = vrot.lane.b32.xlu0 %v1775, 48
    %v3319 = vpop.permute.xlu0 %3318
    %3320 = vrot.lane.b32.xlu0 %v1776, 48
    %v3321 = vpop.permute.xlu0 %3320
    %3322 = vrot.lane.b32.xlu0 %v1777, 48
    %v3323 = vpop.permute.xlu0 %3322
    %3324 = vrot.lane.b32.xlu0 %v1778, 48
    %v3325 = vpop.permute.xlu0 %3324
    %3326 = vrot.lane.b32.xlu0 %v1779, 48
    %v3327 = vpop.permute.xlu0 %3326
    %3328 = vrot.lane.b32.xlu0 %v1780, 48
    %v3329 = vpop.permute.xlu0 %3328
    %3330 = vrot.lane.b32.xlu0 %v1781, 48
    %v3331 = vpop.permute.xlu0 %3330
    %3332 = vrot.lane.b32.xlu0 %v1782, 48
    %v3333 = vpop.permute.xlu0 %3332
    %3334 = vrot.lane.b32.xlu0 %v1783, 48
    %v3335 = vpop.permute.xlu0 %3334
    %3336 = vrot.lane.b32.xlu0 %v1784, 48
    %v3337 = vpop.permute.xlu0 %3336
    %3338 = vrot.lane.b32.xlu0 %v1785, 48
    %v3339 = vpop.permute.xlu0 %3338
    %3340 = vrot.lane.b32.xlu0 %v1786, 48
    %v3341 = vpop.permute.xlu0 %3340
    %3342 = vrot.lane.b32.xlu0 %v1787, 48
    %v3343 = vpop.permute.xlu0 %3342
    %3344 = vrot.lane.b32.xlu0 %v1788, 48
    %v3345 = vpop.permute.xlu0 %3344
    %3346 = vrot.lane.b32.xlu0 %v1789, 48
    %v3347 = vpop.permute.xlu0 %3346
    %3348 = vrot.lane.b32.xlu0 %v1790, 48
    %v3349 = vpop.permute.xlu0 %3348
    %3350 = vrot.lane.b32.xlu0 %v1791, 48
    %v3351 = vpop.permute.xlu0 %3350
    %3352 = vrot.lane.b32.xlu0 %v1792, 48
    %v3353 = vpop.permute.xlu0 %3352
    %3354 = vrot.lane.b32.xlu0 %v1793, 48
    %v3355 = vpop.permute.xlu0 %3354
    %3356 = vrot.lane.b32.xlu0 %v1794, 48
    %v3357 = vpop.permute.xlu0 %3356
    %3358 = vrot.lane.b32.xlu0 %v1795, 48
    %v3359 = vpop.permute.xlu0 %3358
    %3360 = vrot.lane.b32.xlu0 %v1796, 48
    %v3361 = vpop.permute.xlu0 %3360
    %3362 = vrot.lane.b32.xlu0 %v1797, 48
    %v3363 = vpop.permute.xlu0 %3362
    %3364 = vrot.lane.b32.xlu0 %v1798, 48
    %v3365 = vpop.permute.xlu0 %3364
    %3366 = vrot.lane.b32.xlu0 %v1799, 48
    %v3367 = vpop.permute.xlu0 %3366
    %3368 = vrot.lane.b32.xlu0 %v1800, 48
    %v3369 = vpop.permute.xlu0 %3368
    %3370 = vrot.lane.b32.xlu0 %v1801, 48
    %v3371 = vpop.permute.xlu0 %3370
    %3372 = vrot.lane.b32.xlu0 %v1802, 48
    %v3373 = vpop.permute.xlu0 %3372
    %3374 = vrot.lane.b32.xlu0 %v1803, 48
    %v3375 = vpop.permute.xlu0 %3374
    %3376 = vrot.lane.b32.xlu0 %v1804, 48
    %v3377 = vpop.permute.xlu0 %3376
    %3378 = vrot.lane.b32.xlu0 %v1805, 48
    %v3379 = vpop.permute.xlu0 %3378
    %3380 = vrot.lane.b32.xlu0 %v1806, 48
    %v3381 = vpop.permute.xlu0 %3380
    %3382 = vrot.lane.b32.xlu0 %v1807, 48
    %v3383 = vpop.permute.xlu0 %3382
    %3384 = vrot.lane.b32.xlu0 %v1808, 48
    %v3385 = vpop.permute.xlu0 %3384
    %3386 = vrot.lane.b32.xlu0 %v1809, 48
    %v3387 = vpop.permute.xlu0 %3386
    %3388 = vrot.lane.b32.xlu0 %v1810, 48
    %v3389 = vpop.permute.xlu0 %3388
    %3390 = vrot.lane.b32.xlu0 %v1811, 48
    %v3391 = vpop.permute.xlu0 %3390
    %3392 = vrot.lane.b32.xlu0 %v1812, 48
    %v3393 = vpop.permute.xlu0 %3392
    %3394 = vrot.lane.b32.xlu0 %v1813, 48
    %v3395 = vpop.permute.xlu0 %3394
    %3396 = vrot.lane.b32.xlu0 %v1814, 48
    %v3397 = vpop.permute.xlu0 %3396
    %3398 = vrot.lane.b32.xlu0 %v1815, 48
    %v3399 = vpop.permute.xlu0 %3398
    %3400 = vrot.lane.b32.xlu0 %v1816, 48
    %v3401 = vpop.permute.xlu0 %3400
    %3402 = vrot.lane.b32.xlu0 %v1817, 48
    %v3403 = vpop.permute.xlu0 %3402
    %3404 = vrot.lane.b32.xlu0 %v1818, 48
    %v3405 = vpop.permute.xlu0 %3404
    %3406 = vrot.lane.b32.xlu0 %v1819, 48
    %v3407 = vpop.permute.xlu0 %3406
    %3408 = vrot.lane.b32.xlu0 %v1820, 48
    %v3409 = vpop.permute.xlu0 %3408
    %3410 = vrot.lane.b32.xlu0 %v1821, 48
    %v3411 = vpop.permute.xlu0 %3410
    %3412 = vrot.lane.b32.xlu0 %v1822, 48
    %v3413 = vpop.permute.xlu0 %3412
    %3414 = vrot.lane.b32.xlu0 %v1823, 48
    %v3415 = vpop.permute.xlu0 %3414
    %3416 = vrot.lane.b32.xlu0 %v1824, 48
    %v3417 = vpop.permute.xlu0 %3416
    %3418 = vrot.lane.b32.xlu0 %v1825, 48
    %v3419 = vpop.permute.xlu0 %3418
    %3420 = vrot.lane.b32.xlu0 %v1826, 48
    %v3421 = vpop.permute.xlu0 %3420
    %3422 = vrot.lane.b32.xlu0 %v1827, 48
    %v3423 = vpop.permute.xlu0 %3422
    %3424 = vrot.lane.b32.xlu0 %v1828, 48
    %v3425 = vpop.permute.xlu0 %3424
    %3426 = vrot.lane.b32.xlu0 %v1829, 48
    %v3427 = vpop.permute.xlu0 %3426
    %3428 = vrot.lane.b32.xlu0 %v1830, 48
    %v3429 = vpop.permute.xlu0 %3428
    %3430 = vrot.lane.b32.xlu0 %v1831, 48
    %v3431 = vpop.permute.xlu0 %3430
    %3560 = vrot.lane.b32.xlu0 %v1832, 56
    %v3561 = vpop.permute.xlu0 %3560
    %3562 = vrot.lane.b32.xlu0 %v1833, 56
    %v3563 = vpop.permute.xlu0 %3562
    %3564 = vrot.lane.b32.xlu0 %v1834, 56
    %v3565 = vpop.permute.xlu0 %3564
    %3566 = vrot.lane.b32.xlu0 %v1835, 56
    %v3567 = vpop.permute.xlu0 %3566
    %3568 = vrot.lane.b32.xlu0 %v1836, 56
    %v3569 = vpop.permute.xlu0 %3568
    %3570 = vrot.lane.b32.xlu0 %v1837, 56
    %v3571 = vpop.permute.xlu0 %3570
    %3572 = vrot.lane.b32.xlu0 %v1838, 56
    %v3573 = vpop.permute.xlu0 %3572
    %3574 = vrot.lane.b32.xlu0 %v1839, 56
    %v3575 = vpop.permute.xlu0 %3574
    %3576 = vrot.lane.b32.xlu0 %v1840, 56
    %v3577 = vpop.permute.xlu0 %3576
    %3578 = vrot.lane.b32.xlu0 %v1841, 56
    %v3579 = vpop.permute.xlu0 %3578
    %3580 = vrot.lane.b32.xlu0 %v1842, 56
    %v3581 = vpop.permute.xlu0 %3580
    %3582 = vrot.lane.b32.xlu0 %v1843, 56
    %v3583 = vpop.permute.xlu0 %3582
    %3584 = vrot.lane.b32.xlu0 %v1844, 56
    %v3585 = vpop.permute.xlu0 %3584
    %3586 = vrot.lane.b32.xlu0 %v1845, 56
    %v3587 = vpop.permute.xlu0 %3586
    %3588 = vrot.lane.b32.xlu0 %v1846, 56
    %v3589 = vpop.permute.xlu0 %3588
    %3590 = vrot.lane.b32.xlu0 %v1847, 56
    %v3591 = vpop.permute.xlu0 %3590
    %3592 = vrot.lane.b32.xlu0 %v1848, 56
    %v3593 = vpop.permute.xlu0 %3592
    %3594 = vrot.lane.b32.xlu0 %v1849, 56
    %v3595 = vpop.permute.xlu0 %3594
    %3596 = vrot.lane.b32.xlu0 %v1850, 56
    %v3597 = vpop.permute.xlu0 %3596
    %3598 = vrot.lane.b32.xlu0 %v1851, 56
    %v3599 = vpop.permute.xlu0 %3598
    %3600 = vrot.lane.b32.xlu0 %v1852, 56
    %v3601 = vpop.permute.xlu0 %3600
    %3602 = vrot.lane.b32.xlu0 %v1853, 56
    %v3603 = vpop.permute.xlu0 %3602
    %3604 = vrot.lane.b32.xlu0 %v1854, 56
    %v3605 = vpop.permute.xlu0 %3604
    %3606 = vrot.lane.b32.xlu0 %v1855, 56
    %v3607 = vpop.permute.xlu0 %3606
    %3608 = vrot.lane.b32.xlu0 %v1856, 56
    %v3609 = vpop.permute.xlu0 %3608
    %3610 = vrot.lane.b32.xlu0 %v1857, 56
    %v3611 = vpop.permute.xlu0 %3610
    %3612 = vrot.lane.b32.xlu0 %v1858, 56
    %v3613 = vpop.permute.xlu0 %3612
    %3614 = vrot.lane.b32.xlu0 %v1859, 56
    %v3615 = vpop.permute.xlu0 %3614
    %3616 = vrot.lane.b32.xlu0 %v1860, 56
    %v3617 = vpop.permute.xlu0 %3616
    %3618 = vrot.lane.b32.xlu0 %v1861, 56
    %v3619 = vpop.permute.xlu0 %3618
    %3620 = vrot.lane.b32.xlu0 %v1862, 56
    %v3621 = vpop.permute.xlu0 %3620
    %3622 = vrot.lane.b32.xlu0 %v1863, 56
    %v3623 = vpop.permute.xlu0 %3622
    %3624 = vrot.lane.b32.xlu0 %v1864, 56
    %v3625 = vpop.permute.xlu0 %3624
    %3626 = vrot.lane.b32.xlu0 %v1865, 56
    %v3627 = vpop.permute.xlu0 %3626
    %3628 = vrot.lane.b32.xlu0 %v1866, 56
    %v3629 = vpop.permute.xlu0 %3628
    %3630 = vrot.lane.b32.xlu0 %v1867, 56
    %v3631 = vpop.permute.xlu0 %3630
    %3632 = vrot.lane.b32.xlu0 %v1868, 56
    %v3633 = vpop.permute.xlu0 %3632
    %3634 = vrot.lane.b32.xlu0 %v1869, 56
    %v3635 = vpop.permute.xlu0 %3634
    %3636 = vrot.lane.b32.xlu0 %v1870, 56
    %v3637 = vpop.permute.xlu0 %3636
    %3638 = vrot.lane.b32.xlu0 %v1871, 56
    %v3639 = vpop.permute.xlu0 %3638
    %3640 = vrot.lane.b32.xlu0 %v1872, 56
    %v3641 = vpop.permute.xlu0 %3640
    %3642 = vrot.lane.b32.xlu0 %v1873, 56
    %v3643 = vpop.permute.xlu0 %3642
    %3644 = vrot.lane.b32.xlu0 %v1874, 56
    %v3645 = vpop.permute.xlu0 %3644
    %3646 = vrot.lane.b32.xlu0 %v1875, 56
    %v3647 = vpop.permute.xlu0 %3646
    %3648 = vrot.lane.b32.xlu0 %v1876, 56
    %v3649 = vpop.permute.xlu0 %3648
    %3650 = vrot.lane.b32.xlu0 %v1877, 56
    %v3651 = vpop.permute.xlu0 %3650
    %3652 = vrot.lane.b32.xlu0 %v1878, 56
    %v3653 = vpop.permute.xlu0 %3652
    %3654 = vrot.lane.b32.xlu0 %v1879, 56
    %v3655 = vpop.permute.xlu0 %3654
    %3656 = vrot.lane.b32.xlu0 %v1880, 56
    %v3657 = vpop.permute.xlu0 %3656
    %3658 = vrot.lane.b32.xlu0 %v1881, 56
    %v3659 = vpop.permute.xlu0 %3658
    %3660 = vrot.lane.b32.xlu0 %v1882, 56
    %v3661 = vpop.permute.xlu0 %3660
    %3662 = vrot.lane.b32.xlu0 %v1883, 56
    %v3663 = vpop.permute.xlu0 %3662
    %3664 = vrot.lane.b32.xlu0 %v1884, 56
    %v3665 = vpop.permute.xlu0 %3664
    %3666 = vrot.lane.b32.xlu0 %v1885, 56
    %v3667 = vpop.permute.xlu0 %3666
    %3668 = vrot.lane.b32.xlu0 %v1886, 56
    %v3669 = vpop.permute.xlu0 %3668
    %3670 = vrot.lane.b32.xlu0 %v1887, 56
    %v3671 = vpop.permute.xlu0 %3670
    %3672 = vrot.lane.b32.xlu0 %v1888, 56
    %v3673 = vpop.permute.xlu0 %3672
    %3674 = vrot.lane.b32.xlu0 %v1889, 56
    %v3675 = vpop.permute.xlu0 %3674
    %3676 = vrot.lane.b32.xlu0 %v1890, 56
    %v3677 = vpop.permute.xlu0 %3676
    %3678 = vrot.lane.b32.xlu0 %v1891, 56
    %v3679 = vpop.permute.xlu0 %3678
    %3680 = vrot.lane.b32.xlu0 %v1892, 56
    %v3681 = vpop.permute.xlu0 %3680
    %3682 = vrot.lane.b32.xlu0 %v1893, 56
    %v3683 = vpop.permute.xlu0 %3682
    %3684 = vrot.lane.b32.xlu0 %v1894, 56
    %v3685 = vpop.permute.xlu0 %3684
    %3686 = vrot.lane.b32.xlu0 %v1895, 56
    %v3687 = vpop.permute.xlu0 %3686
    %3816 = vrot.lane.b32.xlu0 %v1896, 64
    %v3817 = vpop.permute.xlu0 %3816
    %3818 = vrot.lane.b32.xlu0 %v1897, 64
    %v3819 = vpop.permute.xlu0 %3818
    %3820 = vrot.lane.b32.xlu0 %v1898, 64
    %v3821 = vpop.permute.xlu0 %3820
    %3822 = vrot.lane.b32.xlu0 %v1899, 64
    %v3823 = vpop.permute.xlu0 %3822
    %3824 = vrot.lane.b32.xlu0 %v1900, 64
    %v3825 = vpop.permute.xlu0 %3824
    %3826 = vrot.lane.b32.xlu0 %v1901, 64
    %v3827 = vpop.permute.xlu0 %3826
    %3828 = vrot.lane.b32.xlu0 %v1902, 64
    %v3829 = vpop.permute.xlu0 %3828
    %3830 = vrot.lane.b32.xlu0 %v1903, 64
    %v3831 = vpop.permute.xlu0 %3830
    %3832 = vrot.lane.b32.xlu0 %v1904, 64
    %v3833 = vpop.permute.xlu0 %3832
    %3834 = vrot.lane.b32.xlu0 %v1905, 64
    %v3835 = vpop.permute.xlu0 %3834
    %3836 = vrot.lane.b32.xlu0 %v1906, 64
    %v3837 = vpop.permute.xlu0 %3836
    %3838 = vrot.lane.b32.xlu0 %v1907, 64
    %v3839 = vpop.permute.xlu0 %3838
    %3840 = vrot.lane.b32.xlu0 %v1908, 64
    %v3841 = vpop.permute.xlu0 %3840
    %3842 = vrot.lane.b32.xlu0 %v1909, 64
    %v3843 = vpop.permute.xlu0 %3842
    %3844 = vrot.lane.b32.xlu0 %v1910, 64
    %v3845 = vpop.permute.xlu0 %3844
    %3846 = vrot.lane.b32.xlu0 %v1911, 64
    %v3847 = vpop.permute.xlu0 %3846
    %3848 = vrot.lane.b32.xlu0 %v1912, 64
    %v3849 = vpop.permute.xlu0 %3848
    %3850 = vrot.lane.b32.xlu0 %v1913, 64
    %v3851 = vpop.permute.xlu0 %3850
    %3852 = vrot.lane.b32.xlu0 %v1914, 64
    %v3853 = vpop.permute.xlu0 %3852
    %3854 = vrot.lane.b32.xlu0 %v1915, 64
    %v3855 = vpop.permute.xlu0 %3854
    %3856 = vrot.lane.b32.xlu0 %v1916, 64
    %v3857 = vpop.permute.xlu0 %3856
    %3858 = vrot.lane.b32.xlu0 %v1917, 64
    %v3859 = vpop.permute.xlu0 %3858
    %3860 = vrot.lane.b32.xlu0 %v1918, 64
    %v3861 = vpop.permute.xlu0 %3860
    %3862 = vrot.lane.b32.xlu0 %v1919, 64
    %v3863 = vpop.permute.xlu0 %3862
    %3864 = vrot.lane.b32.xlu0 %v1920, 64
    %v3865 = vpop.permute.xlu0 %3864
    %3866 = vrot.lane.b32.xlu0 %v1921, 64
    %v3867 = vpop.permute.xlu0 %3866
    %3868 = vrot.lane.b32.xlu0 %v1922, 64
    %v3869 = vpop.permute.xlu0 %3868
    %3870 = vrot.lane.b32.xlu0 %v1923, 64
    %v3871 = vpop.permute.xlu0 %3870
    %3872 = vrot.lane.b32.xlu0 %v1924, 64
    %v3873 = vpop.permute.xlu0 %3872
    %3874 = vrot.lane.b32.xlu0 %v1925, 64
    %v3875 = vpop.permute.xlu0 %3874
    %3876 = vrot.lane.b32.xlu0 %v1926, 64
    %v3877 = vpop.permute.xlu0 %3876
    %3878 = vrot.lane.b32.xlu0 %v1927, 64
    %v3879 = vpop.permute.xlu0 %3878
    %3880 = vrot.lane.b32.xlu0 %v1928, 64
    %v3881 = vpop.permute.xlu0 %3880
    %3882 = vrot.lane.b32.xlu0 %v1929, 64
    %v3883 = vpop.permute.xlu0 %3882
    %3884 = vrot.lane.b32.xlu0 %v1930, 64
    %v3885 = vpop.permute.xlu0 %3884
    %3886 = vrot.lane.b32.xlu0 %v1931, 64
    %v3887 = vpop.permute.xlu0 %3886
    %3888 = vrot.lane.b32.xlu0 %v1932, 64
    %v3889 = vpop.permute.xlu0 %3888
    %3890 = vrot.lane.b32.xlu0 %v1933, 64
    %v3891 = vpop.permute.xlu0 %3890
    %3892 = vrot.lane.b32.xlu0 %v1934, 64
    %v3893 = vpop.permute.xlu0 %3892
    %3894 = vrot.lane.b32.xlu0 %v1935, 64
    %v3895 = vpop.permute.xlu0 %3894
    %3896 = vrot.lane.b32.xlu0 %v1936, 64
    %v3897 = vpop.permute.xlu0 %3896
    %3898 = vrot.lane.b32.xlu0 %v1937, 64
    %v3899 = vpop.permute.xlu0 %3898
    %3900 = vrot.lane.b32.xlu0 %v1938, 64
    %v3901 = vpop.permute.xlu0 %3900
    %3902 = vrot.lane.b32.xlu0 %v1939, 64
    %v3903 = vpop.permute.xlu0 %3902
    %3904 = vrot.lane.b32.xlu0 %v1940, 64
    %v3905 = vpop.permute.xlu0 %3904
    %3906 = vrot.lane.b32.xlu0 %v1941, 64
    %v3907 = vpop.permute.xlu0 %3906
    %3908 = vrot.lane.b32.xlu0 %v1942, 64
    %v3909 = vpop.permute.xlu0 %3908
    %3910 = vrot.lane.b32.xlu0 %v1943, 64
    %v3911 = vpop.permute.xlu0 %3910
    %3912 = vrot.lane.b32.xlu0 %v1944, 64
    %v3913 = vpop.permute.xlu0 %3912
    %3914 = vrot.lane.b32.xlu0 %v1945, 64
    %v3915 = vpop.permute.xlu0 %3914
    %3916 = vrot.lane.b32.xlu0 %v1946, 64
    %v3917 = vpop.permute.xlu0 %3916
    %3918 = vrot.lane.b32.xlu0 %v1947, 64
    %v3919 = vpop.permute.xlu0 %3918
    %3920 = vrot.lane.b32.xlu0 %v1948, 64
    %v3921 = vpop.permute.xlu0 %3920
    %3922 = vrot.lane.b32.xlu0 %v1949, 64
    %v3923 = vpop.permute.xlu0 %3922
    %3924 = vrot.lane.b32.xlu0 %v1950, 64
    %v3925 = vpop.permute.xlu0 %3924
    %3926 = vrot.lane.b32.xlu0 %v1951, 64
    %v3927 = vpop.permute.xlu0 %3926
    %3928 = vrot.lane.b32.xlu0 %v1952, 64
    %v3929 = vpop.permute.xlu0 %3928
    %3930 = vrot.lane.b32.xlu0 %v1953, 64
    %v3931 = vpop.permute.xlu0 %3930
    %3932 = vrot.lane.b32.xlu0 %v1954, 64
    %v3933 = vpop.permute.xlu0 %3932
    %3934 = vrot.lane.b32.xlu0 %v1955, 64
    %v3935 = vpop.permute.xlu0 %3934
    %3936 = vrot.lane.b32.xlu0 %v1956, 64
    %v3937 = vpop.permute.xlu0 %3936
    %3938 = vrot.lane.b32.xlu0 %v1957, 64
    %v3939 = vpop.permute.xlu0 %3938
    %3940 = vrot.lane.b32.xlu0 %v1958, 64
    %v3941 = vpop.permute.xlu0 %3940
    %3942 = vrot.lane.b32.xlu0 %v1959, 64
    %v3943 = vpop.permute.xlu0 %3942
    %v4008 = vsel %vm684, %v1383, %v2025
    %v4009 = vsel %vm684, %v1384, %v2027
    %v4010 = vsel %vm684, %v1385, %v2029
    %v4011 = vsel %vm684, %v1386, %v2031
    %v4012 = vsel %vm684, %v1387, %v2033
    %v4013 = vsel %vm684, %v1388, %v2035
    %v4014 = vsel %vm684, %v1389, %v2037
    %v4015 = vsel %vm684, %v1390, %v2039
    %v4016 = vsel %vm684, %v1391, %v2041
    %v4017 = vsel %vm684, %v1392, %v2043
    %v4018 = vsel %vm684, %v1393, %v2045
    %v4019 = vsel %vm684, %v1394, %v2047
    %v4020 = vsel %vm684, %v1395, %v2049
    %v4021 = vsel %vm684, %v1396, %v2051
    %v4022 = vsel %vm684, %v1397, %v2053
    %v4023 = vsel %vm684, %v1398, %v2055
    %v4024 = vsel %vm684, %v1399, %v2057
    %v4025 = vsel %vm684, %v1400, %v2059
    %v4026 = vsel %vm684, %v1401, %v2061
    %v4027 = vsel %vm684, %v1402, %v2063
    %v4028 = vsel %vm684, %v1403, %v2065
    %v4029 = vsel %vm684, %v1404, %v2067
    %v4030 = vsel %vm684, %v1405, %v2069
    %v4031 = vsel %vm684, %v1406, %v2071
    %v4032 = vsel %vm684, %v1407, %v2073
    %v4033 = vsel %vm684, %v1408, %v2075
    %v4034 = vsel %vm684, %v1409, %v2077
    %v4035 = vsel %vm684, %v1410, %v2079
    %v4036 = vsel %vm684, %v1411, %v2081
    %v4037 = vsel %vm684, %v1412, %v2083
    %v4038 = vsel %vm684, %v1413, %v2085
    %v4039 = vsel %vm684, %v1414, %v2087
    %v4040 = vsel %vm684, %v1415, %v2089
    %v4041 = vsel %vm684, %v1416, %v2091
    %v4042 = vsel %vm684, %v1417, %v2093
    %v4043 = vsel %vm684, %v1418, %v2095
    %v4044 = vsel %vm684, %v1419, %v2097
    %v4045 = vsel %vm684, %v1420, %v2099
    %v4046 = vsel %vm684, %v1421, %v2101
    %v4047 = vsel %vm684, %v1422, %v2103
    %v4048 = vsel %vm684, %v1423, %v2105
    %v4049 = vsel %vm684, %v1424, %v2107
    %v4050 = vsel %vm684, %v1425, %v2109
    %v4051 = vsel %vm684, %v1426, %v2111
    %v4052 = vsel %vm684, %v1427, %v2113
    %v4053 = vsel %vm684, %v1428, %v2115
    %v4054 = vsel %vm684, %v1429, %v2117
    %v4055 = vsel %vm684, %v1430, %v2119
    %v4056 = vsel %vm684, %v1431, %v2121
    %v4057 = vsel %vm684, %v1432, %v2123
    %v4058 = vsel %vm684, %v1433, %v2125
    %v4059 = vsel %vm684, %v1434, %v2127
    %v4060 = vsel %vm684, %v1435, %v2129
    %v4061 = vsel %vm684, %v1436, %v2131
    %v4062 = vsel %vm684, %v1437, %v2133
    %v4063 = vsel %vm684, %v1438, %v2135
    %v4064 = vsel %vm684, %v1439, %v2137
    %v4065 = vsel %vm684, %v1440, %v2139
    %v4066 = vsel %vm684, %v1441, %v2141
    %v4067 = vsel %vm684, %v1442, %v2143
    %v4068 = vsel %vm684, %v1443, %v2145
    %v4069 = vsel %vm684, %v1444, %v2147
    %v4070 = vsel %vm684, %v1445, %v2149
    %v4071 = vsel %vm684, %v1446, %v2151
    %vm4072 = vcmask 130048
    %v4073 = vsel %vm4072, %v4008, %v2281
    %v4074 = vsel %vm4072, %v4009, %v2283
    %v4075 = vsel %vm4072, %v4010, %v2285
    %v4076 = vsel %vm4072, %v4011, %v2287
    %v4077 = vsel %vm4072, %v4012, %v2289
    %v4078 = vsel %vm4072, %v4013, %v2291
    %v4079 = vsel %vm4072, %v4014, %v2293
    %v4080 = vsel %vm4072, %v4015, %v2295
    %v4081 = vsel %vm4072, %v4016, %v2297
    %v4082 = vsel %vm4072, %v4017, %v2299
    %v4083 = vsel %vm4072, %v4018, %v2301
    %v4084 = vsel %vm4072, %v4019, %v2303
    %v4085 = vsel %vm4072, %v4020, %v2305
    %v4086 = vsel %vm4072, %v4021, %v2307
    %v4087 = vsel %vm4072, %v4022, %v2309
    %v4088 = vsel %vm4072, %v4023, %v2311
    %v4089 = vsel %vm4072, %v4024, %v2313
    %v4090 = vsel %vm4072, %v4025, %v2315
    %v4091 = vsel %vm4072, %v4026, %v2317
    %v4092 = vsel %vm4072, %v4027, %v2319
    %v4093 = vsel %vm4072, %v4028, %v2321
    %v4094 = vsel %vm4072, %v4029, %v2323
    %v4095 = vsel %vm4072, %v4030, %v2325
    %v4096 = vsel %vm4072, %v4031, %v2327
    %v4097 = vsel %vm4072, %v4032, %v2329
    %v4098 = vsel %vm4072, %v4033, %v2331
    %v4099 = vsel %vm4072, %v4034, %v2333
    %v4100 = vsel %vm4072, %v4035, %v2335
    %v4101 = vsel %vm4072, %v4036, %v2337
    %v4102 = vsel %vm4072, %v4037, %v2339
    %v4103 = vsel %vm4072, %v4038, %v2341
    %v4104 = vsel %vm4072, %v4039, %v2343
    %v4105 = vsel %vm4072, %v4040, %v2345
    %v4106 = vsel %vm4072, %v4041, %v2347
    %v4107 = vsel %vm4072, %v4042, %v2349
    %v4108 = vsel %vm4072, %v4043, %v2351
    %v4109 = vsel %vm4072, %v4044, %v2353
    %v4110 = vsel %vm4072, %v4045, %v2355
    %v4111 = vsel %vm4072, %v4046, %v2357
    %v4112 = vsel %vm4072, %v4047, %v2359
    %v4113 = vsel %vm4072, %v4048, %v2361
    %v4114 = vsel %vm4072, %v4049, %v2363
    %v4115 = vsel %vm4072, %v4050, %v2365
    %v4116 = vsel %vm4072, %v4051, %v2367
    %v4117 = vsel %vm4072, %v4052, %v2369
    %v4118 = vsel %vm4072, %v4053, %v2371
    %v4119 = vsel %vm4072, %v4054, %v2373
    %v4120 = vsel %vm4072, %v4055, %v2375
    %v4121 = vsel %vm4072, %v4056, %v2377
    %v4122 = vsel %vm4072, %v4057, %v2379
    %v4123 = vsel %vm4072, %v4058, %v2381
    %v4124 = vsel %vm4072, %v4059, %v2383
    %v4125 = vsel %vm4072, %v4060, %v2385
    %v4126 = vsel %vm4072, %v4061, %v2387
    %v4127 = vsel %vm4072, %v4062, %v2389
    %v4128 = vsel %vm4072, %v4063, %v2391
    %v4129 = vsel %vm4072, %v4064, %v2393
    %v4130 = vsel %vm4072, %v4065, %v2395
    %v4131 = vsel %vm4072, %v4066, %v2397
    %v4132 = vsel %vm4072, %v4067, %v2399
    %v4133 = vsel %vm4072, %v4068, %v2401
    %v4134 = vsel %vm4072, %v4069, %v2403
    %v4135 = vsel %vm4072, %v4070, %v2405
    %v4136 = vsel %vm4072, %v4071, %v2407
    %vm4137 = vcmask 195584
    %v4138 = vsel %vm4137, %v4073, %v2537
    %v4139 = vsel %vm4137, %v4074, %v2539
    %v4140 = vsel %vm4137, %v4075, %v2541
    %v4141 = vsel %vm4137, %v4076, %v2543
    %v4142 = vsel %vm4137, %v4077, %v2545
    %v4143 = vsel %vm4137, %v4078, %v2547
    %v4144 = vsel %vm4137, %v4079, %v2549
    %v4145 = vsel %vm4137, %v4080, %v2551
    %v4146 = vsel %vm4137, %v4081, %v2553
    %v4147 = vsel %vm4137, %v4082, %v2555
    %v4148 = vsel %vm4137, %v4083, %v2557
    %v4149 = vsel %vm4137, %v4084, %v2559
    %v4150 = vsel %vm4137, %v4085, %v2561
    %v4151 = vsel %vm4137, %v4086, %v2563
    %v4152 = vsel %vm4137, %v4087, %v2565
    %v4153 = vsel %vm4137, %v4088, %v2567
    %v4154 = vsel %vm4137, %v4089, %v2569
    %v4155 = vsel %vm4137, %v4090, %v2571
    %v4156 = vsel %vm4137, %v4091, %v2573
    %v4157 = vsel %vm4137, %v4092, %v2575
    %v4158 = vsel %vm4137, %v4093, %v2577
    %v4159 = vsel %vm4137, %v4094, %v2579
    %v4160 = vsel %vm4137, %v4095, %v2581
    %v4161 = vsel %vm4137, %v4096, %v2583
    %v4162 = vsel %vm4137, %v4097, %v2585
    %v4163 = vsel %vm4137, %v4098, %v2587
    %v4164 = vsel %vm4137, %v4099, %v2589
    %v4165 = vsel %vm4137, %v4100, %v2591
    %v4166 = vsel %vm4137, %v4101, %v2593
    %v4167 = vsel %vm4137, %v4102, %v2595
    %v4168 = vsel %vm4137, %v4103, %v2597
    %v4169 = vsel %vm4137, %v4104, %v2599
    %v4170 = vsel %vm4137, %v4105, %v2601
    %v4171 = vsel %vm4137, %v4106, %v2603
    %v4172 = vsel %vm4137, %v4107, %v2605
    %v4173 = vsel %vm4137, %v4108, %v2607
    %v4174 = vsel %vm4137, %v4109, %v2609
    %v4175 = vsel %vm4137, %v4110, %v2611
    %v4176 = vsel %vm4137, %v4111, %v2613
    %v4177 = vsel %vm4137, %v4112, %v2615
    %v4178 = vsel %vm4137, %v4113, %v2617
    %v4179 = vsel %vm4137, %v4114, %v2619
    %v4180 = vsel %vm4137, %v4115, %v2621
    %v4181 = vsel %vm4137, %v4116, %v2623
    %v4182 = vsel %vm4137, %v4117, %v2625
    %v4183 = vsel %vm4137, %v4118, %v2627
    %v4184 = vsel %vm4137, %v4119, %v2629
    %v4185 = vsel %vm4137, %v4120, %v2631
    %v4186 = vsel %vm4137, %v4121, %v2633
    %v4187 = vsel %vm4137, %v4122, %v2635
    %v4188 = vsel %vm4137, %v4123, %v2637
    %v4189 = vsel %vm4137, %v4124, %v2639
    %v4190 = vsel %vm4137, %v4125, %v2641
    %v4191 = vsel %vm4137, %v4126, %v2643
    %v4192 = vsel %vm4137, %v4127, %v2645
    %v4193 = vsel %vm4137, %v4128, %v2647
    %v4194 = vsel %vm4137, %v4129, %v2649
    %v4195 = vsel %vm4137, %v4130, %v2651
    %v4196 = vsel %vm4137, %v4131, %v2653
    %v4197 = vsel %vm4137, %v4132, %v2655
    %v4198 = vsel %vm4137, %v4133, %v2657
    %v4199 = vsel %vm4137, %v4134, %v2659
    %v4200 = vsel %vm4137, %v4135, %v2661
    %v4201 = vsel %vm4137, %v4136, %v2663
    %vm4202 = vcmask 261120
    %v4203 = vsel %vm4202, %v4138, %v2793
    %v4204 = vsel %vm4202, %v4139, %v2795
    %v4205 = vsel %vm4202, %v4140, %v2797
    %v4206 = vsel %vm4202, %v4141, %v2799
    %v4207 = vsel %vm4202, %v4142, %v2801
    %v4208 = vsel %vm4202, %v4143, %v2803
    %v4209 = vsel %vm4202, %v4144, %v2805
    %v4210 = vsel %vm4202, %v4145, %v2807
    %v4211 = vsel %vm4202, %v4146, %v2809
    %v4212 = vsel %vm4202, %v4147, %v2811
    %v4213 = vsel %vm4202, %v4148, %v2813
    %v4214 = vsel %vm4202, %v4149, %v2815
    %v4215 = vsel %vm4202, %v4150, %v2817
    %v4216 = vsel %vm4202, %v4151, %v2819
    %v4217 = vsel %vm4202, %v4152, %v2821
    %v4218 = vsel %vm4202, %v4153, %v2823
    %v4219 = vsel %vm4202, %v4154, %v2825
    %v4220 = vsel %vm4202, %v4155, %v2827
    %v4221 = vsel %vm4202, %v4156, %v2829
    %v4222 = vsel %vm4202, %v4157, %v2831
    %v4223 = vsel %vm4202, %v4158, %v2833
    %v4224 = vsel %vm4202, %v4159, %v2835
    %v4225 = vsel %vm4202, %v4160, %v2837
    %v4226 = vsel %vm4202, %v4161, %v2839
    %v4227 = vsel %vm4202, %v4162, %v2841
    %v4228 = vsel %vm4202, %v4163, %v2843
    %v4229 = vsel %vm4202, %v4164, %v2845
    %v4230 = vsel %vm4202, %v4165, %v2847
    %v4231 = vsel %vm4202, %v4166, %v2849
    %v4232 = vsel %vm4202, %v4167, %v2851
    %v4233 = vsel %vm4202, %v4168, %v2853
    %v4234 = vsel %vm4202, %v4169, %v2855
    %v4235 = vsel %vm4202, %v4170, %v2857
    %v4236 = vsel %vm4202, %v4171, %v2859
    %v4237 = vsel %vm4202, %v4172, %v2861
    %v4238 = vsel %vm4202, %v4173, %v2863
    %v4239 = vsel %vm4202, %v4174, %v2865
    %v4240 = vsel %vm4202, %v4175, %v2867
    %v4241 = vsel %vm4202, %v4176, %v2869
    %v4242 = vsel %vm4202, %v4177, %v2871
    %v4243 = vsel %vm4202, %v4178, %v2873
    %v4244 = vsel %vm4202, %v4179, %v2875
    %v4245 = vsel %vm4202, %v4180, %v2877
    %v4246 = vsel %vm4202, %v4181, %v2879
    %v4247 = vsel %vm4202, %v4182, %v2881
    %v4248 = vsel %vm4202, %v4183, %v2883
    %v4249 = vsel %vm4202, %v4184, %v2885
    %v4250 = vsel %vm4202, %v4185, %v2887
    %v4251 = vsel %vm4202, %v4186, %v2889
    %v4252 = vsel %vm4202, %v4187, %v2891
    %v4253 = vsel %vm4202, %v4188, %v2893
    %v4254 = vsel %vm4202, %v4189, %v2895
    %v4255 = vsel %vm4202, %v4190, %v2897
    %v4256 = vsel %vm4202, %v4191, %v2899
    %v4257 = vsel %vm4202, %v4192, %v2901
    %v4258 = vsel %vm4202, %v4193, %v2903
    %v4259 = vsel %vm4202, %v4194, %v2905
    %v4260 = vsel %vm4202, %v4195, %v2907
    %v4261 = vsel %vm4202, %v4196, %v2909
    %v4262 = vsel %vm4202, %v4197, %v2911
    %v4263 = vsel %vm4202, %v4198, %v2913
    %v4264 = vsel %vm4202, %v4199, %v2915
    %v4265 = vsel %vm4202, %v4200, %v2917
    %v4266 = vsel %vm4202, %v4201, %v2919
    %vm4267 = vcmask 326656
    %v4268 = vsel %vm4267, %v4203, %v3049
    %v4269 = vsel %vm4267, %v4204, %v3051
    %v4270 = vsel %vm4267, %v4205, %v3053
    %v4271 = vsel %vm4267, %v4206, %v3055
    %v4272 = vsel %vm4267, %v4207, %v3057
    %v4273 = vsel %vm4267, %v4208, %v3059
    %v4274 = vsel %vm4267, %v4209, %v3061
    %v4275 = vsel %vm4267, %v4210, %v3063
    %v4276 = vsel %vm4267, %v4211, %v3065
    %v4277 = vsel %vm4267, %v4212, %v3067
    %v4278 = vsel %vm4267, %v4213, %v3069
    %v4279 = vsel %vm4267, %v4214, %v3071
    %v4280 = vsel %vm4267, %v4215, %v3073
    %v4281 = vsel %vm4267, %v4216, %v3075
    %v4282 = vsel %vm4267, %v4217, %v3077
    %v4283 = vsel %vm4267, %v4218, %v3079
    %v4284 = vsel %vm4267, %v4219, %v3081
    %v4285 = vsel %vm4267, %v4220, %v3083
    %v4286 = vsel %vm4267, %v4221, %v3085
    %v4287 = vsel %vm4267, %v4222, %v3087
    %v4288 = vsel %vm4267, %v4223, %v3089
    %v4289 = vsel %vm4267, %v4224, %v3091
    %v4290 = vsel %vm4267, %v4225, %v3093
    %v4291 = vsel %vm4267, %v4226, %v3095
    %v4292 = vsel %vm4267, %v4227, %v3097
    %v4293 = vsel %vm4267, %v4228, %v3099
    %v4294 = vsel %vm4267, %v4229, %v3101
    %v4295 = vsel %vm4267, %v4230, %v3103
    %v4296 = vsel %vm4267, %v4231, %v3105
    %v4297 = vsel %vm4267, %v4232, %v3107
    %v4298 = vsel %vm4267, %v4233, %v3109
    %v4299 = vsel %vm4267, %v4234, %v3111
    %v4300 = vsel %vm4267, %v4235, %v3113
    %v4301 = vsel %vm4267, %v4236, %v3115
    %v4302 = vsel %vm4267, %v4237, %v3117
    %v4303 = vsel %vm4267, %v4238, %v3119
    %v4304 = vsel %vm4267, %v4239, %v3121
    %v4305 = vsel %vm4267, %v4240, %v3123
    %v4306 = vsel %vm4267, %v4241, %v3125
    %v4307 = vsel %vm4267, %v4242, %v3127
    %v4308 = vsel %vm4267, %v4243, %v3129
    %v4309 = vsel %vm4267, %v4244, %v3131
    %v4310 = vsel %vm4267, %v4245, %v3133
    %v4311 = vsel %vm4267, %v4246, %v3135
    %v4312 = vsel %vm4267, %v4247, %v3137
    %v4313 = vsel %vm4267, %v4248, %v3139
    %v4314 = vsel %vm4267, %v4249, %v3141
    %v4315 = vsel %vm4267, %v4250, %v3143
    %v4316 = vsel %vm4267, %v4251, %v3145
    %v4317 = vsel %vm4267, %v4252, %v3147
    %v4318 = vsel %vm4267, %v4253, %v3149
    %v4319 = vsel %vm4267, %v4254, %v3151
    %v4320 = vsel %vm4267, %v4255, %v3153
    %v4321 = vsel %vm4267, %v4256, %v3155
    %v4322 = vsel %vm4267, %v4257, %v3157
    %v4323 = vsel %vm4267, %v4258, %v3159
    %v4324 = vsel %vm4267, %v4259, %v3161
    %v4325 = vsel %vm4267, %v4260, %v3163
    %v4326 = vsel %vm4267, %v4261, %v3165
    %v4327 = vsel %vm4267, %v4262, %v3167
    %v4328 = vsel %vm4267, %v4263, %v3169
    %v4329 = vsel %vm4267, %v4264, %v3171
    %v4330 = vsel %vm4267, %v4265, %v3173
    %v4331 = vsel %vm4267, %v4266, %v3175
    %vm4332 = vcmask 392192
    %v4333 = vsel %vm4332, %v4268, %v3305
    %v4334 = vsel %vm4332, %v4269, %v3307
    %v4335 = vsel %vm4332, %v4270, %v3309
    %v4336 = vsel %vm4332, %v4271, %v3311
    %v4337 = vsel %vm4332, %v4272, %v3313
    %v4338 = vsel %vm4332, %v4273, %v3315
    %v4339 = vsel %vm4332, %v4274, %v3317
    %v4340 = vsel %vm4332, %v4275, %v3319
    %v4341 = vsel %vm4332, %v4276, %v3321
    %v4342 = vsel %vm4332, %v4277, %v3323
    %v4343 = vsel %vm4332, %v4278, %v3325
    %v4344 = vsel %vm4332, %v4279, %v3327
    %v4345 = vsel %vm4332, %v4280, %v3329
    %v4346 = vsel %vm4332, %v4281, %v3331
    %v4347 = vsel %vm4332, %v4282, %v3333
    %v4348 = vsel %vm4332, %v4283, %v3335
    %v4349 = vsel %vm4332, %v4284, %v3337
    %v4350 = vsel %vm4332, %v4285, %v3339
    %v4351 = vsel %vm4332, %v4286, %v3341
    %v4352 = vsel %vm4332, %v4287, %v3343
    %v4353 = vsel %vm4332, %v4288, %v3345
    %v4354 = vsel %vm4332, %v4289, %v3347
    %v4355 = vsel %vm4332, %v4290, %v3349
    %v4356 = vsel %vm4332, %v4291, %v3351
    %v4357 = vsel %vm4332, %v4292, %v3353
    %v4358 = vsel %vm4332, %v4293, %v3355
    %v4359 = vsel %vm4332, %v4294, %v3357
    %v4360 = vsel %vm4332, %v4295, %v3359
    %v4361 = vsel %vm4332, %v4296, %v3361
    %v4362 = vsel %vm4332, %v4297, %v3363
    %v4363 = vsel %vm4332, %v4298, %v3365
    %v4364 = vsel %vm4332, %v4299, %v3367
    %v4365 = vsel %vm4332, %v4300, %v3369
    %v4366 = vsel %vm4332, %v4301, %v3371
    %v4367 = vsel %vm4332, %v4302, %v3373
    %v4368 = vsel %vm4332, %v4303, %v3375
    %v4369 = vsel %vm4332, %v4304, %v3377
    %v4370 = vsel %vm4332, %v4305, %v3379
    %v4371 = vsel %vm4332, %v4306, %v3381
    %v4372 = vsel %vm4332, %v4307, %v3383
    %v4373 = vsel %vm4332, %v4308, %v3385
    %v4374 = vsel %vm4332, %v4309, %v3387
    %v4375 = vsel %vm4332, %v4310, %v3389
    %v4376 = vsel %vm4332, %v4311, %v3391
    %v4377 = vsel %vm4332, %v4312, %v3393
    %v4378 = vsel %vm4332, %v4313, %v3395
    %v4379 = vsel %vm4332, %v4314, %v3397
    %v4380 = vsel %vm4332, %v4315, %v3399
    %v4381 = vsel %vm4332, %v4316, %v3401
    %v4382 = vsel %vm4332, %v4317, %v3403
    %v4383 = vsel %vm4332, %v4318, %v3405
    %v4384 = vsel %vm4332, %v4319, %v3407
    %v4385 = vsel %vm4332, %v4320, %v3409
    %v4386 = vsel %vm4332, %v4321, %v3411
    %v4387 = vsel %vm4332, %v4322, %v3413
    %v4388 = vsel %vm4332, %v4323, %v3415
    %v4389 = vsel %vm4332, %v4324, %v3417
    %v4390 = vsel %vm4332, %v4325, %v3419
    %v4391 = vsel %vm4332, %v4326, %v3421
    %v4392 = vsel %vm4332, %v4327, %v3423
    %v4393 = vsel %vm4332, %v4328, %v3425
    %v4394 = vsel %vm4332, %v4329, %v3427
    %v4395 = vsel %vm4332, %v4330, %v3429
    %v4396 = vsel %vm4332, %v4331, %v3431
    %vm4397 = vcmask 457728
    %v4398 = vsel %vm4397, %v4333, %v3561
    %v4399 = vsel %vm4397, %v4334, %v3563
    %v4400 = vsel %vm4397, %v4335, %v3565
    %v4401 = vsel %vm4397, %v4336, %v3567
    %v4402 = vsel %vm4397, %v4337, %v3569
    %v4403 = vsel %vm4397, %v4338, %v3571
    %v4404 = vsel %vm4397, %v4339, %v3573
    %v4405 = vsel %vm4397, %v4340, %v3575
    %v4406 = vsel %vm4397, %v4341, %v3577
    %v4407 = vsel %vm4397, %v4342, %v3579
    %v4408 = vsel %vm4397, %v4343, %v3581
    %v4409 = vsel %vm4397, %v4344, %v3583
    %v4410 = vsel %vm4397, %v4345, %v3585
    %v4411 = vsel %vm4397, %v4346, %v3587
    %v4412 = vsel %vm4397, %v4347, %v3589
    %v4413 = vsel %vm4397, %v4348, %v3591
    %v4414 = vsel %vm4397, %v4349, %v3593
    %v4415 = vsel %vm4397, %v4350, %v3595
    %v4416 = vsel %vm4397, %v4351, %v3597
    %v4417 = vsel %vm4397, %v4352, %v3599
    %v4418 = vsel %vm4397, %v4353, %v3601
    %v4419 = vsel %vm4397, %v4354, %v3603
    %v4420 = vsel %vm4397, %v4355, %v3605
    %v4421 = vsel %vm4397, %v4356, %v3607
    %v4422 = vsel %vm4397, %v4357, %v3609
    %v4423 = vsel %vm4397, %v4358, %v3611
    %v4424 = vsel %vm4397, %v4359, %v3613
    %v4425 = vsel %vm4397, %v4360, %v3615
    %v4426 = vsel %vm4397, %v4361, %v3617
    %v4427 = vsel %vm4397, %v4362, %v3619
    %v4428 = vsel %vm4397, %v4363, %v3621
    %v4429 = vsel %vm4397, %v4364, %v3623
    %v4430 = vsel %vm4397, %v4365, %v3625
    %v4431 = vsel %vm4397, %v4366, %v3627
    %v4432 = vsel %vm4397, %v4367, %v3629
    %v4433 = vsel %vm4397, %v4368, %v3631
    %v4434 = vsel %vm4397, %v4369, %v3633
    %v4435 = vsel %vm4397, %v4370, %v3635
    %v4436 = vsel %vm4397, %v4371, %v3637
    %v4437 = vsel %vm4397, %v4372, %v3639
    %v4438 = vsel %vm4397, %v4373, %v3641
    %v4439 = vsel %vm4397, %v4374, %v3643
    %v4440 = vsel %vm4397, %v4375, %v3645
    %v4441 = vsel %vm4397, %v4376, %v3647
    %v4442 = vsel %vm4397, %v4377, %v3649
    %v4443 = vsel %vm4397, %v4378, %v3651
    %v4444 = vsel %vm4397, %v4379, %v3653
    %v4445 = vsel %vm4397, %v4380, %v3655
    %v4446 = vsel %vm4397, %v4381, %v3657
    %v4447 = vsel %vm4397, %v4382, %v3659
    %v4448 = vsel %vm4397, %v4383, %v3661
    %v4449 = vsel %vm4397, %v4384, %v3663
    %v4450 = vsel %vm4397, %v4385, %v3665
    %v4451 = vsel %vm4397, %v4386, %v3667
    %v4452 = vsel %vm4397, %v4387, %v3669
    %v4453 = vsel %vm4397, %v4388, %v3671
    %v4454 = vsel %vm4397, %v4389, %v3673
    %v4455 = vsel %vm4397, %v4390, %v3675
    %v4456 = vsel %vm4397, %v4391, %v3677
    %v4457 = vsel %vm4397, %v4392, %v3679
    %v4458 = vsel %vm4397, %v4393, %v3681
    %v4459 = vsel %vm4397, %v4394, %v3683
    %v4460 = vsel %vm4397, %v4395, %v3685
    %v4461 = vsel %vm4397, %v4396, %v3687
    %vm4462 = vcmask 523264
    %v4463 = vsel %vm4462, %v4398, %v3817
    %v4464 = vsel %vm4462, %v4399, %v3819
    %v4465 = vsel %vm4462, %v4400, %v3821
    %v4466 = vsel %vm4462, %v4401, %v3823
    %v4467 = vsel %vm4462, %v4402, %v3825
    %v4468 = vsel %vm4462, %v4403, %v3827
    %v4469 = vsel %vm4462, %v4404, %v3829
    %v4470 = vsel %vm4462, %v4405, %v3831
    %v4471 = vsel %vm4462, %v4406, %v3833
    %v4472 = vsel %vm4462, %v4407, %v3835
    %v4473 = vsel %vm4462, %v4408, %v3837
    %v4474 = vsel %vm4462, %v4409, %v3839
    %v4475 = vsel %vm4462, %v4410, %v3841
    %v4476 = vsel %vm4462, %v4411, %v3843
    %v4477 = vsel %vm4462, %v4412, %v3845
    %v4478 = vsel %vm4462, %v4413, %v3847
    %v4479 = vsel %vm4462, %v4414, %v3849
    %v4480 = vsel %vm4462, %v4415, %v3851
    %v4481 = vsel %vm4462, %v4416, %v3853
    %v4482 = vsel %vm4462, %v4417, %v3855
    %v4483 = vsel %vm4462, %v4418, %v3857
    %v4484 = vsel %vm4462, %v4419, %v3859
    %v4485 = vsel %vm4462, %v4420, %v3861
    %v4486 = vsel %vm4462, %v4421, %v3863
    %v4487 = vsel %vm4462, %v4422, %v3865
    %v4488 = vsel %vm4462, %v4423, %v3867
    %v4489 = vsel %vm4462, %v4424, %v3869
    %v4490 = vsel %vm4462, %v4425, %v3871
    %v4491 = vsel %vm4462, %v4426, %v3873
    %v4492 = vsel %vm4462, %v4427, %v3875
    %v4493 = vsel %vm4462, %v4428, %v3877
    %v4494 = vsel %vm4462, %v4429, %v3879
    %v4495 = vsel %vm4462, %v4430, %v3881
    %v4496 = vsel %vm4462, %v4431, %v3883
    %v4497 = vsel %vm4462, %v4432, %v3885
    %v4498 = vsel %vm4462, %v4433, %v3887
    %v4499 = vsel %vm4462, %v4434, %v3889
    %v4500 = vsel %vm4462, %v4435, %v3891
    %v4501 = vsel %vm4462, %v4436, %v3893
    %v4502 = vsel %vm4462, %v4437, %v3895
    %v4503 = vsel %vm4462, %v4438, %v3897
    %v4504 = vsel %vm4462, %v4439, %v3899
    %v4505 = vsel %vm4462, %v4440, %v3901
    %v4506 = vsel %vm4462, %v4441, %v3903
    %v4507 = vsel %vm4462, %v4442, %v3905
    %v4508 = vsel %vm4462, %v4443, %v3907
    %v4509 = vsel %vm4462, %v4444, %v3909
    %v4510 = vsel %vm4462, %v4445, %v3911
    %v4511 = vsel %vm4462, %v4446, %v3913
    %v4512 = vsel %vm4462, %v4447, %v3915
    %v4513 = vsel %vm4462, %v4448, %v3917
    %v4514 = vsel %vm4462, %v4449, %v3919
    %v4515 = vsel %vm4462, %v4450, %v3921
    %v4516 = vsel %vm4462, %v4451, %v3923
    %v4517 = vsel %vm4462, %v4452, %v3925
    %v4518 = vsel %vm4462, %v4453, %v3927
    %v4519 = vsel %vm4462, %v4454, %v3929
    %v4520 = vsel %vm4462, %v4455, %v3931
    %v4521 = vsel %vm4462, %v4456, %v3933
    %v4522 = vsel %vm4462, %v4457, %v3935
    %v4523 = vsel %vm4462, %v4458, %v3937
    %v4524 = vsel %vm4462, %v4459, %v3939
    %v4525 = vsel %vm4462, %v4460, %v3941
    %v4526 = vsel %vm4462, %v4461, %v3943
    %v4527 = vld [vmem:[%s3] sm:$0xff]
    %v4528 = vld [vmem:[%s3 + $0x8] sm:$0xff]
    %v4529 = vld [vmem:[%s3 + $0x10] sm:$0xff]
    %v4530 = vld [vmem:[%s3 + $0x18] sm:$0xff]
    %v4531 = vld [vmem:[%s3 + $0x20] sm:$0xff]
    %v4532 = vld [vmem:[%s3 + $0x28] sm:$0xff]
    %v4533 = vld [vmem:[%s3 + $0x30] sm:$0xff]
    %v4534 = vld [vmem:[%s3 + $0x38] sm:$0xff]
    %v4535 = vld [vmem:[%s3 + $0x40] sm:$0xff]
    %vm4536 = vcmask 588800
    %v4538 = vsel %vm4536, %v4463, 0
    %v4541 = vsel %vm4536, %v4464, 0
    %v4544 = vsel %vm4536, %v4465, 0
    %v4547 = vsel %vm4536, %v4466, 0
    %v4550 = vsel %vm4536, %v4467, 0
    %v4553 = vsel %vm4536, %v4468, 0
    %v4556 = vsel %vm4536, %v4469, 0
    %v4559 = vsel %vm4536, %v4470, 0
    %v4562 = vsel %vm4536, %v4471, 0
    %v4565 = vsel %vm4536, %v4472, 0
    %v4568 = vsel %vm4536, %v4473, 0
    %v4571 = vsel %vm4536, %v4474, 0
    %v4574 = vsel %vm4536, %v4475, 0
    %v4577 = vsel %vm4536, %v4476, 0
    %v4580 = vsel %vm4536, %v4477, 0
    %v4583 = vsel %vm4536, %v4478, 0
    %v4586 = vsel %vm4536, %v4479, 0
    %v4589 = vsel %vm4536, %v4480, 0
    %v4592 = vsel %vm4536, %v4481, 0
    %v4595 = vsel %vm4536, %v4482, 0
    %v4598 = vsel %vm4536, %v4483, 0
    %v4601 = vsel %vm4536, %v4484, 0
    %v4604 = vsel %vm4536, %v4485, 0
    %v4607 = vsel %vm4536, %v4486, 0
    %v4610 = vsel %vm4536, %v4487, 0
    %v4613 = vsel %vm4536, %v4488, 0
    %v4616 = vsel %vm4536, %v4489, 0
    %v4619 = vsel %vm4536, %v4490, 0
    %v4622 = vsel %vm4536, %v4491, 0
    %v4625 = vsel %vm4536, %v4492, 0
    %v4628 = vsel %vm4536, %v4493, 0
    %v4631 = vsel %vm4536, %v4494, 0
    %v4634 = vsel %vm4536, %v4495, 0
    %v4637 = vsel %vm4536, %v4496, 0
    %v4640 = vsel %vm4536, %v4497, 0
    %v4643 = vsel %vm4536, %v4498, 0
    %v4646 = vsel %vm4536, %v4499, 0
    %v4649 = vsel %vm4536, %v4500, 0
    %v4652 = vsel %vm4536, %v4501, 0
    %v4655 = vsel %vm4536, %v4502, 0
    %v4658 = vsel %vm4536, %v4503, 0
    %v4661 = vsel %vm4536, %v4504, 0
    %v4664 = vsel %vm4536, %v4505, 0
    %v4667 = vsel %vm4536, %v4506, 0
    %v4670 = vsel %vm4536, %v4507, 0
    %v4673 = vsel %vm4536, %v4508, 0
    %v4676 = vsel %vm4536, %v4509, 0
    %v4679 = vsel %vm4536, %v4510, 0
    %v4682 = vsel %vm4536, %v4511, 0
    %v4685 = vsel %vm4536, %v4512, 0
    %v4688 = vsel %vm4536, %v4513, 0
    %v4691 = vsel %vm4536, %v4514, 0
    %v4694 = vsel %vm4536, %v4515, 0
    %v4697 = vsel %vm4536, %v4516, 0
    %v4700 = vsel %vm4536, %v4517, 0
    %v4703 = vsel %vm4536, %v4518, 0
    %v4706 = vsel %vm4536, %v4519, 0
    %v4709 = vsel %vm4536, %v4520, 0
    %v4712 = vsel %vm4536, %v4521, 0
    %v4715 = vsel %vm4536, %v4522, 0
    %v4718 = vsel %vm4536, %v4523, 0
    %v4721 = vsel %vm4536, %v4524, 0
    %v4724 = vsel %vm4536, %v4525, 0
    %v4727 = vsel %vm4536, %v4526, 0
    %4729 = vmatprep.subr.mxu0 0.0
    %4730 = vmatpush1.msra.mxu0 %v4527
    %4731 = vmatprep.subr.mxu0 0.0
    %4732 = vmatpush1.msra.mxu0 %v4528
    %4733 = vmatprep.subr.mxu0 0.0
    %4734 = vmatpush1.msra.mxu0 %v4529
    %4735 = vmatprep.subr.mxu0 0.0
    %4736 = vmatpush1.msra.mxu0 %v4530
    %4737 = vmatprep.subr.mxu0 0.0
    %4738 = vmatpush1.msra.mxu0 %v4531
    %4739 = vmatprep.subr.mxu0 0.0
    %4740 = vmatpush1.msra.mxu0 %v4532
    %4741 = vmatprep.subr.mxu0 0.0
    %4742 = vmatpush1.msra.mxu0 %v4533
    %4743 = vmatprep.subr.mxu0 0.0
    %4744 = vmatpush1.msra.mxu0 %v4534
    %4745 = vmatprep.subr.mxu0 0.0
    %4746 = vmatpush1.msra.mxu0 %v4535
    %4747 = vmatprep.subr.mxu0 0.0
    %4748 = vmatpush1.msra.mxu0 0.0
    %4749 = vmatprep.subr.mxu0 0.0
    %4750 = vmatpush1.msra.mxu0 0.0
    %4751 = vmatprep.subr.mxu0 0.0
    %4752 = vmatpush1.msra.mxu0 0.0
    %4753 = vmatprep.subr.mxu0 0.0
    %4754 = vmatpush1.msra.mxu0 0.0
    %4755 = vmatprep.subr.mxu0 0.0
    %4756 = vmatpush1.msra.mxu0 0.0
    %4757 = vmatprep.subr.mxu0 0.0
    %4758 = vmatpush1.msra.mxu0 0.0
    %4759 = vmatprep.subr.mxu0 0.0
    %4760 = vmatpush1.msra.mxu0 0.0
    %4761 = vmatprep.subr.mxu0 0.0
    %4762 = vmatpush1.msra.mxu0 0.0
    %4763 = vmatprep.subr.mxu0 0.0
    %4764 = vmatpush1.msra.mxu0 0.0
    %4765 = vmatprep.subr.mxu0 0.0
    %4766 = vmatpush1.msra.mxu0 0.0
    %4767 = vmatprep.subr.mxu0 0.0
    %4768 = vmatpush1.msra.mxu0 0.0
    %4769 = vmatprep.subr.mxu0 0.0
    %4770 = vmatpush1.msra.mxu0 0.0
    %4771 = vmatprep.subr.mxu0 0.0
    %4772 = vmatpush1.msra.mxu0 0.0
    %4773 = vmatprep.subr.mxu0 0.0
    %4774 = vmatpush1.msra.mxu0 0.0
    %4775 = vmatprep.subr.mxu0 0.0
    %4776 = vmatpush1.msra.mxu0 0.0
    %4777 = vmatprep.subr.mxu0 0.0
    %4778 = vmatpush1.msra.mxu0 0.0
    %4779 = vmatprep.subr.mxu0 0.0
    %4780 = vmatpush1.msra.mxu0 0.0
    %4781 = vmatprep.subr.mxu0 0.0
    %4782 = vmatpush1.msra.mxu0 0.0
    %4783 = vmatprep.subr.mxu0 0.0
    %4784 = vmatpush1.msra.mxu0 0.0
    %4785 = vmatprep.subr.mxu0 0.0
    %4786 = vmatpush1.msra.mxu0 0.0
    %4787 = vmatprep.subr.mxu0 0.0
    %4788 = vmatpush1.msra.mxu0 0.0
    %4789 = vmatprep.subr.mxu0 0.0
    %4790 = vmatpush1.msra.mxu0 0.0
    %4791 = vmatprep.subr.mxu0 0.0
    %4792 = vmatpush1.msra.mxu0 0.0
    %4793 = vmatprep.mubr.f32.mxu0 0.0
    %4794 = vmatmul.mubr.f32.gmra.mrb[0].mxu0 %v4538
    %v4795 = vpop.f32.mrb[0].mxu0
    %v4796 = vadd.f32 0.0, %v4795
    %v4797 = vpop.f32.mrb[0].mxu0
    %4798 = vmatprep.mubr.f32.mxu0 0.0
    %4799 = vmatmul.mubr.f32.gmra.mrb[0].mxu0 %v4541
    %v4800 = vpop.f32.mrb[0].mxu0
    %v4801 = vadd.f32 0.0, %v4800
    %v4802 = vpop.f32.mrb[0].mxu0
    %4803 = vmatprep.mubr.f32.mxu0 0.0
    %4804 = vmatmul.mubr.f32.gmra.mrb[0].mxu0 %v4544
    %v4805 = vpop.f32.mrb[0].mxu0
    %v4806 = vadd.f32 0.0, %v4805
    %v4807 = vpop.f32.mrb[0].mxu0
    %4808 = vmatprep.mubr.f32.mxu0 0.0
    %4809 = vmatmul.mubr.f32.gmra.mrb[0].mxu0 %v4547
    %v4810 = vpop.f32.mrb[0].mxu0
    %v4811 = vadd.f32 0.0, %v4810
    %v4812 = vpop.f32.mrb[0].mxu0
    %4813 = vmatprep.mubr.f32.mxu0 0.0
    %4814 = vmatmul.mubr.f32.gmra.mrb[0].mxu0 %v4550
    %v4815 = vpop.f32.mrb[0].mxu0
    %v4816 = vadd.f32 0.0, %v4815
    %v4817 = vpop.f32.mrb[0].mxu0
    %4818 = vmatprep.mubr.f32.mxu0 0.0
    %4819 = vmatmul.mubr.f32.gmra.mrb[0].mxu0 %v4553
    %v4820 = vpop.f32.mrb[0].mxu0
    %v4821 = vadd.f32 0.0, %v4820
    %v4822 = vpop.f32.mrb[0].mxu0
    %4823 = vmatprep.mubr.f32.mxu0 0.0
    %4824 = vmatmul.mubr.f32.gmra.mrb[0].mxu0 %v4556
    %v4825 = vpop.f32.mrb[0].mxu0
    %v4826 = vadd.f32 0.0, %v4825
    %v4827 = vpop.f32.mrb[0].mxu0
    %4828 = vmatprep.mubr.f32.mxu0 0.0
    %4829 = vmatmul.mubr.f32.gmra.mrb[0].mxu0 %v4559
    %v4830 = vpop.f32.mrb[0].mxu0
    %v4831 = vadd.f32 0.0, %v4830
    %v4832 = vpop.f32.mrb[0].mxu0
    %4833 = vmatprep.mubr.f32.mxu0 0.0
    %4834 = vmatmul.mubr.f32.gmra.mrb[0].mxu0 %v4562
    %v4835 = vpop.f32.mrb[0].mxu0
    %v4836 = vadd.f32 0.0, %v4835
    %v4837 = vpop.f32.mrb[0].mxu0
    %4838 = vmatprep.mubr.f32.mxu0 0.0
    %4839 = vmatmul.mubr.f32.gmra.mrb[0].mxu0 %v4565
    %v4840 = vpop.f32.mrb[0].mxu0
    %v4841 = vadd.f32 0.0, %v4840
    %v4842 = vpop.f32.mrb[0].mxu0
    %4843 = vmatprep.mubr.f32.mxu0 0.0
    %4844 = vmatmul.mubr.f32.gmra.mrb[0].mxu0 %v4568
    %v4845 = vpop.f32.mrb[0].mxu0
    %v4846 = vadd.f32 0.0, %v4845
    %v4847 = vpop.f32.mrb[0].mxu0
    %4848 = vmatprep.mubr.f32.mxu0 0.0
    %4849 = vmatmul.mubr.f32.gmra.mrb[0].mxu0 %v4571
    %v4850 = vpop.f32.mrb[0].mxu0
    %v4851 = vadd.f32 0.0, %v4850
    %v4852 = vpop.f32.mrb[0].mxu0
    %4853 = vmatprep.mubr.f32.mxu0 0.0
    %4854 = vmatmul.mubr.f32.gmra.mrb[0].mxu0 %v4574
    %v4855 = vpop.f32.mrb[0].mxu0
    %v4856 = vadd.f32 0.0, %v4855
    %v4857 = vpop.f32.mrb[0].mxu0
    %4858 = vmatprep.mubr.f32.mxu0 0.0
    %4859 = vmatmul.mubr.f32.gmra.mrb[0].mxu0 %v4577
    %v4860 = vpop.f32.mrb[0].mxu0
    %v4861 = vadd.f32 0.0, %v4860
    %v4862 = vpop.f32.mrb[0].mxu0
    %4863 = vmatprep.mubr.f32.mxu0 0.0
    %4864 = vmatmul.mubr.f32.gmra.mrb[0].mxu0 %v4580
    %v4865 = vpop.f32.mrb[0].mxu0
    %v4866 = vadd.f32 0.0, %v4865
    %v4867 = vpop.f32.mrb[0].mxu0
    %4868 = vmatprep.mubr.f32.mxu0 0.0
    %4869 = vmatmul.mubr.f32.gmra.mrb[0].mxu0 %v4583
    %v4870 = vpop.f32.mrb[0].mxu0
    %v4871 = vadd.f32 0.0, %v4870
    %v4872 = vpop.f32.mrb[0].mxu0
    %4873 = vmatprep.mubr.f32.mxu0 0.0
    %4874 = vmatmul.mubr.f32.gmra.mrb[0].mxu0 %v4586
    %v4875 = vpop.f32.mrb[0].mxu0
    %v4876 = vadd.f32 0.0, %v4875
    %v4877 = vpop.f32.mrb[0].mxu0
    %4878 = vmatprep.mubr.f32.mxu0 0.0
    %4879 = vmatmul.mubr.f32.gmra.mrb[0].mxu0 %v4589
    %v4880 = vpop.f32.mrb[0].mxu0
    %v4881 = vadd.f32 0.0, %v4880
    %v4882 = vpop.f32.mrb[0].mxu0
    %4883 = vmatprep.mubr.f32.mxu0 0.0
    %4884 = vmatmul.mubr.f32.gmra.mrb[0].mxu0 %v4592
    %v4885 = vpop.f32.mrb[0].mxu0
    %v4886 = vadd.f32 0.0, %v4885
    %v4887 = vpop.f32.mrb[0].mxu0
    %4888 = vmatprep.mubr.f32.mxu0 0.0
    %4889 = vmatmul.mubr.f32.gmra.mrb[0].mxu0 %v4595
    %v4890 = vpop.f32.mrb[0].mxu0
    %v4891 = vadd.f32 0.0, %v4890
    %v4892 = vpop.f32.mrb[0].mxu0
    %4893 = vmatprep.mubr.f32.mxu0 0.0
    %4894 = vmatmul.mubr.f32.gmra.mrb[0].mxu0 %v4598
    %v4895 = vpop.f32.mrb[0].mxu0
    %v4896 = vadd.f32 0.0, %v4895
    %v4897 = vpop.f32.mrb[0].mxu0
    %4898 = vmatprep.mubr.f32.mxu0 0.0
    %4899 = vmatmul.mubr.f32.gmra.mrb[0].mxu0 %v4601
    %v4900 = vpop.f32.mrb[0].mxu0
    %v4901 = vadd.f32 0.0, %v4900
    %v4902 = vpop.f32.mrb[0].mxu0
    %4903 = vmatprep.mubr.f32.mxu0 0.0
    %4904 = vmatmul.mubr.f32.gmra.mrb[0].mxu0 %v4604
    %v4905 = vpop.f32.mrb[0].mxu0
    %v4906 = vadd.f32 0.0, %v4905
    %v4907 = vpop.f32.mrb[0].mxu0
    %4908 = vmatprep.mubr.f32.mxu0 0.0
    %4909 = vmatmul.mubr.f32.gmra.mrb[0].mxu0 %v4607
    %v4910 = vpop.f32.mrb[0].mxu0
    %v4911 = vadd.f32 0.0, %v4910
    %v4912 = vpop.f32.mrb[0].mxu0
    %4913 = vmatprep.mubr.f32.mxu0 0.0
    %4914 = vmatmul.mubr.f32.gmra.mrb[0].mxu0 %v4610
    %v4915 = vpop.f32.mrb[0].mxu0
    %v4916 = vadd.f32 0.0, %v4915
    %v4917 = vpop.f32.mrb[0].mxu0
    %4918 = vmatprep.mubr.f32.mxu0 0.0
    %4919 = vmatmul.mubr.f32.gmra.mrb[0].mxu0 %v4613
    %v4920 = vpop.f32.mrb[0].mxu0
    %v4921 = vadd.f32 0.0, %v4920
    %v4922 = vpop.f32.mrb[0].mxu0
    %4923 = vmatprep.mubr.f32.mxu0 0.0
    %4924 = vmatmul.mubr.f32.gmra.mrb[0].mxu0 %v4616
    %v4925 = vpop.f32.mrb[0].mxu0
    %v4926 = vadd.f32 0.0, %v4925
    %v4927 = vpop.f32.mrb[0].mxu0
    %4928 = vmatprep.mubr.f32.mxu0 0.0
    %4929 = vmatmul.mubr.f32.gmra.mrb[0].mxu0 %v4619
    %v4930 = vpop.f32.mrb[0].mxu0
    %v4931 = vadd.f32 0.0, %v4930
    %v4932 = vpop.f32.mrb[0].mxu0
    %4933 = vmatprep.mubr.f32.mxu0 0.0
    %4934 = vmatmul.mubr.f32.gmra.mrb[0].mxu0 %v4622
    %v4935 = vpop.f32.mrb[0].mxu0
    %v4936 = vadd.f32 0.0, %v4935
    %v4937 = vpop.f32.mrb[0].mxu0
    %4938 = vmatprep.mubr.f32.mxu0 0.0
    %4939 = vmatmul.mubr.f32.gmra.mrb[0].mxu0 %v4625
    %v4940 = vpop.f32.mrb[0].mxu0
    %v4941 = vadd.f32 0.0, %v4940
    %v4942 = vpop.f32.mrb[0].mxu0
    %4943 = vmatprep.mubr.f32.mxu0 0.0
    %4944 = vmatmul.mubr.f32.gmra.mrb[0].mxu0 %v4628
    %v4945 = vpop.f32.mrb[0].mxu0
    %v4946 = vadd.f32 0.0, %v4945
    %v4947 = vpop.f32.mrb[0].mxu0
    %4948 = vmatprep.mubr.f32.mxu0 0.0
    %4949 = vmatmul.mubr.f32.gmra.mrb[0].mxu0 %v4631
    %v4950 = vpop.f32.mrb[0].mxu0
    %v4951 = vadd.f32 0.0, %v4950
    %v4952 = vpop.f32.mrb[0].mxu0
    %4953 = vmatprep.mubr.f32.mxu0 0.0
    %4954 = vmatmul.mubr.f32.gmra.mrb[0].mxu0 %v4634
    %v4955 = vpop.f32.mrb[0].mxu0
    %v4956 = vadd.f32 0.0, %v4955
    %v4957 = vpop.f32.mrb[0].mxu0
    %4958 = vmatprep.mubr.f32.mxu0 0.0
    %4959 = vmatmul.mubr.f32.gmra.mrb[0].mxu0 %v4637
    %v4960 = vpop.f32.mrb[0].mxu0
    %v4961 = vadd.f32 0.0, %v4960
    %v4962 = vpop.f32.mrb[0].mxu0
    %4963 = vmatprep.mubr.f32.mxu0 0.0
    %4964 = vmatmul.mubr.f32.gmra.mrb[0].mxu0 %v4640
    %v4965 = vpop.f32.mrb[0].mxu0
    %v4966 = vadd.f32 0.0, %v4965
    %v4967 = vpop.f32.mrb[0].mxu0
    %4968 = vmatprep.mubr.f32.mxu0 0.0
    %4969 = vmatmul.mubr.f32.gmra.mrb[0].mxu0 %v4643
    %v4970 = vpop.f32.mrb[0].mxu0
    %v4971 = vadd.f32 0.0, %v4970
    %v4972 = vpop.f32.mrb[0].mxu0
    %4973 = vmatprep.mubr.f32.mxu0 0.0
    %4974 = vmatmul.mubr.f32.gmra.mrb[0].mxu0 %v4646
    %v4975 = vpop.f32.mrb[0].mxu0
    %v4976 = vadd.f32 0.0, %v4975
    %v4977 = vpop.f32.mrb[0].mxu0
    %4978 = vmatprep.mubr.f32.mxu0 0.0
    %4979 = vmatmul.mubr.f32.gmra.mrb[0].mxu0 %v4649
    %v4980 = vpop.f32.mrb[0].mxu0
    %v4981 = vadd.f32 0.0, %v4980
    %v4982 = vpop.f32.mrb[0].mxu0
    %4983 = vmatprep.mubr.f32.mxu0 0.0
    %4984 = vmatmul.mubr.f32.gmra.mrb[0].mxu0 %v4652
    %v4985 = vpop.f32.mrb[0].mxu0
    %v4986 = vadd.f32 0.0, %v4985
    %v4987 = vpop.f32.mrb[0].mxu0
    %4988 = vmatprep.mubr.f32.mxu0 0.0
    %4989 = vmatmul.mubr.f32.gmra.mrb[0].mxu0 %v4655
    %v4990 = vpop.f32.mrb[0].mxu0
    %v4991 = vadd.f32 0.0, %v4990
    %v4992 = vpop.f32.mrb[0].mxu0
    %4993 = vmatprep.mubr.f32.mxu0 0.0
    %4994 = vmatmul.mubr.f32.gmra.mrb[0].mxu0 %v4658
    %v4995 = vpop.f32.mrb[0].mxu0
    %v4996 = vadd.f32 0.0, %v4995
    %v4997 = vpop.f32.mrb[0].mxu0
    %4998 = vmatprep.mubr.f32.mxu0 0.0
    %4999 = vmatmul.mubr.f32.gmra.mrb[0].mxu0 %v4661
    %v5000 = vpop.f32.mrb[0].mxu0
    %v5001 = vadd.f32 0.0, %v5000
    %v5002 = vpop.f32.mrb[0].mxu0
    %5003 = vmatprep.mubr.f32.mxu0 0.0
    %5004 = vmatmul.mubr.f32.gmra.mrb[0].mxu0 %v4664
    %v5005 = vpop.f32.mrb[0].mxu0
    %v5006 = vadd.f32 0.0, %v5005
    %v5007 = vpop.f32.mrb[0].mxu0
    %5008 = vmatprep.mubr.f32.mxu0 0.0
    %5009 = vmatmul.mubr.f32.gmra.mrb[0].mxu0 %v4667
    %v5010 = vpop.f32.mrb[0].mxu0
    %v5011 = vadd.f32 0.0, %v5010
    %v5012 = vpop.f32.mrb[0].mxu0
    %5013 = vmatprep.mubr.f32.mxu0 0.0
    %5014 = vmatmul.mubr.f32.gmra.mrb[0].mxu0 %v4670
    %v5015 = vpop.f32.mrb[0].mxu0
    %v5016 = vadd.f32 0.0, %v5015
    %v5017 = vpop.f32.mrb[0].mxu0
    %5018 = vmatprep.mubr.f32.mxu0 0.0
    %5019 = vmatmul.mubr.f32.gmra.mrb[0].mxu0 %v4673
    %v5020 = vpop.f32.mrb[0].mxu0
    %v5021 = vadd.f32 0.0, %v5020
    %v5022 = vpop.f32.mrb[0].mxu0
    %5023 = vmatprep.mubr.f32.mxu0 0.0
    %5024 = vmatmul.mubr.f32.gmra.mrb[0].mxu0 %v4676
    %v5025 = vpop.f32.mrb[0].mxu0
    %v5026 = vadd.f32 0.0, %v5025
    %v5027 = vpop.f32.mrb[0].mxu0
    %5028 = vmatprep.mubr.f32.mxu0 0.0
    %5029 = vmatmul.mubr.f32.gmra.mrb[0].mxu0 %v4679
    %v5030 = vpop.f32.mrb[0].mxu0
    %v5031 = vadd.f32 0.0, %v5030
    %v5032 = vpop.f32.mrb[0].mxu0
    %5033 = vmatprep.mubr.f32.mxu0 0.0
    %5034 = vmatmul.mubr.f32.gmra.mrb[0].mxu0 %v4682
    %v5035 = vpop.f32.mrb[0].mxu0
    %v5036 = vadd.f32 0.0, %v5035
    %v5037 = vpop.f32.mrb[0].mxu0
    %5038 = vmatprep.mubr.f32.mxu0 0.0
    %5039 = vmatmul.mubr.f32.gmra.mrb[0].mxu0 %v4685
    %v5040 = vpop.f32.mrb[0].mxu0
    %v5041 = vadd.f32 0.0, %v5040
    %v5042 = vpop.f32.mrb[0].mxu0
    %5043 = vmatprep.mubr.f32.mxu0 0.0
    %5044 = vmatmul.mubr.f32.gmra.mrb[0].mxu0 %v4688
    %v5045 = vpop.f32.mrb[0].mxu0
    %v5046 = vadd.f32 0.0, %v5045
    %v5047 = vpop.f32.mrb[0].mxu0
    %5048 = vmatprep.mubr.f32.mxu0 0.0
    %5049 = vmatmul.mubr.f32.gmra.mrb[0].mxu0 %v4691
    %v5050 = vpop.f32.mrb[0].mxu0
    %v5051 = vadd.f32 0.0, %v5050
    %v5052 = vpop.f32.mrb[0].mxu0
    %5053 = vmatprep.mubr.f32.mxu0 0.0
    %5054 = vmatmul.mubr.f32.gmra.mrb[0].mxu0 %v4694
    %v5055 = vpop.f32.mrb[0].mxu0
    %v5056 = vadd.f32 0.0, %v5055
    %v5057 = vpop.f32.mrb[0].mxu0
    %5058 = vmatprep.mubr.f32.mxu0 0.0
    %5059 = vmatmul.mubr.f32.gmra.mrb[0].mxu0 %v4697
    %v5060 = vpop.f32.mrb[0].mxu0
    %v5061 = vadd.f32 0.0, %v5060
    %v5062 = vpop.f32.mrb[0].mxu0
    %5063 = vmatprep.mubr.f32.mxu0 0.0
    %5064 = vmatmul.mubr.f32.gmra.mrb[0].mxu0 %v4700
    %v5065 = vpop.f32.mrb[0].mxu0
    %v5066 = vadd.f32 0.0, %v5065
    %v5067 = vpop.f32.mrb[0].mxu0
    %5068 = vmatprep.mubr.f32.mxu0 0.0
    %5069 = vmatmul.mubr.f32.gmra.mrb[0].mxu0 %v4703
    %v5070 = vpop.f32.mrb[0].mxu0
    %v5071 = vadd.f32 0.0, %v5070
    %v5072 = vpop.f32.mrb[0].mxu0
    %5073 = vmatprep.mubr.f32.mxu0 0.0
    %5074 = vmatmul.mubr.f32.gmra.mrb[0].mxu0 %v4706
    %v5075 = vpop.f32.mrb[0].mxu0
    %v5076 = vadd.f32 0.0, %v5075
    %v5077 = vpop.f32.mrb[0].mxu0
    %5078 = vmatprep.mubr.f32.mxu0 0.0
    %5079 = vmatmul.mubr.f32.gmra.mrb[0].mxu0 %v4709
    %v5080 = vpop.f32.mrb[0].mxu0
    %v5081 = vadd.f32 0.0, %v5080
    %v5082 = vpop.f32.mrb[0].mxu0
    %5083 = vmatprep.mubr.f32.mxu0 0.0
    %5084 = vmatmul.mubr.f32.gmra.mrb[0].mxu0 %v4712
    %v5085 = vpop.f32.mrb[0].mxu0
    %v5086 = vadd.f32 0.0, %v5085
    %v5087 = vpop.f32.mrb[0].mxu0
    %5088 = vmatprep.mubr.f32.mxu0 0.0
    %5089 = vmatmul.mubr.f32.gmra.mrb[0].mxu0 %v4715
    %v5090 = vpop.f32.mrb[0].mxu0
    %v5091 = vadd.f32 0.0, %v5090
    %v5092 = vpop.f32.mrb[0].mxu0
    %5093 = vmatprep.mubr.f32.mxu0 0.0
    %5094 = vmatmul.mubr.f32.gmra.mrb[0].mxu0 %v4718
    %v5095 = vpop.f32.mrb[0].mxu0
    %v5096 = vadd.f32 0.0, %v5095
    %v5097 = vpop.f32.mrb[0].mxu0
    %5098 = vmatprep.mubr.f32.mxu0 0.0
    %5099 = vmatmul.mubr.f32.gmra.mrb[0].mxu0 %v4721
    %v5100 = vpop.f32.mrb[0].mxu0
    %v5101 = vadd.f32 0.0, %v5100
    %v5102 = vpop.f32.mrb[0].mxu0
    %5103 = vmatprep.mubr.f32.mxu0 0.0
    %5104 = vmatmul.mubr.f32.gmra.mrb[0].mxu0 %v4724
    %v5105 = vpop.f32.mrb[0].mxu0
    %v5106 = vadd.f32 0.0, %v5105
    %v5107 = vpop.f32.mrb[0].mxu0
    %5108 = vmatprep.mubr.f32.mxu0 0.0
    %5109 = vmatmul.mubr.f32.gmra.mrb[0].mxu0 %v4727
    %v5110 = vpop.f32.mrb[0].mxu0
    %v5111 = vadd.f32 0.0, %v5110
    %v5112 = vpop.f32.mrb[0].mxu0
    %5113 = vdwg.mxu0
    %v5114 = vsel %vm684, %v4796, 0.0
    %v5115 = vsel %vm684, %v4801, 0.0
    %v5116 = vadd.f32 %v5114, %v5115
    %v5117 = vsel %vm684, %v4806, 0.0
    %v5118 = vadd.f32 %v5116, %v5117
    %v5119 = vsel %vm684, %v4811, 0.0
    %v5120 = vadd.f32 %v5118, %v5119
    %v5121 = vsel %vm684, %v4816, 0.0
    %v5122 = vadd.f32 %v5120, %v5121
    %v5123 = vsel %vm684, %v4821, 0.0
    %v5124 = vadd.f32 %v5122, %v5123
    %v5125 = vsel %vm684, %v4826, 0.0
    %v5126 = vadd.f32 %v5124, %v5125
    %v5127 = vsel %vm684, %v4831, 0.0
    %v5128 = vadd.f32 %v5126, %v5127
    %v5129 = vsel %vm684, %v4836, 0.0
    %v5130 = vadd.f32 %v5128, %v5129
    %v5131 = vsel %vm684, %v4841, 0.0
    %v5132 = vadd.f32 %v5130, %v5131
    %v5133 = vsel %vm684, %v4846, 0.0
    %v5134 = vadd.f32 %v5132, %v5133
    %v5135 = vsel %vm684, %v4851, 0.0
    %v5136 = vadd.f32 %v5134, %v5135
    %v5137 = vsel %vm684, %v4856, 0.0
    %v5138 = vadd.f32 %v5136, %v5137
    %v5139 = vsel %vm684, %v4861, 0.0
    %v5140 = vadd.f32 %v5138, %v5139
    %v5141 = vsel %vm684, %v4866, 0.0
    %v5142 = vadd.f32 %v5140, %v5141
    %v5143 = vsel %vm684, %v4871, 0.0
    %v5144 = vadd.f32 %v5142, %v5143
    %v5145 = vsel %vm684, %v4876, 0.0
    %v5146 = vadd.f32 %v5144, %v5145
    %v5147 = vsel %vm684, %v4881, 0.0
    %v5148 = vadd.f32 %v5146, %v5147
    %v5149 = vsel %vm684, %v4886, 0.0
    %v5150 = vadd.f32 %v5148, %v5149
    %v5151 = vsel %vm684, %v4891, 0.0
    %v5152 = vadd.f32 %v5150, %v5151
    %v5153 = vsel %vm684, %v4896, 0.0
    %v5154 = vadd.f32 %v5152, %v5153
    %v5155 = vsel %vm684, %v4901, 0.0
    %v5156 = vadd.f32 %v5154, %v5155
    %v5157 = vsel %vm684, %v4906, 0.0
    %v5158 = vadd.f32 %v5156, %v5157
    %v5159 = vsel %vm684, %v4911, 0.0
    %v5160 = vadd.f32 %v5158, %v5159
    %v5161 = vsel %vm684, %v4916, 0.0
    %v5162 = vadd.f32 %v5160, %v5161
    %v5163 = vsel %vm684, %v4921, 0.0
    %v5164 = vadd.f32 %v5162, %v5163
    %v5165 = vsel %vm684, %v4926, 0.0
    %v5166 = vadd.f32 %v5164, %v5165
    %v5167 = vsel %vm684, %v4931, 0.0
    %v5168 = vadd.f32 %v5166, %v5167
    %v5169 = vsel %vm684, %v4936, 0.0
    %v5170 = vadd.f32 %v5168, %v5169
    %v5171 = vsel %vm684, %v4941, 0.0
    %v5172 = vadd.f32 %v5170, %v5171
    %v5173 = vsel %vm684, %v4946, 0.0
    %v5174 = vadd.f32 %v5172, %v5173
    %v5175 = vsel %vm684, %v4951, 0.0
    %v5176 = vadd.f32 %v5174, %v5175
    %v5177 = vsel %vm684, %v4956, 0.0
    %v5178 = vadd.f32 %v5176, %v5177
    %v5179 = vsel %vm684, %v4961, 0.0
    %v5180 = vadd.f32 %v5178, %v5179
    %v5181 = vsel %vm684, %v4966, 0.0
    %v5182 = vadd.f32 %v5180, %v5181
    %v5183 = vsel %vm684, %v4971, 0.0
    %v5184 = vadd.f32 %v5182, %v5183
    %v5185 = vsel %vm684, %v4976, 0.0
    %v5186 = vadd.f32 %v5184, %v5185
    %v5187 = vsel %vm684, %v4981, 0.0
    %v5188 = vadd.f32 %v5186, %v5187
    %v5189 = vsel %vm684, %v4986, 0.0
    %v5190 = vadd.f32 %v5188, %v5189
    %v5191 = vsel %vm684, %v4991, 0.0
    %v5192 = vadd.f32 %v5190, %v5191
    %v5193 = vsel %vm684, %v4996, 0.0
    %v5194 = vadd.f32 %v5192, %v5193
    %v5195 = vsel %vm684, %v5001, 0.0
    %v5196 = vadd.f32 %v5194, %v5195
    %v5197 = vsel %vm684, %v5006, 0.0
    %v5198 = vadd.f32 %v5196, %v5197
    %v5199 = vsel %vm684, %v5011, 0.0
    %v5200 = vadd.f32 %v5198, %v5199
    %v5201 = vsel %vm684, %v5016, 0.0
    %v5202 = vadd.f32 %v5200, %v5201
    %v5203 = vsel %vm684, %v5021, 0.0
    %v5204 = vadd.f32 %v5202, %v5203
    %v5205 = vsel %vm684, %v5026, 0.0
    %v5206 = vadd.f32 %v5204, %v5205
    %v5207 = vsel %vm684, %v5031, 0.0
    %v5208 = vadd.f32 %v5206, %v5207
    %v5209 = vsel %vm684, %v5036, 0.0
    %v5210 = vadd.f32 %v5208, %v5209
    %v5211 = vsel %vm684, %v5041, 0.0
    %v5212 = vadd.f32 %v5210, %v5211
    %v5213 = vsel %vm684, %v5046, 0.0
    %v5214 = vadd.f32 %v5212, %v5213
    %v5215 = vsel %vm684, %v5051, 0.0
    %v5216 = vadd.f32 %v5214, %v5215
    %v5217 = vsel %vm684, %v5056, 0.0
    %v5218 = vadd.f32 %v5216, %v5217
    %v5219 = vsel %vm684, %v5061, 0.0
    %v5220 = vadd.f32 %v5218, %v5219
    %v5221 = vsel %vm684, %v5066, 0.0
    %v5222 = vadd.f32 %v5220, %v5221
    %v5223 = vsel %vm684, %v5071, 0.0
    %v5224 = vadd.f32 %v5222, %v5223
    %v5225 = vsel %vm684, %v5076, 0.0
    %v5226 = vadd.f32 %v5224, %v5225
    %v5227 = vsel %vm684, %v5081, 0.0
    %v5228 = vadd.f32 %v5226, %v5227
    %v5229 = vsel %vm684, %v5086, 0.0
    %v5230 = vadd.f32 %v5228, %v5229
    %v5231 = vsel %vm684, %v5091, 0.0
    %v5232 = vadd.f32 %v5230, %v5231
    %v5233 = vsel %vm684, %v5096, 0.0
    %v5234 = vadd.f32 %v5232, %v5233
    %v5235 = vsel %vm684, %v5101, 0.0
    %v5236 = vadd.f32 %v5234, %v5235
    %v5237 = vsel %vm684, %v5106, 0.0
    %v5238 = vadd.f32 %v5236, %v5237
    %v5239 = vsel %vm684, %v5111, 0.0
    %v5240 = vadd.f32 %v5238, %v5239
    %v5241 = vrot.slane %v5240, 4
    %v5242 = vadd.f32 %v5240, %v5241
    %v5243 = vrot.slane %v5242, 2
    %v5244 = vadd.f32 %v5242, %v5243
    %v5245 = vrot.slane %v5244, 1
    %v5246 = vadd.f32 %v5244, %v5245
    %v5247 = vmul.f32 %v5246, %v818
    %v5248 = vmul.f32 %v4796, %v4796
    %v5249 = vmul.f32 %v4801, %v4801
    %v5250 = vmul.f32 %v4806, %v4806
    %v5251 = vmul.f32 %v4811, %v4811
    %v5252 = vmul.f32 %v4816, %v4816
    %v5253 = vmul.f32 %v4821, %v4821
    %v5254 = vmul.f32 %v4826, %v4826
    %v5255 = vmul.f32 %v4831, %v4831
    %v5256 = vmul.f32 %v4836, %v4836
    %v5257 = vmul.f32 %v4841, %v4841
    %v5258 = vmul.f32 %v4846, %v4846
    %v5259 = vmul.f32 %v4851, %v4851
    %v5260 = vmul.f32 %v4856, %v4856
    %v5261 = vmul.f32 %v4861, %v4861
    %v5262 = vmul.f32 %v4866, %v4866
    %v5263 = vmul.f32 %v4871, %v4871
    %v5264 = vmul.f32 %v4876, %v4876
    %v5265 = vmul.f32 %v4881, %v4881
    %v5266 = vmul.f32 %v4886, %v4886
    %v5267 = vmul.f32 %v4891, %v4891
    %v5268 = vmul.f32 %v4896, %v4896
    %v5269 = vmul.f32 %v4901, %v4901
    %v5270 = vmul.f32 %v4906, %v4906
    %v5271 = vmul.f32 %v4911, %v4911
    %v5272 = vmul.f32 %v4916, %v4916
    %v5273 = vmul.f32 %v4921, %v4921
    %v5274 = vmul.f32 %v4926, %v4926
    %v5275 = vmul.f32 %v4931, %v4931
    %v5276 = vmul.f32 %v4936, %v4936
    %v5277 = vmul.f32 %v4941, %v4941
    %v5278 = vmul.f32 %v4946, %v4946
    %v5279 = vmul.f32 %v4951, %v4951
    %v5280 = vmul.f32 %v4956, %v4956
    %v5281 = vmul.f32 %v4961, %v4961
    %v5282 = vmul.f32 %v4966, %v4966
    %v5283 = vmul.f32 %v4971, %v4971
    %v5284 = vmul.f32 %v4976, %v4976
    %v5285 = vmul.f32 %v4981, %v4981
    %v5286 = vmul.f32 %v4986, %v4986
    %v5287 = vmul.f32 %v4991, %v4991
    %v5288 = vmul.f32 %v4996, %v4996
    %v5289 = vmul.f32 %v5001, %v5001
    %v5290 = vmul.f32 %v5006, %v5006
    %v5291 = vmul.f32 %v5011, %v5011
    %v5292 = vmul.f32 %v5016, %v5016
    %v5293 = vmul.f32 %v5021, %v5021
    %v5294 = vmul.f32 %v5026, %v5026
    %v5295 = vmul.f32 %v5031, %v5031
    %v5296 = vmul.f32 %v5036, %v5036
    %v5297 = vmul.f32 %v5041, %v5041
    %v5298 = vmul.f32 %v5046, %v5046
    %v5299 = vmul.f32 %v5051, %v5051
    %v5300 = vmul.f32 %v5056, %v5056
    %v5301 = vmul.f32 %v5061, %v5061
    %v5302 = vmul.f32 %v5066, %v5066
    %v5303 = vmul.f32 %v5071, %v5071
    %v5304 = vmul.f32 %v5076, %v5076
    %v5305 = vmul.f32 %v5081, %v5081
    %v5306 = vmul.f32 %v5086, %v5086
    %v5307 = vmul.f32 %v5091, %v5091
    %v5308 = vmul.f32 %v5096, %v5096
    %v5309 = vmul.f32 %v5101, %v5101
    %v5310 = vmul.f32 %v5106, %v5106
    %v5311 = vmul.f32 %v5111, %v5111
    %v5312 = vsel %vm684, %v5248, 0.0
    %v5313 = vsel %vm684, %v5249, 0.0
    %v5314 = vadd.f32 %v5312, %v5313
    %v5315 = vsel %vm684, %v5250, 0.0
    %v5316 = vadd.f32 %v5314, %v5315
    %v5317 = vsel %vm684, %v5251, 0.0
    %v5318 = vadd.f32 %v5316, %v5317
    %v5319 = vsel %vm684, %v5252, 0.0
    %v5320 = vadd.f32 %v5318, %v5319
    %v5321 = vsel %vm684, %v5253, 0.0
    %v5322 = vadd.f32 %v5320, %v5321
    %v5323 = vsel %vm684, %v5254, 0.0
    %v5324 = vadd.f32 %v5322, %v5323
    %v5325 = vsel %vm684, %v5255, 0.0
    %v5326 = vadd.f32 %v5324, %v5325
    %v5327 = vsel %vm684, %v5256, 0.0
    %v5328 = vadd.f32 %v5326, %v5327
    %v5329 = vsel %vm684, %v5257, 0.0
    %v5330 = vadd.f32 %v5328, %v5329
    %v5331 = vsel %vm684, %v5258, 0.0
    %v5332 = vadd.f32 %v5330, %v5331
    %v5333 = vsel %vm684, %v5259, 0.0
    %v5334 = vadd.f32 %v5332, %v5333
    %v5335 = vsel %vm684, %v5260, 0.0
    %v5336 = vadd.f32 %v5334, %v5335
    %v5337 = vsel %vm684, %v5261, 0.0
    %v5338 = vadd.f32 %v5336, %v5337
    %v5339 = vsel %vm684, %v5262, 0.0
    %v5340 = vadd.f32 %v5338, %v5339
    %v5341 = vsel %vm684, %v5263, 0.0
    %v5342 = vadd.f32 %v5340, %v5341
    %v5343 = vsel %vm684, %v5264, 0.0
    %v5344 = vadd.f32 %v5342, %v5343
    %v5345 = vsel %vm684, %v5265, 0.0
    %v5346 = vadd.f32 %v5344, %v5345
    %v5347 = vsel %vm684, %v5266, 0.0
    %v5348 = vadd.f32 %v5346, %v5347
    %v5349 = vsel %vm684, %v5267, 0.0
    %v5350 = vadd.f32 %v5348, %v5349
    %v5351 = vsel %vm684, %v5268, 0.0
    %v5352 = vadd.f32 %v5350, %v5351
    %v5353 = vsel %vm684, %v5269, 0.0
    %v5354 = vadd.f32 %v5352, %v5353
    %v5355 = vsel %vm684, %v5270, 0.0
    %v5356 = vadd.f32 %v5354, %v5355
    %v5357 = vsel %vm684, %v5271, 0.0
    %v5358 = vadd.f32 %v5356, %v5357
    %v5359 = vsel %vm684, %v5272, 0.0
    %v5360 = vadd.f32 %v5358, %v5359
    %v5361 = vsel %vm684, %v5273, 0.0
    %v5362 = vadd.f32 %v5360, %v5361
    %v5363 = vsel %vm684, %v5274, 0.0
    %v5364 = vadd.f32 %v5362, %v5363
    %v5365 = vsel %vm684, %v5275, 0.0
    %v5366 = vadd.f32 %v5364, %v5365
    %v5367 = vsel %vm684, %v5276, 0.0
    %v5368 = vadd.f32 %v5366, %v5367
    %v5369 = vsel %vm684, %v5277, 0.0
    %v5370 = vadd.f32 %v5368, %v5369
    %v5371 = vsel %vm684, %v5278, 0.0
    %v5372 = vadd.f32 %v5370, %v5371
    %v5373 = vsel %vm684, %v5279, 0.0
    %v5374 = vadd.f32 %v5372, %v5373
    %v5375 = vsel %vm684, %v5280, 0.0
    %v5376 = vadd.f32 %v5374, %v5375
    %v5377 = vsel %vm684, %v5281, 0.0
    %v5378 = vadd.f32 %v5376, %v5377
    %v5379 = vsel %vm684, %v5282, 0.0
    %v5380 = vadd.f32 %v5378, %v5379
    %v5381 = vsel %vm684, %v5283, 0.0
    %v5382 = vadd.f32 %v5380, %v5381
    %v5383 = vsel %vm684, %v5284, 0.0
    %v5384 = vadd.f32 %v5382, %v5383
    %v5385 = vsel %vm684, %v5285, 0.0
    %v5386 = vadd.f32 %v5384, %v5385
    %v5387 = vsel %vm684, %v5286, 0.0
    %v5388 = vadd.f32 %v5386, %v5387
    %v5389 = vsel %vm684, %v5287, 0.0
    %v5390 = vadd.f32 %v5388, %v5389
    %v5391 = vsel %vm684, %v5288, 0.0
    %v5392 = vadd.f32 %v5390, %v5391
    %v5393 = vsel %vm684, %v5289, 0.0
    %v5394 = vadd.f32 %v5392, %v5393
    %v5395 = vsel %vm684, %v5290, 0.0
    %v5396 = vadd.f32 %v5394, %v5395
    %v5397 = vsel %vm684, %v5291, 0.0
    %v5398 = vadd.f32 %v5396, %v5397
    %v5399 = vsel %vm684, %v5292, 0.0
    %v5400 = vadd.f32 %v5398, %v5399
    %v5401 = vsel %vm684, %v5293, 0.0
    %v5402 = vadd.f32 %v5400, %v5401
    %v5403 = vsel %vm684, %v5294, 0.0
    %v5404 = vadd.f32 %v5402, %v5403
    %v5405 = vsel %vm684, %v5295, 0.0
    %v5406 = vadd.f32 %v5404, %v5405
    %v5407 = vsel %vm684, %v5296, 0.0
    %v5408 = vadd.f32 %v5406, %v5407
    %v5409 = vsel %vm684, %v5297, 0.0
    %v5410 = vadd.f32 %v5408, %v5409
    %v5411 = vsel %vm684, %v5298, 0.0
    %v5412 = vadd.f32 %v5410, %v5411
    %v5413 = vsel %vm684, %v5299, 0.0
    %v5414 = vadd.f32 %v5412, %v5413
    %v5415 = vsel %vm684, %v5300, 0.0
    %v5416 = vadd.f32 %v5414, %v5415
    %v5417 = vsel %vm684, %v5301, 0.0
    %v5418 = vadd.f32 %v5416, %v5417
    %v5419 = vsel %vm684, %v5302, 0.0
    %v5420 = vadd.f32 %v5418, %v5419
    %v5421 = vsel %vm684, %v5303, 0.0
    %v5422 = vadd.f32 %v5420, %v5421
    %v5423 = vsel %vm684, %v5304, 0.0
    %v5424 = vadd.f32 %v5422, %v5423
    %v5425 = vsel %vm684, %v5305, 0.0
    %v5426 = vadd.f32 %v5424, %v5425
    %v5427 = vsel %vm684, %v5306, 0.0
    %v5428 = vadd.f32 %v5426, %v5427
    %v5429 = vsel %vm684, %v5307, 0.0
    %v5430 = vadd.f32 %v5428, %v5429
    %v5431 = vsel %vm684, %v5308, 0.0
    %v5432 = vadd.f32 %v5430, %v5431
    %v5433 = vsel %vm684, %v5309, 0.0
    %v5434 = vadd.f32 %v5432, %v5433
    %v5435 = vsel %vm684, %v5310, 0.0
    %v5436 = vadd.f32 %v5434, %v5435
    %v5437 = vsel %vm684, %v5311, 0.0
    %v5438 = vadd.f32 %v5436, %v5437
    %v5439 = vrot.slane %v5438, 4
    %v5440 = vadd.f32 %v5438, %v5439
    %v5441 = vrot.slane %v5440, 2
    %v5442 = vadd.f32 %v5440, %v5441
    %v5443 = vrot.slane %v5442, 1
    %v5444 = vadd.f32 %v5442, %v5443
    %v5445 = vmul.f32 %v5444, %v818
    %v5446 = vmul.f32 %v5247, %v5247
    %v5447 = vsub.f32 %v5445, %v5446
    %v5448 = vld [vmem:[%s7] sm:$0x1]
    %v5449 = vadd.f32 %v5447, 1e-05
    %v5450 = vrsqrt.pop %v5449
    %v5451 = vmul.f32 %v5448, %v5450
    %v5452 = vld [vmem:[%s8] sm:$0x1]
    %v5453 = vmul.f32 %v5247, %v5451
    %v5454 = vsub.f32 %v5452, %v5453
    %v5456 = vlaneseq
    %v5457 = vshrl.u32 %v5456, 7
    %v5458 = vsub.s32 0, %v5457
    %v5459 = vrot.slane %v5451, %v5458
    %v5461 = vmul.f32 %v4796, %v5459
    %v5462 = vmul.f32 %v4801, %v5459
    %v5463 = vmul.f32 %v4806, %v5459
    %v5464 = vmul.f32 %v4811, %v5459
    %v5465 = vmul.f32 %v4816, %v5459
    %v5466 = vmul.f32 %v4821, %v5459
    %v5467 = vmul.f32 %v4826, %v5459
    %v5468 = vmul.f32 %v4831, %v5459
    %v5469 = vmul.f32 %v4836, %v5459
    %v5470 = vmul.f32 %v4841, %v5459
    %v5471 = vmul.f32 %v4846, %v5459
    %v5472 = vmul.f32 %v4851, %v5459
    %v5473 = vmul.f32 %v4856, %v5459
    %v5474 = vmul.f32 %v4861, %v5459
    %v5475 = vmul.f32 %v4866, %v5459
    %v5476 = vmul.f32 %v4871, %v5459
    %v5477 = vmul.f32 %v4876, %v5459
    %v5478 = vmul.f32 %v4881, %v5459
    %v5479 = vmul.f32 %v4886, %v5459
    %v5480 = vmul.f32 %v4891, %v5459
    %v5481 = vmul.f32 %v4896, %v5459
    %v5482 = vmul.f32 %v4901, %v5459
    %v5483 = vmul.f32 %v4906, %v5459
    %v5484 = vmul.f32 %v4911, %v5459
    %v5485 = vmul.f32 %v4916, %v5459
    %v5486 = vmul.f32 %v4921, %v5459
    %v5487 = vmul.f32 %v4926, %v5459
    %v5488 = vmul.f32 %v4931, %v5459
    %v5489 = vmul.f32 %v4936, %v5459
    %v5490 = vmul.f32 %v4941, %v5459
    %v5491 = vmul.f32 %v4946, %v5459
    %v5492 = vmul.f32 %v4951, %v5459
    %v5493 = vmul.f32 %v4956, %v5459
    %v5494 = vmul.f32 %v4961, %v5459
    %v5495 = vmul.f32 %v4966, %v5459
    %v5496 = vmul.f32 %v4971, %v5459
    %v5497 = vmul.f32 %v4976, %v5459
    %v5498 = vmul.f32 %v4981, %v5459
    %v5499 = vmul.f32 %v4986, %v5459
    %v5500 = vmul.f32 %v4991, %v5459
    %v5501 = vmul.f32 %v4996, %v5459
    %v5502 = vmul.f32 %v5001, %v5459
    %v5503 = vmul.f32 %v5006, %v5459
    %v5504 = vmul.f32 %v5011, %v5459
    %v5505 = vmul.f32 %v5016, %v5459
    %v5506 = vmul.f32 %v5021, %v5459
    %v5507 = vmul.f32 %v5026, %v5459
    %v5508 = vmul.f32 %v5031, %v5459
    %v5509 = vmul.f32 %v5036, %v5459
    %v5510 = vmul.f32 %v5041, %v5459
    %v5511 = vmul.f32 %v5046, %v5459
    %v5512 = vmul.f32 %v5051, %v5459
    %v5513 = vmul.f32 %v5056, %v5459
    %v5514 = vmul.f32 %v5061, %v5459
    %v5515 = vmul.f32 %v5066, %v5459
    %v5516 = vmul.f32 %v5071, %v5459
    %v5517 = vmul.f32 %v5076, %v5459
    %v5518 = vmul.f32 %v5081, %v5459
    %v5519 = vmul.f32 %v5086, %v5459
    %v5520 = vmul.f32 %v5091, %v5459
    %v5521 = vmul.f32 %v5096, %v5459
    %v5522 = vmul.f32 %v5101, %v5459
    %v5523 = vmul.f32 %v5106, %v5459
    %v5524 = vmul.f32 %v5111, %v5459
    %v5526 = vlaneseq
    %v5527 = vshrl.u32 %v5526, 7
    %v5528 = vsub.s32 0, %v5527
    %v5529 = vrot.slane %v5454, %v5528
    %v5531 = vadd.f32 %v5461, %v5529
    %v5532 = vadd.f32 %v5462, %v5529
    %v5533 = vadd.f32 %v5463, %v5529
    %v5534 = vadd.f32 %v5464, %v5529
    %v5535 = vadd.f32 %v5465, %v5529
    %v5536 = vadd.f32 %v5466, %v5529
    %v5537 = vadd.f32 %v5467, %v5529
    %v5538 = vadd.f32 %v5468, %v5529
    %v5539 = vadd.f32 %v5469, %v5529
    %v5540 = vadd.f32 %v5470, %v5529
    %v5541 = vadd.f32 %v5471, %v5529
    %v5542 = vadd.f32 %v5472, %v5529
    %v5543 = vadd.f32 %v5473, %v5529
    %v5544 = vadd.f32 %v5474, %v5529
    %v5545 = vadd.f32 %v5475, %v5529
    %v5546 = vadd.f32 %v5476, %v5529
    %v5547 = vadd.f32 %v5477, %v5529
    %v5548 = vadd.f32 %v5478, %v5529
    %v5549 = vadd.f32 %v5479, %v5529
    %v5550 = vadd.f32 %v5480, %v5529
    %v5551 = vadd.f32 %v5481, %v5529
    %v5552 = vadd.f32 %v5482, %v5529
    %v5553 = vadd.f32 %v5483, %v5529
    %v5554 = vadd.f32 %v5484, %v5529
    %v5555 = vadd.f32 %v5485, %v5529
    %v5556 = vadd.f32 %v5486, %v5529
    %v5557 = vadd.f32 %v5487, %v5529
    %v5558 = vadd.f32 %v5488, %v5529
    %v5559 = vadd.f32 %v5489, %v5529
    %v5560 = vadd.f32 %v5490, %v5529
    %v5561 = vadd.f32 %v5491, %v5529
    %v5562 = vadd.f32 %v5492, %v5529
    %v5563 = vadd.f32 %v5493, %v5529
    %v5564 = vadd.f32 %v5494, %v5529
    %v5565 = vadd.f32 %v5495, %v5529
    %v5566 = vadd.f32 %v5496, %v5529
    %v5567 = vadd.f32 %v5497, %v5529
    %v5568 = vadd.f32 %v5498, %v5529
    %v5569 = vadd.f32 %v5499, %v5529
    %v5570 = vadd.f32 %v5500, %v5529
    %v5571 = vadd.f32 %v5501, %v5529
    %v5572 = vadd.f32 %v5502, %v5529
    %v5573 = vadd.f32 %v5503, %v5529
    %v5574 = vadd.f32 %v5504, %v5529
    %v5575 = vadd.f32 %v5505, %v5529
    %v5576 = vadd.f32 %v5506, %v5529
    %v5577 = vadd.f32 %v5507, %v5529
    %v5578 = vadd.f32 %v5508, %v5529
    %v5579 = vadd.f32 %v5509, %v5529
    %v5580 = vadd.f32 %v5510, %v5529
    %v5581 = vadd.f32 %v5511, %v5529
    %v5582 = vadd.f32 %v5512, %v5529
    %v5583 = vadd.f32 %v5513, %v5529
    %v5584 = vadd.f32 %v5514, %v5529
    %v5585 = vadd.f32 %v5515, %v5529
    %v5586 = vadd.f32 %v5516, %v5529
    %v5587 = vadd.f32 %v5517, %v5529
    %v5588 = vadd.f32 %v5518, %v5529
    %v5589 = vadd.f32 %v5519, %v5529
    %v5590 = vadd.f32 %v5520, %v5529
    %v5591 = vadd.f32 %v5521, %v5529
    %v5592 = vadd.f32 %v5522, %v5529
    %v5593 = vadd.f32 %v5523, %v5529
    %v5594 = vadd.f32 %v5524, %v5529
    %v5595 = vld [vmem:[%s1] sm:$0xff]
    %v5596 = vld [vmem:[%s1 + $0x8] sm:$0xff]
    %v5597 = vld [vmem:[%s1 + $0x10] sm:$0xff]
    %v5598 = vld [vmem:[%s1 + $0x18] sm:$0xff]
    %v5599 = vld [vmem:[%s1 + $0x20] sm:$0xff]
    %v5600 = vld [vmem:[%s1 + $0x28] sm:$0xff]
    %v5601 = vld [vmem:[%s1 + $0x30] sm:$0xff]
    %v5602 = vld [vmem:[%s1 + $0x38] sm:$0xff]
    %v5603 = vld [vmem:[%s1 + $0x40] sm:$0xff]
    %v5604 = vld [vmem:[%s1 + $0x48] sm:$0xff]
    %v5605 = vld [vmem:[%s1 + $0x50] sm:$0xff]
    %v5606 = vld [vmem:[%s1 + $0x58] sm:$0xff]
    %v5607 = vld [vmem:[%s1 + $0x60] sm:$0xff]
    %v5608 = vld [vmem:[%s1 + $0x68] sm:$0xff]
    %v5609 = vld [vmem:[%s1 + $0x70] sm:$0xff]
    %v5610 = vld [vmem:[%s1 + $0x78] sm:$0xff]
    %v5611 = vld [vmem:[%s1 + $0x80] sm:$0xff]
    %v5612 = vld [vmem:[%s1 + $0x88] sm:$0xff]
    %v5613 = vld [vmem:[%s1 + $0x90] sm:$0xff]
    %v5614 = vld [vmem:[%s1 + $0x98] sm:$0xff]
    %v5615 = vld [vmem:[%s1 + $0xa0] sm:$0xff]
    %v5616 = vld [vmem:[%s1 + $0xa8] sm:$0xff]
    %v5617 = vld [vmem:[%s1 + $0xb0] sm:$0xff]
    %v5618 = vld [vmem:[%s1 + $0xb8] sm:$0xff]
    %v5619 = vld [vmem:[%s1 + $0xc0] sm:$0xff]
    %v5620 = vld [vmem:[%s1 + $0xc8] sm:$0xff]
    %v5621 = vld [vmem:[%s1 + $0xd0] sm:$0xff]
    %v5622 = vld [vmem:[%s1 + $0xd8] sm:$0xff]
    %v5623 = vld [vmem:[%s1 + $0xe0] sm:$0xff]
    %v5624 = vld [vmem:[%s1 + $0xe8] sm:$0xff]
    %v5625 = vld [vmem:[%s1 + $0xf0] sm:$0xff]
    %v5626 = vld [vmem:[%s1 + $0xf8] sm:$0xff]
    %v5627 = vld [vmem:[%s1 + $0x100] sm:$0xff]
    %v5628 = vld [vmem:[%s1 + $0x108] sm:$0xff]
    %v5629 = vld [vmem:[%s1 + $0x110] sm:$0xff]
    %v5630 = vld [vmem:[%s1 + $0x118] sm:$0xff]
    %v5631 = vld [vmem:[%s1 + $0x120] sm:$0xff]
    %v5632 = vld [vmem:[%s1 + $0x128] sm:$0xff]
    %v5633 = vld [vmem:[%s1 + $0x130] sm:$0xff]
    %v5634 = vld [vmem:[%s1 + $0x138] sm:$0xff]
    %v5635 = vld [vmem:[%s1 + $0x140] sm:$0xff]
    %v5636 = vld [vmem:[%s1 + $0x148] sm:$0xff]
    %v5637 = vld [vmem:[%s1 + $0x150] sm:$0xff]
    %v5638 = vld [vmem:[%s1 + $0x158] sm:$0xff]
    %v5639 = vld [vmem:[%s1 + $0x160] sm:$0xff]
    %v5640 = vld [vmem:[%s1 + $0x168] sm:$0xff]
    %v5641 = vld [vmem:[%s1 + $0x170] sm:$0xff]
    %v5642 = vld [vmem:[%s1 + $0x178] sm:$0xff]
    %v5643 = vld [vmem:[%s1 + $0x180] sm:$0xff]
    %v5644 = vld [vmem:[%s1 + $0x188] sm:$0xff]
    %v5645 = vld [vmem:[%s1 + $0x190] sm:$0xff]
    %v5646 = vld [vmem:[%s1 + $0x198] sm:$0xff]
    %v5647 = vld [vmem:[%s1 + $0x1a0] sm:$0xff]
    %v5648 = vld [vmem:[%s1 + $0x1a8] sm:$0xff]
    %v5649 = vld [vmem:[%s1 + $0x1b0] sm:$0xff]
    %v5650 = vld [vmem:[%s1 + $0x1b8] sm:$0xff]
    %v5651 = vld [vmem:[%s1 + $0x1c0] sm:$0xff]
    %v5652 = vld [vmem:[%s1 + $0x1c8] sm:$0xff]
    %v5653 = vld [vmem:[%s1 + $0x1d0] sm:$0xff]
    %v5654 = vld [vmem:[%s1 + $0x1d8] sm:$0xff]
    %v5655 = vld [vmem:[%s1 + $0x1e0] sm:$0xff]
    %v5656 = vld [vmem:[%s1 + $0x1e8] sm:$0xff]
    %v5657 = vld [vmem:[%s1 + $0x1f0] sm:$0xff]
    %v5658 = vld [vmem:[%s1 + $0x1f8] sm:$0xff]
    %v5659 = vld [vmem:[%s4] sm:$0xf]
    %vm5660 = vcmask 31744
    %v5662 = vsel %vm5660, %v5595, 0
    %v5665 = vsel %vm5660, %v5596, 0
    %v5668 = vsel %vm5660, %v5597, 0
    %v5671 = vsel %vm5660, %v5598, 0
    %v5674 = vsel %vm5660, %v5599, 0
    %v5677 = vsel %vm5660, %v5600, 0
    %v5680 = vsel %vm5660, %v5601, 0
    %v5683 = vsel %vm5660, %v5602, 0
    %v5686 = vsel %vm5660, %v5603, 0
    %v5689 = vsel %vm5660, %v5604, 0
    %v5692 = vsel %vm5660, %v5605, 0
    %v5695 = vsel %vm5660, %v5606, 0
    %v5698 = vsel %vm5660, %v5607, 0
    %v5701 = vsel %vm5660, %v5608, 0
    %v5704 = vsel %vm5660, %v5609, 0
    %v5707 = vsel %vm5660, %v5610, 0
    %v5710 = vsel %vm5660, %v5611, 0
    %v5713 = vsel %vm5660, %v5612, 0
    %v5716 = vsel %vm5660, %v5613, 0
    %v5719 = vsel %vm5660, %v5614, 0
    %v5722 = vsel %vm5660, %v5615, 0
    %v5725 = vsel %vm5660, %v5616, 0
    %v5728 = vsel %vm5660, %v5617, 0
    %v5731 = vsel %vm5660, %v5618, 0
    %v5734 = vsel %vm5660, %v5619, 0
    %v5737 = vsel %vm5660, %v5620, 0
    %v5740 = vsel %vm5660, %v5621, 0
    %v5743 = vsel %vm5660, %v5622, 0
    %v5746 = vsel %vm5660, %v5623, 0
    %v5749 = vsel %vm5660, %v5624, 0
    %v5752 = vsel %vm5660, %v5625, 0
    %v5755 = vsel %vm5660, %v5626, 0
    %v5758 = vsel %vm5660, %v5627, 0
    %v5761 = vsel %vm5660, %v5628, 0
    %v5764 = vsel %vm5660, %v5629, 0
    %v5767 = vsel %vm5660, %v5630, 0
    %v5770 = vsel %vm5660, %v5631, 0
    %v5773 = vsel %vm5660, %v5632, 0
    %v5776 = vsel %vm5660, %v5633, 0
    %v5779 = vsel %vm5660, %v5634, 0
    %v5782 = vsel %vm5660, %v5635, 0
    %v5785 = vsel %vm5660, %v5636, 0
    %v5788 = vsel %vm5660, %v5637, 0
    %v5791 = vsel %vm5660, %v5638, 0
    %v5794 = vsel %vm5660, %v5639, 0
    %v5797 = vsel %vm5660, %v5640, 0
    %v5800 = vsel %vm5660, %v5641, 0
    %v5803 = vsel %vm5660, %v5642, 0
    %v5806 = vsel %vm5660, %v5643, 0
    %v5809 = vsel %vm5660, %v5644, 0
    %v5812 = vsel %vm5660, %v5645, 0
    %v5815 = vsel %vm5660, %v5646, 0
    %v5818 = vsel %vm5660, %v5647, 0
    %v5821 = vsel %vm5660, %v5648, 0
    %v5824 = vsel %vm5660, %v5649, 0
    %v5827 = vsel %vm5660, %v5650, 0
    %v5830 = vsel %vm5660, %v5651, 0
    %v5833 = vsel %vm5660, %v5652, 0
    %v5836 = vsel %vm5660, %v5653, 0
    %v5839 = vsel %vm5660, %v5654, 0
    %v5842 = vsel %vm5660, %v5655, 0
    %v5845 = vsel %vm5660, %v5656, 0
    %v5848 = vsel %vm5660, %v5657, 0
    %v5851 = vsel %vm5660, %v5658, 0
    %v5854 = vsel %vm295, %v5659, 0
    %5856 = vmatprep.subr.mxu0 0.0
    %5857 = vmatpush1.msra.mxu0 %v5854
    %5858 = vmatprep.subr.mxu0 0.0
    %5859 = vmatpush1.msra.mxu0 0.0
    %5860 = vmatprep.subr.mxu0 0.0
    %5861 = vmatpush1.msra.mxu0 0.0
    %5862 = vmatprep.subr.mxu0 0.0
    %5863 = vmatpush1.msra.mxu0 0.0
    %5864 = vmatprep.subr.mxu0 0.0
    %5865 = vmatpush1.msra.mxu0 0.0
    %5866 = vmatprep.subr.mxu0 0.0
    %5867 = vmatpush1.msra.mxu0 0.0
    %5868 = vmatprep.subr.mxu0 0.0
    %5869 = vmatpush1.msra.mxu0 0.0
    %5870 = vmatprep.subr.mxu0 0.0
    %5871 = vmatpush1.msra.mxu0 0.0
    %5872 = vmatprep.subr.mxu0 0.0
    %5873 = vmatpush1.msra.mxu0 0.0
    %5874 = vmatprep.subr.mxu0 0.0
    %5875 = vmatpush1.msra.mxu0 0.0
    %5876 = vmatprep.subr.mxu0 0.0
    %5877 = vmatpush1.msra.mxu0 0.0
    %5878 = vmatprep.subr.mxu0 0.0
    %5879 = vmatpush1.msra.mxu0 0.0
    %5880 = vmatprep.subr.mxu0 0.0
    %5881 = vmatpush1.msra.mxu0 0.0
    %5882 = vmatprep.subr.mxu0 0.0
    %5883 = vmatpush1.msra.mxu0 0.0
    %5884 = vmatprep.subr.mxu0 0.0
    %5885 = vmatpush1.msra.mxu0 0.0
    %5886 = vmatprep.subr.mxu0 0.0
    %5887 = vmatpush1.msra.mxu0 0.0
    %5888 = vmatprep.subr.mxu0 0.0
    %5889 = vmatpush1.msra.mxu0 0.0
    %5890 = vmatprep.subr.mxu0 0.0
    %5891 = vmatpush1.msra.mxu0 0.0
    %5892 = vmatprep.subr.mxu0 0.0
    %5893 = vmatpush1.msra.mxu0 0.0
    %5894 = vmatprep.subr.mxu0 0.0
    %5895 = vmatpush1.msra.mxu0 0.0
    %5896 = vmatprep.subr.mxu0 0.0
    %5897 = vmatpush1.msra.mxu0 0.0
    %5898 = vmatprep.subr.mxu0 0.0
    %5899 = vmatpush1.msra.mxu0 0.0
    %5900 = vmatprep.subr.mxu0 0.0
    %5901 = vmatpush1.msra.mxu0 0.0
    %5902 = vmatprep.subr.mxu0 0.0
    %5903 = vmatpush1.msra.mxu0 0.0
    %5904 = vmatprep.subr.mxu0 0.0
    %5905 = vmatpush1.msra.mxu0 0.0
    %5906 = vmatprep.subr.mxu0 0.0
    %5907 = vmatpush1.msra.mxu0 0.0
    %5908 = vmatprep.subr.mxu0 0.0
    %5909 = vmatpush1.msra.mxu0 0.0
    %5910 = vmatprep.subr.mxu0 0.0
    %5911 = vmatpush1.msra.mxu0 0.0
    %5912 = vmatprep.subr.mxu0 0.0
    %5913 = vmatpush1.msra.mxu0 0.0
    %5914 = vmatprep.subr.mxu0 0.0
    %5915 = vmatpush1.msra.mxu0 0.0
    %5916 = vmatprep.subr.mxu0 0.0
    %5917 = vmatpush1.msra.mxu0 0.0
    %5918 = vmatprep.subr.mxu0 0.0
    %5919 = vmatpush1.msra.mxu0 0.0
    %5920 = vmatprep.mubr.f32.mxu0 0.0
    %5921 = vmatmul.mubr.f32.gmra.mrb[0].mxu0 %v5662
    %v5922 = vpop.f32.mrb[0].mxu0
    %v5923 = vadd.f32 0.0, %v5922
    %v5924 = vpop.f32.mrb[0].mxu0
    %5925 = vmatprep.mubr.f32.mxu0 0.0
    %5926 = vmatmul.mubr.f32.gmra.mrb[0].mxu0 %v5665
    %v5927 = vpop.f32.mrb[0].mxu0
    %v5928 = vadd.f32 0.0, %v5927
    %v5929 = vpop.f32.mrb[0].mxu0
    %5930 = vmatprep.mubr.f32.mxu0 0.0
    %5931 = vmatmul.mubr.f32.gmra.mrb[0].mxu0 %v5668
    %v5932 = vpop.f32.mrb[0].mxu0
    %v5933 = vadd.f32 0.0, %v5932
    %v5934 = vpop.f32.mrb[0].mxu0
    %5935 = vmatprep.mubr.f32.mxu0 0.0
    %5936 = vmatmul.mubr.f32.gmra.mrb[0].mxu0 %v5671
    %v5937 = vpop.f32.mrb[0].mxu0
    %v5938 = vadd.f32 0.0, %v5937
    %v5939 = vpop.f32.mrb[0].mxu0
    %5940 = vmatprep.mubr.f32.mxu0 0.0
    %5941 = vmatmul.mubr.f32.gmra.mrb[0].mxu0 %v5674
    %v5942 = vpop.f32.mrb[0].mxu0
    %v5943 = vadd.f32 0.0, %v5942
    %v5944 = vpop.f32.mrb[0].mxu0
    %5945 = vmatprep.mubr.f32.mxu0 0.0
    %5946 = vmatmul.mubr.f32.gmra.mrb[0].mxu0 %v5677
    %v5947 = vpop.f32.mrb[0].mxu0
    %v5948 = vadd.f32 0.0, %v5947
    %v5949 = vpop.f32.mrb[0].mxu0
    %5950 = vmatprep.mubr.f32.mxu0 0.0
    %5951 = vmatmul.mubr.f32.gmra.mrb[0].mxu0 %v5680
    %v5952 = vpop.f32.mrb[0].mxu0
    %v5953 = vadd.f32 0.0, %v5952
    %v5954 = vpop.f32.mrb[0].mxu0
    %5955 = vmatprep.mubr.f32.mxu0 0.0
    %5956 = vmatmul.mubr.f32.gmra.mrb[0].mxu0 %v5683
    %v5957 = vpop.f32.mrb[0].mxu0
    %v5958 = vadd.f32 0.0, %v5957
    %v5959 = vpop.f32.mrb[0].mxu0
    %5960 = vmatprep.mubr.f32.mxu0 0.0
    %5961 = vmatmul.mubr.f32.gmra.mrb[0].mxu0 %v5686
    %v5962 = vpop.f32.mrb[0].mxu0
    %v5963 = vadd.f32 0.0, %v5962
    %v5964 = vpop.f32.mrb[0].mxu0
    %5965 = vmatprep.mubr.f32.mxu0 0.0
    %5966 = vmatmul.mubr.f32.gmra.mrb[0].mxu0 %v5689
    %v5967 = vpop.f32.mrb[0].mxu0
    %v5968 = vadd.f32 0.0, %v5967
    %v5969 = vpop.f32.mrb[0].mxu0
    %5970 = vmatprep.mubr.f32.mxu0 0.0
    %5971 = vmatmul.mubr.f32.gmra.mrb[0].mxu0 %v5692
    %v5972 = vpop.f32.mrb[0].mxu0
    %v5973 = vadd.f32 0.0, %v5972
    %v5974 = vpop.f32.mrb[0].mxu0
    %5975 = vmatprep.mubr.f32.mxu0 0.0
    %5976 = vmatmul.mubr.f32.gmra.mrb[0].mxu0 %v5695
    %v5977 = vpop.f32.mrb[0].mxu0
    %v5978 = vadd.f32 0.0, %v5977
    %v5979 = vpop.f32.mrb[0].mxu0
    %5980 = vmatprep.mubr.f32.mxu0 0.0
    %5981 = vmatmul.mubr.f32.gmra.mrb[0].mxu0 %v5698
    %v5982 = vpop.f32.mrb[0].mxu0
    %v5983 = vadd.f32 0.0, %v5982
    %v5984 = vpop.f32.mrb[0].mxu0
    %5985 = vmatprep.mubr.f32.mxu0 0.0
    %5986 = vmatmul.mubr.f32.gmra.mrb[0].mxu0 %v5701
    %v5987 = vpop.f32.mrb[0].mxu0
    %v5988 = vadd.f32 0.0, %v5987
    %v5989 = vpop.f32.mrb[0].mxu0
    %5990 = vmatprep.mubr.f32.mxu0 0.0
    %5991 = vmatmul.mubr.f32.gmra.mrb[0].mxu0 %v5704
    %v5992 = vpop.f32.mrb[0].mxu0
    %v5993 = vadd.f32 0.0, %v5992
    %v5994 = vpop.f32.mrb[0].mxu0
    %5995 = vmatprep.mubr.f32.mxu0 0.0
    %5996 = vmatmul.mubr.f32.gmra.mrb[0].mxu0 %v5707
    %v5997 = vpop.f32.mrb[0].mxu0
    %v5998 = vadd.f32 0.0, %v5997
    %v5999 = vpop.f32.mrb[0].mxu0
    %6000 = vmatprep.mubr.f32.mxu0 0.0
    %6001 = vmatmul.mubr.f32.gmra.mrb[0].mxu0 %v5710
    %v6002 = vpop.f32.mrb[0].mxu0
    %v6003 = vadd.f32 0.0, %v6002
    %v6004 = vpop.f32.mrb[0].mxu0
    %6005 = vmatprep.mubr.f32.mxu0 0.0
    %6006 = vmatmul.mubr.f32.gmra.mrb[0].mxu0 %v5713
    %v6007 = vpop.f32.mrb[0].mxu0
    %v6008 = vadd.f32 0.0, %v6007
    %v6009 = vpop.f32.mrb[0].mxu0
    %6010 = vmatprep.mubr.f32.mxu0 0.0
    %6011 = vmatmul.mubr.f32.gmra.mrb[0].mxu0 %v5716
    %v6012 = vpop.f32.mrb[0].mxu0
    %v6013 = vadd.f32 0.0, %v6012
    %v6014 = vpop.f32.mrb[0].mxu0
    %6015 = vmatprep.mubr.f32.mxu0 0.0
    %6016 = vmatmul.mubr.f32.gmra.mrb[0].mxu0 %v5719
    %v6017 = vpop.f32.mrb[0].mxu0
    %v6018 = vadd.f32 0.0, %v6017
    %v6019 = vpop.f32.mrb[0].mxu0
    %6020 = vmatprep.mubr.f32.mxu0 0.0
    %6021 = vmatmul.mubr.f32.gmra.mrb[0].mxu0 %v5722
    %v6022 = vpop.f32.mrb[0].mxu0
    %v6023 = vadd.f32 0.0, %v6022
    %v6024 = vpop.f32.mrb[0].mxu0
    %6025 = vmatprep.mubr.f32.mxu0 0.0
    %6026 = vmatmul.mubr.f32.gmra.mrb[0].mxu0 %v5725
    %v6027 = vpop.f32.mrb[0].mxu0
    %v6028 = vadd.f32 0.0, %v6027
    %v6029 = vpop.f32.mrb[0].mxu0
    %6030 = vmatprep.mubr.f32.mxu0 0.0
    %6031 = vmatmul.mubr.f32.gmra.mrb[0].mxu0 %v5728
    %v6032 = vpop.f32.mrb[0].mxu0
    %v6033 = vadd.f32 0.0, %v6032
    %v6034 = vpop.f32.mrb[0].mxu0
    %6035 = vmatprep.mubr.f32.mxu0 0.0
    %6036 = vmatmul.mubr.f32.gmra.mrb[0].mxu0 %v5731
    %v6037 = vpop.f32.mrb[0].mxu0
    %v6038 = vadd.f32 0.0, %v6037
    %v6039 = vpop.f32.mrb[0].mxu0
    %6040 = vmatprep.mubr.f32.mxu0 0.0
    %6041 = vmatmul.mubr.f32.gmra.mrb[0].mxu0 %v5734
    %v6042 = vpop.f32.mrb[0].mxu0
    %v6043 = vadd.f32 0.0, %v6042
    %v6044 = vpop.f32.mrb[0].mxu0
    %6045 = vmatprep.mubr.f32.mxu0 0.0
    %6046 = vmatmul.mubr.f32.gmra.mrb[0].mxu0 %v5737
    %v6047 = vpop.f32.mrb[0].mxu0
    %v6048 = vadd.f32 0.0, %v6047
    %v6049 = vpop.f32.mrb[0].mxu0
    %6050 = vmatprep.mubr.f32.mxu0 0.0
    %6051 = vmatmul.mubr.f32.gmra.mrb[0].mxu0 %v5740
    %v6052 = vpop.f32.mrb[0].mxu0
    %v6053 = vadd.f32 0.0, %v6052
    %v6054 = vpop.f32.mrb[0].mxu0
    %6055 = vmatprep.mubr.f32.mxu0 0.0
    %6056 = vmatmul.mubr.f32.gmra.mrb[0].mxu0 %v5743
    %v6057 = vpop.f32.mrb[0].mxu0
    %v6058 = vadd.f32 0.0, %v6057
    %v6059 = vpop.f32.mrb[0].mxu0
    %6060 = vmatprep.mubr.f32.mxu0 0.0
    %6061 = vmatmul.mubr.f32.gmra.mrb[0].mxu0 %v5746
    %v6062 = vpop.f32.mrb[0].mxu0
    %v6063 = vadd.f32 0.0, %v6062
    %v6064 = vpop.f32.mrb[0].mxu0
    %6065 = vmatprep.mubr.f32.mxu0 0.0
    %6066 = vmatmul.mubr.f32.gmra.mrb[0].mxu0 %v5749
    %v6067 = vpop.f32.mrb[0].mxu0
    %v6068 = vadd.f32 0.0, %v6067
    %v6069 = vpop.f32.mrb[0].mxu0
    %6070 = vmatprep.mubr.f32.mxu0 0.0
    %6071 = vmatmul.mubr.f32.gmra.mrb[0].mxu0 %v5752
    %v6072 = vpop.f32.mrb[0].mxu0
    %v6073 = vadd.f32 0.0, %v6072
    %v6074 = vpop.f32.mrb[0].mxu0
    %6075 = vmatprep.mubr.f32.mxu0 0.0
    %6076 = vmatmul.mubr.f32.gmra.mrb[0].mxu0 %v5755
    %v6077 = vpop.f32.mrb[0].mxu0
    %v6078 = vadd.f32 0.0, %v6077
    %v6079 = vpop.f32.mrb[0].mxu0
    %6080 = vmatprep.mubr.f32.mxu0 0.0
    %6081 = vmatmul.mubr.f32.gmra.mrb[0].mxu0 %v5758
    %v6082 = vpop.f32.mrb[0].mxu0
    %v6083 = vadd.f32 0.0, %v6082
    %v6084 = vpop.f32.mrb[0].mxu0
    %6085 = vmatprep.mubr.f32.mxu0 0.0
    %6086 = vmatmul.mubr.f32.gmra.mrb[0].mxu0 %v5761
    %v6087 = vpop.f32.mrb[0].mxu0
    %v6088 = vadd.f32 0.0, %v6087
    %v6089 = vpop.f32.mrb[0].mxu0
    %6090 = vmatprep.mubr.f32.mxu0 0.0
    %6091 = vmatmul.mubr.f32.gmra.mrb[0].mxu0 %v5764
    %v6092 = vpop.f32.mrb[0].mxu0
    %v6093 = vadd.f32 0.0, %v6092
    %v6094 = vpop.f32.mrb[0].mxu0
    %6095 = vmatprep.mubr.f32.mxu0 0.0
    %6096 = vmatmul.mubr.f32.gmra.mrb[0].mxu0 %v5767
    %v6097 = vpop.f32.mrb[0].mxu0
    %v6098 = vadd.f32 0.0, %v6097
    %v6099 = vpop.f32.mrb[0].mxu0
    %6100 = vmatprep.mubr.f32.mxu0 0.0
    %6101 = vmatmul.mubr.f32.gmra.mrb[0].mxu0 %v5770
    %v6102 = vpop.f32.mrb[0].mxu0
    %v6103 = vadd.f32 0.0, %v6102
    %v6104 = vpop.f32.mrb[0].mxu0
    %6105 = vmatprep.mubr.f32.mxu0 0.0
    %6106 = vmatmul.mubr.f32.gmra.mrb[0].mxu0 %v5773
    %v6107 = vpop.f32.mrb[0].mxu0
    %v6108 = vadd.f32 0.0, %v6107
    %v6109 = vpop.f32.mrb[0].mxu0
    %6110 = vmatprep.mubr.f32.mxu0 0.0
    %6111 = vmatmul.mubr.f32.gmra.mrb[0].mxu0 %v5776
    %v6112 = vpop.f32.mrb[0].mxu0
    %v6113 = vadd.f32 0.0, %v6112
    %v6114 = vpop.f32.mrb[0].mxu0
    %6115 = vmatprep.mubr.f32.mxu0 0.0
    %6116 = vmatmul.mubr.f32.gmra.mrb[0].mxu0 %v5779
    %v6117 = vpop.f32.mrb[0].mxu0
    %v6118 = vadd.f32 0.0, %v6117
    %v6119 = vpop.f32.mrb[0].mxu0
    %6120 = vmatprep.mubr.f32.mxu0 0.0
    %6121 = vmatmul.mubr.f32.gmra.mrb[0].mxu0 %v5782
    %v6122 = vpop.f32.mrb[0].mxu0
    %v6123 = vadd.f32 0.0, %v6122
    %v6124 = vpop.f32.mrb[0].mxu0
    %6125 = vmatprep.mubr.f32.mxu0 0.0
    %6126 = vmatmul.mubr.f32.gmra.mrb[0].mxu0 %v5785
    %v6127 = vpop.f32.mrb[0].mxu0
    %v6128 = vadd.f32 0.0, %v6127
    %v6129 = vpop.f32.mrb[0].mxu0
    %6130 = vmatprep.mubr.f32.mxu0 0.0
    %6131 = vmatmul.mubr.f32.gmra.mrb[0].mxu0 %v5788
    %v6132 = vpop.f32.mrb[0].mxu0
    %v6133 = vadd.f32 0.0, %v6132
    %v6134 = vpop.f32.mrb[0].mxu0
    %6135 = vmatprep.mubr.f32.mxu0 0.0
    %6136 = vmatmul.mubr.f32.gmra.mrb[0].mxu0 %v5791
    %v6137 = vpop.f32.mrb[0].mxu0
    %v6138 = vadd.f32 0.0, %v6137
    %v6139 = vpop.f32.mrb[0].mxu0
    %6140 = vmatprep.mubr.f32.mxu0 0.0
    %6141 = vmatmul.mubr.f32.gmra.mrb[0].mxu0 %v5794
    %v6142 = vpop.f32.mrb[0].mxu0
    %v6143 = vadd.f32 0.0, %v6142
    %v6144 = vpop.f32.mrb[0].mxu0
    %6145 = vmatprep.mubr.f32.mxu0 0.0
    %6146 = vmatmul.mubr.f32.gmra.mrb[0].mxu0 %v5797
    %v6147 = vpop.f32.mrb[0].mxu0
    %v6148 = vadd.f32 0.0, %v6147
    %v6149 = vpop.f32.mrb[0].mxu0
    %6150 = vmatprep.mubr.f32.mxu0 0.0
    %6151 = vmatmul.mubr.f32.gmra.mrb[0].mxu0 %v5800
    %v6152 = vpop.f32.mrb[0].mxu0
    %v6153 = vadd.f32 0.0, %v6152
    %v6154 = vpop.f32.mrb[0].mxu0
    %6155 = vmatprep.mubr.f32.mxu0 0.0
    %6156 = vmatmul.mubr.f32.gmra.mrb[0].mxu0 %v5803
    %v6157 = vpop.f32.mrb[0].mxu0
    %v6158 = vadd.f32 0.0, %v6157
    %v6159 = vpop.f32.mrb[0].mxu0
    %6160 = vmatprep.mubr.f32.mxu0 0.0
    %6161 = vmatmul.mubr.f32.gmra.mrb[0].mxu0 %v5806
    %v6162 = vpop.f32.mrb[0].mxu0
    %v6163 = vadd.f32 0.0, %v6162
    %v6164 = vpop.f32.mrb[0].mxu0
    %6165 = vmatprep.mubr.f32.mxu0 0.0
    %6166 = vmatmul.mubr.f32.gmra.mrb[0].mxu0 %v5809
    %v6167 = vpop.f32.mrb[0].mxu0
    %v6168 = vadd.f32 0.0, %v6167
    %v6169 = vpop.f32.mrb[0].mxu0
    %6170 = vmatprep.mubr.f32.mxu0 0.0
    %6171 = vmatmul.mubr.f32.gmra.mrb[0].mxu0 %v5812
    %v6172 = vpop.f32.mrb[0].mxu0
    %v6173 = vadd.f32 0.0, %v6172
    %v6174 = vpop.f32.mrb[0].mxu0
    %6175 = vmatprep.mubr.f32.mxu0 0.0
    %6176 = vmatmul.mubr.f32.gmra.mrb[0].mxu0 %v5815
    %v6177 = vpop.f32.mrb[0].mxu0
    %v6178 = vadd.f32 0.0, %v6177
    %v6179 = vpop.f32.mrb[0].mxu0
    %6180 = vmatprep.mubr.f32.mxu0 0.0
    %6181 = vmatmul.mubr.f32.gmra.mrb[0].mxu0 %v5818
    %v6182 = vpop.f32.mrb[0].mxu0
    %v6183 = vadd.f32 0.0, %v6182
    %v6184 = vpop.f32.mrb[0].mxu0
    %6185 = vmatprep.mubr.f32.mxu0 0.0
    %6186 = vmatmul.mubr.f32.gmra.mrb[0].mxu0 %v5821
    %v6187 = vpop.f32.mrb[0].mxu0
    %v6188 = vadd.f32 0.0, %v6187
    %v6189 = vpop.f32.mrb[0].mxu0
    %6190 = vmatprep.mubr.f32.mxu0 0.0
    %6191 = vmatmul.mubr.f32.gmra.mrb[0].mxu0 %v5824
    %v6192 = vpop.f32.mrb[0].mxu0
    %v6193 = vadd.f32 0.0, %v6192
    %v6194 = vpop.f32.mrb[0].mxu0
    %6195 = vmatprep.mubr.f32.mxu0 0.0
    %6196 = vmatmul.mubr.f32.gmra.mrb[0].mxu0 %v5827
    %v6197 = vpop.f32.mrb[0].mxu0
    %v6198 = vadd.f32 0.0, %v6197
    %v6199 = vpop.f32.mrb[0].mxu0
    %6200 = vmatprep.mubr.f32.mxu0 0.0
    %6201 = vmatmul.mubr.f32.gmra.mrb[0].mxu0 %v5830
    %v6202 = vpop.f32.mrb[0].mxu0
    %v6203 = vadd.f32 0.0, %v6202
    %v6204 = vpop.f32.mrb[0].mxu0
    %6205 = vmatprep.mubr.f32.mxu0 0.0
    %6206 = vmatmul.mubr.f32.gmra.mrb[0].mxu0 %v5833
    %v6207 = vpop.f32.mrb[0].mxu0
    %v6208 = vadd.f32 0.0, %v6207
    %v6209 = vpop.f32.mrb[0].mxu0
    %6210 = vmatprep.mubr.f32.mxu0 0.0
    %6211 = vmatmul.mubr.f32.gmra.mrb[0].mxu0 %v5836
    %v6212 = vpop.f32.mrb[0].mxu0
    %v6213 = vadd.f32 0.0, %v6212
    %v6214 = vpop.f32.mrb[0].mxu0
    %6215 = vmatprep.mubr.f32.mxu0 0.0
    %6216 = vmatmul.mubr.f32.gmra.mrb[0].mxu0 %v5839
    %v6217 = vpop.f32.mrb[0].mxu0
    %v6218 = vadd.f32 0.0, %v6217
    %v6219 = vpop.f32.mrb[0].mxu0
    %6220 = vmatprep.mubr.f32.mxu0 0.0
    %6221 = vmatmul.mubr.f32.gmra.mrb[0].mxu0 %v5842
    %v6222 = vpop.f32.mrb[0].mxu0
    %v6223 = vadd.f32 0.0, %v6222
    %v6224 = vpop.f32.mrb[0].mxu0
    %6225 = vmatprep.mubr.f32.mxu0 0.0
    %6226 = vmatmul.mubr.f32.gmra.mrb[0].mxu0 %v5845
    %v6227 = vpop.f32.mrb[0].mxu0
    %v6228 = vadd.f32 0.0, %v6227
    %v6229 = vpop.f32.mrb[0].mxu0
    %6230 = vmatprep.mubr.f32.mxu0 0.0
    %6231 = vmatmul.mubr.f32.gmra.mrb[0].mxu0 %v5848
    %v6232 = vpop.f32.mrb[0].mxu0
    %v6233 = vadd.f32 0.0, %v6232
    %v6234 = vpop.f32.mrb[0].mxu0
    %6235 = vmatprep.mubr.f32.mxu0 0.0
    %6236 = vmatmul.mubr.f32.gmra.mrb[0].mxu0 %v5851
    %v6237 = vpop.f32.mrb[0].mxu0
    %v6238 = vadd.f32 0.0, %v6237
    %v6239 = vpop.f32.mrb[0].mxu0
    %6240 = vdwg.mxu0
    %v6241 = vadd.f32 %v5531, %v5923
    %v6242 = vadd.f32 %v5532, %v5928
    %v6243 = vadd.f32 %v5533, %v5933
    %v6244 = vadd.f32 %v5534, %v5938
    %v6245 = vadd.f32 %v5535, %v5943
    %v6246 = vadd.f32 %v5536, %v5948
    %v6247 = vadd.f32 %v5537, %v5953
    %v6248 = vadd.f32 %v5538, %v5958
    %v6249 = vadd.f32 %v5539, %v5963
    %v6250 = vadd.f32 %v5540, %v5968
    %v6251 = vadd.f32 %v5541, %v5973
    %v6252 = vadd.f32 %v5542, %v5978
    %v6253 = vadd.f32 %v5543, %v5983
    %v6254 = vadd.f32 %v5544, %v5988
    %v6255 = vadd.f32 %v5545, %v5993
    %v6256 = vadd.f32 %v5546, %v5998
    %v6257 = vadd.f32 %v5547, %v6003
    %v6258 = vadd.f32 %v5548, %v6008
    %v6259 = vadd.f32 %v5549, %v6013
    %v6260 = vadd.f32 %v5550, %v6018
    %v6261 = vadd.f32 %v5551, %v6023
    %v6262 = vadd.f32 %v5552, %v6028
    %v6263 = vadd.f32 %v5553, %v6033
    %v6264 = vadd.f32 %v5554, %v6038
    %v6265 = vadd.f32 %v5555, %v6043
    %v6266 = vadd.f32 %v5556, %v6048
    %v6267 = vadd.f32 %v5557, %v6053
    %v6268 = vadd.f32 %v5558, %v6058
    %v6269 = vadd.f32 %v5559, %v6063
    %v6270 = vadd.f32 %v5560, %v6068
    %v6271 = vadd.f32 %v5561, %v6073
    %v6272 = vadd.f32 %v5562, %v6078
    %v6273 = vadd.f32 %v5563, %v6083
    %v6274 = vadd.f32 %v5564, %v6088
    %v6275 = vadd.f32 %v5565, %v6093
    %v6276 = vadd.f32 %v5566, %v6098
    %v6277 = vadd.f32 %v5567, %v6103
    %v6278 = vadd.f32 %v5568, %v6108
    %v6279 = vadd.f32 %v5569, %v6113
    %v6280 = vadd.f32 %v5570, %v6118
    %v6281 = vadd.f32 %v5571, %v6123
    %v6282 = vadd.f32 %v5572, %v6128
    %v6283 = vadd.f32 %v5573, %v6133
    %v6284 = vadd.f32 %v5574, %v6138
    %v6285 = vadd.f32 %v5575, %v6143
    %v6286 = vadd.f32 %v5576, %v6148
    %v6287 = vadd.f32 %v5577, %v6153
    %v6288 = vadd.f32 %v5578, %v6158
    %v6289 = vadd.f32 %v5579, %v6163
    %v6290 = vadd.f32 %v5580, %v6168
    %v6291 = vadd.f32 %v5581, %v6173
    %v6292 = vadd.f32 %v5582, %v6178
    %v6293 = vadd.f32 %v5583, %v6183
    %v6294 = vadd.f32 %v5584, %v6188
    %v6295 = vadd.f32 %v5585, %v6193
    %v6296 = vadd.f32 %v5586, %v6198
    %v6297 = vadd.f32 %v5587, %v6203
    %v6298 = vadd.f32 %v5588, %v6208
    %v6299 = vadd.f32 %v5589, %v6213
    %v6300 = vadd.f32 %v5590, %v6218
    %v6301 = vadd.f32 %v5591, %v6223
    %v6302 = vadd.f32 %v5592, %v6228
    %v6303 = vadd.f32 %v5593, %v6233
    %v6304 = vadd.f32 %v5594, %v6238
    %v6305 = vmax.f32 %v6241, 0.0
    %v6306 = vmax.f32 %v6242, 0.0
    %v6307 = vmax.f32 %v6243, 0.0
    %v6308 = vmax.f32 %v6244, 0.0
    %v6309 = vmax.f32 %v6245, 0.0
    %v6310 = vmax.f32 %v6246, 0.0
    %v6311 = vmax.f32 %v6247, 0.0
    %v6312 = vmax.f32 %v6248, 0.0
    %v6313 = vmax.f32 %v6249, 0.0
    %v6314 = vmax.f32 %v6250, 0.0
    %v6315 = vmax.f32 %v6251, 0.0
    %v6316 = vmax.f32 %v6252, 0.0
    %v6317 = vmax.f32 %v6253, 0.0
    %v6318 = vmax.f32 %v6254, 0.0
    %v6319 = vmax.f32 %v6255, 0.0
    %v6320 = vmax.f32 %v6256, 0.0
    %v6321 = vmax.f32 %v6257, 0.0
    %v6322 = vmax.f32 %v6258, 0.0
    %v6323 = vmax.f32 %v6259, 0.0
    %v6324 = vmax.f32 %v6260, 0.0
    %v6325 = vmax.f32 %v6261, 0.0
    %v6326 = vmax.f32 %v6262, 0.0
    %v6327 = vmax.f32 %v6263, 0.0
    %v6328 = vmax.f32 %v6264, 0.0
    %v6329 = vmax.f32 %v6265, 0.0
    %v6330 = vmax.f32 %v6266, 0.0
    %v6331 = vmax.f32 %v6267, 0.0
    %v6332 = vmax.f32 %v6268, 0.0
    %v6333 = vmax.f32 %v6269, 0.0
    %v6334 = vmax.f32 %v6270, 0.0
    %v6335 = vmax.f32 %v6271, 0.0
    %v6336 = vmax.f32 %v6272, 0.0
    %v6337 = vmax.f32 %v6273, 0.0
    %v6338 = vmax.f32 %v6274, 0.0
    %v6339 = vmax.f32 %v6275, 0.0
    %v6340 = vmax.f32 %v6276, 0.0
    %v6341 = vmax.f32 %v6277, 0.0
    %v6342 = vmax.f32 %v6278, 0.0
    %v6343 = vmax.f32 %v6279, 0.0
    %v6344 = vmax.f32 %v6280, 0.0
    %v6345 = vmax.f32 %v6281, 0.0
    %v6346 = vmax.f32 %v6282, 0.0
    %v6347 = vmax.f32 %v6283, 0.0
    %v6348 = vmax.f32 %v6284, 0.0
    %v6349 = vmax.f32 %v6285, 0.0
    %v6350 = vmax.f32 %v6286, 0.0
    %v6351 = vmax.f32 %v6287, 0.0
    %v6352 = vmax.f32 %v6288, 0.0
    %v6353 = vmax.f32 %v6289, 0.0
    %v6354 = vmax.f32 %v6290, 0.0
    %v6355 = vmax.f32 %v6291, 0.0
    %v6356 = vmax.f32 %v6292, 0.0
    %v6357 = vmax.f32 %v6293, 0.0
    %v6358 = vmax.f32 %v6294, 0.0
    %v6359 = vmax.f32 %v6295, 0.0
    %v6360 = vmax.f32 %v6296, 0.0
    %v6361 = vmax.f32 %v6297, 0.0
    %v6362 = vmax.f32 %v6298, 0.0
    %v6363 = vmax.f32 %v6299, 0.0
    %v6364 = vmax.f32 %v6300, 0.0
    %v6365 = vmax.f32 %v6301, 0.0
    %v6366 = vmax.f32 %v6302, 0.0
    %v6367 = vmax.f32 %v6303, 0.0
    %v6368 = vmax.f32 %v6304, 0.0
    %v6401 = vrot.slane %v6307, 7
    %vm6402 = vcmask 1041409
    %v6403 = vsel %vm6402, %v6401, %v6305
    %v6404 = vrot.slane %v6309, 6
    %vm6405 = vcmask 1042434
    %v6406 = vsel %vm6405, %v6404, %v6403
    %v6407 = vrot.slane %v6311, 5
    %vm6408 = vcmask 1043459
    %v6409 = vsel %vm6408, %v6407, %v6406
    %v6410 = vrot.slane %v6313, 4
    %vm6411 = vcmask 1044484
    %v6412 = vsel %vm6411, %v6410, %v6409
    %v6413 = vrot.slane %v6315, 3
    %vm6414 = vcmask 1045509
    %v6415 = vsel %vm6414, %v6413, %v6412
    %v6416 = vrot.slane %v6317, 2
    %vm6417 = vcmask 1046534
    %v6418 = vsel %vm6417, %v6416, %v6415
    %v6419 = vrot.slane %v6319, 1
    %vm6420 = vcmask 1047559
    %v6421 = vsel %vm6420, %v6419, %v6418
    %v6422 = vrot.slane %v6323, 7
    %v6423 = vsel %vm6402, %v6422, %v6321
    %v6424 = vrot.slane %v6325, 6
    %v6425 = vsel %vm6405, %v6424, %v6423
    %v6426 = vrot.slane %v6327, 5
    %v6427 = vsel %vm6408, %v6426, %v6425
    %v6428 = vrot.slane %v6329, 4
    %v6429 = vsel %vm6411, %v6428, %v6427
    %v6430 = vrot.slane %v6331, 3
    %v6431 = vsel %vm6414, %v6430, %v6429
    %v6432 = vrot.slane %v6333, 2
    %v6433 = vsel %vm6417, %v6432, %v6431
    %v6434 = vrot.slane %v6335, 1
    %v6435 = vsel %vm6420, %v6434, %v6433
    %v6436 = vrot.slane %v6339, 7
    %v6437 = vsel %vm6402, %v6436, %v6337
    %v6438 = vrot.slane %v6341, 6
    %v6439 = vsel %vm6405, %v6438, %v6437
    %v6440 = vrot.slane %v6343, 5
    %v6441 = vsel %vm6408, %v6440, %v6439
    %v6442 = vrot.slane %v6345, 4
    %v6443 = vsel %vm6411, %v6442, %v6441
    %v6444 = vrot.slane %v6347, 3
    %v6445 = vsel %vm6414, %v6444, %v6443
    %v6446 = vrot.slane %v6349, 2
    %v6447 = vsel %vm6417, %v6446, %v6445
    %v6448 = vrot.slane %v6351, 1
    %v6449 = vsel %vm6420, %v6448, %v6447
    %v6450 = vrot.slane %v6355, 7
    %v6451 = vsel %vm6402, %v6450, %v6353
    %v6452 = vrot.slane %v6357, 6
    %v6453 = vsel %vm6405, %v6452, %v6451
    %v6454 = vrot.slane %v6359, 5
    %v6455 = vsel %vm6408, %v6454, %v6453
    %v6456 = vrot.slane %v6361, 4
    %v6457 = vsel %vm6411, %v6456, %v6455
    %v6458 = vrot.slane %v6363, 3
    %v6459 = vsel %vm6414, %v6458, %v6457
    %v6460 = vrot.slane %v6365, 2
    %v6461 = vsel %vm6417, %v6460, %v6459
    %v6462 = vrot.slane %v6367, 1
    %v6463 = vsel %vm6420, %v6462, %v6461
    %v6468 = vrot.slane %v6305, 1
    %v6469 = vsel %vm6402, %v6307, %v6468
    %v6470 = vrot.slane %v6309, 7
    %v6471 = vsel %vm6405, %v6470, %v6469
    %v6472 = vrot.slane %v6311, 6
    %v6473 = vsel %vm6408, %v6472, %v6471
    %v6474 = vrot.slane %v6313, 5
    %v6475 = vsel %vm6411, %v6474, %v6473
    %v6476 = vrot.slane %v6315, 4
    %v6477 = vsel %vm6414, %v6476, %v6475
    %v6478 = vrot.slane %v6317, 3
    %v6479 = vsel %vm6417, %v6478, %v6477
    %v6480 = vrot.slane %v6319, 2
    %v6481 = vsel %vm6420, %v6480, %v6479
    %v6482 = vrot.slane %v6321, 1
    %v6483 = vsel %vm6402, %v6323, %v6482
    %v6484 = vrot.slane %v6325, 7
    %v6485 = vsel %vm6405, %v6484, %v6483
    %v6486 = vrot.slane %v6327, 6
    %v6487 = vsel %vm6408, %v6486, %v6485
    %v6488 = vrot.slane %v6329, 5
    %v6489 = vsel %vm6411, %v6488, %v6487
    %v6490 = vrot.slane %v6331, 4
    %v6491 = vsel %vm6414, %v6490, %v6489
    %v6492 = vrot.slane %v6333, 3
    %v6493 = vsel %vm6417, %v6492, %v6491
    %v6494 = vrot.slane %v6335, 2
    %v6495 = vsel %vm6420, %v6494, %v6493
    %v6496 = vrot.slane %v6337, 1
    %v6497 = vsel %vm6402, %v6339, %v6496
    %v6498 = vrot.slane %v6341, 7
    %v6499 = vsel %vm6405, %v6498, %v6497
    %v6500 = vrot.slane %v6343, 6
    %v6501 = vsel %vm6408, %v6500, %v6499
    %v6502 = vrot.slane %v6345, 5
    %v6503 = vsel %vm6411, %v6502, %v6501
    %v6504 = vrot.slane %v6347, 4
    %v6505 = vsel %vm6414, %v6504, %v6503
    %v6506 = vrot.slane %v6349, 3
    %v6507 = vsel %vm6417, %v6506, %v6505
    %v6508 = vrot.slane %v6351, 2
    %v6509 = vsel %vm6420, %v6508, %v6507
    %v6510 = vrot.slane %v6353, 1
    %v6511 = vsel %vm6402, %v6355, %v6510
    %v6512 = vrot.slane %v6357, 7
    %v6513 = vsel %vm6405, %v6512, %v6511
    %v6514 = vrot.slane %v6359, 6
    %v6515 = vsel %vm6408, %v6514, %v6513
    %v6516 = vrot.slane %v6361, 5
    %v6517 = vsel %vm6411, %v6516, %v6515
    %v6518 = vrot.slane %v6363, 4
    %v6519 = vsel %vm6414, %v6518, %v6517
    %v6520 = vrot.slane %v6365, 3
    %v6521 = vsel %vm6417, %v6520, %v6519
    %v6522 = vrot.slane %v6367, 2
    %v6523 = vsel %vm6420, %v6522, %v6521
    %6524 = vrot.lane.b32.xlu0 %v6481, 8
    %v6525 = vpop.permute.xlu0 %6524
    %6526 = vrot.lane.b32.xlu0 %v6495, 8
    %v6527 = vpop.permute.xlu0 %6526
    %6528 = vrot.lane.b32.xlu0 %v6509, 8
    %v6529 = vpop.permute.xlu0 %6528
    %6530 = vrot.lane.b32.xlu0 %v6523, 8
    %v6531 = vpop.permute.xlu0 %6530
    %v6536 = vrot.slane %v6305, 2
    %v6537 = vrot.slane %v6307, 1
    %v6538 = vsel %vm6402, %v6537, %v6536
    %v6539 = vsel %vm6405, %v6309, %v6538
    %v6540 = vrot.slane %v6311, 7
    %v6541 = vsel %vm6408, %v6540, %v6539
    %v6542 = vrot.slane %v6313, 6
    %v6543 = vsel %vm6411, %v6542, %v6541
    %v6544 = vrot.slane %v6315, 5
    %v6545 = vsel %vm6414, %v6544, %v6543
    %v6546 = vrot.slane %v6317, 4
    %v6547 = vsel %vm6417, %v6546, %v6545
    %v6548 = vrot.slane %v6319, 3
    %v6549 = vsel %vm6420, %v6548, %v6547
    %v6550 = vrot.slane %v6321, 2
    %v6551 = vrot.slane %v6323, 1
    %v6552 = vsel %vm6402, %v6551, %v6550
    %v6553 = vsel %vm6405, %v6325, %v6552
    %v6554 = vrot.slane %v6327, 7
    %v6555 = vsel %vm6408, %v6554, %v6553
    %v6556 = vrot.slane %v6329, 6
    %v6557 = vsel %vm6411, %v6556, %v6555
    %v6558 = vrot.slane %v6331, 5
    %v6559 = vsel %vm6414, %v6558, %v6557
    %v6560 = vrot.slane %v6333, 4
    %v6561 = vsel %vm6417, %v6560, %v6559
    %v6562 = vrot.slane %v6335, 3
    %v6563 = vsel %vm6420, %v6562, %v6561
    %v6564 = vrot.slane %v6337, 2
    %v6565 = vrot.slane %v6339, 1
    %v6566 = vsel %vm6402, %v6565, %v6564
    %v6567 = vsel %vm6405, %v6341, %v6566
    %v6568 = vrot.slane %v6343, 7
    %v6569 = vsel %vm6408, %v6568, %v6567
    %v6570 = vrot.slane %v6345, 6
    %v6571 = vsel %vm6411, %v6570, %v6569
    %v6572 = vrot.slane %v6347, 5
    %v6573 = vsel %vm6414, %v6572, %v6571
    %v6574 = vrot.slane %v6349, 4
    %v6575 = vsel %vm6417, %v6574, %v6573
    %v6576 = vrot.slane %v6351, 3
    %v6577 = vsel %vm6420, %v6576, %v6575
    %v6578 = vrot.slane %v6353, 2
    %v6579 = vrot.slane %v6355, 1
    %v6580 = vsel %vm6402, %v6579, %v6578
    %v6581 = vsel %vm6405, %v6357, %v6580
    %v6582 = vrot.slane %v6359, 7
    %v6583 = vsel %vm6408, %v6582, %v6581
    %v6584 = vrot.slane %v6361, 6
    %v6585 = vsel %vm6411, %v6584, %v6583
    %v6586 = vrot.slane %v6363, 5
    %v6587 = vsel %vm6414, %v6586, %v6585
    %v6588 = vrot.slane %v6365, 4
    %v6589 = vsel %vm6417, %v6588, %v6587
    %v6590 = vrot.slane %v6367, 3
    %v6591 = vsel %vm6420, %v6590, %v6589
    %6592 = vrot.lane.b32.xlu0 %v6549, 16
    %v6593 = vpop.permute.xlu0 %6592
    %6594 = vrot.lane.b32.xlu0 %v6563, 16
    %v6595 = vpop.permute.xlu0 %6594
    %6596 = vrot.lane.b32.xlu0 %v6577, 16
    %v6597 = vpop.permute.xlu0 %6596
    %6598 = vrot.lane.b32.xlu0 %v6591, 16
    %v6599 = vpop.permute.xlu0 %6598
    %v6604 = vrot.slane %v6305, 3
    %v6605 = vrot.slane %v6307, 2
    %v6606 = vsel %vm6402, %v6605, %v6604
    %v6607 = vrot.slane %v6309, 1
    %v6608 = vsel %vm6405, %v6607, %v6606
    %v6609 = vsel %vm6408, %v6311, %v6608
    %v6610 = vrot.slane %v6313, 7
    %v6611 = vsel %vm6411, %v6610, %v6609
    %v6612 = vrot.slane %v6315, 6
    %v6613 = vsel %vm6414, %v6612, %v6611
    %v6614 = vrot.slane %v6317, 5
    %v6615 = vsel %vm6417, %v6614, %v6613
    %v6616 = vrot.slane %v6319, 4
    %v6617 = vsel %vm6420, %v6616, %v6615
    %v6618 = vrot.slane %v6321, 3
    %v6619 = vrot.slane %v6323, 2
    %v6620 = vsel %vm6402, %v6619, %v6618
    %v6621 = vrot.slane %v6325, 1
    %v6622 = vsel %vm6405, %v6621, %v6620
    %v6623 = vsel %vm6408, %v6327, %v6622
    %v6624 = vrot.slane %v6329, 7
    %v6625 = vsel %vm6411, %v6624, %v6623
    %v6626 = vrot.slane %v6331, 6
    %v6627 = vsel %vm6414, %v6626, %v6625
    %v6628 = vrot.slane %v6333, 5
    %v6629 = vsel %vm6417, %v6628, %v6627
    %v6630 = vrot.slane %v6335, 4
    %v6631 = vsel %vm6420, %v6630, %v6629
    %v6632 = vrot.slane %v6337, 3
    %v6633 = vrot.slane %v6339, 2
    %v6634 = vsel %vm6402, %v6633, %v6632
    %v6635 = vrot.slane %v6341, 1
    %v6636 = vsel %vm6405, %v6635, %v6634
    %v6637 = vsel %vm6408, %v6343, %v6636
    %v6638 = vrot.slane %v6345, 7
    %v6639 = vsel %vm6411, %v6638, %v6637
    %v6640 = vrot.slane %v6347, 6
    %v6641 = vsel %vm6414, %v6640, %v6639
    %v6642 = vrot.slane %v6349, 5
    %v6643 = vsel %vm6417, %v6642, %v6641
    %v6644 = vrot.slane %v6351, 4
    %v6645 = vsel %vm6420, %v6644, %v6643
    %v6646 = vrot.slane %v6353, 3
    %v6647 = vrot.slane %v6355, 2
    %v6648 = vsel %vm6402, %v6647, %v6646
    %v6649 = vrot.slane %v6357, 1
    %v6650 = vsel %vm6405, %v6649, %v6648
    %v6651 = vsel %vm6408, %v6359, %v6650
    %v6652 = vrot.slane %v6361, 7
    %v6653 = vsel %vm6411, %v6652, %v6651
    %v6654 = vrot.slane %v6363, 6
    %v6655 = vsel %vm6414, %v6654, %v6653
    %v6656 = vrot.slane %v6365, 5
    %v6657 = vsel %vm6417, %v6656, %v6655
    %v6658 = vrot.slane %v6367, 4
    %v6659 = vsel %vm6420, %v6658, %v6657
    %6660 = vrot.lane.b32.xlu0 %v6617, 24
    %v6661 = vpop.permute.xlu0 %6660
    %6662 = vrot.lane.b32.xlu0 %v6631, 24
    %v6663 = vpop.permute.xlu0 %6662
    %6664 = vrot.lane.b32.xlu0 %v6645, 24
    %v6665 = vpop.permute.xlu0 %6664
    %6666 = vrot.lane.b32.xlu0 %v6659, 24
    %v6667 = vpop.permute.xlu0 %6666
    %v6672 = vrot.slane %v6305, 4
    %v6673 = vrot.slane %v6307, 3
    %v6674 = vsel %vm6402, %v6673, %v6672
    %v6675 = vrot.slane %v6309, 2
    %v6676 = vsel %vm6405, %v6675, %v6674
    %v6677 = vrot.slane %v6311, 1
    %v6678 = vsel %vm6408, %v6677, %v6676
    %v6679 = vsel %vm6411, %v6313, %v6678
    %v6680 = vrot.slane %v6315, 7
    %v6681 = vsel %vm6414, %v6680, %v6679
    %v6682 = vrot.slane %v6317, 6
    %v6683 = vsel %vm6417, %v6682, %v6681
    %v6684 = vrot.slane %v6319, 5
    %v6685 = vsel %vm6420, %v6684, %v6683
    %v6686 = vrot.slane %v6321, 4
    %v6687 = vrot.slane %v6323, 3
    %v6688 = vsel %vm6402, %v6687, %v6686
    %v6689 = vrot.slane %v6325, 2
    %v6690 = vsel %vm6405, %v6689, %v6688
    %v6691 = vrot.slane %v6327, 1
    %v6692 = vsel %vm6408, %v6691, %v6690
    %v6693 = vsel %vm6411, %v6329, %v6692
    %v6694 = vrot.slane %v6331, 7
    %v6695 = vsel %vm6414, %v6694, %v6693
    %v6696 = vrot.slane %v6333, 6
    %v6697 = vsel %vm6417, %v6696, %v6695
    %v6698 = vrot.slane %v6335, 5
    %v6699 = vsel %vm6420, %v6698, %v6697
    %v6700 = vrot.slane %v6337, 4
    %v6701 = vrot.slane %v6339, 3
    %v6702 = vsel %vm6402, %v6701, %v6700
    %v6703 = vrot.slane %v6341, 2
    %v6704 = vsel %vm6405, %v6703, %v6702
    %v6705 = vrot.slane %v6343, 1
    %v6706 = vsel %vm6408, %v6705, %v6704
    %v6707 = vsel %vm6411, %v6345, %v6706
    %v6708 = vrot.slane %v6347, 7
    %v6709 = vsel %vm6414, %v6708, %v6707
    %v6710 = vrot.slane %v6349, 6
    %v6711 = vsel %vm6417, %v6710, %v6709
    %v6712 = vrot.slane %v6351, 5
    %v6713 = vsel %vm6420, %v6712, %v6711
    %v6714 = vrot.slane %v6353, 4
    %v6715 = vrot.slane %v6355, 3
    %v6716 = vsel %vm6402, %v6715, %v6714
    %v6717 = vrot.slane %v6357, 2
    %v6718 = vsel %vm6405, %v6717, %v6716
    %v6719 = vrot.slane %v6359, 1
    %v6720 = vsel %vm6408, %v6719, %v6718
    %v6721 = vsel %vm6411, %v6361, %v6720
    %v6722 = vrot.slane %v6363, 7
    %v6723 = vsel %vm6414, %v6722, %v6721
    %v6724 = vrot.slane %v6365, 6
    %v6725 = vsel %vm6417, %v6724, %v6723
    %v6726 = vrot.slane %v6367, 5
    %v6727 = vsel %vm6420, %v6726, %v6725
    %6728 = vrot.lane.b32.xlu0 %v6685, 32
    %v6729 = vpop.permute.xlu0 %6728
    %6730 = vrot.lane.b32.xlu0 %v6699, 32
    %v6731 = vpop.permute.xlu0 %6730
    %6732 = vrot.lane.b32.xlu0 %v6713, 32
    %v6733 = vpop.permute.xlu0 %6732
    %6734 = vrot.lane.b32.xlu0 %v6727, 32
    %v6735 = vpop.permute.xlu0 %6734
    %v6740 = vrot.slane %v6305, 5
    %v6741 = vrot.slane %v6307, 4
    %v6742 = vsel %vm6402, %v6741, %v6740
    %v6743 = vrot.slane %v6309, 3
    %v6744 = vsel %vm6405, %v6743, %v6742
    %v6745 = vrot.slane %v6311, 2
    %v6746 = vsel %vm6408, %v6745, %v6744
    %v6747 = vrot.slane %v6313, 1
    %v6748 = vsel %vm6411, %v6747, %v6746
    %v6749 = vsel %vm6414, %v6315, %v6748
    %v6750 = vrot.slane %v6317, 7
    %v6751 = vsel %vm6417, %v6750, %v6749
    %v6752 = vrot.slane %v6319, 6
    %v6753 = vsel %vm6420, %v6752, %v6751
    %v6754 = vrot.slane %v6321, 5
    %v6755 = vrot.slane %v6323, 4
    %v6756 = vsel %vm6402, %v6755, %v6754
    %v6757 = vrot.slane %v6325, 3
    %v6758 = vsel %vm6405, %v6757, %v6756
    %v6759 = vrot.slane %v6327, 2
    %v6760 = vsel %vm6408, %v6759, %v6758
    %v6761 = vrot.slane %v6329, 1
    %v6762 = vsel %vm6411, %v6761, %v6760
    %v6763 = vsel %vm6414, %v6331, %v6762
    %v6764 = vrot.slane %v6333, 7
    %v6765 = vsel %vm6417, %v6764, %v6763
    %v6766 = vrot.slane %v6335, 6
    %v6767 = vsel %vm6420, %v6766, %v6765
    %v6768 = vrot.slane %v6337, 5
    %v6769 = vrot.slane %v6339, 4
    %v6770 = vsel %vm6402, %v6769, %v6768
    %v6771 = vrot.slane %v6341, 3
    %v6772 = vsel %vm6405, %v6771, %v6770
    %v6773 = vrot.slane %v6343, 2
    %v6774 = vsel %vm6408, %v6773, %v6772
    %v6775 = vrot.slane %v6345, 1
    %v6776 = vsel %vm6411, %v6775, %v6774
    %v6777 = vsel %vm6414, %v6347, %v6776
    %v6778 = vrot.slane %v6349, 7
    %v6779 = vsel %vm6417, %v6778, %v6777
    %v6780 = vrot.slane %v6351, 6
    %v6781 = vsel %vm6420, %v6780, %v6779
    %v6782 = vrot.slane %v6353, 5
    %v6783 = vrot.slane %v6355, 4
    %v6784 = vsel %vm6402, %v6783, %v6782
    %v6785 = vrot.slane %v6357, 3
    %v6786 = vsel %vm6405, %v6785, %v6784
    %v6787 = vrot.slane %v6359, 2
    %v6788 = vsel %vm6408, %v6787, %v6786
    %v6789 = vrot.slane %v6361, 1
    %v6790 = vsel %vm6411, %v6789, %v6788
    %v6791 = vsel %vm6414, %v6363, %v6790
    %v6792 = vrot.slane %v6365, 7
    %v6793 = vsel %vm6417, %v6792, %v6791
    %v6794 = vrot.slane %v6367, 6
    %v6795 = vsel %vm6420, %v6794, %v6793
    %6796 = vrot.lane.b32.xlu0 %v6753, 40
    %v6797 = vpop.permute.xlu0 %6796
    %6798 = vrot.lane.b32.xlu0 %v6767, 40
    %v6799 = vpop.permute.xlu0 %6798
    %6800 = vrot.lane.b32.xlu0 %v6781, 40
    %v6801 = vpop.permute.xlu0 %6800
    %6802 = vrot.lane.b32.xlu0 %v6795, 40
    %v6803 = vpop.permute.xlu0 %6802
    %v6808 = vrot.slane %v6305, 6
    %v6809 = vrot.slane %v6307, 5
    %v6810 = vsel %vm6402, %v6809, %v6808
    %v6811 = vrot.slane %v6309, 4
    %v6812 = vsel %vm6405, %v6811, %v6810
    %v6813 = vrot.slane %v6311, 3
    %v6814 = vsel %vm6408, %v6813, %v6812
    %v6815 = vrot.slane %v6313, 2
    %v6816 = vsel %vm6411, %v6815, %v6814
    %v6817 = vrot.slane %v6315, 1
    %v6818 = vsel %vm6414, %v6817, %v6816
    %v6819 = vsel %vm6417, %v6317, %v6818
    %v6820 = vrot.slane %v6319, 7
    %v6821 = vsel %vm6420, %v6820, %v6819
    %v6822 = vrot.slane %v6321, 6
    %v6823 = vrot.slane %v6323, 5
    %v6824 = vsel %vm6402, %v6823, %v6822
    %v6825 = vrot.slane %v6325, 4
    %v6826 = vsel %vm6405, %v6825, %v6824
    %v6827 = vrot.slane %v6327, 3
    %v6828 = vsel %vm6408, %v6827, %v6826
    %v6829 = vrot.slane %v6329, 2
    %v6830 = vsel %vm6411, %v6829, %v6828
    %v6831 = vrot.slane %v6331, 1
    %v6832 = vsel %vm6414, %v6831, %v6830
    %v6833 = vsel %vm6417, %v6333, %v6832
    %v6834 = vrot.slane %v6335, 7
    %v6835 = vsel %vm6420, %v6834, %v6833
    %v6836 = vrot.slane %v6337, 6
    %v6837 = vrot.slane %v6339, 5
    %v6838 = vsel %vm6402, %v6837, %v6836
    %v6839 = vrot.slane %v6341, 4
    %v6840 = vsel %vm6405, %v6839, %v6838
    %v6841 = vrot.slane %v6343, 3
    %v6842 = vsel %vm6408, %v6841, %v6840
    %v6843 = vrot.slane %v6345, 2
    %v6844 = vsel %vm6411, %v6843, %v6842
    %v6845 = vrot.slane %v6347, 1
    %v6846 = vsel %vm6414, %v6845, %v6844
    %v6847 = vsel %vm6417, %v6349, %v6846
    %v6848 = vrot.slane %v6351, 7
    %v6849 = vsel %vm6420, %v6848, %v6847
    %v6850 = vrot.slane %v6353, 6
    %v6851 = vrot.slane %v6355, 5
    %v6852 = vsel %vm6402, %v6851, %v6850
    %v6853 = vrot.slane %v6357, 4
    %v6854 = vsel %vm6405, %v6853, %v6852
    %v6855 = vrot.slane %v6359, 3
    %v6856 = vsel %vm6408, %v6855, %v6854
    %v6857 = vrot.slane %v6361, 2
    %v6858 = vsel %vm6411, %v6857, %v6856
    %v6859 = vrot.slane %v6363, 1
    %v6860 = vsel %vm6414, %v6859, %v6858
    %v6861 = vsel %vm6417, %v6365, %v6860
    %v6862 = vrot.slane %v6367, 7
    %v6863 = vsel %vm6420, %v6862, %v6861
    %6864 = vrot.lane.b32.xlu0 %v6821, 48
    %v6865 = vpop.permute.xlu0 %6864
    %6866 = vrot.lane.b32.xlu0 %v6835, 48
    %v6867 = vpop.permute.xlu0 %6866
    %6868 = vrot.lane.b32.xlu0 %v6849, 48
    %v6869 = vpop.permute.xlu0 %6868
    %6870 = vrot.lane.b32.xlu0 %v6863, 48
    %v6871 = vpop.permute.xlu0 %6870
    %v6876 = vrot.slane %v6305, 7
    %v6877 = vrot.slane %v6307, 6
    %v6878 = vsel %vm6402, %v6877, %v6876
    %v6879 = vrot.slane %v6309, 5
    %v6880 = vsel %vm6405, %v6879, %v6878
    %v6881 = vrot.slane %v6311, 4
    %v6882 = vsel %vm6408, %v6881, %v6880
    %v6883 = vrot.slane %v6313, 3
    %v6884 = vsel %vm6411, %v6883, %v6882
    %v6885 = vrot.slane %v6315, 2
    %v6886 = vsel %vm6414, %v6885, %v6884
    %v6887 = vrot.slane %v6317, 1
    %v6888 = vsel %vm6417, %v6887, %v6886
    %v6889 = vsel %vm6420, %v6319, %v6888
    %v6890 = vrot.slane %v6321, 7
    %v6891 = vrot.slane %v6323, 6
    %v6892 = vsel %vm6402, %v6891, %v6890
    %v6893 = vrot.slane %v6325, 5
    %v6894 = vsel %vm6405, %v6893, %v6892
    %v6895 = vrot.slane %v6327, 4
    %v6896 = vsel %vm6408, %v6895, %v6894
    %v6897 = vrot.slane %v6329, 3
    %v6898 = vsel %vm6411, %v6897, %v6896
    %v6899 = vrot.slane %v6331, 2
    %v6900 = vsel %vm6414, %v6899, %v6898
    %v6901 = vrot.slane %v6333, 1
    %v6902 = vsel %vm6417, %v6901, %v6900
    %v6903 = vsel %vm6420, %v6335, %v6902
    %v6904 = vrot.slane %v6337, 7
    %v6905 = vrot.slane %v6339, 6
    %v6906 = vsel %vm6402, %v6905, %v6904
    %v6907 = vrot.slane %v6341, 5
    %v6908 = vsel %vm6405, %v6907, %v6906
    %v6909 = vrot.slane %v6343, 4
    %v6910 = vsel %vm6408, %v6909, %v6908
    %v6911 = vrot.slane %v6345, 3
    %v6912 = vsel %vm6411, %v6911, %v6910
    %v6913 = vrot.slane %v6347, 2
    %v6914 = vsel %vm6414, %v6913, %v6912
    %v6915 = vrot.slane %v6349, 1
    %v6916 = vsel %vm6417, %v6915, %v6914
    %v6917 = vsel %vm6420, %v6351, %v6916
    %v6918 = vrot.slane %v6353, 7
    %v6919 = vrot.slane %v6355, 6
    %v6920 = vsel %vm6402, %v6919, %v6918
    %v6921 = vrot.slane %v6357, 5
    %v6922 = vsel %vm6405, %v6921, %v6920
    %v6923 = vrot.slane %v6359, 4
    %v6924 = vsel %vm6408, %v6923, %v6922
    %v6925 = vrot.slane %v6361, 3
    %v6926 = vsel %vm6411, %v6925, %v6924
    %v6927 = vrot.slane %v6363, 2
    %v6928 = vsel %vm6414, %v6927, %v6926
    %v6929 = vrot.slane %v6365, 1
    %v6930 = vsel %vm6417, %v6929, %v6928
    %v6931 = vsel %vm6420, %v6367, %v6930
    %6932 = vrot.lane.b32.xlu0 %v6889, 56
    %v6933 = vpop.permute.xlu0 %6932
    %6934 = vrot.lane.b32.xlu0 %v6903, 56
    %v6935 = vpop.permute.xlu0 %6934
    %6936 = vrot.lane.b32.xlu0 %v6917, 56
    %v6937 = vpop.permute.xlu0 %6936
    %6938 = vrot.lane.b32.xlu0 %v6931, 56
    %v6939 = vpop.permute.xlu0 %6938
    %v6976 = vrot.slane %v6308, 7
    %v6977 = vsel %vm6402, %v6976, %v6306
    %v6978 = vrot.slane %v6310, 6
    %v6979 = vsel %vm6405, %v6978, %v6977
    %v6980 = vrot.slane %v6312, 5
    %v6981 = vsel %vm6408, %v6980, %v6979
    %v6982 = vrot.slane %v6314, 4
    %v6983 = vsel %vm6411, %v6982, %v6981
    %v6984 = vrot.slane %v6316, 3
    %v6985 = vsel %vm6414, %v6984, %v6983
    %v6986 = vrot.slane %v6318, 2
    %v6987 = vsel %vm6417, %v6986, %v6985
    %v6988 = vrot.slane %v6320, 1
    %v6989 = vsel %vm6420, %v6988, %v6987
    %v6990 = vrot.slane %v6324, 7
    %v6991 = vsel %vm6402, %v6990, %v6322
    %v6992 = vrot.slane %v6326, 6
    %v6993 = vsel %vm6405, %v6992, %v6991
    %v6994 = vrot.slane %v6328, 5
    %v6995 = vsel %vm6408, %v6994, %v6993
    %v6996 = vrot.slane %v6330, 4
    %v6997 = vsel %vm6411, %v6996, %v6995
    %v6998 = vrot.slane %v6332, 3
    %v6999 = vsel %vm6414, %v6998, %v6997
    %v7000 = vrot.slane %v6334, 2
    %v7001 = vsel %vm6417, %v7000, %v6999
    %v7002 = vrot.slane %v6336, 1
    %v7003 = vsel %vm6420, %v7002, %v7001
    %v7004 = vrot.slane %v6340, 7
    %v7005 = vsel %vm6402, %v7004, %v6338
    %v7006 = vrot.slane %v6342, 6
    %v7007 = vsel %vm6405, %v7006, %v7005
    %v7008 = vrot.slane %v6344, 5
    %v7009 = vsel %vm6408, %v7008, %v7007
    %v7010 = vrot.slane %v6346, 4
    %v7011 = vsel %vm6411, %v7010, %v7009
    %v7012 = vrot.slane %v6348, 3
    %v7013 = vsel %vm6414, %v7012, %v7011
    %v7014 = vrot.slane %v6350, 2
    %v7015 = vsel %vm6417, %v7014, %v7013
    %v7016 = vrot.slane %v6352, 1
    %v7017 = vsel %vm6420, %v7016, %v7015
    %v7018 = vrot.slane %v6356, 7
    %v7019 = vsel %vm6402, %v7018, %v6354
    %v7020 = vrot.slane %v6358, 6
    %v7021 = vsel %vm6405, %v7020, %v7019
    %v7022 = vrot.slane %v6360, 5
    %v7023 = vsel %vm6408, %v7022, %v7021
    %v7024 = vrot.slane %v6362, 4
    %v7025 = vsel %vm6411, %v7024, %v7023
    %v7026 = vrot.slane %v6364, 3
    %v7027 = vsel %vm6414, %v7026, %v7025
    %v7028 = vrot.slane %v6366, 2
    %v7029 = vsel %vm6417, %v7028, %v7027
    %v7030 = vrot.slane %v6368, 1
    %v7031 = vsel %vm6420, %v7030, %v7029
    %7032 = vrot.lane.b32.xlu0 %v6989, 64
    %v7033 = vpop.permute.xlu0 %7032
    %7034 = vrot.lane.b32.xlu0 %v7003, 64
    %v7035 = vpop.permute.xlu0 %7034
    %7036 = vrot.lane.b32.xlu0 %v7017, 64
    %v7037 = vpop.permute.xlu0 %7036
    %7038 = vrot.lane.b32.xlu0 %v7031, 64
    %v7039 = vpop.permute.xlu0 %7038
    %v7044 = vrot.slane %v6306, 1
    %v7045 = vsel %vm6402, %v6308, %v7044
    %v7046 = vrot.slane %v6310, 7
    %v7047 = vsel %vm6405, %v7046, %v7045
    %v7048 = vrot.slane %v6312, 6
    %v7049 = vsel %vm6408, %v7048, %v7047
    %v7050 = vrot.slane %v6314, 5
    %v7051 = vsel %vm6411, %v7050, %v7049
    %v7052 = vrot.slane %v6316, 4
    %v7053 = vsel %vm6414, %v7052, %v7051
    %v7054 = vrot.slane %v6318, 3
    %v7055 = vsel %vm6417, %v7054, %v7053
    %v7056 = vrot.slane %v6320, 2
    %v7057 = vsel %vm6420, %v7056, %v7055
    %v7058 = vrot.slane %v6322, 1
    %v7059 = vsel %vm6402, %v6324, %v7058
    %v7060 = vrot.slane %v6326, 7
    %v7061 = vsel %vm6405, %v7060, %v7059
    %v7062 = vrot.slane %v6328, 6
    %v7063 = vsel %vm6408, %v7062, %v7061
    %v7064 = vrot.slane %v6330, 5
    %v7065 = vsel %vm6411, %v7064, %v7063
    %v7066 = vrot.slane %v6332, 4
    %v7067 = vsel %vm6414, %v7066, %v7065
    %v7068 = vrot.slane %v6334, 3
    %v7069 = vsel %vm6417, %v7068, %v7067
    %v7070 = vrot.slane %v6336, 2
    %v7071 = vsel %vm6420, %v7070, %v7069
    %v7072 = vrot.slane %v6338, 1
    %v7073 = vsel %vm6402, %v6340, %v7072
    %v7074 = vrot.slane %v6342, 7
    %v7075 = vsel %vm6405, %v7074, %v7073
    %v7076 = vrot.slane %v6344, 6
    %v7077 = vsel %vm6408, %v7076, %v7075
    %v7078 = vrot.slane %v6346, 5
    %v7079 = vsel %vm6411, %v7078, %v7077
    %v7080 = vrot.slane %v6348, 4
    %v7081 = vsel %vm6414, %v7080, %v7079
    %v7082 = vrot.slane %v6350, 3
    %v7083 = vsel %vm6417, %v7082, %v7081
    %v7084 = vrot.slane %v6352, 2
    %v7085 = vsel %vm6420, %v7084, %v7083
    %v7086 = vrot.slane %v6354, 1
    %v7087 = vsel %vm6402, %v6356, %v7086
    %v7088 = vrot.slane %v6358, 7
    %v7089 = vsel %vm6405, %v7088, %v7087
    %v7090 = vrot.slane %v6360, 6
    %v7091 = vsel %vm6408, %v7090, %v7089
    %v7092 = vrot.slane %v6362, 5
    %v7093 = vsel %vm6411, %v7092, %v7091
    %v7094 = vrot.slane %v6364, 4
    %v7095 = vsel %vm6414, %v7094, %v7093
    %v7096 = vrot.slane %v6366, 3
    %v7097 = vsel %vm6417, %v7096, %v7095
    %v7098 = vrot.slane %v6368, 2
    %v7099 = vsel %vm6420, %v7098, %v7097
    %7100 = vrot.lane.b32.xlu0 %v7057, 72
    %v7101 = vpop.permute.xlu0 %7100
    %7102 = vrot.lane.b32.xlu0 %v7071, 72
    %v7103 = vpop.permute.xlu0 %7102
    %7104 = vrot.lane.b32.xlu0 %v7085, 72
    %v7105 = vpop.permute.xlu0 %7104
    %7106 = vrot.lane.b32.xlu0 %v7099, 72
    %v7107 = vpop.permute.xlu0 %7106
    %v7112 = vrot.slane %v6306, 2
    %v7113 = vrot.slane %v6308, 1
    %v7114 = vsel %vm6402, %v7113, %v7112
    %v7115 = vsel %vm6405, %v6310, %v7114
    %v7116 = vrot.slane %v6312, 7
    %v7117 = vsel %vm6408, %v7116, %v7115
    %v7118 = vrot.slane %v6314, 6
    %v7119 = vsel %vm6411, %v7118, %v7117
    %v7120 = vrot.slane %v6316, 5
    %v7121 = vsel %vm6414, %v7120, %v7119
    %v7122 = vrot.slane %v6318, 4
    %v7123 = vsel %vm6417, %v7122, %v7121
    %v7124 = vrot.slane %v6320, 3
    %v7125 = vsel %vm6420, %v7124, %v7123
    %v7126 = vrot.slane %v6322, 2
    %v7127 = vrot.slane %v6324, 1
    %v7128 = vsel %vm6402, %v7127, %v7126
    %v7129 = vsel %vm6405, %v6326, %v7128
    %v7130 = vrot.slane %v6328, 7
    %v7131 = vsel %vm6408, %v7130, %v7129
    %v7132 = vrot.slane %v6330, 6
    %v7133 = vsel %vm6411, %v7132, %v7131
    %v7134 = vrot.slane %v6332, 5
    %v7135 = vsel %vm6414, %v7134, %v7133
    %v7136 = vrot.slane %v6334, 4
    %v7137 = vsel %vm6417, %v7136, %v7135
    %v7138 = vrot.slane %v6336, 3
    %v7139 = vsel %vm6420, %v7138, %v7137
    %v7140 = vrot.slane %v6338, 2
    %v7141 = vrot.slane %v6340, 1
    %v7142 = vsel %vm6402, %v7141, %v7140
    %v7143 = vsel %vm6405, %v6342, %v7142
    %v7144 = vrot.slane %v6344, 7
    %v7145 = vsel %vm6408, %v7144, %v7143
    %v7146 = vrot.slane %v6346, 6
    %v7147 = vsel %vm6411, %v7146, %v7145
    %v7148 = vrot.slane %v6348, 5
    %v7149 = vsel %vm6414, %v7148, %v7147
    %v7150 = vrot.slane %v6350, 4
    %v7151 = vsel %vm6417, %v7150, %v7149
    %v7152 = vrot.slane %v6352, 3
    %v7153 = vsel %vm6420, %v7152, %v7151
    %v7154 = vrot.slane %v6354, 2
    %v7155 = vrot.slane %v6356, 1
    %v7156 = vsel %vm6402, %v7155, %v7154
    %v7157 = vsel %vm6405, %v6358, %v7156
    %v7158 = vrot.slane %v6360, 7
    %v7159 = vsel %vm6408, %v7158, %v7157
    %v7160 = vrot.slane %v6362, 6
    %v7161 = vsel %vm6411, %v7160, %v7159
    %v7162 = vrot.slane %v6364, 5
    %v7163 = vsel %vm6414, %v7162, %v7161
    %v7164 = vrot.slane %v6366, 4
    %v7165 = vsel %vm6417, %v7164, %v7163
    %v7166 = vrot.slane %v6368, 3
    %v7167 = vsel %vm6420, %v7166, %v7165
    %7168 = vrot.lane.b32.xlu0 %v7125, 80
    %v7169 = vpop.permute.xlu0 %7168
    %7170 = vrot.lane.b32.xlu0 %v7139, 80
    %v7171 = vpop.permute.xlu0 %7170
    %7172 = vrot.lane.b32.xlu0 %v7153, 80
    %v7173 = vpop.permute.xlu0 %7172
    %7174 = vrot.lane.b32.xlu0 %v7167, 80
    %v7175 = vpop.permute.xlu0 %7174
    %v7180 = vrot.slane %v6306, 3
    %v7181 = vrot.slane %v6308, 2
    %v7182 = vsel %vm6402, %v7181, %v7180
    %v7183 = vrot.slane %v6310, 1
    %v7184 = vsel %vm6405, %v7183, %v7182
    %v7185 = vsel %vm6408, %v6312, %v7184
    %v7186 = vrot.slane %v6314, 7
    %v7187 = vsel %vm6411, %v7186, %v7185
    %v7188 = vrot.slane %v6316, 6
    %v7189 = vsel %vm6414, %v7188, %v7187
    %v7190 = vrot.slane %v6318, 5
    %v7191 = vsel %vm6417, %v7190, %v7189
    %v7192 = vrot.slane %v6320, 4
    %v7193 = vsel %vm6420, %v7192, %v7191
    %v7194 = vrot.slane %v6322, 3
    %v7195 = vrot.slane %v6324, 2
    %v7196 = vsel %vm6402, %v7195, %v7194
    %v7197 = vrot.slane %v6326, 1
    %v7198 = vsel %vm6405, %v7197, %v7196
    %v7199 = vsel %vm6408, %v6328, %v7198
    %v7200 = vrot.slane %v6330, 7
    %v7201 = vsel %vm6411, %v7200, %v7199
    %v7202 = vrot.slane %v6332, 6
    %v7203 = vsel %vm6414, %v7202, %v7201
    %v7204 = vrot.slane %v6334, 5
    %v7205 = vsel %vm6417, %v7204, %v7203
    %v7206 = vrot.slane %v6336, 4
    %v7207 = vsel %vm6420, %v7206, %v7205
    %v7208 = vrot.slane %v6338, 3
    %v7209 = vrot.slane %v6340, 2
    %v7210 = vsel %vm6402, %v7209, %v7208
    %v7211 = vrot.slane %v6342, 1
    %v7212 = vsel %vm6405, %v7211, %v7210
    %v7213 = vsel %vm6408, %v6344, %v7212
    %v7214 = vrot.slane %v6346, 7
    %v7215 = vsel %vm6411, %v7214, %v7213
    %v7216 = vrot.slane %v6348, 6
    %v7217 = vsel %vm6414, %v7216, %v7215
    %v7218 = vrot.slane %v6350, 5
    %v7219 = vsel %vm6417, %v7218, %v7217
    %v7220 = vrot.slane %v6352, 4
    %v7221 = vsel %vm6420, %v7220, %v7219
    %v7222 = vrot.slane %v6354, 3
    %v7223 = vrot.slane %v6356, 2
    %v7224 = vsel %vm6402, %v7223, %v7222
    %v7225 = vrot.slane %v6358, 1
    %v7226 = vsel %vm6405, %v7225, %v7224
    %v7227 = vsel %vm6408, %v6360, %v7226
    %v7228 = vrot.slane %v6362, 7
    %v7229 = vsel %vm6411, %v7228, %v7227
    %v7230 = vrot.slane %v6364, 6
    %v7231 = vsel %vm6414, %v7230, %v7229
    %v7232 = vrot.slane %v6366, 5
    %v7233 = vsel %vm6417, %v7232, %v7231
    %v7234 = vrot.slane %v6368, 4
    %v7235 = vsel %vm6420, %v7234, %v7233
    %7236 = vrot.lane.b32.xlu0 %v7193, 88
    %v7237 = vpop.permute.xlu0 %7236
    %7238 = vrot.lane.b32.xlu0 %v7207, 88
    %v7239 = vpop.permute.xlu0 %7238
    %7240 = vrot.lane.b32.xlu0 %v7221, 88
    %v7241 = vpop.permute.xlu0 %7240
    %7242 = vrot.lane.b32.xlu0 %v7235, 88
    %v7243 = vpop.permute.xlu0 %7242
    %v7248 = vrot.slane %v6306, 4
    %v7249 = vrot.slane %v6308, 3
    %v7250 = vsel %vm6402, %v7249, %v7248
    %v7251 = vrot.slane %v6310, 2
    %v7252 = vsel %vm6405, %v7251, %v7250
    %v7253 = vrot.slane %v6312, 1
    %v7254 = vsel %vm6408, %v7253, %v7252
    %v7255 = vsel %vm6411, %v6314, %v7254
    %v7256 = vrot.slane %v6316, 7
    %v7257 = vsel %vm6414, %v7256, %v7255
    %v7258 = vrot.slane %v6318, 6
    %v7259 = vsel %vm6417, %v7258, %v7257
    %v7260 = vrot.slane %v6320, 5
    %v7261 = vsel %vm6420, %v7260, %v7259
    %v7262 = vrot.slane %v6322, 4
    %v7263 = vrot.slane %v6324, 3
    %v7264 = vsel %vm6402, %v7263, %v7262
    %v7265 = vrot.slane %v6326, 2
    %v7266 = vsel %vm6405, %v7265, %v7264
    %v7267 = vrot.slane %v6328, 1
    %v7268 = vsel %vm6408, %v7267, %v7266
    %v7269 = vsel %vm6411, %v6330, %v7268
    %v7270 = vrot.slane %v6332, 7
    %v7271 = vsel %vm6414, %v7270, %v7269
    %v7272 = vrot.slane %v6334, 6
    %v7273 = vsel %vm6417, %v7272, %v7271
    %v7274 = vrot.slane %v6336, 5
    %v7275 = vsel %vm6420, %v7274, %v7273
    %v7276 = vrot.slane %v6338, 4
    %v7277 = vrot.slane %v6340, 3
    %v7278 = vsel %vm6402, %v7277, %v7276
    %v7279 = vrot.slane %v6342, 2
    %v7280 = vsel %vm6405, %v7279, %v7278
    %v7281 = vrot.slane %v6344, 1
    %v7282 = vsel %vm6408, %v7281, %v7280
    %v7283 = vsel %vm6411, %v6346, %v7282
    %v7284 = vrot.slane %v6348, 7
    %v7285 = vsel %vm6414, %v7284, %v7283
    %v7286 = vrot.slane %v6350, 6
    %v7287 = vsel %vm6417, %v7286, %v7285
    %v7288 = vrot.slane %v6352, 5
    %v7289 = vsel %vm6420, %v7288, %v7287
    %v7290 = vrot.slane %v6354, 4
    %v7291 = vrot.slane %v6356, 3
    %v7292 = vsel %vm6402, %v7291, %v7290
    %v7293 = vrot.slane %v6358, 2
    %v7294 = vsel %vm6405, %v7293, %v7292
    %v7295 = vrot.slane %v6360, 1
    %v7296 = vsel %vm6408, %v7295, %v7294
    %v7297 = vsel %vm6411, %v6362, %v7296
    %v7298 = vrot.slane %v6364, 7
    %v7299 = vsel %vm6414, %v7298, %v7297
    %v7300 = vrot.slane %v6366, 6
    %v7301 = vsel %vm6417, %v7300, %v7299
    %v7302 = vrot.slane %v6368, 5
    %v7303 = vsel %vm6420, %v7302, %v7301
    %7304 = vrot.lane.b32.xlu0 %v7261, 96
    %v7305 = vpop.permute.xlu0 %7304
    %7306 = vrot.lane.b32.xlu0 %v7275, 96
    %v7307 = vpop.permute.xlu0 %7306
    %7308 = vrot.lane.b32.xlu0 %v7289, 96
    %v7309 = vpop.permute.xlu0 %7308
    %7310 = vrot.lane.b32.xlu0 %v7303, 96
    %v7311 = vpop.permute.xlu0 %7310
    %v7316 = vrot.slane %v6306, 5
    %v7317 = vrot.slane %v6308, 4
    %v7318 = vsel %vm6402, %v7317, %v7316
    %v7319 = vrot.slane %v6310, 3
    %v7320 = vsel %vm6405, %v7319, %v7318
    %v7321 = vrot.slane %v6312, 2
    %v7322 = vsel %vm6408, %v7321, %v7320
    %v7323 = vrot.slane %v6314, 1
    %v7324 = vsel %vm6411, %v7323, %v7322
    %v7325 = vsel %vm6414, %v6316, %v7324
    %v7326 = vrot.slane %v6318, 7
    %v7327 = vsel %vm6417, %v7326, %v7325
    %v7328 = vrot.slane %v6320, 6
    %v7329 = vsel %vm6420, %v7328, %v7327
    %v7330 = vrot.slane %v6322, 5
    %v7331 = vrot.slane %v6324, 4
    %v7332 = vsel %vm6402, %v7331, %v7330
    %v7333 = vrot.slane %v6326, 3
    %v7334 = vsel %vm6405, %v7333, %v7332
    %v7335 = vrot.slane %v6328, 2
    %v7336 = vsel %vm6408, %v7335, %v7334
    %v7337 = vrot.slane %v6330, 1
    %v7338 = vsel %vm6411, %v7337, %v7336
    %v7339 = vsel %vm6414, %v6332, %v7338
    %v7340 = vrot.slane %v6334, 7
    %v7341 = vsel %vm6417, %v7340, %v7339
    %v7342 = vrot.slane %v6336, 6
    %v7343 = vsel %vm6420, %v7342, %v7341
    %v7344 = vrot.slane %v6338, 5
    %v7345 = vrot.slane %v6340, 4
    %v7346 = vsel %vm6402, %v7345, %v7344
    %v7347 = vrot.slane %v6342, 3
    %v7348 = vsel %vm6405, %v7347, %v7346
    %v7349 = vrot.slane %v6344, 2
    %v7350 = vsel %vm6408, %v7349, %v7348
    %v7351 = vrot.slane %v6346, 1
    %v7352 = vsel %vm6411, %v7351, %v7350
    %v7353 = vsel %vm6414, %v6348, %v7352
    %v7354 = vrot.slane %v6350, 7
    %v7355 = vsel %vm6417, %v7354, %v7353
    %v7356 = vrot.slane %v6352, 6
    %v7357 = vsel %vm6420, %v7356, %v7355
    %v7358 = vrot.slane %v6354, 5
    %v7359 = vrot.slane %v6356, 4
    %v7360 = vsel %vm6402, %v7359, %v7358
    %v7361 = vrot.slane %v6358, 3
    %v7362 = vsel %vm6405, %v7361, %v7360
    %v7363 = vrot.slane %v6360, 2
    %v7364 = vsel %vm6408, %v7363, %v7362
    %v7365 = vrot.slane %v6362, 1
    %v7366 = vsel %vm6411, %v7365, %v7364
    %v7367 = vsel %vm6414, %v6364, %v7366
    %v7368 = vrot.slane %v6366, 7
    %v7369 = vsel %vm6417, %v7368, %v7367
    %v7370 = vrot.slane %v6368, 6
    %v7371 = vsel %vm6420, %v7370, %v7369
    %7372 = vrot.lane.b32.xlu0 %v7329, 104
    %v7373 = vpop.permute.xlu0 %7372
    %7374 = vrot.lane.b32.xlu0 %v7343, 104
    %v7375 = vpop.permute.xlu0 %7374
    %7376 = vrot.lane.b32.xlu0 %v7357, 104
    %v7377 = vpop.permute.xlu0 %7376
    %7378 = vrot.lane.b32.xlu0 %v7371, 104
    %v7379 = vpop.permute.xlu0 %7378
    %v7384 = vrot.slane %v6306, 6
    %v7385 = vrot.slane %v6308, 5
    %v7386 = vsel %vm6402, %v7385, %v7384
    %v7387 = vrot.slane %v6310, 4
    %v7388 = vsel %vm6405, %v7387, %v7386
    %v7389 = vrot.slane %v6312, 3
    %v7390 = vsel %vm6408, %v7389, %v7388
    %v7391 = vrot.slane %v6314, 2
    %v7392 = vsel %vm6411, %v7391, %v7390
    %v7393 = vrot.slane %v6316, 1
    %v7394 = vsel %vm6414, %v7393, %v7392
    %v7395 = vsel %vm6417, %v6318, %v7394
    %v7396 = vrot.slane %v6320, 7
    %v7397 = vsel %vm6420, %v7396, %v7395
    %v7398 = vrot.slane %v6322, 6
    %v7399 = vrot.slane %v6324, 5
    %v7400 = vsel %vm6402, %v7399, %v7398
    %v7401 = vrot.slane %v6326, 4
    %v7402 = vsel %vm6405, %v7401, %v7400
    %v7403 = vrot.slane %v6328, 3
    %v7404 = vsel %vm6408, %v7403, %v7402
    %v7405 = vrot.slane %v6330, 2
    %v7406 = vsel %vm6411, %v7405, %v7404
    %v7407 = vrot.slane %v6332, 1
    %v7408 = vsel %vm6414, %v7407, %v7406
    %v7409 = vsel %vm6417, %v6334, %v7408
    %v7410 = vrot.slane %v6336, 7
    %v7411 = vsel %vm6420, %v7410, %v7409
    %v7412 = vrot.slane %v6338, 6
    %v7413 = vrot.slane %v6340, 5
    %v7414 = vsel %vm6402, %v7413, %v7412
    %v7415 = vrot.slane %v6342, 4
    %v7416 = vsel %vm6405, %v7415, %v7414
    %v7417 = vrot.slane %v6344, 3
    %v7418 = vsel %vm6408, %v7417, %v7416
    %v7419 = vrot.slane %v6346, 2
    %v7420 = vsel %vm6411, %v7419, %v7418
    %v7421 = vrot.slane %v6348, 1
    %v7422 = vsel %vm6414, %v7421, %v7420
    %v7423 = vsel %vm6417, %v6350, %v7422
    %v7424 = vrot.slane %v6352, 7
    %v7425 = vsel %vm6420, %v7424, %v7423
    %v7426 = vrot.slane %v6354, 6
    %v7427 = vrot.slane %v6356, 5
    %v7428 = vsel %vm6402, %v7427, %v7426
    %v7429 = vrot.slane %v6358, 4
    %v7430 = vsel %vm6405, %v7429, %v7428
    %v7431 = vrot.slane %v6360, 3
    %v7432 = vsel %vm6408, %v7431, %v7430
    %v7433 = vrot.slane %v6362, 2
    %v7434 = vsel %vm6411, %v7433, %v7432
    %v7435 = vrot.slane %v6364, 1
    %v7436 = vsel %vm6414, %v7435, %v7434
    %v7437 = vsel %vm6417, %v6366, %v7436
    %v7438 = vrot.slane %v6368, 7
    %v7439 = vsel %vm6420, %v7438, %v7437
    %7440 = vrot.lane.b32.xlu0 %v7397, 112
    %v7441 = vpop.permute.xlu0 %7440
    %7442 = vrot.lane.b32.xlu0 %v7411, 112
    %v7443 = vpop.permute.xlu0 %7442
    %7444 = vrot.lane.b32.xlu0 %v7425, 112
    %v7445 = vpop.permute.xlu0 %7444
    %7446 = vrot.lane.b32.xlu0 %v7439, 112
    %v7447 = vpop.permute.xlu0 %7446
    %v7452 = vrot.slane %v6306, 7
    %v7453 = vrot.slane %v6308, 6
    %v7454 = vsel %vm6402, %v7453, %v7452
    %v7455 = vrot.slane %v6310, 5
    %v7456 = vsel %vm6405, %v7455, %v7454
    %v7457 = vrot.slane %v6312, 4
    %v7458 = vsel %vm6408, %v7457, %v7456
    %v7459 = vrot.slane %v6314, 3
    %v7460 = vsel %vm6411, %v7459, %v7458
    %v7461 = vrot.slane %v6316, 2
    %v7462 = vsel %vm6414, %v7461, %v7460
    %v7463 = vrot.slane %v6318, 1
    %v7464 = vsel %vm6417, %v7463, %v7462
    %v7465 = vsel %vm6420, %v6320, %v7464
    %v7466 = vrot.slane %v6322, 7
    %v7467 = vrot.slane %v6324, 6
    %v7468 = vsel %vm6402, %v7467, %v7466
    %v7469 = vrot.slane %v6326, 5
    %v7470 = vsel %vm6405, %v7469, %v7468
    %v7471 = vrot.slane %v6328, 4
    %v7472 = vsel %vm6408, %v7471, %v7470
    %v7473 = vrot.slane %v6330, 3
    %v7474 = vsel %vm6411, %v7473, %v7472
    %v7475 = vrot.slane %v6332, 2
    %v7476 = vsel %vm6414, %v7475, %v7474
    %v7477 = vrot.slane %v6334, 1
    %v7478 = vsel %vm6417, %v7477, %v7476
    %v7479 = vsel %vm6420, %v6336, %v7478
    %v7480 = vrot.slane %v6338, 7
    %v7481 = vrot.slane %v6340, 6
    %v7482 = vsel %vm6402, %v7481, %v7480
    %v7483 = vrot.slane %v6342, 5
    %v7484 = vsel %vm6405, %v7483, %v7482
    %v7485 = vrot.slane %v6344, 4
    %v7486 = vsel %vm6408, %v7485, %v7484
    %v7487 = vrot.slane %v6346, 3
    %v7488 = vsel %vm6411, %v7487, %v7486
    %v7489 = vrot.slane %v6348, 2
    %v7490 = vsel %vm6414, %v7489, %v7488
    %v7491 = vrot.slane %v6350, 1
    %v7492 = vsel %vm6417, %v7491, %v7490
    %v7493 = vsel %vm6420, %v6352, %v7492
    %v7494 = vrot.slane %v6354, 7
    %v7495 = vrot.slane %v6356, 6
    %v7496 = vsel %vm6402, %v7495, %v7494
    %v7497 = vrot.slane %v6358, 5
    %v7498 = vsel %vm6405, %v7497, %v7496
    %v7499 = vrot.slane %v6360, 4
    %v7500 = vsel %vm6408, %v7499, %v7498
    %v7501 = vrot.slane %v6362, 3
    %v7502 = vsel %vm6411, %v7501, %v7500
    %v7503 = vrot.slane %v6364, 2
    %v7504 = vsel %vm6414, %v7503, %v7502
    %v7505 = vrot.slane %v6366, 1
    %v7506 = vsel %vm6417, %v7505, %v7504
    %v7507 = vsel %vm6420, %v6368, %v7506
    %7508 = vrot.lane.b32.xlu0 %v7465, 120
    %v7509 = vpop.permute.xlu0 %7508
    %7510 = vrot.lane.b32.xlu0 %v7479, 120
    %v7511 = vpop.permute.xlu0 %7510
    %7512 = vrot.lane.b32.xlu0 %v7493, 120
    %v7513 = vpop.permute.xlu0 %7512
    %7514 = vrot.lane.b32.xlu0 %v7507, 120
    %v7515 = vpop.permute.xlu0 %7514
    %v7520 = vsel %vm684, %v6421, %v6525
    %v7521 = vsel %vm684, %v6435, %v6527
    %v7522 = vsel %vm684, %v6449, %v6529
    %v7523 = vsel %vm684, %v6463, %v6531
    %v7524 = vsel %vm4072, %v7520, %v6593
    %v7525 = vsel %vm4072, %v7521, %v6595
    %v7526 = vsel %vm4072, %v7522, %v6597
    %v7527 = vsel %vm4072, %v7523, %v6599
    %v7528 = vsel %vm4137, %v7524, %v6661
    %v7529 = vsel %vm4137, %v7525, %v6663
    %v7530 = vsel %vm4137, %v7526, %v6665
    %v7531 = vsel %vm4137, %v7527, %v6667
    %v7532 = vsel %vm4202, %v7528, %v6729
    %v7533 = vsel %vm4202, %v7529, %v6731
    %v7534 = vsel %vm4202, %v7530, %v6733
    %v7535 = vsel %vm4202, %v7531, %v6735
    %v7536 = vsel %vm4267, %v7532, %v6797
    %v7537 = vsel %vm4267, %v7533, %v6799
    %v7538 = vsel %vm4267, %v7534, %v6801
    %v7539 = vsel %vm4267, %v7535, %v6803
    %v7540 = vsel %vm4332, %v7536, %v6865
    %v7541 = vsel %vm4332, %v7537, %v6867
    %v7542 = vsel %vm4332, %v7538, %v6869
    %v7543 = vsel %vm4332, %v7539, %v6871
    %v7544 = vsel %vm4397, %v7540, %v6933
    %v7545 = vsel %vm4397, %v7541, %v6935
    %v7546 = vsel %vm4397, %v7542, %v6937
    %v7547 = vsel %vm4397, %v7543, %v6939
    %v7548 = vsel %vm4462, %v7544, %v7033
    %v7549 = vsel %vm4462, %v7545, %v7035
    %v7550 = vsel %vm4462, %v7546, %v7037
    %v7551 = vsel %vm4462, %v7547, %v7039
    %v7552 = vsel %vm4536, %v7548, %v7101
    %v7553 = vsel %vm4536, %v7549, %v7103
    %v7554 = vsel %vm4536, %v7550, %v7105
    %v7555 = vsel %vm4536, %v7551, %v7107
    %vm7556 = vcmask 654336
    %v7557 = vsel %vm7556, %v7552, %v7169
    %v7558 = vsel %vm7556, %v7553, %v7171
    %v7559 = vsel %vm7556, %v7554, %v7173
    %v7560 = vsel %vm7556, %v7555, %v7175
    %vm7561 = vcmask 719872
    %v7562 = vsel %vm7561, %v7557, %v7237
    %v7563 = vsel %vm7561, %v7558, %v7239
    %v7564 = vsel %vm7561, %v7559, %v7241
    %v7565 = vsel %vm7561, %v7560, %v7243
    %vm7566 = vcmask 785408
    %v7567 = vsel %vm7566, %v7562, %v7305
    %v7568 = vsel %vm7566, %v7563, %v7307
    %v7569 = vsel %vm7566, %v7564, %v7309
    %v7570 = vsel %vm7566, %v7565, %v7311
    %vm7571 = vcmask 850944
    %v7572 = vsel %vm7571, %v7567, %v7373
    %v7573 = vsel %vm7571, %v7568, %v7375
    %v7574 = vsel %vm7571, %v7569, %v7377
    %v7575 = vsel %vm7571, %v7570, %v7379
    %vm7576 = vcmask 916480
    %v7577 = vsel %vm7576, %v7572, %v7441
    %v7578 = vsel %vm7576, %v7573, %v7443
    %v7579 = vsel %vm7576, %v7574, %v7445
    %v7580 = vsel %vm7576, %v7575, %v7447
    %vm7581 = vcmask 982016
    %v7582 = vsel %vm7581, %v7577, %v7509
    %v7583 = vsel %vm7581, %v7578, %v7511
    %v7584 = vsel %vm7581, %v7579, %v7513
    %v7585 = vsel %vm7581, %v7580, %v7515
    %7586 = vst [vmem:[#allocation3] sm:$0xff] %v7582
    %7587 = vst [vmem:[#allocation3 + $0x8] sm:$0xff] %v7583
    %7588 = vst [vmem:[#allocation3 + $0x10] sm:$0xff] %v7584
    %7589 = vst [vmem:[#allocation3 + $0x18] sm:$0xff] %v7585
    // Predicated region
    $region38: #{tpu_custom_call.1} parent=1 // pred_check
      _
    $region39: #{tpu_custom_call.1} parent=1 // pred_check_branch
      %7591 = sbr.rel (0) target = $region41
    $region40: #{tpu_custom_call.1} parent=1 // pred_region
      %s7593 = ssub.s32 512, 512
      %7594 = vsyncadd [#allocation4], %s7593
      %s7595 = sshll.u32 [#allocation3], 4
      %s7596 = int_to_ptr.vmem [resolvable:$true] %s7595
      %7601 = dma.vmem_to_hbm [thread:$0]  %s7596, 512, %s9, [#allocation4], 128, 128, 8
    $region41: #{tpu_custom_call.1} parent=1 // pred_fallthru
      _
    // Predicated region
    $region42: #{tpu_custom_call.1} parent=1 // pred_check
      _
    $region43: #{tpu_custom_call.1} parent=1 // pred_check_branch
      %7603 = sbr.rel (0) target = $region45
    $region44: #{tpu_custom_call.1} parent=1 // pred_region
      %7604 = dma.done [#allocation4], 512
    $region45: #{tpu_custom_call.1} parent=1 // pred_fallthru
      _
    %7605 = vsyncpa [#allocation4], 1

</llo_original>
